<compile_context>
chip_gen: v6e
topology: v6e:2x2x1
jax: 0.10.0
libtpu: 0.0.40
codegen_flags: <defaults>
</compile_context>

<pallas_src>
import functools

import jax
import jax.numpy as jnp
import numpy as np
from jax.experimental import pallas as pl
from jax.experimental.pallas import tpu as pltpu


def _make_freq_bands(multi_res, use_log_bands):
    max_freq_log2 = multi_res - 1
    if use_log_bands:
        bands = 2.0 ** np.linspace(0.0, max_freq_log2, num=multi_res)
    else:
        bands = np.linspace(2.0 ** 0, 2.0 ** max_freq_log2, num=multi_res)
    return tuple(float(b) for b in bands)


def _freq_embed_kernel(x_ref, o_ref, *, freq_bands, include_input):
    # x_ref: [BR, C] lane-dense block of flattened input scalars.
    # o_ref: [num_parts, BR, C]; part p holds embed_fn_p applied elementwise.
    base = 0
    if include_input:
        o_ref[0] = x_ref[...]
        base = 1
    # Static Python loop over frequencies; each iteration is one wide VPU mul
    # plus two wide EUP transcendentals, stored straight into its output slice.
    # TODO(synk): on v5e (single f32-only EUP) a double-angle recurrence for
    # log-spaced bands could move sin/cos work to the idle VALUs, but its
    # compounded error over 10 doublings risks the 1e-5 tolerance, so keep EUP.
    for k, f in enumerate(freq_bands):
        xf = x_ref[...] * jnp.float32(f)
        o_ref[base + 2 * k] = jnp.sin(xf)
        o_ref[base + 2 * k + 1] = jnp.cos(xf)


def freq_embedder(x, *, in_dim=3, multi_res=10, use_log_bands=True,
                  include_input=True, block_rows=256, lane_cols=512):
    """Pallas implementation of FreqEmbedder.forward.

    x: [..., in_dim] float32. Returns [..., out_dim] with PyTorch column order.
    """
    assert x.shape[-1] == in_dim
    x = x.astype(jnp.float32)
    freq_bands = _make_freq_bands(multi_res, use_log_bands)
    num_parts = 2 * multi_res + (1 if include_input else 0)
    out_dim = num_parts * in_dim

    lead_shape = x.shape[:-1]
    n = int(np.prod(lead_shape)) if lead_shape else 1
    m = n * in_dim

    # Lane-dense relayout: flatten all scalars and tile as [R_pad, C] with
    # C % 128 == 0 and block rows a multiple of 8 (the (8,128) constraint).
    c = lane_cols
    r = pl.cdiv(m, c)
    br = min(block_rows, r)
    br = max(8, ((br + 7) // 8) * 8)
    r_pad = pl.cdiv(r, br) * br
    m_pad = r_pad * c

    flat = x.reshape(m)
    if m_pad != m:
        flat = jnp.pad(flat, (0, m_pad - m))
    x2 = flat.reshape(r_pad, c)

    kernel = functools.partial(_freq_embed_kernel, freq_bands=freq_bands,
                               include_input=include_input)

    out = pl.pallas_call(
        kernel,
        out_shape=jax.ShapeDtypeStruct((num_parts, r_pad, c), jnp.float32),
        grid_spec=pltpu.PrefetchScalarGridSpec(
            num_scalar_prefetch=0,
            grid=(r_pad // br,),
            in_specs=[pl.BlockSpec((br, c), lambda i: (i, 0))],
            out_specs=pl.BlockSpec((num_parts, br, c), lambda i: (0, i, 0)),
        ),
        compiler_params=pltpu.CompilerParams(
            dimension_semantics=("parallel",),
            vmem_limit_bytes=32 * 1024 * 1024),
    )(x2)

    # Restore the PyTorch concatenation order (parts interleaved per input
    # coordinate): [P, N, D] -> [N, P, D] -> [N, P*D].
    # TODO(synk): fold this permutation into the embedding's consumer to avoid
    # the extra HBM pass of the wrapper-side transpose.
    out = out.reshape(num_parts, m_pad)[:, :m]
    out = out.reshape(num_parts, n, in_dim).transpose(1, 0, 2).reshape(n, out_dim)
    return out.reshape(*lead_shape, out_dim)


def _reference(x, *, multi_res=10, use_log_bands=True, include_input=True):
    freq_bands = _make_freq_bands(multi_res, use_log_bands)
    parts = []
    if include_input:
        parts.append(x)
    for f in freq_bands:
        parts.append(jnp.sin(x * jnp.float32(f)))
        parts.append(jnp.cos(x * jnp.float32(f)))
    return jnp.concatenate(parts, axis=-1)


if __name__ == "__main__":
    key = jax.random.PRNGKey(0)
    # Small NeRF-style input: batch of 2 rays, 128 sample points, xyz coords.
    x = jax.random.normal(key, (2, 128, 3), dtype=jnp.float32)

    out = freq_embedder(x, in_dim=3, multi_res=10,
                        use_log_bands=True, include_input=True)
    out = jax.block_until_ready(out)

    ref = _reference(x)
    assert out.shape == (2, 128, 63), out.shape
    np.testing.assert_allclose(np.asarray(out), np.asarray(ref),
                               atol=1e-5, rtol=1e-5)
    print("KERNEL_OK")
</pallas_src>

<mosaic_0001>
module attributes {stable_mosaic.version = 11 : i64} {
  func.func @_freq_embed_kernel(%arg0: i32, %arg1: memref<8x512xf32, #tpu.memory_space<vmem>>, %arg2: memref<21x8x512xf32, #tpu.memory_space<vmem>>) attributes {dimension_semantics = [#tpu.dimension_semantics<parallel>], iteration_bounds = array<i64: 1>, scalar_prefetch = 0 : i64, scratch_operands = 0 : i64, tpu.core_type = #tpu.core_type<tc>, window_params = [{transform_indices = @transform_0, window_bounds = array<i64: 8, 512>}, {transform_indices = @transform_1, window_bounds = array<i64: 21, 8, 512>}]} {
    %c0 = arith.constant 0 : index
    %c0_0 = arith.constant 0 : index
    %0 = vector.load %arg1[%c0, %c0_0] : memref<8x512xf32, #tpu.memory_space<vmem>>, vector<8x512xf32>
    %c0_1 = arith.constant 0 : index
    %c0_2 = arith.constant 0 : index
    %c0_3 = arith.constant 0 : index
    %1 = vector.load %arg2[%c0_1, %c0_2, %c0_3] : memref<21x8x512xf32, #tpu.memory_space<vmem>>, vector<1x8x512xf32>
    %2 = vector.shape_cast %1 : vector<1x8x512xf32> to vector<8x512xf32>
    %3 = vector.shape_cast %0 : vector<8x512xf32> to vector<1x8x512xf32>
    tpu.vector_store %arg2[%c0_1, %c0_2, %c0_3], %3 {strides = array<i32>} : memref<21x8x512xf32, #tpu.memory_space<vmem>>, vector<1x8x512xf32>,
    %c0_4 = arith.constant 0 : index
    %c0_5 = arith.constant 0 : index
    %4 = vector.load %arg1[%c0_4, %c0_5] : memref<8x512xf32, #tpu.memory_space<vmem>>, vector<8x512xf32>
    %cst = arith.constant 1.000000e+00 : f32
    %5 = vector.broadcast %cst : f32 to vector<8x512xf32>
    %6 = arith.mulf %4, %5 : vector<8x512xf32>
    %7 = math.sin %6 : vector<8x512xf32>
    %c1 = arith.constant 1 : index
    %c0_6 = arith.constant 0 : index
    %c0_7 = arith.constant 0 : index
    %8 = vector.load %arg2[%c1, %c0_6, %c0_7] : memref<21x8x512xf32, #tpu.memory_space<vmem>>, vector<1x8x512xf32>
    %9 = vector.shape_cast %8 : vector<1x8x512xf32> to vector<8x512xf32>
    %10 = vector.shape_cast %7 : vector<8x512xf32> to vector<1x8x512xf32>
    tpu.vector_store %arg2[%c1, %c0_6, %c0_7], %10 {strides = array<i32>} : memref<21x8x512xf32, #tpu.memory_space<vmem>>, vector<1x8x512xf32>,
    %11 = math.cos %6 : vector<8x512xf32>
    %c2 = arith.constant 2 : index
    %c0_8 = arith.constant 0 : index
    %c0_9 = arith.constant 0 : index
    %12 = vector.load %arg2[%c2, %c0_8, %c0_9] : memref<21x8x512xf32, #tpu.memory_space<vmem>>, vector<1x8x512xf32>
    %13 = vector.shape_cast %12 : vector<1x8x512xf32> to vector<8x512xf32>
    %14 = vector.shape_cast %11 : vector<8x512xf32> to vector<1x8x512xf32>
    tpu.vector_store %arg2[%c2, %c0_8, %c0_9], %14 {strides = array<i32>} : memref<21x8x512xf32, #tpu.memory_space<vmem>>, vector<1x8x512xf32>,
    %c0_10 = arith.constant 0 : index
    %c0_11 = arith.constant 0 : index
    %15 = vector.load %arg1[%c0_10, %c0_11] : memref<8x512xf32, #tpu.memory_space<vmem>>, vector<8x512xf32>
    %cst_12 = arith.constant 2.000000e+00 : f32
    %16 = vector.broadcast %cst_12 : f32 to vector<8x512xf32>
    %17 = arith.mulf %15, %16 : vector<8x512xf32>
    %18 = math.sin %17 : vector<8x512xf32>
    %c3 = arith.constant 3 : index
    %c0_13 = arith.constant 0 : index
    %c0_14 = arith.constant 0 : index
    %19 = vector.load %arg2[%c3, %c0_13, %c0_14] : memref<21x8x512xf32, #tpu.memory_space<vmem>>, vector<1x8x512xf32>
    %20 = vector.shape_cast %19 : vector<1x8x512xf32> to vector<8x512xf32>
    %21 = vector.shape_cast %18 : vector<8x512xf32> to vector<1x8x512xf32>
    tpu.vector_store %arg2[%c3, %c0_13, %c0_14], %21 {strides = array<i32>} : memref<21x8x512xf32, #tpu.memory_space<vmem>>, vector<1x8x512xf32>,
    %22 = math.cos %17 : vector<8x512xf32>
    %c4 = arith.constant 4 : index
    %c0_15 = arith.constant 0 : index
    %c0_16 = arith.constant 0 : index
    %23 = vector.load %arg2[%c4, %c0_15, %c0_16] : memref<21x8x512xf32, #tpu.memory_space<vmem>>, vector<1x8x512xf32>
    %24 = vector.shape_cast %23 : vector<1x8x512xf32> to vector<8x512xf32>
    %25 = vector.shape_cast %22 : vector<8x512xf32> to vector<1x8x512xf32>
    tpu.vector_store %arg2[%c4, %c0_15, %c0_16], %25 {strides = array<i32>} : memref<21x8x512xf32, #tpu.memory_space<vmem>>, vector<1x8x512xf32>,
    %c0_17 = arith.constant 0 : index
    %c0_18 = arith.constant 0 : index
    %26 = vector.load %arg1[%c0_17, %c0_18] : memref<8x512xf32, #tpu.memory_space<vmem>>, vector<8x512xf32>
    %cst_19 = arith.constant 4.000000e+00 : f32
    %27 = vector.broadcast %cst_19 : f32 to vector<8x512xf32>
    %28 = arith.mulf %26, %27 : vector<8x512xf32>
    %29 = math.sin %28 : vector<8x512xf32>
    %c5 = arith.constant 5 : index
    %c0_20 = arith.constant 0 : index
    %c0_21 = arith.constant 0 : index
    %30 = vector.load %arg2[%c5, %c0_20, %c0_21] : memref<21x8x512xf32, #tpu.memory_space<vmem>>, vector<1x8x512xf32>
    %31 = vector.shape_cast %30 : vector<1x8x512xf32> to vector<8x512xf32>
    %32 = vector.shape_cast %29 : vector<8x512xf32> to vector<1x8x512xf32>
    tpu.vector_store %arg2[%c5, %c0_20, %c0_21], %32 {strides = array<i32>} : memref<21x8x512xf32, #tpu.memory_space<vmem>>, vector<1x8x512xf32>,
    %33 = math.cos %28 : vector<8x512xf32>
    %c6 = arith.constant 6 : index
    %c0_22 = arith.constant 0 : index
    %c0_23 = arith.constant 0 : index
    %34 = vector.load %arg2[%c6, %c0_22, %c0_23] : memref<21x8x512xf32, #tpu.memory_space<vmem>>, vector<1x8x512xf32>
    %35 = vector.shape_cast %34 : vector<1x8x512xf32> to vector<8x512xf32>
    %36 = vector.shape_cast %33 : vector<8x512xf32> to vector<1x8x512xf32>
    tpu.vector_store %arg2[%c6, %c0_22, %c0_23], %36 {strides = array<i32>} : memref<21x8x512xf32, #tpu.memory_space<vmem>>, vector<1x8x512xf32>,
    %c0_24 = arith.constant 0 : index
    %c0_25 = arith.constant 0 : index
    %37 = vector.load %arg1[%c0_24, %c0_25] : memref<8x512xf32, #tpu.memory_space<vmem>>, vector<8x512xf32>
    %cst_26 = arith.constant 8.000000e+00 : f32
    %38 = vector.broadcast %cst_26 : f32 to vector<8x512xf32>
    %39 = arith.mulf %37, %38 : vector<8x512xf32>
    %40 = math.sin %39 : vector<8x512xf32>
    %c7 = arith.constant 7 : index
    %c0_27 = arith.constant 0 : index
    %c0_28 = arith.constant 0 : index
    %41 = vector.load %arg2[%c7, %c0_27, %c0_28] : memref<21x8x512xf32, #tpu.memory_space<vmem>>, vector<1x8x512xf32>
    %42 = vector.shape_cast %41 : vector<1x8x512xf32> to vector<8x512xf32>
    %43 = vector.shape_cast %40 : vector<8x512xf32> to vector<1x8x512xf32>
    tpu.vector_store %arg2[%c7, %c0_27, %c0_28], %43 {strides = array<i32>} : memref<21x8x512xf32, #tpu.memory_space<vmem>>, vector<1x8x512xf32>,
    %44 = math.cos %39 : vector<8x512xf32>
    %c8 = arith.constant 8 : index
    %c0_29 = arith.constant 0 : index
    %c0_30 = arith.constant 0 : index
    %45 = vector.load %arg2[%c8, %c0_29, %c0_30] : memref<21x8x512xf32, #tpu.memory_space<vmem>>, vector<1x8x512xf32>
    %46 = vector.shape_cast %45 : vector<1x8x512xf32> to vector<8x512xf32>
    %47 = vector.shape_cast %44 : vector<8x512xf32> to vector<1x8x512xf32>
    tpu.vector_store %arg2[%c8, %c0_29, %c0_30], %47 {strides = array<i32>} : memref<21x8x512xf32, #tpu.memory_space<vmem>>, vector<1x8x512xf32>,
    %c0_31 = arith.constant 0 : index
    %c0_32 = arith.constant 0 : index
    %48 = vector.load %arg1[%c0_31, %c0_32] : memref<8x512xf32, #tpu.memory_space<vmem>>, vector<8x512xf32>
    %cst_33 = arith.constant 1.600000e+01 : f32
    %49 = vector.broadcast %cst_33 : f32 to vector<8x512xf32>
    %50 = arith.mulf %48, %49 : vector<8x512xf32>
    %51 = math.sin %50 : vector<8x512xf32>
    %c9 = arith.constant 9 : index
    %c0_34 = arith.constant 0 : index
    %c0_35 = arith.constant 0 : index
    %52 = vector.load %arg2[%c9, %c0_34, %c0_35] : memref<21x8x512xf32, #tpu.memory_space<vmem>>, vector<1x8x512xf32>
    %53 = vector.shape_cast %52 : vector<1x8x512xf32> to vector<8x512xf32>
    %54 = vector.shape_cast %51 : vector<8x512xf32> to vector<1x8x512xf32>
    tpu.vector_store %arg2[%c9, %c0_34, %c0_35], %54 {strides = array<i32>} : memref<21x8x512xf32, #tpu.memory_space<vmem>>, vector<1x8x512xf32>,
    %55 = math.cos %50 : vector<8x512xf32>
    %c10 = arith.constant 10 : index
    %c0_36 = arith.constant 0 : index
    %c0_37 = arith.constant 0 : index
    %56 = vector.load %arg2[%c10, %c0_36, %c0_37] : memref<21x8x512xf32, #tpu.memory_space<vmem>>, vector<1x8x512xf32>
    %57 = vector.shape_cast %56 : vector<1x8x512xf32> to vector<8x512xf32>
    %58 = vector.shape_cast %55 : vector<8x512xf32> to vector<1x8x512xf32>
    tpu.vector_store %arg2[%c10, %c0_36, %c0_37], %58 {strides = array<i32>} : memref<21x8x512xf32, #tpu.memory_space<vmem>>, vector<1x8x512xf32>,
    %c0_38 = arith.constant 0 : index
    %c0_39 = arith.constant 0 : index
    %59 = vector.load %arg1[%c0_38, %c0_39] : memref<8x512xf32, #tpu.memory_space<vmem>>, vector<8x512xf32>
    %cst_40 = arith.constant 3.200000e+01 : f32
    %60 = vector.broadcast %cst_40 : f32 to vector<8x512xf32>
    %61 = arith.mulf %59, %60 : vector<8x512xf32>
    %62 = math.sin %61 : vector<8x512xf32>
    %c11 = arith.constant 11 : index
    %c0_41 = arith.constant 0 : index
    %c0_42 = arith.constant 0 : index
    %63 = vector.load %arg2[%c11, %c0_41, %c0_42] : memref<21x8x512xf32, #tpu.memory_space<vmem>>, vector<1x8x512xf32>
    %64 = vector.shape_cast %63 : vector<1x8x512xf32> to vector<8x512xf32>
    %65 = vector.shape_cast %62 : vector<8x512xf32> to vector<1x8x512xf32>
    tpu.vector_store %arg2[%c11, %c0_41, %c0_42], %65 {strides = array<i32>} : memref<21x8x512xf32, #tpu.memory_space<vmem>>, vector<1x8x512xf32>,
    %66 = math.cos %61 : vector<8x512xf32>
    %c12 = arith.constant 12 : index
    %c0_43 = arith.constant 0 : index
    %c0_44 = arith.constant 0 : index
    %67 = vector.load %arg2[%c12, %c0_43, %c0_44] : memref<21x8x512xf32, #tpu.memory_space<vmem>>, vector<1x8x512xf32>
    %68 = vector.shape_cast %67 : vector<1x8x512xf32> to vector<8x512xf32>
    %69 = vector.shape_cast %66 : vector<8x512xf32> to vector<1x8x512xf32>
    tpu.vector_store %arg2[%c12, %c0_43, %c0_44], %69 {strides = array<i32>} : memref<21x8x512xf32, #tpu.memory_space<vmem>>, vector<1x8x512xf32>,
    %c0_45 = arith.constant 0 : index
    %c0_46 = arith.constant 0 : index
    %70 = vector.load %arg1[%c0_45, %c0_46] : memref<8x512xf32, #tpu.memory_space<vmem>>, vector<8x512xf32>
    %cst_47 = arith.constant 6.400000e+01 : f32
    %71 = vector.broadcast %cst_47 : f32 to vector<8x512xf32>
    %72 = arith.mulf %70, %71 : vector<8x512xf32>
    %73 = math.sin %72 : vector<8x512xf32>
    %c13 = arith.constant 13 : index
    %c0_48 = arith.constant 0 : index
    %c0_49 = arith.constant 0 : index
    %74 = vector.load %arg2[%c13, %c0_48, %c0_49] : memref<21x8x512xf32, #tpu.memory_space<vmem>>, vector<1x8x512xf32>
    %75 = vector.shape_cast %74 : vector<1x8x512xf32> to vector<8x512xf32>
    %76 = vector.shape_cast %73 : vector<8x512xf32> to vector<1x8x512xf32>
    tpu.vector_store %arg2[%c13, %c0_48, %c0_49], %76 {strides = array<i32>} : memref<21x8x512xf32, #tpu.memory_space<vmem>>, vector<1x8x512xf32>,
    %77 = math.cos %72 : vector<8x512xf32>
    %c14 = arith.constant 14 : index
    %c0_50 = arith.constant 0 : index
    %c0_51 = arith.constant 0 : index
    %78 = vector.load %arg2[%c14, %c0_50, %c0_51] : memref<21x8x512xf32, #tpu.memory_space<vmem>>, vector<1x8x512xf32>
    %79 = vector.shape_cast %78 : vector<1x8x512xf32> to vector<8x512xf32>
    %80 = vector.shape_cast %77 : vector<8x512xf32> to vector<1x8x512xf32>
    tpu.vector_store %arg2[%c14, %c0_50, %c0_51], %80 {strides = array<i32>} : memref<21x8x512xf32, #tpu.memory_space<vmem>>, vector<1x8x512xf32>,
    %c0_52 = arith.constant 0 : index
    %c0_53 = arith.constant 0 : index
    %81 = vector.load %arg1[%c0_52, %c0_53] : memref<8x512xf32, #tpu.memory_space<vmem>>, vector<8x512xf32>
    %cst_54 = arith.constant 1.280000e+02 : f32
    %82 = vector.broadcast %cst_54 : f32 to vector<8x512xf32>
    %83 = arith.mulf %81, %82 : vector<8x512xf32>
    %84 = math.sin %83 : vector<8x512xf32>
    %c15 = arith.constant 15 : index
    %c0_55 = arith.constant 0 : index
    %c0_56 = arith.constant 0 : index
    %85 = vector.load %arg2[%c15, %c0_55, %c0_56] : memref<21x8x512xf32, #tpu.memory_space<vmem>>, vector<1x8x512xf32>
    %86 = vector.shape_cast %85 : vector<1x8x512xf32> to vector<8x512xf32>
    %87 = vector.shape_cast %84 : vector<8x512xf32> to vector<1x8x512xf32>
    tpu.vector_store %arg2[%c15, %c0_55, %c0_56], %87 {strides = array<i32>} : memref<21x8x512xf32, #tpu.memory_space<vmem>>, vector<1x8x512xf32>,
    %88 = math.cos %83 : vector<8x512xf32>
    %c16 = arith.constant 16 : index
    %c0_57 = arith.constant 0 : index
    %c0_58 = arith.constant 0 : index
    %89 = vector.load %arg2[%c16, %c0_57, %c0_58] : memref<21x8x512xf32, #tpu.memory_space<vmem>>, vector<1x8x512xf32>
    %90 = vector.shape_cast %89 : vector<1x8x512xf32> to vector<8x512xf32>
    %91 = vector.shape_cast %88 : vector<8x512xf32> to vector<1x8x512xf32>
    tpu.vector_store %arg2[%c16, %c0_57, %c0_58], %91 {strides = array<i32>} : memref<21x8x512xf32, #tpu.memory_space<vmem>>, vector<1x8x512xf32>,
    %c0_59 = arith.constant 0 : index
    %c0_60 = arith.constant 0 : index
    %92 = vector.load %arg1[%c0_59, %c0_60] : memref<8x512xf32, #tpu.memory_space<vmem>>, vector<8x512xf32>
    %cst_61 = arith.constant 2.560000e+02 : f32
    %93 = vector.broadcast %cst_61 : f32 to vector<8x512xf32>
    %94 = arith.mulf %92, %93 : vector<8x512xf32>
    %95 = math.sin %94 : vector<8x512xf32>
    %c17 = arith.constant 17 : index
    %c0_62 = arith.constant 0 : index
    %c0_63 = arith.constant 0 : index
    %96 = vector.load %arg2[%c17, %c0_62, %c0_63] : memref<21x8x512xf32, #tpu.memory_space<vmem>>, vector<1x8x512xf32>
    %97 = vector.shape_cast %96 : vector<1x8x512xf32> to vector<8x512xf32>
    %98 = vector.shape_cast %95 : vector<8x512xf32> to vector<1x8x512xf32>
    tpu.vector_store %arg2[%c17, %c0_62, %c0_63], %98 {strides = array<i32>} : memref<21x8x512xf32, #tpu.memory_space<vmem>>, vector<1x8x512xf32>,
    %99 = math.cos %94 : vector<8x512xf32>
    %c18 = arith.constant 18 : index
    %c0_64 = arith.constant 0 : index
    %c0_65 = arith.constant 0 : index
    %100 = vector.load %arg2[%c18, %c0_64, %c0_65] : memref<21x8x512xf32, #tpu.memory_space<vmem>>, vector<1x8x512xf32>
    %101 = vector.shape_cast %100 : vector<1x8x512xf32> to vector<8x512xf32>
    %102 = vector.shape_cast %99 : vector<8x512xf32> to vector<1x8x512xf32>
    tpu.vector_store %arg2[%c18, %c0_64, %c0_65], %102 {strides = array<i32>} : memref<21x8x512xf32, #tpu.memory_space<vmem>>, vector<1x8x512xf32>,
    %c0_66 = arith.constant 0 : index
    %c0_67 = arith.constant 0 : index
    %103 = vector.load %arg1[%c0_66, %c0_67] : memref<8x512xf32, #tpu.memory_space<vmem>>, vector<8x512xf32>
    %cst_68 = arith.constant 5.120000e+02 : f32
    %104 = vector.broadcast %cst_68 : f32 to vector<8x512xf32>
    %105 = arith.mulf %103, %104 : vector<8x512xf32>
    %106 = math.sin %105 : vector<8x512xf32>
    %c19 = arith.constant 19 : index
    %c0_69 = arith.constant 0 : index
    %c0_70 = arith.constant 0 : index
    %107 = vector.load %arg2[%c19, %c0_69, %c0_70] : memref<21x8x512xf32, #tpu.memory_space<vmem>>, vector<1x8x512xf32>
    %108 = vector.shape_cast %107 : vector<1x8x512xf32> to vector<8x512xf32>
    %109 = vector.shape_cast %106 : vector<8x512xf32> to vector<1x8x512xf32>
    tpu.vector_store %arg2[%c19, %c0_69, %c0_70], %109 {strides = array<i32>} : memref<21x8x512xf32, #tpu.memory_space<vmem>>, vector<1x8x512xf32>,
    %110 = math.cos %105 : vector<8x512xf32>
    %c20 = arith.constant 20 : index
    %c0_71 = arith.constant 0 : index
    %c0_72 = arith.constant 0 : index
    %111 = vector.load %arg2[%c20, %c0_71, %c0_72] : memref<21x8x512xf32, #tpu.memory_space<vmem>>, vector<1x8x512xf32>
    %112 = vector.shape_cast %111 : vector<1x8x512xf32> to vector<8x512xf32>
    %113 = vector.shape_cast %110 : vector<8x512xf32> to vector<1x8x512xf32>
    tpu.vector_store %arg2[%c20, %c0_71, %c0_72], %113 {strides = array<i32>} : memref<21x8x512xf32, #tpu.memory_space<vmem>>, vector<1x8x512xf32>,
    return
  }
  func.func @transform_0(%arg0: i32) -> (i32, i32) {
    %c0_i32 = arith.constant 0 : i32
    %c0_i32_0 = arith.constant 0 : i32
    return %arg0, %c0_i32 : i32, i32
  }
  func.func @transform_1(%arg0: i32) -> (i32, i32, i32) {
    %c0_i32 = arith.constant 0 : i32
    %c0_i32_0 = arith.constant 0 : i32
    %c0_i32_1 = arith.constant 0 : i32
    return %c0_i32, %arg0, %c0_i32_0 : i32, i32, i32
  }
}

</mosaic_0001>

<llo_original>
// kernel: tpu_custom_call.1
$region0: #{tpu_custom_call.1}
  #allocation0 [shape = 'u32[]', space=smem, size = 0x4, offset = 0x4, fixed_abs, tag = 'smem constant byte address 0x4 - core index']
  #allocation1 [shape = 'u32[144,128]{1,0:T(1,128)}', space=vmem, size = 0x12000, scoped, tag = 'internal scratch']
  %s0 = inlined_call_operand.hbm [shape: f32[8,512], index: 0, kind: input, shape index: {}]
  %s1 = inlined_call_operand.hbm [shape: f32[21,8,512], index: 1, kind: output, shape index: {}]
  %s2 = sld [smem:[#allocation0]]
  $region18: #{tpu_custom_call.1} parent=0
    _
  %s4 = ssub.s32 1, %s2
  %s5 = scalar_select 0, %s4, %s2
  $region1: #{tpu_custom_call.1} parent=0
    #allocation2 [shape = 'u8[16384]{0}', space=vmem, size = 0x4000, scoped, tag = 'input window, operand 0, single buffered']
    #allocation3 [shape = 's32[1]{0}', space=sflag, size = 0x4, scoped, tag = 'scoped memory for tpu_custom_call.1']
    #allocation4 [shape = 's32[1]{0}', space=sflag, size = 0x4, scoped, tag = 'scoped memory for tpu_custom_call.1']
    #allocation5 [shape = 'u8[344064]{0}', space=vmem, size = 0x54000, scoped, tag = 'output window, operand 0, single buffered']
    %6 = vsyncpa [#allocation3], 0
    %7 = vsyncpa [#allocation4], 0
    // Predicated region
    $region2: #{tpu_custom_call.1} parent=1 // pred_check
      _
    $region3: #{tpu_custom_call.1} parent=1 // pred_check_branch
      %9 = sbr.rel (0) target = $region5
    $region4: #{tpu_custom_call.1} parent=1 // pred_region
      %s11 = ssub.s32 512, 512
      %12 = vsyncadd [#allocation3], %s11
      %s14 = sshll.u32 [#allocation2], 4
      %s15 = int_to_ptr.vmem [resolvable:$true] %s14
      %17 = dma.hbm_to_vmem [thread:$0]  %s0, 512, %s15, [#allocation3]
    $region5: #{tpu_custom_call.1} parent=1 // pred_fallthru
      _
    // Predicated region
    $region6: #{tpu_custom_call.1} parent=1 // pred_check
      _
    $region7: #{tpu_custom_call.1} parent=1 // pred_check_branch
      %19 = sbr.rel (0) target = $region9
    $region8: #{tpu_custom_call.1} parent=1 // pred_region
      %20 = dma.done [#allocation3], 512
    $region9: #{tpu_custom_call.1} parent=1 // pred_fallthru
      _
    %v21 = vld [vmem:[#allocation2] sm:$0xff]
    %v22 = vld [vmem:[#allocation2 + $0x8] sm:$0xff]
    %v23 = vld [vmem:[#allocation2 + $0x10] sm:$0xff]
    %v24 = vld [vmem:[#allocation2 + $0x18] sm:$0xff]
    %25 = vst [vmem:[#allocation5] sm:$0xff] %v21
    %26 = vst [vmem:[#allocation5 + $0x8] sm:$0xff] %v22
    %27 = vst [vmem:[#allocation5 + $0x10] sm:$0xff] %v23
    %28 = vst [vmem:[#allocation5 + $0x18] sm:$0xff] %v24
    %v29 = vld [vmem:[#allocation2] sm:$0xff]
    %v30 = vld [vmem:[#allocation2 + $0x8] sm:$0xff]
    %v31 = vld [vmem:[#allocation2 + $0x10] sm:$0xff]
    %v32 = vld [vmem:[#allocation2 + $0x18] sm:$0xff]
    %v33 = vand.u32 2147483647, %v29
    %vm34 = vcmp.le.f32.partialorder %v33, 0.7853982
    %vm35 = vcmp.lt.s32.totalorder %v29, 0
    %v36 = vand.u32 %v29, 2139095040
    %v37 = vshrl.u32 %v36, 23
    %v38 = vsub.s32 %v37, 127
    %v39 = vand.u32 2147483647, %v29
    %v40 = vand.u32 %v39, 8388607
    %v41 = vor.u32 %v40, 8388608
    %v42 = vsub.s32 0, %v41
    %v43 = vadd.s32 %v38, 1
    %vm44 = vcmp.gt.s32.totalorder %v43, 0
    %v45 = vsel %vm44, %v43, 0
    %v46 = vshrl.u32 %v45, 5
    %v47 = vand.u32 %v45, 31
    %v48 = vsub.s32 32, %v47
    %v49 = vshrl.u32 683565275, %v48
    %v50 = vshll.u32 683565275, %v47
    %v51 = vshrl.u32 2475754826, %v48
    %v52 = vor.u32 %v50, %v51
    %v53 = vshll.u32 2475754826, %v47
    %v54 = vshrl.u32 2131351028, %v48
    %v55 = vor.u32 %v53, %v54
    %v56 = vshll.u32 2131351028, %v47
    %v57 = vshrl.u32 2102212464, %v48
    %v58 = vor.u32 %v56, %v57
    %v59 = vshll.u32 2102212464, %v47
    %v60 = vshrl.u32 920167782, %v48
    %v61 = vor.u32 %v59, %v60
    %v62 = vshll.u32 920167782, %v47
    %v63 = vshrl.u32 1326507024, %v48
    %v64 = vor.u32 %v62, %v63
    %vm65 = vcmp.lt.s32.totalorder %v46, 1
    %vm66 = vcmp.lt.s32.totalorder %v46, 2
    %vm67 = vcmp.lt.s32.totalorder %v46, 3
    %vm68 = vcmp.lt.s32.totalorder %v46, 4
    %v69 = vsel %vm65, %v49, %v52
    %v70 = vsel %vm68, %v58, 2102212464
    %v71 = vsel %vm67, %v55, %v70
    %v72 = vsel %vm66, %v69, %v71
    %v73 = vsel %vm65, %v52, %v55
    %v74 = vsel %vm68, %v61, 920167782
    %v75 = vsel %vm67, %v58, %v74
    %v76 = vsel %vm66, %v73, %v75
    %v77 = vsel %vm65, %v55, %v58
    %v78 = vsel %vm68, %v64, 1326507024
    %v79 = vsel %vm67, %v61, %v78
    %v80 = vsel %vm66, %v77, %v79
    %v81 = vshll.u32 %v41, 8
    %v82 = vmul.u32.u64.compose %v81, %v80
    %v83 = vextract.low.u32 %v82
    %v84 = vextract.high.u32 %v82
    %v85 = vmul.u32.u64.compose %v81, %v76
    %v86 = vextract.low.u32 %v85
    %v87 = vextract.high.u32 %v85
    %v88 = vmul.u32 %v81, %v72
    %v89 = vadd.s32 %v84, %v86
    %vm90 = vc.u32 %v84, %v86
    %v91 = vadd.s32 %v87, 1
    %v92 = vsel %vm90, %v91, %v87
    %v93 = vadd.s32 %v88, %v92
    %v94 = vadd.s32 %v93, 536870912
    %v95 = vshrl.u32 %v94, 30
    %v96 = vshll.u32 %v95, 30
    %v97 = vsub.s32 %v93, %v96
    %vm98 = vcmp.lt.s32.totalorder %v97, 0
    %v99 = vsub.s32 0, %v97
    %v100 = vsel %vm98, %v99, %v97
    %v101 = vclz %v100
    %v102 = vsub.s32 %v101, 2
    %vm103 = vcmp.gt.s32.totalorder 0, %v102
    %v104 = vsel %vm103, 0, %v102
    %v105 = vsub.s32 32, %v104
    %v106 = vshll.u32 %v97, %v104
    %v107 = vshrl.u32 %v89, %v105
    %v108 = vor.u32 %v106, %v107
    %v109 = vsub.s32 4294967266, %v104
    %v110 = vadd.s32 %v109, 127
    %v111 = vshll.u32 %v110, 23
    %v112 = vor.u32 4788187, %v111
    %v113 = vand.u32 2147483647, %v112
    %v115 = vcvt.s32.f32 %v108
    %v116 = vmul.f32 %v115, %v113
    %v117 = vxor.u32 %v116, 2147483648
    %v118 = vsel %vm35, %v117, %v116
    %v119 = vsub.s32 4, %v95
    %v120 = vsel %vm35, %v119, %v95
    %v121 = vsel %vm34, %v29, %v118
    %v122 = vsel %vm34, 0, %v120
    %v123 = vcosq.f32.pop %v121
    %v124 = vsinq.f32.pop %v121
    %vm125 = vweird.f32 %v29
    %v126 = vadd.s32 %v122, 3
    %v127 = vand.u32 %v126, 3
    %vm128 = vcmp.lt.s32.totalorder %v127, 2
    %vm129 = vcmp.eq.s32.totalorder %v127, 0
    %v130 = vxor.u32 %v124, 2147483648
    %v131 = vsel %vm129, %v123, %v130
    %vm132 = vcmp.eq.s32.totalorder %v127, 2
    %v133 = vxor.u32 %v123, 2147483648
    %v134 = vsel %vm132, %v133, %v124
    %v135 = vsel %vm128, %v131, %v134
    %v136 = vsel %vm125, nan, %v135
    %v137 = vand.u32 2147483647, %v30
    %vm138 = vcmp.le.f32.partialorder %v137, 0.7853982
    %vm139 = vcmp.lt.s32.totalorder %v30, 0
    %v140 = vand.u32 %v30, 2139095040
    %v141 = vshrl.u32 %v140, 23
    %v142 = vsub.s32 %v141, 127
    %v143 = vand.u32 2147483647, %v30
    %v144 = vand.u32 %v143, 8388607
    %v145 = vor.u32 %v144, 8388608
    %v146 = vsub.s32 0, %v145
    %v147 = vadd.s32 %v142, 1
    %vm148 = vcmp.gt.s32.totalorder %v147, 0
    %v149 = vsel %vm148, %v147, 0
    %v150 = vshrl.u32 %v149, 5
    %v151 = vand.u32 %v149, 31
    %v152 = vsub.s32 32, %v151
    %v153 = vshrl.u32 683565275, %v152
    %v154 = vshll.u32 683565275, %v151
    %v155 = vshrl.u32 2475754826, %v152
    %v156 = vor.u32 %v154, %v155
    %v157 = vshll.u32 2475754826, %v151
    %v158 = vshrl.u32 2131351028, %v152
    %v159 = vor.u32 %v157, %v158
    %v160 = vshll.u32 2131351028, %v151
    %v161 = vshrl.u32 2102212464, %v152
    %v162 = vor.u32 %v160, %v161
    %v163 = vshll.u32 2102212464, %v151
    %v164 = vshrl.u32 920167782, %v152
    %v165 = vor.u32 %v163, %v164
    %v166 = vshll.u32 920167782, %v151
    %v167 = vshrl.u32 1326507024, %v152
    %v168 = vor.u32 %v166, %v167
    %vm169 = vcmp.lt.s32.totalorder %v150, 1
    %vm170 = vcmp.lt.s32.totalorder %v150, 2
    %vm171 = vcmp.lt.s32.totalorder %v150, 3
    %vm172 = vcmp.lt.s32.totalorder %v150, 4
    %v173 = vsel %vm169, %v153, %v156
    %v174 = vsel %vm172, %v162, 2102212464
    %v175 = vsel %vm171, %v159, %v174
    %v176 = vsel %vm170, %v173, %v175
    %v177 = vsel %vm169, %v156, %v159
    %v178 = vsel %vm172, %v165, 920167782
    %v179 = vsel %vm171, %v162, %v178
    %v180 = vsel %vm170, %v177, %v179
    %v181 = vsel %vm169, %v159, %v162
    %v182 = vsel %vm172, %v168, 1326507024
    %v183 = vsel %vm171, %v165, %v182
    %v184 = vsel %vm170, %v181, %v183
    %v185 = vshll.u32 %v145, 8
    %v186 = vmul.u32.u64.compose %v185, %v184
    %v187 = vextract.low.u32 %v186
    %v188 = vextract.high.u32 %v186
    %v189 = vmul.u32.u64.compose %v185, %v180
    %v190 = vextract.low.u32 %v189
    %v191 = vextract.high.u32 %v189
    %v192 = vmul.u32 %v185, %v176
    %v193 = vadd.s32 %v188, %v190
    %vm194 = vc.u32 %v188, %v190
    %v195 = vadd.s32 %v191, 1
    %v196 = vsel %vm194, %v195, %v191
    %v197 = vadd.s32 %v192, %v196
    %v198 = vadd.s32 %v197, 536870912
    %v199 = vshrl.u32 %v198, 30
    %v200 = vshll.u32 %v199, 30
    %v201 = vsub.s32 %v197, %v200
    %vm202 = vcmp.lt.s32.totalorder %v201, 0
    %v203 = vsub.s32 0, %v201
    %v204 = vsel %vm202, %v203, %v201
    %v205 = vclz %v204
    %v206 = vsub.s32 %v205, 2
    %vm207 = vcmp.gt.s32.totalorder 0, %v206
    %v208 = vsel %vm207, 0, %v206
    %v209 = vsub.s32 32, %v208
    %v210 = vshll.u32 %v201, %v208
    %v211 = vshrl.u32 %v193, %v209
    %v212 = vor.u32 %v210, %v211
    %v213 = vsub.s32 4294967266, %v208
    %v214 = vadd.s32 %v213, 127
    %v215 = vshll.u32 %v214, 23
    %v216 = vor.u32 4788187, %v215
    %v217 = vand.u32 2147483647, %v216
    %v219 = vcvt.s32.f32 %v212
    %v220 = vmul.f32 %v219, %v217
    %v221 = vxor.u32 %v220, 2147483648
    %v222 = vsel %vm139, %v221, %v220
    %v223 = vsub.s32 4, %v199
    %v224 = vsel %vm139, %v223, %v199
    %v225 = vsel %vm138, %v30, %v222
    %v226 = vsel %vm138, 0, %v224
    %v227 = vcosq.f32.pop %v225
    %v228 = vsinq.f32.pop %v225
    %vm229 = vweird.f32 %v30
    %v230 = vadd.s32 %v226, 3
    %v231 = vand.u32 %v230, 3
    %vm232 = vcmp.lt.s32.totalorder %v231, 2
    %vm233 = vcmp.eq.s32.totalorder %v231, 0
    %v234 = vxor.u32 %v228, 2147483648
    %v235 = vsel %vm233, %v227, %v234
    %vm236 = vcmp.eq.s32.totalorder %v231, 2
    %v237 = vxor.u32 %v227, 2147483648
    %v238 = vsel %vm236, %v237, %v228
    %v239 = vsel %vm232, %v235, %v238
    %v240 = vsel %vm229, nan, %v239
    %v241 = vand.u32 2147483647, %v31
    %vm242 = vcmp.le.f32.partialorder %v241, 0.7853982
    %vm243 = vcmp.lt.s32.totalorder %v31, 0
    %v244 = vand.u32 %v31, 2139095040
    %v245 = vshrl.u32 %v244, 23
    %v246 = vsub.s32 %v245, 127
    %v247 = vand.u32 2147483647, %v31
    %v248 = vand.u32 %v247, 8388607
    %v249 = vor.u32 %v248, 8388608
    %v250 = vsub.s32 0, %v249
    %v251 = vadd.s32 %v246, 1
    %vm252 = vcmp.gt.s32.totalorder %v251, 0
    %v253 = vsel %vm252, %v251, 0
    %v254 = vshrl.u32 %v253, 5
    %v255 = vand.u32 %v253, 31
    %v256 = vsub.s32 32, %v255
    %v257 = vshrl.u32 683565275, %v256
    %v258 = vshll.u32 683565275, %v255
    %v259 = vshrl.u32 2475754826, %v256
    %v260 = vor.u32 %v258, %v259
    %v261 = vshll.u32 2475754826, %v255
    %v262 = vshrl.u32 2131351028, %v256
    %v263 = vor.u32 %v261, %v262
    %v264 = vshll.u32 2131351028, %v255
    %v265 = vshrl.u32 2102212464, %v256
    %v266 = vor.u32 %v264, %v265
    %v267 = vshll.u32 2102212464, %v255
    %v268 = vshrl.u32 920167782, %v256
    %v269 = vor.u32 %v267, %v268
    %v270 = vshll.u32 920167782, %v255
    %v271 = vshrl.u32 1326507024, %v256
    %v272 = vor.u32 %v270, %v271
    %vm273 = vcmp.lt.s32.totalorder %v254, 1
    %vm274 = vcmp.lt.s32.totalorder %v254, 2
    %vm275 = vcmp.lt.s32.totalorder %v254, 3
    %vm276 = vcmp.lt.s32.totalorder %v254, 4
    %v277 = vsel %vm273, %v257, %v260
    %v278 = vsel %vm276, %v266, 2102212464
    %v279 = vsel %vm275, %v263, %v278
    %v280 = vsel %vm274, %v277, %v279
    %v281 = vsel %vm273, %v260, %v263
    %v282 = vsel %vm276, %v269, 920167782
    %v283 = vsel %vm275, %v266, %v282
    %v284 = vsel %vm274, %v281, %v283
    %v285 = vsel %vm273, %v263, %v266
    %v286 = vsel %vm276, %v272, 1326507024
    %v287 = vsel %vm275, %v269, %v286
    %v288 = vsel %vm274, %v285, %v287
    %v289 = vshll.u32 %v249, 8
    %v290 = vmul.u32.u64.compose %v289, %v288
    %v291 = vextract.low.u32 %v290
    %v292 = vextract.high.u32 %v290
    %v293 = vmul.u32.u64.compose %v289, %v284
    %v294 = vextract.low.u32 %v293
    %v295 = vextract.high.u32 %v293
    %v296 = vmul.u32 %v289, %v280
    %v297 = vadd.s32 %v292, %v294
    %vm298 = vc.u32 %v292, %v294
    %v299 = vadd.s32 %v295, 1
    %v300 = vsel %vm298, %v299, %v295
    %v301 = vadd.s32 %v296, %v300
    %v302 = vadd.s32 %v301, 536870912
    %v303 = vshrl.u32 %v302, 30
    %v304 = vshll.u32 %v303, 30
    %v305 = vsub.s32 %v301, %v304
    %vm306 = vcmp.lt.s32.totalorder %v305, 0
    %v307 = vsub.s32 0, %v305
    %v308 = vsel %vm306, %v307, %v305
    %v309 = vclz %v308
    %v310 = vsub.s32 %v309, 2
    %vm311 = vcmp.gt.s32.totalorder 0, %v310
    %v312 = vsel %vm311, 0, %v310
    %v313 = vsub.s32 32, %v312
    %v314 = vshll.u32 %v305, %v312
    %v315 = vshrl.u32 %v297, %v313
    %v316 = vor.u32 %v314, %v315
    %v317 = vsub.s32 4294967266, %v312
    %v318 = vadd.s32 %v317, 127
    %v319 = vshll.u32 %v318, 23
    %v320 = vor.u32 4788187, %v319
    %v321 = vand.u32 2147483647, %v320
    %v323 = vcvt.s32.f32 %v316
    %v324 = vmul.f32 %v323, %v321
    %v325 = vxor.u32 %v324, 2147483648
    %v326 = vsel %vm243, %v325, %v324
    %v327 = vsub.s32 4, %v303
    %v328 = vsel %vm243, %v327, %v303
    %v329 = vsel %vm242, %v31, %v326
    %v330 = vsel %vm242, 0, %v328
    %v331 = vcosq.f32.pop %v329
    %v332 = vsinq.f32.pop %v329
    %vm333 = vweird.f32 %v31
    %v334 = vadd.s32 %v330, 3
    %v335 = vand.u32 %v334, 3
    %vm336 = vcmp.lt.s32.totalorder %v335, 2
    %vm337 = vcmp.eq.s32.totalorder %v335, 0
    %v338 = vxor.u32 %v332, 2147483648
    %v339 = vsel %vm337, %v331, %v338
    %vm340 = vcmp.eq.s32.totalorder %v335, 2
    %v341 = vxor.u32 %v331, 2147483648
    %v342 = vsel %vm340, %v341, %v332
    %v343 = vsel %vm336, %v339, %v342
    %v344 = vsel %vm333, nan, %v343
    %v345 = vand.u32 2147483647, %v32
    %vm346 = vcmp.le.f32.partialorder %v345, 0.7853982
    %vm347 = vcmp.lt.s32.totalorder %v32, 0
    %v348 = vand.u32 %v32, 2139095040
    %v349 = vshrl.u32 %v348, 23
    %v350 = vsub.s32 %v349, 127
    %v351 = vand.u32 2147483647, %v32
    %v352 = vand.u32 %v351, 8388607
    %v353 = vor.u32 %v352, 8388608
    %v354 = vsub.s32 0, %v353
    %v355 = vadd.s32 %v350, 1
    %vm356 = vcmp.gt.s32.totalorder %v355, 0
    %v357 = vsel %vm356, %v355, 0
    %v358 = vshrl.u32 %v357, 5
    %v359 = vand.u32 %v357, 31
    %v360 = vsub.s32 32, %v359
    %v361 = vshrl.u32 683565275, %v360
    %v362 = vshll.u32 683565275, %v359
    %v363 = vshrl.u32 2475754826, %v360
    %v364 = vor.u32 %v362, %v363
    %v365 = vshll.u32 2475754826, %v359
    %v366 = vshrl.u32 2131351028, %v360
    %v367 = vor.u32 %v365, %v366
    %v368 = vshll.u32 2131351028, %v359
    %v369 = vshrl.u32 2102212464, %v360
    %v370 = vor.u32 %v368, %v369
    %v371 = vshll.u32 2102212464, %v359
    %v372 = vshrl.u32 920167782, %v360
    %v373 = vor.u32 %v371, %v372
    %v374 = vshll.u32 920167782, %v359
    %v375 = vshrl.u32 1326507024, %v360
    %v376 = vor.u32 %v374, %v375
    %vm377 = vcmp.lt.s32.totalorder %v358, 1
    %vm378 = vcmp.lt.s32.totalorder %v358, 2
    %vm379 = vcmp.lt.s32.totalorder %v358, 3
    %vm380 = vcmp.lt.s32.totalorder %v358, 4
    %v381 = vsel %vm377, %v361, %v364
    %v382 = vsel %vm380, %v370, 2102212464
    %v383 = vsel %vm379, %v367, %v382
    %v384 = vsel %vm378, %v381, %v383
    %v385 = vsel %vm377, %v364, %v367
    %v386 = vsel %vm380, %v373, 920167782
    %v387 = vsel %vm379, %v370, %v386
    %v388 = vsel %vm378, %v385, %v387
    %v389 = vsel %vm377, %v367, %v370
    %v390 = vsel %vm380, %v376, 1326507024
    %v391 = vsel %vm379, %v373, %v390
    %v392 = vsel %vm378, %v389, %v391
    %v393 = vshll.u32 %v353, 8
    %v394 = vmul.u32.u64.compose %v393, %v392
    %v395 = vextract.low.u32 %v394
    %v396 = vextract.high.u32 %v394
    %v397 = vmul.u32.u64.compose %v393, %v388
    %v398 = vextract.low.u32 %v397
    %v399 = vextract.high.u32 %v397
    %v400 = vmul.u32 %v393, %v384
    %v401 = vadd.s32 %v396, %v398
    %vm402 = vc.u32 %v396, %v398
    %v403 = vadd.s32 %v399, 1
    %v404 = vsel %vm402, %v403, %v399
    %v405 = vadd.s32 %v400, %v404
    %v406 = vadd.s32 %v405, 536870912
    %v407 = vshrl.u32 %v406, 30
    %v408 = vshll.u32 %v407, 30
    %v409 = vsub.s32 %v405, %v408
    %vm410 = vcmp.lt.s32.totalorder %v409, 0
    %v411 = vsub.s32 0, %v409
    %v412 = vsel %vm410, %v411, %v409
    %v413 = vclz %v412
    %v414 = vsub.s32 %v413, 2
    %vm415 = vcmp.gt.s32.totalorder 0, %v414
    %v416 = vsel %vm415, 0, %v414
    %v417 = vsub.s32 32, %v416
    %v418 = vshll.u32 %v409, %v416
    %v419 = vshrl.u32 %v401, %v417
    %v420 = vor.u32 %v418, %v419
    %v421 = vsub.s32 4294967266, %v416
    %v422 = vadd.s32 %v421, 127
    %v423 = vshll.u32 %v422, 23
    %v424 = vor.u32 4788187, %v423
    %v425 = vand.u32 2147483647, %v424
    %v427 = vcvt.s32.f32 %v420
    %v428 = vmul.f32 %v427, %v425
    %v429 = vxor.u32 %v428, 2147483648
    %v430 = vsel %vm347, %v429, %v428
    %v431 = vsub.s32 4, %v407
    %v432 = vsel %vm347, %v431, %v407
    %v433 = vsel %vm346, %v32, %v430
    %v434 = vsel %vm346, 0, %v432
    %v435 = vcosq.f32.pop %v433
    %v436 = vsinq.f32.pop %v433
    %vm437 = vweird.f32 %v32
    %v438 = vadd.s32 %v434, 3
    %v439 = vand.u32 %v438, 3
    %vm440 = vcmp.lt.s32.totalorder %v439, 2
    %vm441 = vcmp.eq.s32.totalorder %v439, 0
    %v442 = vxor.u32 %v436, 2147483648
    %v443 = vsel %vm441, %v435, %v442
    %vm444 = vcmp.eq.s32.totalorder %v439, 2
    %v445 = vxor.u32 %v435, 2147483648
    %v446 = vsel %vm444, %v445, %v436
    %v447 = vsel %vm440, %v443, %v446
    %v448 = vsel %vm437, nan, %v447
    %s449 = scalar_lea.vmem [#allocation5], 32
    %450 = vst [vmem:[%s449] sm:$0xff] %v136
    %451 = vst [vmem:[%s449 + $0x8] sm:$0xff] %v240
    %452 = vst [vmem:[%s449 + $0x10] sm:$0xff] %v344
    %453 = vst [vmem:[%s449 + $0x18] sm:$0xff] %v448
    %v454 = vand.u32 2147483647, %v29
    %vm455 = vcmp.le.f32.partialorder %v454, 0.7853982
    %vm456 = vcmp.lt.s32.totalorder %v29, 0
    %v457 = vand.u32 %v29, 2139095040
    %v458 = vshrl.u32 %v457, 23
    %v459 = vsub.s32 %v458, 127
    %v460 = vand.u32 2147483647, %v29
    %v461 = vand.u32 %v460, 8388607
    %v462 = vor.u32 %v461, 8388608
    %v463 = vsub.s32 0, %v462
    %v464 = vadd.s32 %v459, 1
    %vm465 = vcmp.gt.s32.totalorder %v464, 0
    %v466 = vsel %vm465, %v464, 0
    %v467 = vshrl.u32 %v466, 5
    %v468 = vand.u32 %v466, 31
    %v469 = vsub.s32 32, %v468
    %v470 = vshrl.u32 683565275, %v469
    %v471 = vshll.u32 683565275, %v468
    %v472 = vshrl.u32 2475754826, %v469
    %v473 = vor.u32 %v471, %v472
    %v474 = vshll.u32 2475754826, %v468
    %v475 = vshrl.u32 2131351028, %v469
    %v476 = vor.u32 %v474, %v475
    %v477 = vshll.u32 2131351028, %v468
    %v478 = vshrl.u32 2102212464, %v469
    %v479 = vor.u32 %v477, %v478
    %v480 = vshll.u32 2102212464, %v468
    %v481 = vshrl.u32 920167782, %v469
    %v482 = vor.u32 %v480, %v481
    %v483 = vshll.u32 920167782, %v468
    %v484 = vshrl.u32 1326507024, %v469
    %v485 = vor.u32 %v483, %v484
    %vm486 = vcmp.lt.s32.totalorder %v467, 1
    %vm487 = vcmp.lt.s32.totalorder %v467, 2
    %vm488 = vcmp.lt.s32.totalorder %v467, 3
    %vm489 = vcmp.lt.s32.totalorder %v467, 4
    %v490 = vsel %vm486, %v470, %v473
    %v491 = vsel %vm489, %v479, 2102212464
    %v492 = vsel %vm488, %v476, %v491
    %v493 = vsel %vm487, %v490, %v492
    %v494 = vsel %vm486, %v473, %v476
    %v495 = vsel %vm489, %v482, 920167782
    %v496 = vsel %vm488, %v479, %v495
    %v497 = vsel %vm487, %v494, %v496
    %v498 = vsel %vm486, %v476, %v479
    %v499 = vsel %vm489, %v485, 1326507024
    %v500 = vsel %vm488, %v482, %v499
    %v501 = vsel %vm487, %v498, %v500
    %v502 = vshll.u32 %v462, 8
    %v503 = vmul.u32.u64.compose %v502, %v501
    %v504 = vextract.low.u32 %v503
    %v505 = vextract.high.u32 %v503
    %v506 = vmul.u32.u64.compose %v502, %v497
    %v507 = vextract.low.u32 %v506
    %v508 = vextract.high.u32 %v506
    %v509 = vmul.u32 %v502, %v493
    %v510 = vadd.s32 %v505, %v507
    %vm511 = vc.u32 %v505, %v507
    %v512 = vadd.s32 %v508, 1
    %v513 = vsel %vm511, %v512, %v508
    %v514 = vadd.s32 %v509, %v513
    %v515 = vadd.s32 %v514, 536870912
    %v516 = vshrl.u32 %v515, 30
    %v517 = vshll.u32 %v516, 30
    %v518 = vsub.s32 %v514, %v517
    %vm519 = vcmp.lt.s32.totalorder %v518, 0
    %v520 = vsub.s32 0, %v518
    %v521 = vsel %vm519, %v520, %v518
    %v522 = vclz %v521
    %v523 = vsub.s32 %v522, 2
    %vm524 = vcmp.gt.s32.totalorder 0, %v523
    %v525 = vsel %vm524, 0, %v523
    %v526 = vsub.s32 32, %v525
    %v527 = vshll.u32 %v518, %v525
    %v528 = vshrl.u32 %v510, %v526
    %v529 = vor.u32 %v527, %v528
    %v530 = vsub.s32 4294967266, %v525
    %v531 = vadd.s32 %v530, 127
    %v532 = vshll.u32 %v531, 23
    %v533 = vor.u32 4788187, %v532
    %v534 = vand.u32 2147483647, %v533
    %v536 = vcvt.s32.f32 %v529
    %v537 = vmul.f32 %v536, %v534
    %v538 = vxor.u32 %v537, 2147483648
    %v539 = vsel %vm456, %v538, %v537
    %v540 = vsub.s32 4, %v516
    %v541 = vsel %vm456, %v540, %v516
    %v542 = vsel %vm455, %v29, %v539
    %v543 = vsel %vm455, 0, %v541
    %v544 = vcosq.f32.pop %v542
    %v545 = vsinq.f32.pop %v542
    %vm546 = vweird.f32 %v29
    %v547 = vand.u32 %v543, 3
    %vm548 = vcmp.lt.s32.totalorder %v547, 2
    %vm549 = vcmp.eq.s32.totalorder %v547, 0
    %v550 = vxor.u32 %v545, 2147483648
    %v551 = vsel %vm549, %v544, %v550
    %vm552 = vcmp.eq.s32.totalorder %v547, 2
    %v553 = vxor.u32 %v544, 2147483648
    %v554 = vsel %vm552, %v553, %v545
    %v555 = vsel %vm548, %v551, %v554
    %v556 = vsel %vm546, nan, %v555
    %v557 = vand.u32 2147483647, %v30
    %vm558 = vcmp.le.f32.partialorder %v557, 0.7853982
    %vm559 = vcmp.lt.s32.totalorder %v30, 0
    %v560 = vand.u32 %v30, 2139095040
    %v561 = vshrl.u32 %v560, 23
    %v562 = vsub.s32 %v561, 127
    %v563 = vand.u32 2147483647, %v30
    %v564 = vand.u32 %v563, 8388607
    %v565 = vor.u32 %v564, 8388608
    %v566 = vsub.s32 0, %v565
    %v567 = vadd.s32 %v562, 1
    %vm568 = vcmp.gt.s32.totalorder %v567, 0
    %v569 = vsel %vm568, %v567, 0
    %v570 = vshrl.u32 %v569, 5
    %v571 = vand.u32 %v569, 31
    %v572 = vsub.s32 32, %v571
    %v573 = vshrl.u32 683565275, %v572
    %v574 = vshll.u32 683565275, %v571
    %v575 = vshrl.u32 2475754826, %v572
    %v576 = vor.u32 %v574, %v575
    %v577 = vshll.u32 2475754826, %v571
    %v578 = vshrl.u32 2131351028, %v572
    %v579 = vor.u32 %v577, %v578
    %v580 = vshll.u32 2131351028, %v571
    %v581 = vshrl.u32 2102212464, %v572
    %v582 = vor.u32 %v580, %v581
    %v583 = vshll.u32 2102212464, %v571
    %v584 = vshrl.u32 920167782, %v572
    %v585 = vor.u32 %v583, %v584
    %v586 = vshll.u32 920167782, %v571
    %v587 = vshrl.u32 1326507024, %v572
    %v588 = vor.u32 %v586, %v587
    %vm589 = vcmp.lt.s32.totalorder %v570, 1
    %vm590 = vcmp.lt.s32.totalorder %v570, 2
    %vm591 = vcmp.lt.s32.totalorder %v570, 3
    %vm592 = vcmp.lt.s32.totalorder %v570, 4
    %v593 = vsel %vm589, %v573, %v576
    %v594 = vsel %vm592, %v582, 2102212464
    %v595 = vsel %vm591, %v579, %v594
    %v596 = vsel %vm590, %v593, %v595
    %v597 = vsel %vm589, %v576, %v579
    %v598 = vsel %vm592, %v585, 920167782
    %v599 = vsel %vm591, %v582, %v598
    %v600 = vsel %vm590, %v597, %v599
    %v601 = vsel %vm589, %v579, %v582
    %v602 = vsel %vm592, %v588, 1326507024
    %v603 = vsel %vm591, %v585, %v602
    %v604 = vsel %vm590, %v601, %v603
    %v605 = vshll.u32 %v565, 8
    %v606 = vmul.u32.u64.compose %v605, %v604
    %v607 = vextract.low.u32 %v606
    %v608 = vextract.high.u32 %v606
    %v609 = vmul.u32.u64.compose %v605, %v600
    %v610 = vextract.low.u32 %v609
    %v611 = vextract.high.u32 %v609
    %v612 = vmul.u32 %v605, %v596
    %v613 = vadd.s32 %v608, %v610
    %vm614 = vc.u32 %v608, %v610
    %v615 = vadd.s32 %v611, 1
    %v616 = vsel %vm614, %v615, %v611
    %v617 = vadd.s32 %v612, %v616
    %v618 = vadd.s32 %v617, 536870912
    %v619 = vshrl.u32 %v618, 30
    %v620 = vshll.u32 %v619, 30
    %v621 = vsub.s32 %v617, %v620
    %vm622 = vcmp.lt.s32.totalorder %v621, 0
    %v623 = vsub.s32 0, %v621
    %v624 = vsel %vm622, %v623, %v621
    %v625 = vclz %v624
    %v626 = vsub.s32 %v625, 2
    %vm627 = vcmp.gt.s32.totalorder 0, %v626
    %v628 = vsel %vm627, 0, %v626
    %v629 = vsub.s32 32, %v628
    %v630 = vshll.u32 %v621, %v628
    %v631 = vshrl.u32 %v613, %v629
    %v632 = vor.u32 %v630, %v631
    %v633 = vsub.s32 4294967266, %v628
    %v634 = vadd.s32 %v633, 127
    %v635 = vshll.u32 %v634, 23
    %v636 = vor.u32 4788187, %v635
    %v637 = vand.u32 2147483647, %v636
    %v639 = vcvt.s32.f32 %v632
    %v640 = vmul.f32 %v639, %v637
    %v641 = vxor.u32 %v640, 2147483648
    %v642 = vsel %vm559, %v641, %v640
    %v643 = vsub.s32 4, %v619
    %v644 = vsel %vm559, %v643, %v619
    %v645 = vsel %vm558, %v30, %v642
    %v646 = vsel %vm558, 0, %v644
    %v647 = vcosq.f32.pop %v645
    %v648 = vsinq.f32.pop %v645
    %vm649 = vweird.f32 %v30
    %v650 = vand.u32 %v646, 3
    %vm651 = vcmp.lt.s32.totalorder %v650, 2
    %vm652 = vcmp.eq.s32.totalorder %v650, 0
    %v653 = vxor.u32 %v648, 2147483648
    %v654 = vsel %vm652, %v647, %v653
    %vm655 = vcmp.eq.s32.totalorder %v650, 2
    %v656 = vxor.u32 %v647, 2147483648
    %v657 = vsel %vm655, %v656, %v648
    %v658 = vsel %vm651, %v654, %v657
    %v659 = vsel %vm649, nan, %v658
    %v660 = vand.u32 2147483647, %v31
    %vm661 = vcmp.le.f32.partialorder %v660, 0.7853982
    %vm662 = vcmp.lt.s32.totalorder %v31, 0
    %v663 = vand.u32 %v31, 2139095040
    %v664 = vshrl.u32 %v663, 23
    %v665 = vsub.s32 %v664, 127
    %v666 = vand.u32 2147483647, %v31
    %v667 = vand.u32 %v666, 8388607
    %v668 = vor.u32 %v667, 8388608
    %v669 = vsub.s32 0, %v668
    %v670 = vadd.s32 %v665, 1
    %vm671 = vcmp.gt.s32.totalorder %v670, 0
    %v672 = vsel %vm671, %v670, 0
    %v673 = vshrl.u32 %v672, 5
    %v674 = vand.u32 %v672, 31
    %v675 = vsub.s32 32, %v674
    %v676 = vshrl.u32 683565275, %v675
    %v677 = vshll.u32 683565275, %v674
    %v678 = vshrl.u32 2475754826, %v675
    %v679 = vor.u32 %v677, %v678
    %v680 = vshll.u32 2475754826, %v674
    %v681 = vshrl.u32 2131351028, %v675
    %v682 = vor.u32 %v680, %v681
    %v683 = vshll.u32 2131351028, %v674
    %v684 = vshrl.u32 2102212464, %v675
    %v685 = vor.u32 %v683, %v684
    %v686 = vshll.u32 2102212464, %v674
    %v687 = vshrl.u32 920167782, %v675
    %v688 = vor.u32 %v686, %v687
    %v689 = vshll.u32 920167782, %v674
    %v690 = vshrl.u32 1326507024, %v675
    %v691 = vor.u32 %v689, %v690
    %vm692 = vcmp.lt.s32.totalorder %v673, 1
    %vm693 = vcmp.lt.s32.totalorder %v673, 2
    %vm694 = vcmp.lt.s32.totalorder %v673, 3
    %vm695 = vcmp.lt.s32.totalorder %v673, 4
    %v696 = vsel %vm692, %v676, %v679
    %v697 = vsel %vm695, %v685, 2102212464
    %v698 = vsel %vm694, %v682, %v697
    %v699 = vsel %vm693, %v696, %v698
    %v700 = vsel %vm692, %v679, %v682
    %v701 = vsel %vm695, %v688, 920167782
    %v702 = vsel %vm694, %v685, %v701
    %v703 = vsel %vm693, %v700, %v702
    %v704 = vsel %vm692, %v682, %v685
    %v705 = vsel %vm695, %v691, 1326507024
    %v706 = vsel %vm694, %v688, %v705
    %v707 = vsel %vm693, %v704, %v706
    %v708 = vshll.u32 %v668, 8
    %v709 = vmul.u32.u64.compose %v708, %v707
    %v710 = vextract.low.u32 %v709
    %v711 = vextract.high.u32 %v709
    %v712 = vmul.u32.u64.compose %v708, %v703
    %v713 = vextract.low.u32 %v712
    %v714 = vextract.high.u32 %v712
    %v715 = vmul.u32 %v708, %v699
    %v716 = vadd.s32 %v711, %v713
    %vm717 = vc.u32 %v711, %v713
    %v718 = vadd.s32 %v714, 1
    %v719 = vsel %vm717, %v718, %v714
    %v720 = vadd.s32 %v715, %v719
    %v721 = vadd.s32 %v720, 536870912
    %v722 = vshrl.u32 %v721, 30
    %v723 = vshll.u32 %v722, 30
    %v724 = vsub.s32 %v720, %v723
    %vm725 = vcmp.lt.s32.totalorder %v724, 0
    %v726 = vsub.s32 0, %v724
    %v727 = vsel %vm725, %v726, %v724
    %v728 = vclz %v727
    %v729 = vsub.s32 %v728, 2
    %vm730 = vcmp.gt.s32.totalorder 0, %v729
    %v731 = vsel %vm730, 0, %v729
    %v732 = vsub.s32 32, %v731
    %v733 = vshll.u32 %v724, %v731
    %v734 = vshrl.u32 %v716, %v732
    %v735 = vor.u32 %v733, %v734
    %v736 = vsub.s32 4294967266, %v731
    %v737 = vadd.s32 %v736, 127
    %v738 = vshll.u32 %v737, 23
    %v739 = vor.u32 4788187, %v738
    %v740 = vand.u32 2147483647, %v739
    %v742 = vcvt.s32.f32 %v735
    %v743 = vmul.f32 %v742, %v740
    %v744 = vxor.u32 %v743, 2147483648
    %v745 = vsel %vm662, %v744, %v743
    %v746 = vsub.s32 4, %v722
    %v747 = vsel %vm662, %v746, %v722
    %v748 = vsel %vm661, %v31, %v745
    %v749 = vsel %vm661, 0, %v747
    %v750 = vcosq.f32.pop %v748
    %v751 = vsinq.f32.pop %v748
    %vm752 = vweird.f32 %v31
    %v753 = vand.u32 %v749, 3
    %vm754 = vcmp.lt.s32.totalorder %v753, 2
    %vm755 = vcmp.eq.s32.totalorder %v753, 0
    %v756 = vxor.u32 %v751, 2147483648
    %v757 = vsel %vm755, %v750, %v756
    %vm758 = vcmp.eq.s32.totalorder %v753, 2
    %v759 = vxor.u32 %v750, 2147483648
    %v760 = vsel %vm758, %v759, %v751
    %v761 = vsel %vm754, %v757, %v760
    %v762 = vsel %vm752, nan, %v761
    %v763 = vand.u32 2147483647, %v32
    %vm764 = vcmp.le.f32.partialorder %v763, 0.7853982
    %vm765 = vcmp.lt.s32.totalorder %v32, 0
    %v766 = vand.u32 %v32, 2139095040
    %v767 = vshrl.u32 %v766, 23
    %v768 = vsub.s32 %v767, 127
    %v769 = vand.u32 2147483647, %v32
    %v770 = vand.u32 %v769, 8388607
    %v771 = vor.u32 %v770, 8388608
    %v772 = vsub.s32 0, %v771
    %v773 = vadd.s32 %v768, 1
    %vm774 = vcmp.gt.s32.totalorder %v773, 0
    %v775 = vsel %vm774, %v773, 0
    %v776 = vshrl.u32 %v775, 5
    %v777 = vand.u32 %v775, 31
    %v778 = vsub.s32 32, %v777
    %v779 = vshrl.u32 683565275, %v778
    %v780 = vshll.u32 683565275, %v777
    %v781 = vshrl.u32 2475754826, %v778
    %v782 = vor.u32 %v780, %v781
    %v783 = vshll.u32 2475754826, %v777
    %v784 = vshrl.u32 2131351028, %v778
    %v785 = vor.u32 %v783, %v784
    %v786 = vshll.u32 2131351028, %v777
    %v787 = vshrl.u32 2102212464, %v778
    %v788 = vor.u32 %v786, %v787
    %v789 = vshll.u32 2102212464, %v777
    %v790 = vshrl.u32 920167782, %v778
    %v791 = vor.u32 %v789, %v790
    %v792 = vshll.u32 920167782, %v777
    %v793 = vshrl.u32 1326507024, %v778
    %v794 = vor.u32 %v792, %v793
    %vm795 = vcmp.lt.s32.totalorder %v776, 1
    %vm796 = vcmp.lt.s32.totalorder %v776, 2
    %vm797 = vcmp.lt.s32.totalorder %v776, 3
    %vm798 = vcmp.lt.s32.totalorder %v776, 4
    %v799 = vsel %vm795, %v779, %v782
    %v800 = vsel %vm798, %v788, 2102212464
    %v801 = vsel %vm797, %v785, %v800
    %v802 = vsel %vm796, %v799, %v801
    %v803 = vsel %vm795, %v782, %v785
    %v804 = vsel %vm798, %v791, 920167782
    %v805 = vsel %vm797, %v788, %v804
    %v806 = vsel %vm796, %v803, %v805
    %v807 = vsel %vm795, %v785, %v788
    %v808 = vsel %vm798, %v794, 1326507024
    %v809 = vsel %vm797, %v791, %v808
    %v810 = vsel %vm796, %v807, %v809
    %v811 = vshll.u32 %v771, 8
    %v812 = vmul.u32.u64.compose %v811, %v810
    %v813 = vextract.low.u32 %v812
    %v814 = vextract.high.u32 %v812
    %v815 = vmul.u32.u64.compose %v811, %v806
    %v816 = vextract.low.u32 %v815
    %v817 = vextract.high.u32 %v815
    %v818 = vmul.u32 %v811, %v802
    %v819 = vadd.s32 %v814, %v816
    %vm820 = vc.u32 %v814, %v816
    %v821 = vadd.s32 %v817, 1
    %v822 = vsel %vm820, %v821, %v817
    %v823 = vadd.s32 %v818, %v822
    %v824 = vadd.s32 %v823, 536870912
    %v825 = vshrl.u32 %v824, 30
    %v826 = vshll.u32 %v825, 30
    %v827 = vsub.s32 %v823, %v826
    %vm828 = vcmp.lt.s32.totalorder %v827, 0
    %v829 = vsub.s32 0, %v827
    %v830 = vsel %vm828, %v829, %v827
    %v831 = vclz %v830
    %v832 = vsub.s32 %v831, 2
    %vm833 = vcmp.gt.s32.totalorder 0, %v832
    %v834 = vsel %vm833, 0, %v832
    %v835 = vsub.s32 32, %v834
    %v836 = vshll.u32 %v827, %v834
    %v837 = vshrl.u32 %v819, %v835
    %v838 = vor.u32 %v836, %v837
    %v839 = vsub.s32 4294967266, %v834
    %v840 = vadd.s32 %v839, 127
    %v841 = vshll.u32 %v840, 23
    %v842 = vor.u32 4788187, %v841
    %v843 = vand.u32 2147483647, %v842
    %v845 = vcvt.s32.f32 %v838
    %v846 = vmul.f32 %v845, %v843
    %v847 = vxor.u32 %v846, 2147483648
    %v848 = vsel %vm765, %v847, %v846
    %v849 = vsub.s32 4, %v825
    %v850 = vsel %vm765, %v849, %v825
    %v851 = vsel %vm764, %v32, %v848
    %v852 = vsel %vm764, 0, %v850
    %v853 = vcosq.f32.pop %v851
    %v854 = vsinq.f32.pop %v851
    %vm855 = vweird.f32 %v32
    %v856 = vand.u32 %v852, 3
    %vm857 = vcmp.lt.s32.totalorder %v856, 2
    %vm858 = vcmp.eq.s32.totalorder %v856, 0
    %v859 = vxor.u32 %v854, 2147483648
    %v860 = vsel %vm858, %v853, %v859
    %vm861 = vcmp.eq.s32.totalorder %v856, 2
    %v862 = vxor.u32 %v853, 2147483648
    %v863 = vsel %vm861, %v862, %v854
    %v864 = vsel %vm857, %v860, %v863
    %v865 = vsel %vm855, nan, %v864
    %s866 = scalar_lea.vmem [#allocation5], 64
    %867 = vst [vmem:[%s866] sm:$0xff] %v556
    %868 = vst [vmem:[%s866 + $0x8] sm:$0xff] %v659
    %869 = vst [vmem:[%s866 + $0x10] sm:$0xff] %v762
    %870 = vst [vmem:[%s866 + $0x18] sm:$0xff] %v865
    %v871 = vld [vmem:[#allocation2] sm:$0xff]
    %v872 = vld [vmem:[#allocation2 + $0x8] sm:$0xff]
    %v873 = vld [vmem:[#allocation2 + $0x10] sm:$0xff]
    %v874 = vld [vmem:[#allocation2 + $0x18] sm:$0xff]
    %v875 = vmul.f32 %v871, 2.0
    %v876 = vmul.f32 %v872, 2.0
    %v877 = vmul.f32 %v873, 2.0
    %v878 = vmul.f32 %v874, 2.0
    %v879 = vand.u32 2147483647, %v875
    %vm880 = vcmp.le.f32.partialorder %v879, 0.7853982
    %vm881 = vcmp.lt.s32.totalorder %v875, 0
    %v882 = vand.u32 %v875, 2139095040
    %v883 = vshrl.u32 %v882, 23
    %v884 = vsub.s32 %v883, 127
    %v885 = vand.u32 2147483647, %v875
    %v886 = vand.u32 %v885, 8388607
    %v887 = vor.u32 %v886, 8388608
    %v888 = vsub.s32 0, %v887
    %v889 = vadd.s32 %v884, 1
    %vm890 = vcmp.gt.s32.totalorder %v889, 0
    %v891 = vsel %vm890, %v889, 0
    %v892 = vshrl.u32 %v891, 5
    %v893 = vand.u32 %v891, 31
    %v894 = vsub.s32 32, %v893
    %v895 = vshrl.u32 683565275, %v894
    %v896 = vshll.u32 683565275, %v893
    %v897 = vshrl.u32 2475754826, %v894
    %v898 = vor.u32 %v896, %v897
    %v899 = vshll.u32 2475754826, %v893
    %v900 = vshrl.u32 2131351028, %v894
    %v901 = vor.u32 %v899, %v900
    %v902 = vshll.u32 2131351028, %v893
    %v903 = vshrl.u32 2102212464, %v894
    %v904 = vor.u32 %v902, %v903
    %v905 = vshll.u32 2102212464, %v893
    %v906 = vshrl.u32 920167782, %v894
    %v907 = vor.u32 %v905, %v906
    %v908 = vshll.u32 920167782, %v893
    %v909 = vshrl.u32 1326507024, %v894
    %v910 = vor.u32 %v908, %v909
    %vm911 = vcmp.lt.s32.totalorder %v892, 1
    %vm912 = vcmp.lt.s32.totalorder %v892, 2
    %vm913 = vcmp.lt.s32.totalorder %v892, 3
    %vm914 = vcmp.lt.s32.totalorder %v892, 4
    %v915 = vsel %vm911, %v895, %v898
    %v916 = vsel %vm914, %v904, 2102212464
    %v917 = vsel %vm913, %v901, %v916
    %v918 = vsel %vm912, %v915, %v917
    %v919 = vsel %vm911, %v898, %v901
    %v920 = vsel %vm914, %v907, 920167782
    %v921 = vsel %vm913, %v904, %v920
    %v922 = vsel %vm912, %v919, %v921
    %v923 = vsel %vm911, %v901, %v904
    %v924 = vsel %vm914, %v910, 1326507024
    %v925 = vsel %vm913, %v907, %v924
    %v926 = vsel %vm912, %v923, %v925
    %v927 = vshll.u32 %v887, 8
    %v928 = vmul.u32.u64.compose %v927, %v926
    %v929 = vextract.low.u32 %v928
    %v930 = vextract.high.u32 %v928
    %v931 = vmul.u32.u64.compose %v927, %v922
    %v932 = vextract.low.u32 %v931
    %v933 = vextract.high.u32 %v931
    %v934 = vmul.u32 %v927, %v918
    %v935 = vadd.s32 %v930, %v932
    %vm936 = vc.u32 %v930, %v932
    %v937 = vadd.s32 %v933, 1
    %v938 = vsel %vm936, %v937, %v933
    %v939 = vadd.s32 %v934, %v938
    %v940 = vadd.s32 %v939, 536870912
    %v941 = vshrl.u32 %v940, 30
    %v942 = vshll.u32 %v941, 30
    %v943 = vsub.s32 %v939, %v942
    %vm944 = vcmp.lt.s32.totalorder %v943, 0
    %v945 = vsub.s32 0, %v943
    %v946 = vsel %vm944, %v945, %v943
    %v947 = vclz %v946
    %v948 = vsub.s32 %v947, 2
    %vm949 = vcmp.gt.s32.totalorder 0, %v948
    %v950 = vsel %vm949, 0, %v948
    %v951 = vsub.s32 32, %v950
    %v952 = vshll.u32 %v943, %v950
    %v953 = vshrl.u32 %v935, %v951
    %v954 = vor.u32 %v952, %v953
    %v955 = vsub.s32 4294967266, %v950
    %v956 = vadd.s32 %v955, 127
    %v957 = vshll.u32 %v956, 23
    %v958 = vor.u32 4788187, %v957
    %v959 = vand.u32 2147483647, %v958
    %v961 = vcvt.s32.f32 %v954
    %v962 = vmul.f32 %v961, %v959
    %v963 = vxor.u32 %v962, 2147483648
    %v964 = vsel %vm881, %v963, %v962
    %v965 = vsub.s32 4, %v941
    %v966 = vsel %vm881, %v965, %v941
    %v967 = vsel %vm880, %v875, %v964
    %v968 = vsel %vm880, 0, %v966
    %v969 = vcosq.f32.pop %v967
    %v970 = vsinq.f32.pop %v967
    %vm971 = vweird.f32 %v875
    %v972 = vadd.s32 %v968, 3
    %v973 = vand.u32 %v972, 3
    %vm974 = vcmp.lt.s32.totalorder %v973, 2
    %vm975 = vcmp.eq.s32.totalorder %v973, 0
    %v976 = vxor.u32 %v970, 2147483648
    %v977 = vsel %vm975, %v969, %v976
    %vm978 = vcmp.eq.s32.totalorder %v973, 2
    %v979 = vxor.u32 %v969, 2147483648
    %v980 = vsel %vm978, %v979, %v970
    %v981 = vsel %vm974, %v977, %v980
    %v982 = vsel %vm971, nan, %v981
    %v983 = vand.u32 2147483647, %v876
    %vm984 = vcmp.le.f32.partialorder %v983, 0.7853982
    %vm985 = vcmp.lt.s32.totalorder %v876, 0
    %v986 = vand.u32 %v876, 2139095040
    %v987 = vshrl.u32 %v986, 23
    %v988 = vsub.s32 %v987, 127
    %v989 = vand.u32 2147483647, %v876
    %v990 = vand.u32 %v989, 8388607
    %v991 = vor.u32 %v990, 8388608
    %v992 = vsub.s32 0, %v991
    %v993 = vadd.s32 %v988, 1
    %vm994 = vcmp.gt.s32.totalorder %v993, 0
    %v995 = vsel %vm994, %v993, 0
    %v996 = vshrl.u32 %v995, 5
    %v997 = vand.u32 %v995, 31
    %v998 = vsub.s32 32, %v997
    %v999 = vshrl.u32 683565275, %v998
    %v1000 = vshll.u32 683565275, %v997
    %v1001 = vshrl.u32 2475754826, %v998
    %v1002 = vor.u32 %v1000, %v1001
    %v1003 = vshll.u32 2475754826, %v997
    %v1004 = vshrl.u32 2131351028, %v998
    %v1005 = vor.u32 %v1003, %v1004
    %v1006 = vshll.u32 2131351028, %v997
    %v1007 = vshrl.u32 2102212464, %v998
    %v1008 = vor.u32 %v1006, %v1007
    %v1009 = vshll.u32 2102212464, %v997
    %v1010 = vshrl.u32 920167782, %v998
    %v1011 = vor.u32 %v1009, %v1010
    %v1012 = vshll.u32 920167782, %v997
    %v1013 = vshrl.u32 1326507024, %v998
    %v1014 = vor.u32 %v1012, %v1013
    %vm1015 = vcmp.lt.s32.totalorder %v996, 1
    %vm1016 = vcmp.lt.s32.totalorder %v996, 2
    %vm1017 = vcmp.lt.s32.totalorder %v996, 3
    %vm1018 = vcmp.lt.s32.totalorder %v996, 4
    %v1019 = vsel %vm1015, %v999, %v1002
    %v1020 = vsel %vm1018, %v1008, 2102212464
    %v1021 = vsel %vm1017, %v1005, %v1020
    %v1022 = vsel %vm1016, %v1019, %v1021
    %v1023 = vsel %vm1015, %v1002, %v1005
    %v1024 = vsel %vm1018, %v1011, 920167782
    %v1025 = vsel %vm1017, %v1008, %v1024
    %v1026 = vsel %vm1016, %v1023, %v1025
    %v1027 = vsel %vm1015, %v1005, %v1008
    %v1028 = vsel %vm1018, %v1014, 1326507024
    %v1029 = vsel %vm1017, %v1011, %v1028
    %v1030 = vsel %vm1016, %v1027, %v1029
    %v1031 = vshll.u32 %v991, 8
    %v1032 = vmul.u32.u64.compose %v1031, %v1030
    %v1033 = vextract.low.u32 %v1032
    %v1034 = vextract.high.u32 %v1032
    %v1035 = vmul.u32.u64.compose %v1031, %v1026
    %v1036 = vextract.low.u32 %v1035
    %v1037 = vextract.high.u32 %v1035
    %v1038 = vmul.u32 %v1031, %v1022
    %v1039 = vadd.s32 %v1034, %v1036
    %vm1040 = vc.u32 %v1034, %v1036
    %v1041 = vadd.s32 %v1037, 1
    %v1042 = vsel %vm1040, %v1041, %v1037
    %v1043 = vadd.s32 %v1038, %v1042
    %v1044 = vadd.s32 %v1043, 536870912
    %v1045 = vshrl.u32 %v1044, 30
    %v1046 = vshll.u32 %v1045, 30
    %v1047 = vsub.s32 %v1043, %v1046
    %vm1048 = vcmp.lt.s32.totalorder %v1047, 0
    %v1049 = vsub.s32 0, %v1047
    %v1050 = vsel %vm1048, %v1049, %v1047
    %v1051 = vclz %v1050
    %v1052 = vsub.s32 %v1051, 2
    %vm1053 = vcmp.gt.s32.totalorder 0, %v1052
    %v1054 = vsel %vm1053, 0, %v1052
    %v1055 = vsub.s32 32, %v1054
    %v1056 = vshll.u32 %v1047, %v1054
    %v1057 = vshrl.u32 %v1039, %v1055
    %v1058 = vor.u32 %v1056, %v1057
    %v1059 = vsub.s32 4294967266, %v1054
    %v1060 = vadd.s32 %v1059, 127
    %v1061 = vshll.u32 %v1060, 23
    %v1062 = vor.u32 4788187, %v1061
    %v1063 = vand.u32 2147483647, %v1062
    %v1065 = vcvt.s32.f32 %v1058
    %v1066 = vmul.f32 %v1065, %v1063
    %v1067 = vxor.u32 %v1066, 2147483648
    %v1068 = vsel %vm985, %v1067, %v1066
    %v1069 = vsub.s32 4, %v1045
    %v1070 = vsel %vm985, %v1069, %v1045
    %v1071 = vsel %vm984, %v876, %v1068
    %v1072 = vsel %vm984, 0, %v1070
    %v1073 = vcosq.f32.pop %v1071
    %v1074 = vsinq.f32.pop %v1071
    %vm1075 = vweird.f32 %v876
    %v1076 = vadd.s32 %v1072, 3
    %v1077 = vand.u32 %v1076, 3
    %vm1078 = vcmp.lt.s32.totalorder %v1077, 2
    %vm1079 = vcmp.eq.s32.totalorder %v1077, 0
    %v1080 = vxor.u32 %v1074, 2147483648
    %v1081 = vsel %vm1079, %v1073, %v1080
    %vm1082 = vcmp.eq.s32.totalorder %v1077, 2
    %v1083 = vxor.u32 %v1073, 2147483648
    %v1084 = vsel %vm1082, %v1083, %v1074
    %v1085 = vsel %vm1078, %v1081, %v1084
    %v1086 = vsel %vm1075, nan, %v1085
    %v1087 = vand.u32 2147483647, %v877
    %vm1088 = vcmp.le.f32.partialorder %v1087, 0.7853982
    %vm1089 = vcmp.lt.s32.totalorder %v877, 0
    %v1090 = vand.u32 %v877, 2139095040
    %v1091 = vshrl.u32 %v1090, 23
    %v1092 = vsub.s32 %v1091, 127
    %v1093 = vand.u32 2147483647, %v877
    %v1094 = vand.u32 %v1093, 8388607
    %v1095 = vor.u32 %v1094, 8388608
    %v1096 = vsub.s32 0, %v1095
    %v1097 = vadd.s32 %v1092, 1
    %vm1098 = vcmp.gt.s32.totalorder %v1097, 0
    %v1099 = vsel %vm1098, %v1097, 0
    %v1100 = vshrl.u32 %v1099, 5
    %v1101 = vand.u32 %v1099, 31
    %v1102 = vsub.s32 32, %v1101
    %v1103 = vshrl.u32 683565275, %v1102
    %v1104 = vshll.u32 683565275, %v1101
    %v1105 = vshrl.u32 2475754826, %v1102
    %v1106 = vor.u32 %v1104, %v1105
    %v1107 = vshll.u32 2475754826, %v1101
    %v1108 = vshrl.u32 2131351028, %v1102
    %v1109 = vor.u32 %v1107, %v1108
    %v1110 = vshll.u32 2131351028, %v1101
    %v1111 = vshrl.u32 2102212464, %v1102
    %v1112 = vor.u32 %v1110, %v1111
    %v1113 = vshll.u32 2102212464, %v1101
    %v1114 = vshrl.u32 920167782, %v1102
    %v1115 = vor.u32 %v1113, %v1114
    %v1116 = vshll.u32 920167782, %v1101
    %v1117 = vshrl.u32 1326507024, %v1102
    %v1118 = vor.u32 %v1116, %v1117
    %vm1119 = vcmp.lt.s32.totalorder %v1100, 1
    %vm1120 = vcmp.lt.s32.totalorder %v1100, 2
    %vm1121 = vcmp.lt.s32.totalorder %v1100, 3
    %vm1122 = vcmp.lt.s32.totalorder %v1100, 4
    %v1123 = vsel %vm1119, %v1103, %v1106
    %v1124 = vsel %vm1122, %v1112, 2102212464
    %v1125 = vsel %vm1121, %v1109, %v1124
    %v1126 = vsel %vm1120, %v1123, %v1125
    %v1127 = vsel %vm1119, %v1106, %v1109
    %v1128 = vsel %vm1122, %v1115, 920167782
    %v1129 = vsel %vm1121, %v1112, %v1128
    %v1130 = vsel %vm1120, %v1127, %v1129
    %v1131 = vsel %vm1119, %v1109, %v1112
    %v1132 = vsel %vm1122, %v1118, 1326507024
    %v1133 = vsel %vm1121, %v1115, %v1132
    %v1134 = vsel %vm1120, %v1131, %v1133
    %v1135 = vshll.u32 %v1095, 8
    %v1136 = vmul.u32.u64.compose %v1135, %v1134
    %v1137 = vextract.low.u32 %v1136
    %v1138 = vextract.high.u32 %v1136
    %v1139 = vmul.u32.u64.compose %v1135, %v1130
    %v1140 = vextract.low.u32 %v1139
    %v1141 = vextract.high.u32 %v1139
    %v1142 = vmul.u32 %v1135, %v1126
    %v1143 = vadd.s32 %v1138, %v1140
    %vm1144 = vc.u32 %v1138, %v1140
    %v1145 = vadd.s32 %v1141, 1
    %v1146 = vsel %vm1144, %v1145, %v1141
    %v1147 = vadd.s32 %v1142, %v1146
    %v1148 = vadd.s32 %v1147, 536870912
    %v1149 = vshrl.u32 %v1148, 30
    %v1150 = vshll.u32 %v1149, 30
    %v1151 = vsub.s32 %v1147, %v1150
    %vm1152 = vcmp.lt.s32.totalorder %v1151, 0
    %v1153 = vsub.s32 0, %v1151
    %v1154 = vsel %vm1152, %v1153, %v1151
    %v1155 = vclz %v1154
    %v1156 = vsub.s32 %v1155, 2
    %vm1157 = vcmp.gt.s32.totalorder 0, %v1156
    %v1158 = vsel %vm1157, 0, %v1156
    %v1159 = vsub.s32 32, %v1158
    %v1160 = vshll.u32 %v1151, %v1158
    %v1161 = vshrl.u32 %v1143, %v1159
    %v1162 = vor.u32 %v1160, %v1161
    %v1163 = vsub.s32 4294967266, %v1158
    %v1164 = vadd.s32 %v1163, 127
    %v1165 = vshll.u32 %v1164, 23
    %v1166 = vor.u32 4788187, %v1165
    %v1167 = vand.u32 2147483647, %v1166
    %v1169 = vcvt.s32.f32 %v1162
    %v1170 = vmul.f32 %v1169, %v1167
    %v1171 = vxor.u32 %v1170, 2147483648
    %v1172 = vsel %vm1089, %v1171, %v1170
    %v1173 = vsub.s32 4, %v1149
    %v1174 = vsel %vm1089, %v1173, %v1149
    %v1175 = vsel %vm1088, %v877, %v1172
    %v1176 = vsel %vm1088, 0, %v1174
    %v1177 = vcosq.f32.pop %v1175
    %v1178 = vsinq.f32.pop %v1175
    %vm1179 = vweird.f32 %v877
    %v1180 = vadd.s32 %v1176, 3
    %v1181 = vand.u32 %v1180, 3
    %vm1182 = vcmp.lt.s32.totalorder %v1181, 2
    %vm1183 = vcmp.eq.s32.totalorder %v1181, 0
    %v1184 = vxor.u32 %v1178, 2147483648
    %v1185 = vsel %vm1183, %v1177, %v1184
    %vm1186 = vcmp.eq.s32.totalorder %v1181, 2
    %v1187 = vxor.u32 %v1177, 2147483648
    %v1188 = vsel %vm1186, %v1187, %v1178
    %v1189 = vsel %vm1182, %v1185, %v1188
    %v1190 = vsel %vm1179, nan, %v1189
    %v1191 = vand.u32 2147483647, %v878
    %vm1192 = vcmp.le.f32.partialorder %v1191, 0.7853982
    %vm1193 = vcmp.lt.s32.totalorder %v878, 0
    %v1194 = vand.u32 %v878, 2139095040
    %v1195 = vshrl.u32 %v1194, 23
    %v1196 = vsub.s32 %v1195, 127
    %v1197 = vand.u32 2147483647, %v878
    %v1198 = vand.u32 %v1197, 8388607
    %v1199 = vor.u32 %v1198, 8388608
    %v1200 = vsub.s32 0, %v1199
    %v1201 = vadd.s32 %v1196, 1
    %vm1202 = vcmp.gt.s32.totalorder %v1201, 0
    %v1203 = vsel %vm1202, %v1201, 0
    %v1204 = vshrl.u32 %v1203, 5
    %v1205 = vand.u32 %v1203, 31
    %v1206 = vsub.s32 32, %v1205
    %v1207 = vshrl.u32 683565275, %v1206
    %v1208 = vshll.u32 683565275, %v1205
    %v1209 = vshrl.u32 2475754826, %v1206
    %v1210 = vor.u32 %v1208, %v1209
    %v1211 = vshll.u32 2475754826, %v1205
    %v1212 = vshrl.u32 2131351028, %v1206
    %v1213 = vor.u32 %v1211, %v1212
    %v1214 = vshll.u32 2131351028, %v1205
    %v1215 = vshrl.u32 2102212464, %v1206
    %v1216 = vor.u32 %v1214, %v1215
    %v1217 = vshll.u32 2102212464, %v1205
    %v1218 = vshrl.u32 920167782, %v1206
    %v1219 = vor.u32 %v1217, %v1218
    %v1220 = vshll.u32 920167782, %v1205
    %v1221 = vshrl.u32 1326507024, %v1206
    %v1222 = vor.u32 %v1220, %v1221
    %vm1223 = vcmp.lt.s32.totalorder %v1204, 1
    %vm1224 = vcmp.lt.s32.totalorder %v1204, 2
    %vm1225 = vcmp.lt.s32.totalorder %v1204, 3
    %vm1226 = vcmp.lt.s32.totalorder %v1204, 4
    %v1227 = vsel %vm1223, %v1207, %v1210
    %v1228 = vsel %vm1226, %v1216, 2102212464
    %v1229 = vsel %vm1225, %v1213, %v1228
    %v1230 = vsel %vm1224, %v1227, %v1229
    %v1231 = vsel %vm1223, %v1210, %v1213
    %v1232 = vsel %vm1226, %v1219, 920167782
    %v1233 = vsel %vm1225, %v1216, %v1232
    %v1234 = vsel %vm1224, %v1231, %v1233
    %v1235 = vsel %vm1223, %v1213, %v1216
    %v1236 = vsel %vm1226, %v1222, 1326507024
    %v1237 = vsel %vm1225, %v1219, %v1236
    %v1238 = vsel %vm1224, %v1235, %v1237
    %v1239 = vshll.u32 %v1199, 8
    %v1240 = vmul.u32.u64.compose %v1239, %v1238
    %v1241 = vextract.low.u32 %v1240
    %v1242 = vextract.high.u32 %v1240
    %v1243 = vmul.u32.u64.compose %v1239, %v1234
    %v1244 = vextract.low.u32 %v1243
    %v1245 = vextract.high.u32 %v1243
    %v1246 = vmul.u32 %v1239, %v1230
    %v1247 = vadd.s32 %v1242, %v1244
    %vm1248 = vc.u32 %v1242, %v1244
    %v1249 = vadd.s32 %v1245, 1
    %v1250 = vsel %vm1248, %v1249, %v1245
    %v1251 = vadd.s32 %v1246, %v1250
    %v1252 = vadd.s32 %v1251, 536870912
    %v1253 = vshrl.u32 %v1252, 30
    %v1254 = vshll.u32 %v1253, 30
    %v1255 = vsub.s32 %v1251, %v1254
    %vm1256 = vcmp.lt.s32.totalorder %v1255, 0
    %v1257 = vsub.s32 0, %v1255
    %v1258 = vsel %vm1256, %v1257, %v1255
    %v1259 = vclz %v1258
    %v1260 = vsub.s32 %v1259, 2
    %vm1261 = vcmp.gt.s32.totalorder 0, %v1260
    %v1262 = vsel %vm1261, 0, %v1260
    %v1263 = vsub.s32 32, %v1262
    %v1264 = vshll.u32 %v1255, %v1262
    %v1265 = vshrl.u32 %v1247, %v1263
    %v1266 = vor.u32 %v1264, %v1265
    %v1267 = vsub.s32 4294967266, %v1262
    %v1268 = vadd.s32 %v1267, 127
    %v1269 = vshll.u32 %v1268, 23
    %v1270 = vor.u32 4788187, %v1269
    %v1271 = vand.u32 2147483647, %v1270
    %v1273 = vcvt.s32.f32 %v1266
    %v1274 = vmul.f32 %v1273, %v1271
    %v1275 = vxor.u32 %v1274, 2147483648
    %v1276 = vsel %vm1193, %v1275, %v1274
    %v1277 = vsub.s32 4, %v1253
    %v1278 = vsel %vm1193, %v1277, %v1253
    %v1279 = vsel %vm1192, %v878, %v1276
    %v1280 = vsel %vm1192, 0, %v1278
    %v1281 = vcosq.f32.pop %v1279
    %v1282 = vsinq.f32.pop %v1279
    %vm1283 = vweird.f32 %v878
    %v1284 = vadd.s32 %v1280, 3
    %v1285 = vand.u32 %v1284, 3
    %vm1286 = vcmp.lt.s32.totalorder %v1285, 2
    %vm1287 = vcmp.eq.s32.totalorder %v1285, 0
    %v1288 = vxor.u32 %v1282, 2147483648
    %v1289 = vsel %vm1287, %v1281, %v1288
    %vm1290 = vcmp.eq.s32.totalorder %v1285, 2
    %v1291 = vxor.u32 %v1281, 2147483648
    %v1292 = vsel %vm1290, %v1291, %v1282
    %v1293 = vsel %vm1286, %v1289, %v1292
    %v1294 = vsel %vm1283, nan, %v1293
    %s1295 = scalar_lea.vmem [#allocation5], 96
    %1296 = vst [vmem:[%s1295] sm:$0xff] %v982
    %1297 = vst [vmem:[%s1295 + $0x8] sm:$0xff] %v1086
    %1298 = vst [vmem:[%s1295 + $0x10] sm:$0xff] %v1190
    %1299 = vst [vmem:[%s1295 + $0x18] sm:$0xff] %v1294
    %v1300 = vand.u32 2147483647, %v875
    %vm1301 = vcmp.le.f32.partialorder %v1300, 0.7853982
    %vm1302 = vcmp.lt.s32.totalorder %v875, 0
    %v1303 = vand.u32 %v875, 2139095040
    %v1304 = vshrl.u32 %v1303, 23
    %v1305 = vsub.s32 %v1304, 127
    %v1306 = vand.u32 2147483647, %v875
    %v1307 = vand.u32 %v1306, 8388607
    %v1308 = vor.u32 %v1307, 8388608
    %v1309 = vsub.s32 0, %v1308
    %v1310 = vadd.s32 %v1305, 1
    %vm1311 = vcmp.gt.s32.totalorder %v1310, 0
    %v1312 = vsel %vm1311, %v1310, 0
    %v1313 = vshrl.u32 %v1312, 5
    %v1314 = vand.u32 %v1312, 31
    %v1315 = vsub.s32 32, %v1314
    %v1316 = vshrl.u32 683565275, %v1315
    %v1317 = vshll.u32 683565275, %v1314
    %v1318 = vshrl.u32 2475754826, %v1315
    %v1319 = vor.u32 %v1317, %v1318
    %v1320 = vshll.u32 2475754826, %v1314
    %v1321 = vshrl.u32 2131351028, %v1315
    %v1322 = vor.u32 %v1320, %v1321
    %v1323 = vshll.u32 2131351028, %v1314
    %v1324 = vshrl.u32 2102212464, %v1315
    %v1325 = vor.u32 %v1323, %v1324
    %v1326 = vshll.u32 2102212464, %v1314
    %v1327 = vshrl.u32 920167782, %v1315
    %v1328 = vor.u32 %v1326, %v1327
    %v1329 = vshll.u32 920167782, %v1314
    %v1330 = vshrl.u32 1326507024, %v1315
    %v1331 = vor.u32 %v1329, %v1330
    %vm1332 = vcmp.lt.s32.totalorder %v1313, 1
    %vm1333 = vcmp.lt.s32.totalorder %v1313, 2
    %vm1334 = vcmp.lt.s32.totalorder %v1313, 3
    %vm1335 = vcmp.lt.s32.totalorder %v1313, 4
    %v1336 = vsel %vm1332, %v1316, %v1319
    %v1337 = vsel %vm1335, %v1325, 2102212464
    %v1338 = vsel %vm1334, %v1322, %v1337
    %v1339 = vsel %vm1333, %v1336, %v1338
    %v1340 = vsel %vm1332, %v1319, %v1322
    %v1341 = vsel %vm1335, %v1328, 920167782
    %v1342 = vsel %vm1334, %v1325, %v1341
    %v1343 = vsel %vm1333, %v1340, %v1342
    %v1344 = vsel %vm1332, %v1322, %v1325
    %v1345 = vsel %vm1335, %v1331, 1326507024
    %v1346 = vsel %vm1334, %v1328, %v1345
    %v1347 = vsel %vm1333, %v1344, %v1346
    %v1348 = vshll.u32 %v1308, 8
    %v1349 = vmul.u32.u64.compose %v1348, %v1347
    %v1350 = vextract.low.u32 %v1349
    %v1351 = vextract.high.u32 %v1349
    %v1352 = vmul.u32.u64.compose %v1348, %v1343
    %v1353 = vextract.low.u32 %v1352
    %v1354 = vextract.high.u32 %v1352
    %v1355 = vmul.u32 %v1348, %v1339
    %v1356 = vadd.s32 %v1351, %v1353
    %vm1357 = vc.u32 %v1351, %v1353
    %v1358 = vadd.s32 %v1354, 1
    %v1359 = vsel %vm1357, %v1358, %v1354
    %v1360 = vadd.s32 %v1355, %v1359
    %v1361 = vadd.s32 %v1360, 536870912
    %v1362 = vshrl.u32 %v1361, 30
    %v1363 = vshll.u32 %v1362, 30
    %v1364 = vsub.s32 %v1360, %v1363
    %vm1365 = vcmp.lt.s32.totalorder %v1364, 0
    %v1366 = vsub.s32 0, %v1364
    %v1367 = vsel %vm1365, %v1366, %v1364
    %v1368 = vclz %v1367
    %v1369 = vsub.s32 %v1368, 2
    %vm1370 = vcmp.gt.s32.totalorder 0, %v1369
    %v1371 = vsel %vm1370, 0, %v1369
    %v1372 = vsub.s32 32, %v1371
    %v1373 = vshll.u32 %v1364, %v1371
    %v1374 = vshrl.u32 %v1356, %v1372
    %v1375 = vor.u32 %v1373, %v1374
    %v1376 = vsub.s32 4294967266, %v1371
    %v1377 = vadd.s32 %v1376, 127
    %v1378 = vshll.u32 %v1377, 23
    %v1379 = vor.u32 4788187, %v1378
    %v1380 = vand.u32 2147483647, %v1379
    %v1382 = vcvt.s32.f32 %v1375
    %v1383 = vmul.f32 %v1382, %v1380
    %v1384 = vxor.u32 %v1383, 2147483648
    %v1385 = vsel %vm1302, %v1384, %v1383
    %v1386 = vsub.s32 4, %v1362
    %v1387 = vsel %vm1302, %v1386, %v1362
    %v1388 = vsel %vm1301, %v875, %v1385
    %v1389 = vsel %vm1301, 0, %v1387
    %v1390 = vcosq.f32.pop %v1388
    %v1391 = vsinq.f32.pop %v1388
    %vm1392 = vweird.f32 %v875
    %v1393 = vand.u32 %v1389, 3
    %vm1394 = vcmp.lt.s32.totalorder %v1393, 2
    %vm1395 = vcmp.eq.s32.totalorder %v1393, 0
    %v1396 = vxor.u32 %v1391, 2147483648
    %v1397 = vsel %vm1395, %v1390, %v1396
    %vm1398 = vcmp.eq.s32.totalorder %v1393, 2
    %v1399 = vxor.u32 %v1390, 2147483648
    %v1400 = vsel %vm1398, %v1399, %v1391
    %v1401 = vsel %vm1394, %v1397, %v1400
    %v1402 = vsel %vm1392, nan, %v1401
    %v1403 = vand.u32 2147483647, %v876
    %vm1404 = vcmp.le.f32.partialorder %v1403, 0.7853982
    %vm1405 = vcmp.lt.s32.totalorder %v876, 0
    %v1406 = vand.u32 %v876, 2139095040
    %v1407 = vshrl.u32 %v1406, 23
    %v1408 = vsub.s32 %v1407, 127
    %v1409 = vand.u32 2147483647, %v876
    %v1410 = vand.u32 %v1409, 8388607
    %v1411 = vor.u32 %v1410, 8388608
    %v1412 = vsub.s32 0, %v1411
    %v1413 = vadd.s32 %v1408, 1
    %vm1414 = vcmp.gt.s32.totalorder %v1413, 0
    %v1415 = vsel %vm1414, %v1413, 0
    %v1416 = vshrl.u32 %v1415, 5
    %v1417 = vand.u32 %v1415, 31
    %v1418 = vsub.s32 32, %v1417
    %v1419 = vshrl.u32 683565275, %v1418
    %v1420 = vshll.u32 683565275, %v1417
    %v1421 = vshrl.u32 2475754826, %v1418
    %v1422 = vor.u32 %v1420, %v1421
    %v1423 = vshll.u32 2475754826, %v1417
    %v1424 = vshrl.u32 2131351028, %v1418
    %v1425 = vor.u32 %v1423, %v1424
    %v1426 = vshll.u32 2131351028, %v1417
    %v1427 = vshrl.u32 2102212464, %v1418
    %v1428 = vor.u32 %v1426, %v1427
    %v1429 = vshll.u32 2102212464, %v1417
    %v1430 = vshrl.u32 920167782, %v1418
    %v1431 = vor.u32 %v1429, %v1430
    %v1432 = vshll.u32 920167782, %v1417
    %v1433 = vshrl.u32 1326507024, %v1418
    %v1434 = vor.u32 %v1432, %v1433
    %vm1435 = vcmp.lt.s32.totalorder %v1416, 1
    %vm1436 = vcmp.lt.s32.totalorder %v1416, 2
    %vm1437 = vcmp.lt.s32.totalorder %v1416, 3
    %vm1438 = vcmp.lt.s32.totalorder %v1416, 4
    %v1439 = vsel %vm1435, %v1419, %v1422
    %v1440 = vsel %vm1438, %v1428, 2102212464
    %v1441 = vsel %vm1437, %v1425, %v1440
    %v1442 = vsel %vm1436, %v1439, %v1441
    %v1443 = vsel %vm1435, %v1422, %v1425
    %v1444 = vsel %vm1438, %v1431, 920167782
    %v1445 = vsel %vm1437, %v1428, %v1444
    %v1446 = vsel %vm1436, %v1443, %v1445
    %v1447 = vsel %vm1435, %v1425, %v1428
    %v1448 = vsel %vm1438, %v1434, 1326507024
    %v1449 = vsel %vm1437, %v1431, %v1448
    %v1450 = vsel %vm1436, %v1447, %v1449
    %v1451 = vshll.u32 %v1411, 8
    %v1452 = vmul.u32.u64.compose %v1451, %v1450
    %v1453 = vextract.low.u32 %v1452
    %v1454 = vextract.high.u32 %v1452
    %v1455 = vmul.u32.u64.compose %v1451, %v1446
    %v1456 = vextract.low.u32 %v1455
    %v1457 = vextract.high.u32 %v1455
    %v1458 = vmul.u32 %v1451, %v1442
    %v1459 = vadd.s32 %v1454, %v1456
    %vm1460 = vc.u32 %v1454, %v1456
    %v1461 = vadd.s32 %v1457, 1
    %v1462 = vsel %vm1460, %v1461, %v1457
    %v1463 = vadd.s32 %v1458, %v1462
    %v1464 = vadd.s32 %v1463, 536870912
    %v1465 = vshrl.u32 %v1464, 30
    %v1466 = vshll.u32 %v1465, 30
    %v1467 = vsub.s32 %v1463, %v1466
    %vm1468 = vcmp.lt.s32.totalorder %v1467, 0
    %v1469 = vsub.s32 0, %v1467
    %v1470 = vsel %vm1468, %v1469, %v1467
    %v1471 = vclz %v1470
    %v1472 = vsub.s32 %v1471, 2
    %vm1473 = vcmp.gt.s32.totalorder 0, %v1472
    %v1474 = vsel %vm1473, 0, %v1472
    %v1475 = vsub.s32 32, %v1474
    %v1476 = vshll.u32 %v1467, %v1474
    %v1477 = vshrl.u32 %v1459, %v1475
    %v1478 = vor.u32 %v1476, %v1477
    %v1479 = vsub.s32 4294967266, %v1474
    %v1480 = vadd.s32 %v1479, 127
    %v1481 = vshll.u32 %v1480, 23
    %v1482 = vor.u32 4788187, %v1481
    %v1483 = vand.u32 2147483647, %v1482
    %v1485 = vcvt.s32.f32 %v1478
    %v1486 = vmul.f32 %v1485, %v1483
    %v1487 = vxor.u32 %v1486, 2147483648
    %v1488 = vsel %vm1405, %v1487, %v1486
    %v1489 = vsub.s32 4, %v1465
    %v1490 = vsel %vm1405, %v1489, %v1465
    %v1491 = vsel %vm1404, %v876, %v1488
    %v1492 = vsel %vm1404, 0, %v1490
    %v1493 = vcosq.f32.pop %v1491
    %v1494 = vsinq.f32.pop %v1491
    %vm1495 = vweird.f32 %v876
    %v1496 = vand.u32 %v1492, 3
    %vm1497 = vcmp.lt.s32.totalorder %v1496, 2
    %vm1498 = vcmp.eq.s32.totalorder %v1496, 0
    %v1499 = vxor.u32 %v1494, 2147483648
    %v1500 = vsel %vm1498, %v1493, %v1499
    %vm1501 = vcmp.eq.s32.totalorder %v1496, 2
    %v1502 = vxor.u32 %v1493, 2147483648
    %v1503 = vsel %vm1501, %v1502, %v1494
    %v1504 = vsel %vm1497, %v1500, %v1503
    %v1505 = vsel %vm1495, nan, %v1504
    %v1506 = vand.u32 2147483647, %v877
    %vm1507 = vcmp.le.f32.partialorder %v1506, 0.7853982
    %vm1508 = vcmp.lt.s32.totalorder %v877, 0
    %v1509 = vand.u32 %v877, 2139095040
    %v1510 = vshrl.u32 %v1509, 23
    %v1511 = vsub.s32 %v1510, 127
    %v1512 = vand.u32 2147483647, %v877
    %v1513 = vand.u32 %v1512, 8388607
    %v1514 = vor.u32 %v1513, 8388608
    %v1515 = vsub.s32 0, %v1514
    %v1516 = vadd.s32 %v1511, 1
    %vm1517 = vcmp.gt.s32.totalorder %v1516, 0
    %v1518 = vsel %vm1517, %v1516, 0
    %v1519 = vshrl.u32 %v1518, 5
    %v1520 = vand.u32 %v1518, 31
    %v1521 = vsub.s32 32, %v1520
    %v1522 = vshrl.u32 683565275, %v1521
    %v1523 = vshll.u32 683565275, %v1520
    %v1524 = vshrl.u32 2475754826, %v1521
    %v1525 = vor.u32 %v1523, %v1524
    %v1526 = vshll.u32 2475754826, %v1520
    %v1527 = vshrl.u32 2131351028, %v1521
    %v1528 = vor.u32 %v1526, %v1527
    %v1529 = vshll.u32 2131351028, %v1520
    %v1530 = vshrl.u32 2102212464, %v1521
    %v1531 = vor.u32 %v1529, %v1530
    %v1532 = vshll.u32 2102212464, %v1520
    %v1533 = vshrl.u32 920167782, %v1521
    %v1534 = vor.u32 %v1532, %v1533
    %v1535 = vshll.u32 920167782, %v1520
    %v1536 = vshrl.u32 1326507024, %v1521
    %v1537 = vor.u32 %v1535, %v1536
    %vm1538 = vcmp.lt.s32.totalorder %v1519, 1
    %vm1539 = vcmp.lt.s32.totalorder %v1519, 2
    %vm1540 = vcmp.lt.s32.totalorder %v1519, 3
    %vm1541 = vcmp.lt.s32.totalorder %v1519, 4
    %v1542 = vsel %vm1538, %v1522, %v1525
    %v1543 = vsel %vm1541, %v1531, 2102212464
    %v1544 = vsel %vm1540, %v1528, %v1543
    %v1545 = vsel %vm1539, %v1542, %v1544
    %v1546 = vsel %vm1538, %v1525, %v1528
    %v1547 = vsel %vm1541, %v1534, 920167782
    %v1548 = vsel %vm1540, %v1531, %v1547
    %v1549 = vsel %vm1539, %v1546, %v1548
    %v1550 = vsel %vm1538, %v1528, %v1531
    %v1551 = vsel %vm1541, %v1537, 1326507024
    %v1552 = vsel %vm1540, %v1534, %v1551
    %v1553 = vsel %vm1539, %v1550, %v1552
    %v1554 = vshll.u32 %v1514, 8
    %v1555 = vmul.u32.u64.compose %v1554, %v1553
    %v1556 = vextract.low.u32 %v1555
    %v1557 = vextract.high.u32 %v1555
    %v1558 = vmul.u32.u64.compose %v1554, %v1549
    %v1559 = vextract.low.u32 %v1558
    %v1560 = vextract.high.u32 %v1558
    %v1561 = vmul.u32 %v1554, %v1545
    %v1562 = vadd.s32 %v1557, %v1559
    %vm1563 = vc.u32 %v1557, %v1559
    %v1564 = vadd.s32 %v1560, 1
    %v1565 = vsel %vm1563, %v1564, %v1560
    %v1566 = vadd.s32 %v1561, %v1565
    %v1567 = vadd.s32 %v1566, 536870912
    %v1568 = vshrl.u32 %v1567, 30
    %v1569 = vshll.u32 %v1568, 30
    %v1570 = vsub.s32 %v1566, %v1569
    %vm1571 = vcmp.lt.s32.totalorder %v1570, 0
    %v1572 = vsub.s32 0, %v1570
    %v1573 = vsel %vm1571, %v1572, %v1570
    %v1574 = vclz %v1573
    %v1575 = vsub.s32 %v1574, 2
    %vm1576 = vcmp.gt.s32.totalorder 0, %v1575
    %v1577 = vsel %vm1576, 0, %v1575
    %v1578 = vsub.s32 32, %v1577
    %v1579 = vshll.u32 %v1570, %v1577
    %v1580 = vshrl.u32 %v1562, %v1578
    %v1581 = vor.u32 %v1579, %v1580
    %v1582 = vsub.s32 4294967266, %v1577
    %v1583 = vadd.s32 %v1582, 127
    %v1584 = vshll.u32 %v1583, 23
    %v1585 = vor.u32 4788187, %v1584
    %v1586 = vand.u32 2147483647, %v1585
    %v1588 = vcvt.s32.f32 %v1581
    %v1589 = vmul.f32 %v1588, %v1586
    %v1590 = vxor.u32 %v1589, 2147483648
    %v1591 = vsel %vm1508, %v1590, %v1589
    %v1592 = vsub.s32 4, %v1568
    %v1593 = vsel %vm1508, %v1592, %v1568
    %v1594 = vsel %vm1507, %v877, %v1591
    %v1595 = vsel %vm1507, 0, %v1593
    %v1596 = vcosq.f32.pop %v1594
    %v1597 = vsinq.f32.pop %v1594
    %vm1598 = vweird.f32 %v877
    %v1599 = vand.u32 %v1595, 3
    %vm1600 = vcmp.lt.s32.totalorder %v1599, 2
    %vm1601 = vcmp.eq.s32.totalorder %v1599, 0
    %v1602 = vxor.u32 %v1597, 2147483648
    %v1603 = vsel %vm1601, %v1596, %v1602
    %vm1604 = vcmp.eq.s32.totalorder %v1599, 2
    %v1605 = vxor.u32 %v1596, 2147483648
    %v1606 = vsel %vm1604, %v1605, %v1597
    %v1607 = vsel %vm1600, %v1603, %v1606
    %v1608 = vsel %vm1598, nan, %v1607
    %v1609 = vand.u32 2147483647, %v878
    %vm1610 = vcmp.le.f32.partialorder %v1609, 0.7853982
    %vm1611 = vcmp.lt.s32.totalorder %v878, 0
    %v1612 = vand.u32 %v878, 2139095040
    %v1613 = vshrl.u32 %v1612, 23
    %v1614 = vsub.s32 %v1613, 127
    %v1615 = vand.u32 2147483647, %v878
    %v1616 = vand.u32 %v1615, 8388607
    %v1617 = vor.u32 %v1616, 8388608
    %v1618 = vsub.s32 0, %v1617
    %v1619 = vadd.s32 %v1614, 1
    %vm1620 = vcmp.gt.s32.totalorder %v1619, 0
    %v1621 = vsel %vm1620, %v1619, 0
    %v1622 = vshrl.u32 %v1621, 5
    %v1623 = vand.u32 %v1621, 31
    %v1624 = vsub.s32 32, %v1623
    %v1625 = vshrl.u32 683565275, %v1624
    %v1626 = vshll.u32 683565275, %v1623
    %v1627 = vshrl.u32 2475754826, %v1624
    %v1628 = vor.u32 %v1626, %v1627
    %v1629 = vshll.u32 2475754826, %v1623
    %v1630 = vshrl.u32 2131351028, %v1624
    %v1631 = vor.u32 %v1629, %v1630
    %v1632 = vshll.u32 2131351028, %v1623
    %v1633 = vshrl.u32 2102212464, %v1624
    %v1634 = vor.u32 %v1632, %v1633
    %v1635 = vshll.u32 2102212464, %v1623
    %v1636 = vshrl.u32 920167782, %v1624
    %v1637 = vor.u32 %v1635, %v1636
    %v1638 = vshll.u32 920167782, %v1623
    %v1639 = vshrl.u32 1326507024, %v1624
    %v1640 = vor.u32 %v1638, %v1639
    %vm1641 = vcmp.lt.s32.totalorder %v1622, 1
    %vm1642 = vcmp.lt.s32.totalorder %v1622, 2
    %vm1643 = vcmp.lt.s32.totalorder %v1622, 3
    %vm1644 = vcmp.lt.s32.totalorder %v1622, 4
    %v1645 = vsel %vm1641, %v1625, %v1628
    %v1646 = vsel %vm1644, %v1634, 2102212464
    %v1647 = vsel %vm1643, %v1631, %v1646
    %v1648 = vsel %vm1642, %v1645, %v1647
    %v1649 = vsel %vm1641, %v1628, %v1631
    %v1650 = vsel %vm1644, %v1637, 920167782
    %v1651 = vsel %vm1643, %v1634, %v1650
    %v1652 = vsel %vm1642, %v1649, %v1651
    %v1653 = vsel %vm1641, %v1631, %v1634
    %v1654 = vsel %vm1644, %v1640, 1326507024
    %v1655 = vsel %vm1643, %v1637, %v1654
    %v1656 = vsel %vm1642, %v1653, %v1655
    %v1657 = vshll.u32 %v1617, 8
    %v1658 = vmul.u32.u64.compose %v1657, %v1656
    %v1659 = vextract.low.u32 %v1658
    %v1660 = vextract.high.u32 %v1658
    %v1661 = vmul.u32.u64.compose %v1657, %v1652
    %v1662 = vextract.low.u32 %v1661
    %v1663 = vextract.high.u32 %v1661
    %v1664 = vmul.u32 %v1657, %v1648
    %v1665 = vadd.s32 %v1660, %v1662
    %vm1666 = vc.u32 %v1660, %v1662
    %v1667 = vadd.s32 %v1663, 1
    %v1668 = vsel %vm1666, %v1667, %v1663
    %v1669 = vadd.s32 %v1664, %v1668
    %v1670 = vadd.s32 %v1669, 536870912
    %v1671 = vshrl.u32 %v1670, 30
    %v1672 = vshll.u32 %v1671, 30
    %v1673 = vsub.s32 %v1669, %v1672
    %vm1674 = vcmp.lt.s32.totalorder %v1673, 0
    %v1675 = vsub.s32 0, %v1673
    %v1676 = vsel %vm1674, %v1675, %v1673
    %v1677 = vclz %v1676
    %v1678 = vsub.s32 %v1677, 2
    %vm1679 = vcmp.gt.s32.totalorder 0, %v1678
    %v1680 = vsel %vm1679, 0, %v1678
    %v1681 = vsub.s32 32, %v1680
    %v1682 = vshll.u32 %v1673, %v1680
    %v1683 = vshrl.u32 %v1665, %v1681
    %v1684 = vor.u32 %v1682, %v1683
    %v1685 = vsub.s32 4294967266, %v1680
    %v1686 = vadd.s32 %v1685, 127
    %v1687 = vshll.u32 %v1686, 23
    %v1688 = vor.u32 4788187, %v1687
    %v1689 = vand.u32 2147483647, %v1688
    %v1691 = vcvt.s32.f32 %v1684
    %v1692 = vmul.f32 %v1691, %v1689
    %v1693 = vxor.u32 %v1692, 2147483648
    %v1694 = vsel %vm1611, %v1693, %v1692
    %v1695 = vsub.s32 4, %v1671
    %v1696 = vsel %vm1611, %v1695, %v1671
    %v1697 = vsel %vm1610, %v878, %v1694
    %v1698 = vsel %vm1610, 0, %v1696
    %v1699 = vcosq.f32.pop %v1697
    %v1700 = vsinq.f32.pop %v1697
    %vm1701 = vweird.f32 %v878
    %v1702 = vand.u32 %v1698, 3
    %vm1703 = vcmp.lt.s32.totalorder %v1702, 2
    %vm1704 = vcmp.eq.s32.totalorder %v1702, 0
    %v1705 = vxor.u32 %v1700, 2147483648
    %v1706 = vsel %vm1704, %v1699, %v1705
    %vm1707 = vcmp.eq.s32.totalorder %v1702, 2
    %v1708 = vxor.u32 %v1699, 2147483648
    %v1709 = vsel %vm1707, %v1708, %v1700
    %v1710 = vsel %vm1703, %v1706, %v1709
    %v1711 = vsel %vm1701, nan, %v1710
    %s1712 = scalar_lea.vmem [#allocation5], 128
    %1713 = vst [vmem:[%s1712] sm:$0xff] %v1402
    %1714 = vst [vmem:[%s1712 + $0x8] sm:$0xff] %v1505
    %1715 = vst [vmem:[%s1712 + $0x10] sm:$0xff] %v1608
    %1716 = vst [vmem:[%s1712 + $0x18] sm:$0xff] %v1711
    %v1717 = vld [vmem:[#allocation2] sm:$0xff]
    %v1718 = vld [vmem:[#allocation2 + $0x8] sm:$0xff]
    %v1719 = vld [vmem:[#allocation2 + $0x10] sm:$0xff]
    %v1720 = vld [vmem:[#allocation2 + $0x18] sm:$0xff]
    %v1721 = vmul.f32 %v1717, 4.0
    %v1722 = vmul.f32 %v1718, 4.0
    %v1723 = vmul.f32 %v1719, 4.0
    %v1724 = vmul.f32 %v1720, 4.0
    %v1725 = vand.u32 2147483647, %v1721
    %vm1726 = vcmp.le.f32.partialorder %v1725, 0.7853982
    %vm1727 = vcmp.lt.s32.totalorder %v1721, 0
    %v1728 = vand.u32 %v1721, 2139095040
    %v1729 = vshrl.u32 %v1728, 23
    %v1730 = vsub.s32 %v1729, 127
    %v1731 = vand.u32 2147483647, %v1721
    %v1732 = vand.u32 %v1731, 8388607
    %v1733 = vor.u32 %v1732, 8388608
    %v1734 = vsub.s32 0, %v1733
    %v1735 = vadd.s32 %v1730, 1
    %vm1736 = vcmp.gt.s32.totalorder %v1735, 0
    %v1737 = vsel %vm1736, %v1735, 0
    %v1738 = vshrl.u32 %v1737, 5
    %v1739 = vand.u32 %v1737, 31
    %v1740 = vsub.s32 32, %v1739
    %v1741 = vshrl.u32 683565275, %v1740
    %v1742 = vshll.u32 683565275, %v1739
    %v1743 = vshrl.u32 2475754826, %v1740
    %v1744 = vor.u32 %v1742, %v1743
    %v1745 = vshll.u32 2475754826, %v1739
    %v1746 = vshrl.u32 2131351028, %v1740
    %v1747 = vor.u32 %v1745, %v1746
    %v1748 = vshll.u32 2131351028, %v1739
    %v1749 = vshrl.u32 2102212464, %v1740
    %v1750 = vor.u32 %v1748, %v1749
    %v1751 = vshll.u32 2102212464, %v1739
    %v1752 = vshrl.u32 920167782, %v1740
    %v1753 = vor.u32 %v1751, %v1752
    %v1754 = vshll.u32 920167782, %v1739
    %v1755 = vshrl.u32 1326507024, %v1740
    %v1756 = vor.u32 %v1754, %v1755
    %vm1757 = vcmp.lt.s32.totalorder %v1738, 1
    %vm1758 = vcmp.lt.s32.totalorder %v1738, 2
    %vm1759 = vcmp.lt.s32.totalorder %v1738, 3
    %vm1760 = vcmp.lt.s32.totalorder %v1738, 4
    %v1761 = vsel %vm1757, %v1741, %v1744
    %v1762 = vsel %vm1760, %v1750, 2102212464
    %v1763 = vsel %vm1759, %v1747, %v1762
    %v1764 = vsel %vm1758, %v1761, %v1763
    %v1765 = vsel %vm1757, %v1744, %v1747
    %v1766 = vsel %vm1760, %v1753, 920167782
    %v1767 = vsel %vm1759, %v1750, %v1766
    %v1768 = vsel %vm1758, %v1765, %v1767
    %v1769 = vsel %vm1757, %v1747, %v1750
    %v1770 = vsel %vm1760, %v1756, 1326507024
    %v1771 = vsel %vm1759, %v1753, %v1770
    %v1772 = vsel %vm1758, %v1769, %v1771
    %v1773 = vshll.u32 %v1733, 8
    %v1774 = vmul.u32.u64.compose %v1773, %v1772
    %v1775 = vextract.low.u32 %v1774
    %v1776 = vextract.high.u32 %v1774
    %v1777 = vmul.u32.u64.compose %v1773, %v1768
    %v1778 = vextract.low.u32 %v1777
    %v1779 = vextract.high.u32 %v1777
    %v1780 = vmul.u32 %v1773, %v1764
    %v1781 = vadd.s32 %v1776, %v1778
    %vm1782 = vc.u32 %v1776, %v1778
    %v1783 = vadd.s32 %v1779, 1
    %v1784 = vsel %vm1782, %v1783, %v1779
    %v1785 = vadd.s32 %v1780, %v1784
    %v1786 = vadd.s32 %v1785, 536870912
    %v1787 = vshrl.u32 %v1786, 30
    %v1788 = vshll.u32 %v1787, 30
    %v1789 = vsub.s32 %v1785, %v1788
    %vm1790 = vcmp.lt.s32.totalorder %v1789, 0
    %v1791 = vsub.s32 0, %v1789
    %v1792 = vsel %vm1790, %v1791, %v1789
    %v1793 = vclz %v1792
    %v1794 = vsub.s32 %v1793, 2
    %vm1795 = vcmp.gt.s32.totalorder 0, %v1794
    %v1796 = vsel %vm1795, 0, %v1794
    %v1797 = vsub.s32 32, %v1796
    %v1798 = vshll.u32 %v1789, %v1796
    %v1799 = vshrl.u32 %v1781, %v1797
    %v1800 = vor.u32 %v1798, %v1799
    %v1801 = vsub.s32 4294967266, %v1796
    %v1802 = vadd.s32 %v1801, 127
    %v1803 = vshll.u32 %v1802, 23
    %v1804 = vor.u32 4788187, %v1803
    %v1805 = vand.u32 2147483647, %v1804
    %v1807 = vcvt.s32.f32 %v1800
    %v1808 = vmul.f32 %v1807, %v1805
    %v1809 = vxor.u32 %v1808, 2147483648
    %v1810 = vsel %vm1727, %v1809, %v1808
    %v1811 = vsub.s32 4, %v1787
    %v1812 = vsel %vm1727, %v1811, %v1787
    %v1813 = vsel %vm1726, %v1721, %v1810
    %v1814 = vsel %vm1726, 0, %v1812
    %v1815 = vcosq.f32.pop %v1813
    %v1816 = vsinq.f32.pop %v1813
    %vm1817 = vweird.f32 %v1721
    %v1818 = vadd.s32 %v1814, 3
    %v1819 = vand.u32 %v1818, 3
    %vm1820 = vcmp.lt.s32.totalorder %v1819, 2
    %vm1821 = vcmp.eq.s32.totalorder %v1819, 0
    %v1822 = vxor.u32 %v1816, 2147483648
    %v1823 = vsel %vm1821, %v1815, %v1822
    %vm1824 = vcmp.eq.s32.totalorder %v1819, 2
    %v1825 = vxor.u32 %v1815, 2147483648
    %v1826 = vsel %vm1824, %v1825, %v1816
    %v1827 = vsel %vm1820, %v1823, %v1826
    %v1828 = vsel %vm1817, nan, %v1827
    %v1829 = vand.u32 2147483647, %v1722
    %vm1830 = vcmp.le.f32.partialorder %v1829, 0.7853982
    %vm1831 = vcmp.lt.s32.totalorder %v1722, 0
    %v1832 = vand.u32 %v1722, 2139095040
    %v1833 = vshrl.u32 %v1832, 23
    %v1834 = vsub.s32 %v1833, 127
    %v1835 = vand.u32 2147483647, %v1722
    %v1836 = vand.u32 %v1835, 8388607
    %v1837 = vor.u32 %v1836, 8388608
    %v1838 = vsub.s32 0, %v1837
    %v1839 = vadd.s32 %v1834, 1
    %vm1840 = vcmp.gt.s32.totalorder %v1839, 0
    %v1841 = vsel %vm1840, %v1839, 0
    %v1842 = vshrl.u32 %v1841, 5
    %v1843 = vand.u32 %v1841, 31
    %v1844 = vsub.s32 32, %v1843
    %v1845 = vshrl.u32 683565275, %v1844
    %v1846 = vshll.u32 683565275, %v1843
    %v1847 = vshrl.u32 2475754826, %v1844
    %v1848 = vor.u32 %v1846, %v1847
    %v1849 = vshll.u32 2475754826, %v1843
    %v1850 = vshrl.u32 2131351028, %v1844
    %v1851 = vor.u32 %v1849, %v1850
    %v1852 = vshll.u32 2131351028, %v1843
    %v1853 = vshrl.u32 2102212464, %v1844
    %v1854 = vor.u32 %v1852, %v1853
    %v1855 = vshll.u32 2102212464, %v1843
    %v1856 = vshrl.u32 920167782, %v1844
    %v1857 = vor.u32 %v1855, %v1856
    %v1858 = vshll.u32 920167782, %v1843
    %v1859 = vshrl.u32 1326507024, %v1844
    %v1860 = vor.u32 %v1858, %v1859
    %vm1861 = vcmp.lt.s32.totalorder %v1842, 1
    %vm1862 = vcmp.lt.s32.totalorder %v1842, 2
    %vm1863 = vcmp.lt.s32.totalorder %v1842, 3
    %vm1864 = vcmp.lt.s32.totalorder %v1842, 4
    %v1865 = vsel %vm1861, %v1845, %v1848
    %v1866 = vsel %vm1864, %v1854, 2102212464
    %v1867 = vsel %vm1863, %v1851, %v1866
    %v1868 = vsel %vm1862, %v1865, %v1867
    %v1869 = vsel %vm1861, %v1848, %v1851
    %v1870 = vsel %vm1864, %v1857, 920167782
    %v1871 = vsel %vm1863, %v1854, %v1870
    %v1872 = vsel %vm1862, %v1869, %v1871
    %v1873 = vsel %vm1861, %v1851, %v1854
    %v1874 = vsel %vm1864, %v1860, 1326507024
    %v1875 = vsel %vm1863, %v1857, %v1874
    %v1876 = vsel %vm1862, %v1873, %v1875
    %v1877 = vshll.u32 %v1837, 8
    %v1878 = vmul.u32.u64.compose %v1877, %v1876
    %v1879 = vextract.low.u32 %v1878
    %v1880 = vextract.high.u32 %v1878
    %v1881 = vmul.u32.u64.compose %v1877, %v1872
    %v1882 = vextract.low.u32 %v1881
    %v1883 = vextract.high.u32 %v1881
    %v1884 = vmul.u32 %v1877, %v1868
    %v1885 = vadd.s32 %v1880, %v1882
    %vm1886 = vc.u32 %v1880, %v1882
    %v1887 = vadd.s32 %v1883, 1
    %v1888 = vsel %vm1886, %v1887, %v1883
    %v1889 = vadd.s32 %v1884, %v1888
    %v1890 = vadd.s32 %v1889, 536870912
    %v1891 = vshrl.u32 %v1890, 30
    %v1892 = vshll.u32 %v1891, 30
    %v1893 = vsub.s32 %v1889, %v1892
    %vm1894 = vcmp.lt.s32.totalorder %v1893, 0
    %v1895 = vsub.s32 0, %v1893
    %v1896 = vsel %vm1894, %v1895, %v1893
    %v1897 = vclz %v1896
    %v1898 = vsub.s32 %v1897, 2
    %vm1899 = vcmp.gt.s32.totalorder 0, %v1898
    %v1900 = vsel %vm1899, 0, %v1898
    %v1901 = vsub.s32 32, %v1900
    %v1902 = vshll.u32 %v1893, %v1900
    %v1903 = vshrl.u32 %v1885, %v1901
    %v1904 = vor.u32 %v1902, %v1903
    %v1905 = vsub.s32 4294967266, %v1900
    %v1906 = vadd.s32 %v1905, 127
    %v1907 = vshll.u32 %v1906, 23
    %v1908 = vor.u32 4788187, %v1907
    %v1909 = vand.u32 2147483647, %v1908
    %v1911 = vcvt.s32.f32 %v1904
    %v1912 = vmul.f32 %v1911, %v1909
    %v1913 = vxor.u32 %v1912, 2147483648
    %v1914 = vsel %vm1831, %v1913, %v1912
    %v1915 = vsub.s32 4, %v1891
    %v1916 = vsel %vm1831, %v1915, %v1891
    %v1917 = vsel %vm1830, %v1722, %v1914
    %v1918 = vsel %vm1830, 0, %v1916
    %v1919 = vcosq.f32.pop %v1917
    %v1920 = vsinq.f32.pop %v1917
    %vm1921 = vweird.f32 %v1722
    %v1922 = vadd.s32 %v1918, 3
    %v1923 = vand.u32 %v1922, 3
    %vm1924 = vcmp.lt.s32.totalorder %v1923, 2
    %vm1925 = vcmp.eq.s32.totalorder %v1923, 0
    %v1926 = vxor.u32 %v1920, 2147483648
    %v1927 = vsel %vm1925, %v1919, %v1926
    %vm1928 = vcmp.eq.s32.totalorder %v1923, 2
    %v1929 = vxor.u32 %v1919, 2147483648
    %v1930 = vsel %vm1928, %v1929, %v1920
    %v1931 = vsel %vm1924, %v1927, %v1930
    %v1932 = vsel %vm1921, nan, %v1931
    %v1933 = vand.u32 2147483647, %v1723
    %vm1934 = vcmp.le.f32.partialorder %v1933, 0.7853982
    %vm1935 = vcmp.lt.s32.totalorder %v1723, 0
    %v1936 = vand.u32 %v1723, 2139095040
    %v1937 = vshrl.u32 %v1936, 23
    %v1938 = vsub.s32 %v1937, 127
    %v1939 = vand.u32 2147483647, %v1723
    %v1940 = vand.u32 %v1939, 8388607
    %v1941 = vor.u32 %v1940, 8388608
    %v1942 = vsub.s32 0, %v1941
    %v1943 = vadd.s32 %v1938, 1
    %vm1944 = vcmp.gt.s32.totalorder %v1943, 0
    %v1945 = vsel %vm1944, %v1943, 0
    %v1946 = vshrl.u32 %v1945, 5
    %v1947 = vand.u32 %v1945, 31
    %v1948 = vsub.s32 32, %v1947
    %v1949 = vshrl.u32 683565275, %v1948
    %v1950 = vshll.u32 683565275, %v1947
    %v1951 = vshrl.u32 2475754826, %v1948
    %v1952 = vor.u32 %v1950, %v1951
    %v1953 = vshll.u32 2475754826, %v1947
    %v1954 = vshrl.u32 2131351028, %v1948
    %v1955 = vor.u32 %v1953, %v1954
    %v1956 = vshll.u32 2131351028, %v1947
    %v1957 = vshrl.u32 2102212464, %v1948
    %v1958 = vor.u32 %v1956, %v1957
    %v1959 = vshll.u32 2102212464, %v1947
    %v1960 = vshrl.u32 920167782, %v1948
    %v1961 = vor.u32 %v1959, %v1960
    %v1962 = vshll.u32 920167782, %v1947
    %v1963 = vshrl.u32 1326507024, %v1948
    %v1964 = vor.u32 %v1962, %v1963
    %vm1965 = vcmp.lt.s32.totalorder %v1946, 1
    %vm1966 = vcmp.lt.s32.totalorder %v1946, 2
    %vm1967 = vcmp.lt.s32.totalorder %v1946, 3
    %vm1968 = vcmp.lt.s32.totalorder %v1946, 4
    %v1969 = vsel %vm1965, %v1949, %v1952
    %v1970 = vsel %vm1968, %v1958, 2102212464
    %v1971 = vsel %vm1967, %v1955, %v1970
    %v1972 = vsel %vm1966, %v1969, %v1971
    %v1973 = vsel %vm1965, %v1952, %v1955
    %v1974 = vsel %vm1968, %v1961, 920167782
    %v1975 = vsel %vm1967, %v1958, %v1974
    %v1976 = vsel %vm1966, %v1973, %v1975
    %v1977 = vsel %vm1965, %v1955, %v1958
    %v1978 = vsel %vm1968, %v1964, 1326507024
    %v1979 = vsel %vm1967, %v1961, %v1978
    %v1980 = vsel %vm1966, %v1977, %v1979
    %v1981 = vshll.u32 %v1941, 8
    %v1982 = vmul.u32.u64.compose %v1981, %v1980
    %v1983 = vextract.low.u32 %v1982
    %v1984 = vextract.high.u32 %v1982
    %v1985 = vmul.u32.u64.compose %v1981, %v1976
    %v1986 = vextract.low.u32 %v1985
    %v1987 = vextract.high.u32 %v1985
    %v1988 = vmul.u32 %v1981, %v1972
    %v1989 = vadd.s32 %v1984, %v1986
    %vm1990 = vc.u32 %v1984, %v1986
    %v1991 = vadd.s32 %v1987, 1
    %v1992 = vsel %vm1990, %v1991, %v1987
    %v1993 = vadd.s32 %v1988, %v1992
    %v1994 = vadd.s32 %v1993, 536870912
    %v1995 = vshrl.u32 %v1994, 30
    %v1996 = vshll.u32 %v1995, 30
    %v1997 = vsub.s32 %v1993, %v1996
    %vm1998 = vcmp.lt.s32.totalorder %v1997, 0
    %v1999 = vsub.s32 0, %v1997
    %v2000 = vsel %vm1998, %v1999, %v1997
    %v2001 = vclz %v2000
    %v2002 = vsub.s32 %v2001, 2
    %vm2003 = vcmp.gt.s32.totalorder 0, %v2002
    %v2004 = vsel %vm2003, 0, %v2002
    %v2005 = vsub.s32 32, %v2004
    %v2006 = vshll.u32 %v1997, %v2004
    %v2007 = vshrl.u32 %v1989, %v2005
    %v2008 = vor.u32 %v2006, %v2007
    %v2009 = vsub.s32 4294967266, %v2004
    %v2010 = vadd.s32 %v2009, 127
    %v2011 = vshll.u32 %v2010, 23
    %v2012 = vor.u32 4788187, %v2011
    %v2013 = vand.u32 2147483647, %v2012
    %v2015 = vcvt.s32.f32 %v2008
    %v2016 = vmul.f32 %v2015, %v2013
    %v2017 = vxor.u32 %v2016, 2147483648
    %v2018 = vsel %vm1935, %v2017, %v2016
    %v2019 = vsub.s32 4, %v1995
    %v2020 = vsel %vm1935, %v2019, %v1995
    %v2021 = vsel %vm1934, %v1723, %v2018
    %v2022 = vsel %vm1934, 0, %v2020
    %v2023 = vcosq.f32.pop %v2021
    %v2024 = vsinq.f32.pop %v2021
    %vm2025 = vweird.f32 %v1723
    %v2026 = vadd.s32 %v2022, 3
    %v2027 = vand.u32 %v2026, 3
    %vm2028 = vcmp.lt.s32.totalorder %v2027, 2
    %vm2029 = vcmp.eq.s32.totalorder %v2027, 0
    %v2030 = vxor.u32 %v2024, 2147483648
    %v2031 = vsel %vm2029, %v2023, %v2030
    %vm2032 = vcmp.eq.s32.totalorder %v2027, 2
    %v2033 = vxor.u32 %v2023, 2147483648
    %v2034 = vsel %vm2032, %v2033, %v2024
    %v2035 = vsel %vm2028, %v2031, %v2034
    %v2036 = vsel %vm2025, nan, %v2035
    %v2037 = vand.u32 2147483647, %v1724
    %vm2038 = vcmp.le.f32.partialorder %v2037, 0.7853982
    %vm2039 = vcmp.lt.s32.totalorder %v1724, 0
    %v2040 = vand.u32 %v1724, 2139095040
    %v2041 = vshrl.u32 %v2040, 23
    %v2042 = vsub.s32 %v2041, 127
    %v2043 = vand.u32 2147483647, %v1724
    %v2044 = vand.u32 %v2043, 8388607
    %v2045 = vor.u32 %v2044, 8388608
    %v2046 = vsub.s32 0, %v2045
    %v2047 = vadd.s32 %v2042, 1
    %vm2048 = vcmp.gt.s32.totalorder %v2047, 0
    %v2049 = vsel %vm2048, %v2047, 0
    %v2050 = vshrl.u32 %v2049, 5
    %v2051 = vand.u32 %v2049, 31
    %v2052 = vsub.s32 32, %v2051
    %v2053 = vshrl.u32 683565275, %v2052
    %v2054 = vshll.u32 683565275, %v2051
    %v2055 = vshrl.u32 2475754826, %v2052
    %v2056 = vor.u32 %v2054, %v2055
    %v2057 = vshll.u32 2475754826, %v2051
    %v2058 = vshrl.u32 2131351028, %v2052
    %v2059 = vor.u32 %v2057, %v2058
    %v2060 = vshll.u32 2131351028, %v2051
    %v2061 = vshrl.u32 2102212464, %v2052
    %v2062 = vor.u32 %v2060, %v2061
    %v2063 = vshll.u32 2102212464, %v2051
    %v2064 = vshrl.u32 920167782, %v2052
    %v2065 = vor.u32 %v2063, %v2064
    %v2066 = vshll.u32 920167782, %v2051
    %v2067 = vshrl.u32 1326507024, %v2052
    %v2068 = vor.u32 %v2066, %v2067
    %vm2069 = vcmp.lt.s32.totalorder %v2050, 1
    %vm2070 = vcmp.lt.s32.totalorder %v2050, 2
    %vm2071 = vcmp.lt.s32.totalorder %v2050, 3
    %vm2072 = vcmp.lt.s32.totalorder %v2050, 4
    %v2073 = vsel %vm2069, %v2053, %v2056
    %v2074 = vsel %vm2072, %v2062, 2102212464
    %v2075 = vsel %vm2071, %v2059, %v2074
    %v2076 = vsel %vm2070, %v2073, %v2075
    %v2077 = vsel %vm2069, %v2056, %v2059
    %v2078 = vsel %vm2072, %v2065, 920167782
    %v2079 = vsel %vm2071, %v2062, %v2078
    %v2080 = vsel %vm2070, %v2077, %v2079
    %v2081 = vsel %vm2069, %v2059, %v2062
    %v2082 = vsel %vm2072, %v2068, 1326507024
    %v2083 = vsel %vm2071, %v2065, %v2082
    %v2084 = vsel %vm2070, %v2081, %v2083
    %v2085 = vshll.u32 %v2045, 8
    %v2086 = vmul.u32.u64.compose %v2085, %v2084
    %v2087 = vextract.low.u32 %v2086
    %v2088 = vextract.high.u32 %v2086
    %v2089 = vmul.u32.u64.compose %v2085, %v2080
    %v2090 = vextract.low.u32 %v2089
    %v2091 = vextract.high.u32 %v2089
    %v2092 = vmul.u32 %v2085, %v2076
    %v2093 = vadd.s32 %v2088, %v2090
    %vm2094 = vc.u32 %v2088, %v2090
    %v2095 = vadd.s32 %v2091, 1
    %v2096 = vsel %vm2094, %v2095, %v2091
    %v2097 = vadd.s32 %v2092, %v2096
    %v2098 = vadd.s32 %v2097, 536870912
    %v2099 = vshrl.u32 %v2098, 30
    %v2100 = vshll.u32 %v2099, 30
    %v2101 = vsub.s32 %v2097, %v2100
    %vm2102 = vcmp.lt.s32.totalorder %v2101, 0
    %v2103 = vsub.s32 0, %v2101
    %v2104 = vsel %vm2102, %v2103, %v2101
    %v2105 = vclz %v2104
    %v2106 = vsub.s32 %v2105, 2
    %vm2107 = vcmp.gt.s32.totalorder 0, %v2106
    %v2108 = vsel %vm2107, 0, %v2106
    %v2109 = vsub.s32 32, %v2108
    %v2110 = vshll.u32 %v2101, %v2108
    %v2111 = vshrl.u32 %v2093, %v2109
    %v2112 = vor.u32 %v2110, %v2111
    %v2113 = vsub.s32 4294967266, %v2108
    %v2114 = vadd.s32 %v2113, 127
    %v2115 = vshll.u32 %v2114, 23
    %v2116 = vor.u32 4788187, %v2115
    %v2117 = vand.u32 2147483647, %v2116
    %v2119 = vcvt.s32.f32 %v2112
    %v2120 = vmul.f32 %v2119, %v2117
    %v2121 = vxor.u32 %v2120, 2147483648
    %v2122 = vsel %vm2039, %v2121, %v2120
    %v2123 = vsub.s32 4, %v2099
    %v2124 = vsel %vm2039, %v2123, %v2099
    %v2125 = vsel %vm2038, %v1724, %v2122
    %v2126 = vsel %vm2038, 0, %v2124
    %v2127 = vcosq.f32.pop %v2125
    %v2128 = vsinq.f32.pop %v2125
    %vm2129 = vweird.f32 %v1724
    %v2130 = vadd.s32 %v2126, 3
    %v2131 = vand.u32 %v2130, 3
    %vm2132 = vcmp.lt.s32.totalorder %v2131, 2
    %vm2133 = vcmp.eq.s32.totalorder %v2131, 0
    %v2134 = vxor.u32 %v2128, 2147483648
    %v2135 = vsel %vm2133, %v2127, %v2134
    %vm2136 = vcmp.eq.s32.totalorder %v2131, 2
    %v2137 = vxor.u32 %v2127, 2147483648
    %v2138 = vsel %vm2136, %v2137, %v2128
    %v2139 = vsel %vm2132, %v2135, %v2138
    %v2140 = vsel %vm2129, nan, %v2139
    %s2141 = scalar_lea.vmem [#allocation5], 160
    %2142 = vst [vmem:[%s2141] sm:$0xff] %v1828
    %2143 = vst [vmem:[%s2141 + $0x8] sm:$0xff] %v1932
    %2144 = vst [vmem:[%s2141 + $0x10] sm:$0xff] %v2036
    %2145 = vst [vmem:[%s2141 + $0x18] sm:$0xff] %v2140
    %v2146 = vand.u32 2147483647, %v1721
    %vm2147 = vcmp.le.f32.partialorder %v2146, 0.7853982
    %vm2148 = vcmp.lt.s32.totalorder %v1721, 0
    %v2149 = vand.u32 %v1721, 2139095040
    %v2150 = vshrl.u32 %v2149, 23
    %v2151 = vsub.s32 %v2150, 127
    %v2152 = vand.u32 2147483647, %v1721
    %v2153 = vand.u32 %v2152, 8388607
    %v2154 = vor.u32 %v2153, 8388608
    %v2155 = vsub.s32 0, %v2154
    %v2156 = vadd.s32 %v2151, 1
    %vm2157 = vcmp.gt.s32.totalorder %v2156, 0
    %v2158 = vsel %vm2157, %v2156, 0
    %v2159 = vshrl.u32 %v2158, 5
    %v2160 = vand.u32 %v2158, 31
    %v2161 = vsub.s32 32, %v2160
    %v2162 = vshrl.u32 683565275, %v2161
    %v2163 = vshll.u32 683565275, %v2160
    %v2164 = vshrl.u32 2475754826, %v2161
    %v2165 = vor.u32 %v2163, %v2164
    %v2166 = vshll.u32 2475754826, %v2160
    %v2167 = vshrl.u32 2131351028, %v2161
    %v2168 = vor.u32 %v2166, %v2167
    %v2169 = vshll.u32 2131351028, %v2160
    %v2170 = vshrl.u32 2102212464, %v2161
    %v2171 = vor.u32 %v2169, %v2170
    %v2172 = vshll.u32 2102212464, %v2160
    %v2173 = vshrl.u32 920167782, %v2161
    %v2174 = vor.u32 %v2172, %v2173
    %v2175 = vshll.u32 920167782, %v2160
    %v2176 = vshrl.u32 1326507024, %v2161
    %v2177 = vor.u32 %v2175, %v2176
    %vm2178 = vcmp.lt.s32.totalorder %v2159, 1
    %vm2179 = vcmp.lt.s32.totalorder %v2159, 2
    %vm2180 = vcmp.lt.s32.totalorder %v2159, 3
    %vm2181 = vcmp.lt.s32.totalorder %v2159, 4
    %v2182 = vsel %vm2178, %v2162, %v2165
    %v2183 = vsel %vm2181, %v2171, 2102212464
    %v2184 = vsel %vm2180, %v2168, %v2183
    %v2185 = vsel %vm2179, %v2182, %v2184
    %v2186 = vsel %vm2178, %v2165, %v2168
    %v2187 = vsel %vm2181, %v2174, 920167782
    %v2188 = vsel %vm2180, %v2171, %v2187
    %v2189 = vsel %vm2179, %v2186, %v2188
    %v2190 = vsel %vm2178, %v2168, %v2171
    %v2191 = vsel %vm2181, %v2177, 1326507024
    %v2192 = vsel %vm2180, %v2174, %v2191
    %v2193 = vsel %vm2179, %v2190, %v2192
    %v2194 = vshll.u32 %v2154, 8
    %v2195 = vmul.u32.u64.compose %v2194, %v2193
    %v2196 = vextract.low.u32 %v2195
    %v2197 = vextract.high.u32 %v2195
    %v2198 = vmul.u32.u64.compose %v2194, %v2189
    %v2199 = vextract.low.u32 %v2198
    %v2200 = vextract.high.u32 %v2198
    %v2201 = vmul.u32 %v2194, %v2185
    %v2202 = vadd.s32 %v2197, %v2199
    %vm2203 = vc.u32 %v2197, %v2199
    %v2204 = vadd.s32 %v2200, 1
    %v2205 = vsel %vm2203, %v2204, %v2200
    %v2206 = vadd.s32 %v2201, %v2205
    %v2207 = vadd.s32 %v2206, 536870912
    %v2208 = vshrl.u32 %v2207, 30
    %v2209 = vshll.u32 %v2208, 30
    %v2210 = vsub.s32 %v2206, %v2209
    %vm2211 = vcmp.lt.s32.totalorder %v2210, 0
    %v2212 = vsub.s32 0, %v2210
    %v2213 = vsel %vm2211, %v2212, %v2210
    %v2214 = vclz %v2213
    %v2215 = vsub.s32 %v2214, 2
    %vm2216 = vcmp.gt.s32.totalorder 0, %v2215
    %v2217 = vsel %vm2216, 0, %v2215
    %v2218 = vsub.s32 32, %v2217
    %v2219 = vshll.u32 %v2210, %v2217
    %v2220 = vshrl.u32 %v2202, %v2218
    %v2221 = vor.u32 %v2219, %v2220
    %v2222 = vsub.s32 4294967266, %v2217
    %v2223 = vadd.s32 %v2222, 127
    %v2224 = vshll.u32 %v2223, 23
    %v2225 = vor.u32 4788187, %v2224
    %v2226 = vand.u32 2147483647, %v2225
    %v2228 = vcvt.s32.f32 %v2221
    %v2229 = vmul.f32 %v2228, %v2226
    %v2230 = vxor.u32 %v2229, 2147483648
    %v2231 = vsel %vm2148, %v2230, %v2229
    %v2232 = vsub.s32 4, %v2208
    %v2233 = vsel %vm2148, %v2232, %v2208
    %v2234 = vsel %vm2147, %v1721, %v2231
    %v2235 = vsel %vm2147, 0, %v2233
    %v2236 = vcosq.f32.pop %v2234
    %v2237 = vsinq.f32.pop %v2234
    %vm2238 = vweird.f32 %v1721
    %v2239 = vand.u32 %v2235, 3
    %vm2240 = vcmp.lt.s32.totalorder %v2239, 2
    %vm2241 = vcmp.eq.s32.totalorder %v2239, 0
    %v2242 = vxor.u32 %v2237, 2147483648
    %v2243 = vsel %vm2241, %v2236, %v2242
    %vm2244 = vcmp.eq.s32.totalorder %v2239, 2
    %v2245 = vxor.u32 %v2236, 2147483648
    %v2246 = vsel %vm2244, %v2245, %v2237
    %v2247 = vsel %vm2240, %v2243, %v2246
    %v2248 = vsel %vm2238, nan, %v2247
    %v2249 = vand.u32 2147483647, %v1722
    %vm2250 = vcmp.le.f32.partialorder %v2249, 0.7853982
    %vm2251 = vcmp.lt.s32.totalorder %v1722, 0
    %v2252 = vand.u32 %v1722, 2139095040
    %v2253 = vshrl.u32 %v2252, 23
    %v2254 = vsub.s32 %v2253, 127
    %v2255 = vand.u32 2147483647, %v1722
    %v2256 = vand.u32 %v2255, 8388607
    %v2257 = vor.u32 %v2256, 8388608
    %v2258 = vsub.s32 0, %v2257
    %v2259 = vadd.s32 %v2254, 1
    %vm2260 = vcmp.gt.s32.totalorder %v2259, 0
    %v2261 = vsel %vm2260, %v2259, 0
    %v2262 = vshrl.u32 %v2261, 5
    %v2263 = vand.u32 %v2261, 31
    %v2264 = vsub.s32 32, %v2263
    %v2265 = vshrl.u32 683565275, %v2264
    %v2266 = vshll.u32 683565275, %v2263
    %v2267 = vshrl.u32 2475754826, %v2264
    %v2268 = vor.u32 %v2266, %v2267
    %v2269 = vshll.u32 2475754826, %v2263
    %v2270 = vshrl.u32 2131351028, %v2264
    %v2271 = vor.u32 %v2269, %v2270
    %v2272 = vshll.u32 2131351028, %v2263
    %v2273 = vshrl.u32 2102212464, %v2264
    %v2274 = vor.u32 %v2272, %v2273
    %v2275 = vshll.u32 2102212464, %v2263
    %v2276 = vshrl.u32 920167782, %v2264
    %v2277 = vor.u32 %v2275, %v2276
    %v2278 = vshll.u32 920167782, %v2263
    %v2279 = vshrl.u32 1326507024, %v2264
    %v2280 = vor.u32 %v2278, %v2279
    %vm2281 = vcmp.lt.s32.totalorder %v2262, 1
    %vm2282 = vcmp.lt.s32.totalorder %v2262, 2
    %vm2283 = vcmp.lt.s32.totalorder %v2262, 3
    %vm2284 = vcmp.lt.s32.totalorder %v2262, 4
    %v2285 = vsel %vm2281, %v2265, %v2268
    %v2286 = vsel %vm2284, %v2274, 2102212464
    %v2287 = vsel %vm2283, %v2271, %v2286
    %v2288 = vsel %vm2282, %v2285, %v2287
    %v2289 = vsel %vm2281, %v2268, %v2271
    %v2290 = vsel %vm2284, %v2277, 920167782
    %v2291 = vsel %vm2283, %v2274, %v2290
    %v2292 = vsel %vm2282, %v2289, %v2291
    %v2293 = vsel %vm2281, %v2271, %v2274
    %v2294 = vsel %vm2284, %v2280, 1326507024
    %v2295 = vsel %vm2283, %v2277, %v2294
    %v2296 = vsel %vm2282, %v2293, %v2295
    %v2297 = vshll.u32 %v2257, 8
    %v2298 = vmul.u32.u64.compose %v2297, %v2296
    %v2299 = vextract.low.u32 %v2298
    %v2300 = vextract.high.u32 %v2298
    %v2301 = vmul.u32.u64.compose %v2297, %v2292
    %v2302 = vextract.low.u32 %v2301
    %v2303 = vextract.high.u32 %v2301
    %v2304 = vmul.u32 %v2297, %v2288
    %v2305 = vadd.s32 %v2300, %v2302
    %vm2306 = vc.u32 %v2300, %v2302
    %v2307 = vadd.s32 %v2303, 1
    %v2308 = vsel %vm2306, %v2307, %v2303
    %v2309 = vadd.s32 %v2304, %v2308
    %v2310 = vadd.s32 %v2309, 536870912
    %v2311 = vshrl.u32 %v2310, 30
    %v2312 = vshll.u32 %v2311, 30
    %v2313 = vsub.s32 %v2309, %v2312
    %vm2314 = vcmp.lt.s32.totalorder %v2313, 0
    %v2315 = vsub.s32 0, %v2313
    %v2316 = vsel %vm2314, %v2315, %v2313
    %v2317 = vclz %v2316
    %v2318 = vsub.s32 %v2317, 2
    %vm2319 = vcmp.gt.s32.totalorder 0, %v2318
    %v2320 = vsel %vm2319, 0, %v2318
    %v2321 = vsub.s32 32, %v2320
    %v2322 = vshll.u32 %v2313, %v2320
    %v2323 = vshrl.u32 %v2305, %v2321
    %v2324 = vor.u32 %v2322, %v2323
    %v2325 = vsub.s32 4294967266, %v2320
    %v2326 = vadd.s32 %v2325, 127
    %v2327 = vshll.u32 %v2326, 23
    %v2328 = vor.u32 4788187, %v2327
    %v2329 = vand.u32 2147483647, %v2328
    %v2331 = vcvt.s32.f32 %v2324
    %v2332 = vmul.f32 %v2331, %v2329
    %v2333 = vxor.u32 %v2332, 2147483648
    %v2334 = vsel %vm2251, %v2333, %v2332
    %v2335 = vsub.s32 4, %v2311
    %v2336 = vsel %vm2251, %v2335, %v2311
    %v2337 = vsel %vm2250, %v1722, %v2334
    %v2338 = vsel %vm2250, 0, %v2336
    %v2339 = vcosq.f32.pop %v2337
    %v2340 = vsinq.f32.pop %v2337
    %vm2341 = vweird.f32 %v1722
    %v2342 = vand.u32 %v2338, 3
    %vm2343 = vcmp.lt.s32.totalorder %v2342, 2
    %vm2344 = vcmp.eq.s32.totalorder %v2342, 0
    %v2345 = vxor.u32 %v2340, 2147483648
    %v2346 = vsel %vm2344, %v2339, %v2345
    %vm2347 = vcmp.eq.s32.totalorder %v2342, 2
    %v2348 = vxor.u32 %v2339, 2147483648
    %v2349 = vsel %vm2347, %v2348, %v2340
    %v2350 = vsel %vm2343, %v2346, %v2349
    %v2351 = vsel %vm2341, nan, %v2350
    %v2352 = vand.u32 2147483647, %v1723
    %vm2353 = vcmp.le.f32.partialorder %v2352, 0.7853982
    %vm2354 = vcmp.lt.s32.totalorder %v1723, 0
    %v2355 = vand.u32 %v1723, 2139095040
    %v2356 = vshrl.u32 %v2355, 23
    %v2357 = vsub.s32 %v2356, 127
    %v2358 = vand.u32 2147483647, %v1723
    %v2359 = vand.u32 %v2358, 8388607
    %v2360 = vor.u32 %v2359, 8388608
    %v2361 = vsub.s32 0, %v2360
    %v2362 = vadd.s32 %v2357, 1
    %vm2363 = vcmp.gt.s32.totalorder %v2362, 0
    %v2364 = vsel %vm2363, %v2362, 0
    %v2365 = vshrl.u32 %v2364, 5
    %v2366 = vand.u32 %v2364, 31
    %v2367 = vsub.s32 32, %v2366
    %v2368 = vshrl.u32 683565275, %v2367
    %v2369 = vshll.u32 683565275, %v2366
    %v2370 = vshrl.u32 2475754826, %v2367
    %v2371 = vor.u32 %v2369, %v2370
    %v2372 = vshll.u32 2475754826, %v2366
    %v2373 = vshrl.u32 2131351028, %v2367
    %v2374 = vor.u32 %v2372, %v2373
    %v2375 = vshll.u32 2131351028, %v2366
    %v2376 = vshrl.u32 2102212464, %v2367
    %v2377 = vor.u32 %v2375, %v2376
    %v2378 = vshll.u32 2102212464, %v2366
    %v2379 = vshrl.u32 920167782, %v2367
    %v2380 = vor.u32 %v2378, %v2379
    %v2381 = vshll.u32 920167782, %v2366
    %v2382 = vshrl.u32 1326507024, %v2367
    %v2383 = vor.u32 %v2381, %v2382
    %vm2384 = vcmp.lt.s32.totalorder %v2365, 1
    %vm2385 = vcmp.lt.s32.totalorder %v2365, 2
    %vm2386 = vcmp.lt.s32.totalorder %v2365, 3
    %vm2387 = vcmp.lt.s32.totalorder %v2365, 4
    %v2388 = vsel %vm2384, %v2368, %v2371
    %v2389 = vsel %vm2387, %v2377, 2102212464
    %v2390 = vsel %vm2386, %v2374, %v2389
    %v2391 = vsel %vm2385, %v2388, %v2390
    %v2392 = vsel %vm2384, %v2371, %v2374
    %v2393 = vsel %vm2387, %v2380, 920167782
    %v2394 = vsel %vm2386, %v2377, %v2393
    %v2395 = vsel %vm2385, %v2392, %v2394
    %v2396 = vsel %vm2384, %v2374, %v2377
    %v2397 = vsel %vm2387, %v2383, 1326507024
    %v2398 = vsel %vm2386, %v2380, %v2397
    %v2399 = vsel %vm2385, %v2396, %v2398
    %v2400 = vshll.u32 %v2360, 8
    %v2401 = vmul.u32.u64.compose %v2400, %v2399
    %v2402 = vextract.low.u32 %v2401
    %v2403 = vextract.high.u32 %v2401
    %v2404 = vmul.u32.u64.compose %v2400, %v2395
    %v2405 = vextract.low.u32 %v2404
    %v2406 = vextract.high.u32 %v2404
    %v2407 = vmul.u32 %v2400, %v2391
    %v2408 = vadd.s32 %v2403, %v2405
    %vm2409 = vc.u32 %v2403, %v2405
    %v2410 = vadd.s32 %v2406, 1
    %v2411 = vsel %vm2409, %v2410, %v2406
    %v2412 = vadd.s32 %v2407, %v2411
    %v2413 = vadd.s32 %v2412, 536870912
    %v2414 = vshrl.u32 %v2413, 30
    %v2415 = vshll.u32 %v2414, 30
    %v2416 = vsub.s32 %v2412, %v2415
    %vm2417 = vcmp.lt.s32.totalorder %v2416, 0
    %v2418 = vsub.s32 0, %v2416
    %v2419 = vsel %vm2417, %v2418, %v2416
    %v2420 = vclz %v2419
    %v2421 = vsub.s32 %v2420, 2
    %vm2422 = vcmp.gt.s32.totalorder 0, %v2421
    %v2423 = vsel %vm2422, 0, %v2421
    %v2424 = vsub.s32 32, %v2423
    %v2425 = vshll.u32 %v2416, %v2423
    %v2426 = vshrl.u32 %v2408, %v2424
    %v2427 = vor.u32 %v2425, %v2426
    %v2428 = vsub.s32 4294967266, %v2423
    %v2429 = vadd.s32 %v2428, 127
    %v2430 = vshll.u32 %v2429, 23
    %v2431 = vor.u32 4788187, %v2430
    %v2432 = vand.u32 2147483647, %v2431
    %v2434 = vcvt.s32.f32 %v2427
    %v2435 = vmul.f32 %v2434, %v2432
    %v2436 = vxor.u32 %v2435, 2147483648
    %v2437 = vsel %vm2354, %v2436, %v2435
    %v2438 = vsub.s32 4, %v2414
    %v2439 = vsel %vm2354, %v2438, %v2414
    %v2440 = vsel %vm2353, %v1723, %v2437
    %v2441 = vsel %vm2353, 0, %v2439
    %v2442 = vcosq.f32.pop %v2440
    %v2443 = vsinq.f32.pop %v2440
    %vm2444 = vweird.f32 %v1723
    %v2445 = vand.u32 %v2441, 3
    %vm2446 = vcmp.lt.s32.totalorder %v2445, 2
    %vm2447 = vcmp.eq.s32.totalorder %v2445, 0
    %v2448 = vxor.u32 %v2443, 2147483648
    %v2449 = vsel %vm2447, %v2442, %v2448
    %vm2450 = vcmp.eq.s32.totalorder %v2445, 2
    %v2451 = vxor.u32 %v2442, 2147483648
    %v2452 = vsel %vm2450, %v2451, %v2443
    %v2453 = vsel %vm2446, %v2449, %v2452
    %v2454 = vsel %vm2444, nan, %v2453
    %v2455 = vand.u32 2147483647, %v1724
    %vm2456 = vcmp.le.f32.partialorder %v2455, 0.7853982
    %vm2457 = vcmp.lt.s32.totalorder %v1724, 0
    %v2458 = vand.u32 %v1724, 2139095040
    %v2459 = vshrl.u32 %v2458, 23
    %v2460 = vsub.s32 %v2459, 127
    %v2461 = vand.u32 2147483647, %v1724
    %v2462 = vand.u32 %v2461, 8388607
    %v2463 = vor.u32 %v2462, 8388608
    %v2464 = vsub.s32 0, %v2463
    %v2465 = vadd.s32 %v2460, 1
    %vm2466 = vcmp.gt.s32.totalorder %v2465, 0
    %v2467 = vsel %vm2466, %v2465, 0
    %v2468 = vshrl.u32 %v2467, 5
    %v2469 = vand.u32 %v2467, 31
    %v2470 = vsub.s32 32, %v2469
    %v2471 = vshrl.u32 683565275, %v2470
    %v2472 = vshll.u32 683565275, %v2469
    %v2473 = vshrl.u32 2475754826, %v2470
    %v2474 = vor.u32 %v2472, %v2473
    %v2475 = vshll.u32 2475754826, %v2469
    %v2476 = vshrl.u32 2131351028, %v2470
    %v2477 = vor.u32 %v2475, %v2476
    %v2478 = vshll.u32 2131351028, %v2469
    %v2479 = vshrl.u32 2102212464, %v2470
    %v2480 = vor.u32 %v2478, %v2479
    %v2481 = vshll.u32 2102212464, %v2469
    %v2482 = vshrl.u32 920167782, %v2470
    %v2483 = vor.u32 %v2481, %v2482
    %v2484 = vshll.u32 920167782, %v2469
    %v2485 = vshrl.u32 1326507024, %v2470
    %v2486 = vor.u32 %v2484, %v2485
    %vm2487 = vcmp.lt.s32.totalorder %v2468, 1
    %vm2488 = vcmp.lt.s32.totalorder %v2468, 2
    %vm2489 = vcmp.lt.s32.totalorder %v2468, 3
    %vm2490 = vcmp.lt.s32.totalorder %v2468, 4
    %v2491 = vsel %vm2487, %v2471, %v2474
    %v2492 = vsel %vm2490, %v2480, 2102212464
    %v2493 = vsel %vm2489, %v2477, %v2492
    %v2494 = vsel %vm2488, %v2491, %v2493
    %v2495 = vsel %vm2487, %v2474, %v2477
    %v2496 = vsel %vm2490, %v2483, 920167782
    %v2497 = vsel %vm2489, %v2480, %v2496
    %v2498 = vsel %vm2488, %v2495, %v2497
    %v2499 = vsel %vm2487, %v2477, %v2480
    %v2500 = vsel %vm2490, %v2486, 1326507024
    %v2501 = vsel %vm2489, %v2483, %v2500
    %v2502 = vsel %vm2488, %v2499, %v2501
    %v2503 = vshll.u32 %v2463, 8
    %v2504 = vmul.u32.u64.compose %v2503, %v2502
    %v2505 = vextract.low.u32 %v2504
    %v2506 = vextract.high.u32 %v2504
    %v2507 = vmul.u32.u64.compose %v2503, %v2498
    %v2508 = vextract.low.u32 %v2507
    %v2509 = vextract.high.u32 %v2507
    %v2510 = vmul.u32 %v2503, %v2494
    %v2511 = vadd.s32 %v2506, %v2508
    %vm2512 = vc.u32 %v2506, %v2508
    %v2513 = vadd.s32 %v2509, 1
    %v2514 = vsel %vm2512, %v2513, %v2509
    %v2515 = vadd.s32 %v2510, %v2514
    %v2516 = vadd.s32 %v2515, 536870912
    %v2517 = vshrl.u32 %v2516, 30
    %v2518 = vshll.u32 %v2517, 30
    %v2519 = vsub.s32 %v2515, %v2518
    %vm2520 = vcmp.lt.s32.totalorder %v2519, 0
    %v2521 = vsub.s32 0, %v2519
    %v2522 = vsel %vm2520, %v2521, %v2519
    %v2523 = vclz %v2522
    %v2524 = vsub.s32 %v2523, 2
    %vm2525 = vcmp.gt.s32.totalorder 0, %v2524
    %v2526 = vsel %vm2525, 0, %v2524
    %v2527 = vsub.s32 32, %v2526
    %v2528 = vshll.u32 %v2519, %v2526
    %v2529 = vshrl.u32 %v2511, %v2527
    %v2530 = vor.u32 %v2528, %v2529
    %v2531 = vsub.s32 4294967266, %v2526
    %v2532 = vadd.s32 %v2531, 127
    %v2533 = vshll.u32 %v2532, 23
    %v2534 = vor.u32 4788187, %v2533
    %v2535 = vand.u32 2147483647, %v2534
    %v2537 = vcvt.s32.f32 %v2530
    %v2538 = vmul.f32 %v2537, %v2535
    %v2539 = vxor.u32 %v2538, 2147483648
    %v2540 = vsel %vm2457, %v2539, %v2538
    %v2541 = vsub.s32 4, %v2517
    %v2542 = vsel %vm2457, %v2541, %v2517
    %v2543 = vsel %vm2456, %v1724, %v2540
    %v2544 = vsel %vm2456, 0, %v2542
    %v2545 = vcosq.f32.pop %v2543
    %v2546 = vsinq.f32.pop %v2543
    %vm2547 = vweird.f32 %v1724
    %v2548 = vand.u32 %v2544, 3
    %vm2549 = vcmp.lt.s32.totalorder %v2548, 2
    %vm2550 = vcmp.eq.s32.totalorder %v2548, 0
    %v2551 = vxor.u32 %v2546, 2147483648
    %v2552 = vsel %vm2550, %v2545, %v2551
    %vm2553 = vcmp.eq.s32.totalorder %v2548, 2
    %v2554 = vxor.u32 %v2545, 2147483648
    %v2555 = vsel %vm2553, %v2554, %v2546
    %v2556 = vsel %vm2549, %v2552, %v2555
    %v2557 = vsel %vm2547, nan, %v2556
    %s2558 = scalar_lea.vmem [#allocation5], 192
    %2559 = vst [vmem:[%s2558] sm:$0xff] %v2248
    %2560 = vst [vmem:[%s2558 + $0x8] sm:$0xff] %v2351
    %2561 = vst [vmem:[%s2558 + $0x10] sm:$0xff] %v2454
    %2562 = vst [vmem:[%s2558 + $0x18] sm:$0xff] %v2557
    %v2563 = vld [vmem:[#allocation2] sm:$0xff]
    %v2564 = vld [vmem:[#allocation2 + $0x8] sm:$0xff]
    %v2565 = vld [vmem:[#allocation2 + $0x10] sm:$0xff]
    %v2566 = vld [vmem:[#allocation2 + $0x18] sm:$0xff]
    %v2567 = vmul.f32 %v2563, 8.0
    %v2568 = vmul.f32 %v2564, 8.0
    %v2569 = vmul.f32 %v2565, 8.0
    %v2570 = vmul.f32 %v2566, 8.0
    %v2571 = vand.u32 2147483647, %v2567
    %vm2572 = vcmp.le.f32.partialorder %v2571, 0.7853982
    %vm2573 = vcmp.lt.s32.totalorder %v2567, 0
    %v2574 = vand.u32 %v2567, 2139095040
    %v2575 = vshrl.u32 %v2574, 23
    %v2576 = vsub.s32 %v2575, 127
    %v2577 = vand.u32 2147483647, %v2567
    %v2578 = vand.u32 %v2577, 8388607
    %v2579 = vor.u32 %v2578, 8388608
    %v2580 = vsub.s32 0, %v2579
    %v2581 = vadd.s32 %v2576, 1
    %vm2582 = vcmp.gt.s32.totalorder %v2581, 0
    %v2583 = vsel %vm2582, %v2581, 0
    %v2584 = vshrl.u32 %v2583, 5
    %v2585 = vand.u32 %v2583, 31
    %v2586 = vsub.s32 32, %v2585
    %v2587 = vshrl.u32 683565275, %v2586
    %v2588 = vshll.u32 683565275, %v2585
    %v2589 = vshrl.u32 2475754826, %v2586
    %v2590 = vor.u32 %v2588, %v2589
    %v2591 = vshll.u32 2475754826, %v2585
    %v2592 = vshrl.u32 2131351028, %v2586
    %v2593 = vor.u32 %v2591, %v2592
    %v2594 = vshll.u32 2131351028, %v2585
    %v2595 = vshrl.u32 2102212464, %v2586
    %v2596 = vor.u32 %v2594, %v2595
    %v2597 = vshll.u32 2102212464, %v2585
    %v2598 = vshrl.u32 920167782, %v2586
    %v2599 = vor.u32 %v2597, %v2598
    %v2600 = vshll.u32 920167782, %v2585
    %v2601 = vshrl.u32 1326507024, %v2586
    %v2602 = vor.u32 %v2600, %v2601
    %vm2603 = vcmp.lt.s32.totalorder %v2584, 1
    %vm2604 = vcmp.lt.s32.totalorder %v2584, 2
    %vm2605 = vcmp.lt.s32.totalorder %v2584, 3
    %vm2606 = vcmp.lt.s32.totalorder %v2584, 4
    %v2607 = vsel %vm2603, %v2587, %v2590
    %v2608 = vsel %vm2606, %v2596, 2102212464
    %v2609 = vsel %vm2605, %v2593, %v2608
    %v2610 = vsel %vm2604, %v2607, %v2609
    %v2611 = vsel %vm2603, %v2590, %v2593
    %v2612 = vsel %vm2606, %v2599, 920167782
    %v2613 = vsel %vm2605, %v2596, %v2612
    %v2614 = vsel %vm2604, %v2611, %v2613
    %v2615 = vsel %vm2603, %v2593, %v2596
    %v2616 = vsel %vm2606, %v2602, 1326507024
    %v2617 = vsel %vm2605, %v2599, %v2616
    %v2618 = vsel %vm2604, %v2615, %v2617
    %v2619 = vshll.u32 %v2579, 8
    %v2620 = vmul.u32.u64.compose %v2619, %v2618
    %v2621 = vextract.low.u32 %v2620
    %v2622 = vextract.high.u32 %v2620
    %v2623 = vmul.u32.u64.compose %v2619, %v2614
    %v2624 = vextract.low.u32 %v2623
    %v2625 = vextract.high.u32 %v2623
    %v2626 = vmul.u32 %v2619, %v2610
    %v2627 = vadd.s32 %v2622, %v2624
    %vm2628 = vc.u32 %v2622, %v2624
    %v2629 = vadd.s32 %v2625, 1
    %v2630 = vsel %vm2628, %v2629, %v2625
    %v2631 = vadd.s32 %v2626, %v2630
    %v2632 = vadd.s32 %v2631, 536870912
    %v2633 = vshrl.u32 %v2632, 30
    %v2634 = vshll.u32 %v2633, 30
    %v2635 = vsub.s32 %v2631, %v2634
    %vm2636 = vcmp.lt.s32.totalorder %v2635, 0
    %v2637 = vsub.s32 0, %v2635
    %v2638 = vsel %vm2636, %v2637, %v2635
    %v2639 = vclz %v2638
    %v2640 = vsub.s32 %v2639, 2
    %vm2641 = vcmp.gt.s32.totalorder 0, %v2640
    %v2642 = vsel %vm2641, 0, %v2640
    %v2643 = vsub.s32 32, %v2642
    %v2644 = vshll.u32 %v2635, %v2642
    %v2645 = vshrl.u32 %v2627, %v2643
    %v2646 = vor.u32 %v2644, %v2645
    %v2647 = vsub.s32 4294967266, %v2642
    %v2648 = vadd.s32 %v2647, 127
    %v2649 = vshll.u32 %v2648, 23
    %v2650 = vor.u32 4788187, %v2649
    %v2651 = vand.u32 2147483647, %v2650
    %v2653 = vcvt.s32.f32 %v2646
    %v2654 = vmul.f32 %v2653, %v2651
    %v2655 = vxor.u32 %v2654, 2147483648
    %v2656 = vsel %vm2573, %v2655, %v2654
    %v2657 = vsub.s32 4, %v2633
    %v2658 = vsel %vm2573, %v2657, %v2633
    %v2659 = vsel %vm2572, %v2567, %v2656
    %v2660 = vsel %vm2572, 0, %v2658
    %v2661 = vcosq.f32.pop %v2659
    %v2662 = vsinq.f32.pop %v2659
    %vm2663 = vweird.f32 %v2567
    %v2664 = vadd.s32 %v2660, 3
    %v2665 = vand.u32 %v2664, 3
    %vm2666 = vcmp.lt.s32.totalorder %v2665, 2
    %vm2667 = vcmp.eq.s32.totalorder %v2665, 0
    %v2668 = vxor.u32 %v2662, 2147483648
    %v2669 = vsel %vm2667, %v2661, %v2668
    %vm2670 = vcmp.eq.s32.totalorder %v2665, 2
    %v2671 = vxor.u32 %v2661, 2147483648
    %v2672 = vsel %vm2670, %v2671, %v2662
    %v2673 = vsel %vm2666, %v2669, %v2672
    %v2674 = vsel %vm2663, nan, %v2673
    %v2675 = vand.u32 2147483647, %v2568
    %vm2676 = vcmp.le.f32.partialorder %v2675, 0.7853982
    %vm2677 = vcmp.lt.s32.totalorder %v2568, 0
    %v2678 = vand.u32 %v2568, 2139095040
    %v2679 = vshrl.u32 %v2678, 23
    %v2680 = vsub.s32 %v2679, 127
    %v2681 = vand.u32 2147483647, %v2568
    %v2682 = vand.u32 %v2681, 8388607
    %v2683 = vor.u32 %v2682, 8388608
    %v2684 = vsub.s32 0, %v2683
    %v2685 = vadd.s32 %v2680, 1
    %vm2686 = vcmp.gt.s32.totalorder %v2685, 0
    %v2687 = vsel %vm2686, %v2685, 0
    %v2688 = vshrl.u32 %v2687, 5
    %v2689 = vand.u32 %v2687, 31
    %v2690 = vsub.s32 32, %v2689
    %v2691 = vshrl.u32 683565275, %v2690
    %v2692 = vshll.u32 683565275, %v2689
    %v2693 = vshrl.u32 2475754826, %v2690
    %v2694 = vor.u32 %v2692, %v2693
    %v2695 = vshll.u32 2475754826, %v2689
    %v2696 = vshrl.u32 2131351028, %v2690
    %v2697 = vor.u32 %v2695, %v2696
    %v2698 = vshll.u32 2131351028, %v2689
    %v2699 = vshrl.u32 2102212464, %v2690
    %v2700 = vor.u32 %v2698, %v2699
    %v2701 = vshll.u32 2102212464, %v2689
    %v2702 = vshrl.u32 920167782, %v2690
    %v2703 = vor.u32 %v2701, %v2702
    %v2704 = vshll.u32 920167782, %v2689
    %v2705 = vshrl.u32 1326507024, %v2690
    %v2706 = vor.u32 %v2704, %v2705
    %vm2707 = vcmp.lt.s32.totalorder %v2688, 1
    %vm2708 = vcmp.lt.s32.totalorder %v2688, 2
    %vm2709 = vcmp.lt.s32.totalorder %v2688, 3
    %vm2710 = vcmp.lt.s32.totalorder %v2688, 4
    %v2711 = vsel %vm2707, %v2691, %v2694
    %v2712 = vsel %vm2710, %v2700, 2102212464
    %v2713 = vsel %vm2709, %v2697, %v2712
    %v2714 = vsel %vm2708, %v2711, %v2713
    %v2715 = vsel %vm2707, %v2694, %v2697
    %v2716 = vsel %vm2710, %v2703, 920167782
    %v2717 = vsel %vm2709, %v2700, %v2716
    %v2718 = vsel %vm2708, %v2715, %v2717
    %v2719 = vsel %vm2707, %v2697, %v2700
    %v2720 = vsel %vm2710, %v2706, 1326507024
    %v2721 = vsel %vm2709, %v2703, %v2720
    %v2722 = vsel %vm2708, %v2719, %v2721
    %v2723 = vshll.u32 %v2683, 8
    %v2724 = vmul.u32.u64.compose %v2723, %v2722
    %v2725 = vextract.low.u32 %v2724
    %v2726 = vextract.high.u32 %v2724
    %v2727 = vmul.u32.u64.compose %v2723, %v2718
    %v2728 = vextract.low.u32 %v2727
    %v2729 = vextract.high.u32 %v2727
    %v2730 = vmul.u32 %v2723, %v2714
    %v2731 = vadd.s32 %v2726, %v2728
    %vm2732 = vc.u32 %v2726, %v2728
    %v2733 = vadd.s32 %v2729, 1
    %v2734 = vsel %vm2732, %v2733, %v2729
    %v2735 = vadd.s32 %v2730, %v2734
    %v2736 = vadd.s32 %v2735, 536870912
    %v2737 = vshrl.u32 %v2736, 30
    %v2738 = vshll.u32 %v2737, 30
    %v2739 = vsub.s32 %v2735, %v2738
    %vm2740 = vcmp.lt.s32.totalorder %v2739, 0
    %v2741 = vsub.s32 0, %v2739
    %v2742 = vsel %vm2740, %v2741, %v2739
    %v2743 = vclz %v2742
    %v2744 = vsub.s32 %v2743, 2
    %vm2745 = vcmp.gt.s32.totalorder 0, %v2744
    %v2746 = vsel %vm2745, 0, %v2744
    %v2747 = vsub.s32 32, %v2746
    %v2748 = vshll.u32 %v2739, %v2746
    %v2749 = vshrl.u32 %v2731, %v2747
    %v2750 = vor.u32 %v2748, %v2749
    %v2751 = vsub.s32 4294967266, %v2746
    %v2752 = vadd.s32 %v2751, 127
    %v2753 = vshll.u32 %v2752, 23
    %v2754 = vor.u32 4788187, %v2753
    %v2755 = vand.u32 2147483647, %v2754
    %v2757 = vcvt.s32.f32 %v2750
    %v2758 = vmul.f32 %v2757, %v2755
    %v2759 = vxor.u32 %v2758, 2147483648
    %v2760 = vsel %vm2677, %v2759, %v2758
    %v2761 = vsub.s32 4, %v2737
    %v2762 = vsel %vm2677, %v2761, %v2737
    %v2763 = vsel %vm2676, %v2568, %v2760
    %v2764 = vsel %vm2676, 0, %v2762
    %v2765 = vcosq.f32.pop %v2763
    %v2766 = vsinq.f32.pop %v2763
    %vm2767 = vweird.f32 %v2568
    %v2768 = vadd.s32 %v2764, 3
    %v2769 = vand.u32 %v2768, 3
    %vm2770 = vcmp.lt.s32.totalorder %v2769, 2
    %vm2771 = vcmp.eq.s32.totalorder %v2769, 0
    %v2772 = vxor.u32 %v2766, 2147483648
    %v2773 = vsel %vm2771, %v2765, %v2772
    %vm2774 = vcmp.eq.s32.totalorder %v2769, 2
    %v2775 = vxor.u32 %v2765, 2147483648
    %v2776 = vsel %vm2774, %v2775, %v2766
    %v2777 = vsel %vm2770, %v2773, %v2776
    %v2778 = vsel %vm2767, nan, %v2777
    %v2779 = vand.u32 2147483647, %v2569
    %vm2780 = vcmp.le.f32.partialorder %v2779, 0.7853982
    %vm2781 = vcmp.lt.s32.totalorder %v2569, 0
    %v2782 = vand.u32 %v2569, 2139095040
    %v2783 = vshrl.u32 %v2782, 23
    %v2784 = vsub.s32 %v2783, 127
    %v2785 = vand.u32 2147483647, %v2569
    %v2786 = vand.u32 %v2785, 8388607
    %v2787 = vor.u32 %v2786, 8388608
    %v2788 = vsub.s32 0, %v2787
    %v2789 = vadd.s32 %v2784, 1
    %vm2790 = vcmp.gt.s32.totalorder %v2789, 0
    %v2791 = vsel %vm2790, %v2789, 0
    %v2792 = vshrl.u32 %v2791, 5
    %v2793 = vand.u32 %v2791, 31
    %v2794 = vsub.s32 32, %v2793
    %v2795 = vshrl.u32 683565275, %v2794
    %v2796 = vshll.u32 683565275, %v2793
    %v2797 = vshrl.u32 2475754826, %v2794
    %v2798 = vor.u32 %v2796, %v2797
    %v2799 = vshll.u32 2475754826, %v2793
    %v2800 = vshrl.u32 2131351028, %v2794
    %v2801 = vor.u32 %v2799, %v2800
    %v2802 = vshll.u32 2131351028, %v2793
    %v2803 = vshrl.u32 2102212464, %v2794
    %v2804 = vor.u32 %v2802, %v2803
    %v2805 = vshll.u32 2102212464, %v2793
    %v2806 = vshrl.u32 920167782, %v2794
    %v2807 = vor.u32 %v2805, %v2806
    %v2808 = vshll.u32 920167782, %v2793
    %v2809 = vshrl.u32 1326507024, %v2794
    %v2810 = vor.u32 %v2808, %v2809
    %vm2811 = vcmp.lt.s32.totalorder %v2792, 1
    %vm2812 = vcmp.lt.s32.totalorder %v2792, 2
    %vm2813 = vcmp.lt.s32.totalorder %v2792, 3
    %vm2814 = vcmp.lt.s32.totalorder %v2792, 4
    %v2815 = vsel %vm2811, %v2795, %v2798
    %v2816 = vsel %vm2814, %v2804, 2102212464
    %v2817 = vsel %vm2813, %v2801, %v2816
    %v2818 = vsel %vm2812, %v2815, %v2817
    %v2819 = vsel %vm2811, %v2798, %v2801
    %v2820 = vsel %vm2814, %v2807, 920167782
    %v2821 = vsel %vm2813, %v2804, %v2820
    %v2822 = vsel %vm2812, %v2819, %v2821
    %v2823 = vsel %vm2811, %v2801, %v2804
    %v2824 = vsel %vm2814, %v2810, 1326507024
    %v2825 = vsel %vm2813, %v2807, %v2824
    %v2826 = vsel %vm2812, %v2823, %v2825
    %v2827 = vshll.u32 %v2787, 8
    %v2828 = vmul.u32.u64.compose %v2827, %v2826
    %v2829 = vextract.low.u32 %v2828
    %v2830 = vextract.high.u32 %v2828
    %v2831 = vmul.u32.u64.compose %v2827, %v2822
    %v2832 = vextract.low.u32 %v2831
    %v2833 = vextract.high.u32 %v2831
    %v2834 = vmul.u32 %v2827, %v2818
    %v2835 = vadd.s32 %v2830, %v2832
    %vm2836 = vc.u32 %v2830, %v2832
    %v2837 = vadd.s32 %v2833, 1
    %v2838 = vsel %vm2836, %v2837, %v2833
    %v2839 = vadd.s32 %v2834, %v2838
    %v2840 = vadd.s32 %v2839, 536870912
    %v2841 = vshrl.u32 %v2840, 30
    %v2842 = vshll.u32 %v2841, 30
    %v2843 = vsub.s32 %v2839, %v2842
    %vm2844 = vcmp.lt.s32.totalorder %v2843, 0
    %v2845 = vsub.s32 0, %v2843
    %v2846 = vsel %vm2844, %v2845, %v2843
    %v2847 = vclz %v2846
    %v2848 = vsub.s32 %v2847, 2
    %vm2849 = vcmp.gt.s32.totalorder 0, %v2848
    %v2850 = vsel %vm2849, 0, %v2848
    %v2851 = vsub.s32 32, %v2850
    %v2852 = vshll.u32 %v2843, %v2850
    %v2853 = vshrl.u32 %v2835, %v2851
    %v2854 = vor.u32 %v2852, %v2853
    %v2855 = vsub.s32 4294967266, %v2850
    %v2856 = vadd.s32 %v2855, 127
    %v2857 = vshll.u32 %v2856, 23
    %v2858 = vor.u32 4788187, %v2857
    %v2859 = vand.u32 2147483647, %v2858
    %v2861 = vcvt.s32.f32 %v2854
    %v2862 = vmul.f32 %v2861, %v2859
    %v2863 = vxor.u32 %v2862, 2147483648
    %v2864 = vsel %vm2781, %v2863, %v2862
    %v2865 = vsub.s32 4, %v2841
    %v2866 = vsel %vm2781, %v2865, %v2841
    %v2867 = vsel %vm2780, %v2569, %v2864
    %v2868 = vsel %vm2780, 0, %v2866
    %v2869 = vcosq.f32.pop %v2867
    %v2870 = vsinq.f32.pop %v2867
    %vm2871 = vweird.f32 %v2569
    %v2872 = vadd.s32 %v2868, 3
    %v2873 = vand.u32 %v2872, 3
    %vm2874 = vcmp.lt.s32.totalorder %v2873, 2
    %vm2875 = vcmp.eq.s32.totalorder %v2873, 0
    %v2876 = vxor.u32 %v2870, 2147483648
    %v2877 = vsel %vm2875, %v2869, %v2876
    %vm2878 = vcmp.eq.s32.totalorder %v2873, 2
    %v2879 = vxor.u32 %v2869, 2147483648
    %v2880 = vsel %vm2878, %v2879, %v2870
    %v2881 = vsel %vm2874, %v2877, %v2880
    %v2882 = vsel %vm2871, nan, %v2881
    %v2883 = vand.u32 2147483647, %v2570
    %vm2884 = vcmp.le.f32.partialorder %v2883, 0.7853982
    %vm2885 = vcmp.lt.s32.totalorder %v2570, 0
    %v2886 = vand.u32 %v2570, 2139095040
    %v2887 = vshrl.u32 %v2886, 23
    %v2888 = vsub.s32 %v2887, 127
    %v2889 = vand.u32 2147483647, %v2570
    %v2890 = vand.u32 %v2889, 8388607
    %v2891 = vor.u32 %v2890, 8388608
    %v2892 = vsub.s32 0, %v2891
    %v2893 = vadd.s32 %v2888, 1
    %vm2894 = vcmp.gt.s32.totalorder %v2893, 0
    %v2895 = vsel %vm2894, %v2893, 0
    %v2896 = vshrl.u32 %v2895, 5
    %v2897 = vand.u32 %v2895, 31
    %v2898 = vsub.s32 32, %v2897
    %v2899 = vshrl.u32 683565275, %v2898
    %v2900 = vshll.u32 683565275, %v2897
    %v2901 = vshrl.u32 2475754826, %v2898
    %v2902 = vor.u32 %v2900, %v2901
    %v2903 = vshll.u32 2475754826, %v2897
    %v2904 = vshrl.u32 2131351028, %v2898
    %v2905 = vor.u32 %v2903, %v2904
    %v2906 = vshll.u32 2131351028, %v2897
    %v2907 = vshrl.u32 2102212464, %v2898
    %v2908 = vor.u32 %v2906, %v2907
    %v2909 = vshll.u32 2102212464, %v2897
    %v2910 = vshrl.u32 920167782, %v2898
    %v2911 = vor.u32 %v2909, %v2910
    %v2912 = vshll.u32 920167782, %v2897
    %v2913 = vshrl.u32 1326507024, %v2898
    %v2914 = vor.u32 %v2912, %v2913
    %vm2915 = vcmp.lt.s32.totalorder %v2896, 1
    %vm2916 = vcmp.lt.s32.totalorder %v2896, 2
    %vm2917 = vcmp.lt.s32.totalorder %v2896, 3
    %vm2918 = vcmp.lt.s32.totalorder %v2896, 4
    %v2919 = vsel %vm2915, %v2899, %v2902
    %v2920 = vsel %vm2918, %v2908, 2102212464
    %v2921 = vsel %vm2917, %v2905, %v2920
    %v2922 = vsel %vm2916, %v2919, %v2921
    %v2923 = vsel %vm2915, %v2902, %v2905
    %v2924 = vsel %vm2918, %v2911, 920167782
    %v2925 = vsel %vm2917, %v2908, %v2924
    %v2926 = vsel %vm2916, %v2923, %v2925
    %v2927 = vsel %vm2915, %v2905, %v2908
    %v2928 = vsel %vm2918, %v2914, 1326507024
    %v2929 = vsel %vm2917, %v2911, %v2928
    %v2930 = vsel %vm2916, %v2927, %v2929
    %v2931 = vshll.u32 %v2891, 8
    %v2932 = vmul.u32.u64.compose %v2931, %v2930
    %v2933 = vextract.low.u32 %v2932
    %v2934 = vextract.high.u32 %v2932
    %v2935 = vmul.u32.u64.compose %v2931, %v2926
    %v2936 = vextract.low.u32 %v2935
    %v2937 = vextract.high.u32 %v2935
    %v2938 = vmul.u32 %v2931, %v2922
    %v2939 = vadd.s32 %v2934, %v2936
    %vm2940 = vc.u32 %v2934, %v2936
    %v2941 = vadd.s32 %v2937, 1
    %v2942 = vsel %vm2940, %v2941, %v2937
    %v2943 = vadd.s32 %v2938, %v2942
    %v2944 = vadd.s32 %v2943, 536870912
    %v2945 = vshrl.u32 %v2944, 30
    %v2946 = vshll.u32 %v2945, 30
    %v2947 = vsub.s32 %v2943, %v2946
    %vm2948 = vcmp.lt.s32.totalorder %v2947, 0
    %v2949 = vsub.s32 0, %v2947
    %v2950 = vsel %vm2948, %v2949, %v2947
    %v2951 = vclz %v2950
    %v2952 = vsub.s32 %v2951, 2
    %vm2953 = vcmp.gt.s32.totalorder 0, %v2952
    %v2954 = vsel %vm2953, 0, %v2952
    %v2955 = vsub.s32 32, %v2954
    %v2956 = vshll.u32 %v2947, %v2954
    %v2957 = vshrl.u32 %v2939, %v2955
    %v2958 = vor.u32 %v2956, %v2957
    %v2959 = vsub.s32 4294967266, %v2954
    %v2960 = vadd.s32 %v2959, 127
    %v2961 = vshll.u32 %v2960, 23
    %v2962 = vor.u32 4788187, %v2961
    %v2963 = vand.u32 2147483647, %v2962
    %v2965 = vcvt.s32.f32 %v2958
    %v2966 = vmul.f32 %v2965, %v2963
    %v2967 = vxor.u32 %v2966, 2147483648
    %v2968 = vsel %vm2885, %v2967, %v2966
    %v2969 = vsub.s32 4, %v2945
    %v2970 = vsel %vm2885, %v2969, %v2945
    %v2971 = vsel %vm2884, %v2570, %v2968
    %v2972 = vsel %vm2884, 0, %v2970
    %v2973 = vcosq.f32.pop %v2971
    %v2974 = vsinq.f32.pop %v2971
    %vm2975 = vweird.f32 %v2570
    %v2976 = vadd.s32 %v2972, 3
    %v2977 = vand.u32 %v2976, 3
    %vm2978 = vcmp.lt.s32.totalorder %v2977, 2
    %vm2979 = vcmp.eq.s32.totalorder %v2977, 0
    %v2980 = vxor.u32 %v2974, 2147483648
    %v2981 = vsel %vm2979, %v2973, %v2980
    %vm2982 = vcmp.eq.s32.totalorder %v2977, 2
    %v2983 = vxor.u32 %v2973, 2147483648
    %v2984 = vsel %vm2982, %v2983, %v2974
    %v2985 = vsel %vm2978, %v2981, %v2984
    %v2986 = vsel %vm2975, nan, %v2985
    %s2987 = scalar_lea.vmem [#allocation5], 224
    %2988 = vst [vmem:[%s2987] sm:$0xff] %v2674
    %2989 = vst [vmem:[%s2987 + $0x8] sm:$0xff] %v2778
    %2990 = vst [vmem:[%s2987 + $0x10] sm:$0xff] %v2882
    %2991 = vst [vmem:[%s2987 + $0x18] sm:$0xff] %v2986
    %v2992 = vand.u32 2147483647, %v2567
    %vm2993 = vcmp.le.f32.partialorder %v2992, 0.7853982
    %vm2994 = vcmp.lt.s32.totalorder %v2567, 0
    %v2995 = vand.u32 %v2567, 2139095040
    %v2996 = vshrl.u32 %v2995, 23
    %v2997 = vsub.s32 %v2996, 127
    %v2998 = vand.u32 2147483647, %v2567
    %v2999 = vand.u32 %v2998, 8388607
    %v3000 = vor.u32 %v2999, 8388608
    %v3001 = vsub.s32 0, %v3000
    %v3002 = vadd.s32 %v2997, 1
    %vm3003 = vcmp.gt.s32.totalorder %v3002, 0
    %v3004 = vsel %vm3003, %v3002, 0
    %v3005 = vshrl.u32 %v3004, 5
    %v3006 = vand.u32 %v3004, 31
    %v3007 = vsub.s32 32, %v3006
    %v3008 = vshrl.u32 683565275, %v3007
    %v3009 = vshll.u32 683565275, %v3006
    %v3010 = vshrl.u32 2475754826, %v3007
    %v3011 = vor.u32 %v3009, %v3010
    %v3012 = vshll.u32 2475754826, %v3006
    %v3013 = vshrl.u32 2131351028, %v3007
    %v3014 = vor.u32 %v3012, %v3013
    %v3015 = vshll.u32 2131351028, %v3006
    %v3016 = vshrl.u32 2102212464, %v3007
    %v3017 = vor.u32 %v3015, %v3016
    %v3018 = vshll.u32 2102212464, %v3006
    %v3019 = vshrl.u32 920167782, %v3007
    %v3020 = vor.u32 %v3018, %v3019
    %v3021 = vshll.u32 920167782, %v3006
    %v3022 = vshrl.u32 1326507024, %v3007
    %v3023 = vor.u32 %v3021, %v3022
    %vm3024 = vcmp.lt.s32.totalorder %v3005, 1
    %vm3025 = vcmp.lt.s32.totalorder %v3005, 2
    %vm3026 = vcmp.lt.s32.totalorder %v3005, 3
    %vm3027 = vcmp.lt.s32.totalorder %v3005, 4
    %v3028 = vsel %vm3024, %v3008, %v3011
    %v3029 = vsel %vm3027, %v3017, 2102212464
    %v3030 = vsel %vm3026, %v3014, %v3029
    %v3031 = vsel %vm3025, %v3028, %v3030
    %v3032 = vsel %vm3024, %v3011, %v3014
    %v3033 = vsel %vm3027, %v3020, 920167782
    %v3034 = vsel %vm3026, %v3017, %v3033
    %v3035 = vsel %vm3025, %v3032, %v3034
    %v3036 = vsel %vm3024, %v3014, %v3017
    %v3037 = vsel %vm3027, %v3023, 1326507024
    %v3038 = vsel %vm3026, %v3020, %v3037
    %v3039 = vsel %vm3025, %v3036, %v3038
    %v3040 = vshll.u32 %v3000, 8
    %v3041 = vmul.u32.u64.compose %v3040, %v3039
    %v3042 = vextract.low.u32 %v3041
    %v3043 = vextract.high.u32 %v3041
    %v3044 = vmul.u32.u64.compose %v3040, %v3035
    %v3045 = vextract.low.u32 %v3044
    %v3046 = vextract.high.u32 %v3044
    %v3047 = vmul.u32 %v3040, %v3031
    %v3048 = vadd.s32 %v3043, %v3045
    %vm3049 = vc.u32 %v3043, %v3045
    %v3050 = vadd.s32 %v3046, 1
    %v3051 = vsel %vm3049, %v3050, %v3046
    %v3052 = vadd.s32 %v3047, %v3051
    %v3053 = vadd.s32 %v3052, 536870912
    %v3054 = vshrl.u32 %v3053, 30
    %v3055 = vshll.u32 %v3054, 30
    %v3056 = vsub.s32 %v3052, %v3055
    %vm3057 = vcmp.lt.s32.totalorder %v3056, 0
    %v3058 = vsub.s32 0, %v3056
    %v3059 = vsel %vm3057, %v3058, %v3056
    %v3060 = vclz %v3059
    %v3061 = vsub.s32 %v3060, 2
    %vm3062 = vcmp.gt.s32.totalorder 0, %v3061
    %v3063 = vsel %vm3062, 0, %v3061
    %v3064 = vsub.s32 32, %v3063
    %v3065 = vshll.u32 %v3056, %v3063
    %v3066 = vshrl.u32 %v3048, %v3064
    %v3067 = vor.u32 %v3065, %v3066
    %v3068 = vsub.s32 4294967266, %v3063
    %v3069 = vadd.s32 %v3068, 127
    %v3070 = vshll.u32 %v3069, 23
    %v3071 = vor.u32 4788187, %v3070
    %v3072 = vand.u32 2147483647, %v3071
    %v3074 = vcvt.s32.f32 %v3067
    %v3075 = vmul.f32 %v3074, %v3072
    %v3076 = vxor.u32 %v3075, 2147483648
    %v3077 = vsel %vm2994, %v3076, %v3075
    %v3078 = vsub.s32 4, %v3054
    %v3079 = vsel %vm2994, %v3078, %v3054
    %v3080 = vsel %vm2993, %v2567, %v3077
    %v3081 = vsel %vm2993, 0, %v3079
    %v3082 = vcosq.f32.pop %v3080
    %v3083 = vsinq.f32.pop %v3080
    %vm3084 = vweird.f32 %v2567
    %v3085 = vand.u32 %v3081, 3
    %vm3086 = vcmp.lt.s32.totalorder %v3085, 2
    %vm3087 = vcmp.eq.s32.totalorder %v3085, 0
    %v3088 = vxor.u32 %v3083, 2147483648
    %v3089 = vsel %vm3087, %v3082, %v3088
    %vm3090 = vcmp.eq.s32.totalorder %v3085, 2
    %v3091 = vxor.u32 %v3082, 2147483648
    %v3092 = vsel %vm3090, %v3091, %v3083
    %v3093 = vsel %vm3086, %v3089, %v3092
    %v3094 = vsel %vm3084, nan, %v3093
    %v3095 = vand.u32 2147483647, %v2568
    %vm3096 = vcmp.le.f32.partialorder %v3095, 0.7853982
    %vm3097 = vcmp.lt.s32.totalorder %v2568, 0
    %v3098 = vand.u32 %v2568, 2139095040
    %v3099 = vshrl.u32 %v3098, 23
    %v3100 = vsub.s32 %v3099, 127
    %v3101 = vand.u32 2147483647, %v2568
    %v3102 = vand.u32 %v3101, 8388607
    %v3103 = vor.u32 %v3102, 8388608
    %v3104 = vsub.s32 0, %v3103
    %v3105 = vadd.s32 %v3100, 1
    %vm3106 = vcmp.gt.s32.totalorder %v3105, 0
    %v3107 = vsel %vm3106, %v3105, 0
    %v3108 = vshrl.u32 %v3107, 5
    %v3109 = vand.u32 %v3107, 31
    %v3110 = vsub.s32 32, %v3109
    %v3111 = vshrl.u32 683565275, %v3110
    %v3112 = vshll.u32 683565275, %v3109
    %v3113 = vshrl.u32 2475754826, %v3110
    %v3114 = vor.u32 %v3112, %v3113
    %v3115 = vshll.u32 2475754826, %v3109
    %v3116 = vshrl.u32 2131351028, %v3110
    %v3117 = vor.u32 %v3115, %v3116
    %v3118 = vshll.u32 2131351028, %v3109
    %v3119 = vshrl.u32 2102212464, %v3110
    %v3120 = vor.u32 %v3118, %v3119
    %v3121 = vshll.u32 2102212464, %v3109
    %v3122 = vshrl.u32 920167782, %v3110
    %v3123 = vor.u32 %v3121, %v3122
    %v3124 = vshll.u32 920167782, %v3109
    %v3125 = vshrl.u32 1326507024, %v3110
    %v3126 = vor.u32 %v3124, %v3125
    %vm3127 = vcmp.lt.s32.totalorder %v3108, 1
    %vm3128 = vcmp.lt.s32.totalorder %v3108, 2
    %vm3129 = vcmp.lt.s32.totalorder %v3108, 3
    %vm3130 = vcmp.lt.s32.totalorder %v3108, 4
    %v3131 = vsel %vm3127, %v3111, %v3114
    %v3132 = vsel %vm3130, %v3120, 2102212464
    %v3133 = vsel %vm3129, %v3117, %v3132
    %v3134 = vsel %vm3128, %v3131, %v3133
    %v3135 = vsel %vm3127, %v3114, %v3117
    %v3136 = vsel %vm3130, %v3123, 920167782
    %v3137 = vsel %vm3129, %v3120, %v3136
    %v3138 = vsel %vm3128, %v3135, %v3137
    %v3139 = vsel %vm3127, %v3117, %v3120
    %v3140 = vsel %vm3130, %v3126, 1326507024
    %v3141 = vsel %vm3129, %v3123, %v3140
    %v3142 = vsel %vm3128, %v3139, %v3141
    %v3143 = vshll.u32 %v3103, 8
    %v3144 = vmul.u32.u64.compose %v3143, %v3142
    %v3145 = vextract.low.u32 %v3144
    %v3146 = vextract.high.u32 %v3144
    %v3147 = vmul.u32.u64.compose %v3143, %v3138
    %v3148 = vextract.low.u32 %v3147
    %v3149 = vextract.high.u32 %v3147
    %v3150 = vmul.u32 %v3143, %v3134
    %v3151 = vadd.s32 %v3146, %v3148
    %vm3152 = vc.u32 %v3146, %v3148
    %v3153 = vadd.s32 %v3149, 1
    %v3154 = vsel %vm3152, %v3153, %v3149
    %v3155 = vadd.s32 %v3150, %v3154
    %v3156 = vadd.s32 %v3155, 536870912
    %v3157 = vshrl.u32 %v3156, 30
    %v3158 = vshll.u32 %v3157, 30
    %v3159 = vsub.s32 %v3155, %v3158
    %vm3160 = vcmp.lt.s32.totalorder %v3159, 0
    %v3161 = vsub.s32 0, %v3159
    %v3162 = vsel %vm3160, %v3161, %v3159
    %v3163 = vclz %v3162
    %v3164 = vsub.s32 %v3163, 2
    %vm3165 = vcmp.gt.s32.totalorder 0, %v3164
    %v3166 = vsel %vm3165, 0, %v3164
    %v3167 = vsub.s32 32, %v3166
    %v3168 = vshll.u32 %v3159, %v3166
    %v3169 = vshrl.u32 %v3151, %v3167
    %v3170 = vor.u32 %v3168, %v3169
    %v3171 = vsub.s32 4294967266, %v3166
    %v3172 = vadd.s32 %v3171, 127
    %v3173 = vshll.u32 %v3172, 23
    %v3174 = vor.u32 4788187, %v3173
    %v3175 = vand.u32 2147483647, %v3174
    %v3177 = vcvt.s32.f32 %v3170
    %v3178 = vmul.f32 %v3177, %v3175
    %v3179 = vxor.u32 %v3178, 2147483648
    %v3180 = vsel %vm3097, %v3179, %v3178
    %v3181 = vsub.s32 4, %v3157
    %v3182 = vsel %vm3097, %v3181, %v3157
    %v3183 = vsel %vm3096, %v2568, %v3180
    %v3184 = vsel %vm3096, 0, %v3182
    %v3185 = vcosq.f32.pop %v3183
    %v3186 = vsinq.f32.pop %v3183
    %vm3187 = vweird.f32 %v2568
    %v3188 = vand.u32 %v3184, 3
    %vm3189 = vcmp.lt.s32.totalorder %v3188, 2
    %vm3190 = vcmp.eq.s32.totalorder %v3188, 0
    %v3191 = vxor.u32 %v3186, 2147483648
    %v3192 = vsel %vm3190, %v3185, %v3191
    %vm3193 = vcmp.eq.s32.totalorder %v3188, 2
    %v3194 = vxor.u32 %v3185, 2147483648
    %v3195 = vsel %vm3193, %v3194, %v3186
    %v3196 = vsel %vm3189, %v3192, %v3195
    %v3197 = vsel %vm3187, nan, %v3196
    %v3198 = vand.u32 2147483647, %v2569
    %vm3199 = vcmp.le.f32.partialorder %v3198, 0.7853982
    %vm3200 = vcmp.lt.s32.totalorder %v2569, 0
    %v3201 = vand.u32 %v2569, 2139095040
    %v3202 = vshrl.u32 %v3201, 23
    %v3203 = vsub.s32 %v3202, 127
    %v3204 = vand.u32 2147483647, %v2569
    %v3205 = vand.u32 %v3204, 8388607
    %v3206 = vor.u32 %v3205, 8388608
    %v3207 = vsub.s32 0, %v3206
    %v3208 = vadd.s32 %v3203, 1
    %vm3209 = vcmp.gt.s32.totalorder %v3208, 0
    %v3210 = vsel %vm3209, %v3208, 0
    %v3211 = vshrl.u32 %v3210, 5
    %v3212 = vand.u32 %v3210, 31
    %v3213 = vsub.s32 32, %v3212
    %v3214 = vshrl.u32 683565275, %v3213
    %v3215 = vshll.u32 683565275, %v3212
    %v3216 = vshrl.u32 2475754826, %v3213
    %v3217 = vor.u32 %v3215, %v3216
    %v3218 = vshll.u32 2475754826, %v3212
    %v3219 = vshrl.u32 2131351028, %v3213
    %v3220 = vor.u32 %v3218, %v3219
    %v3221 = vshll.u32 2131351028, %v3212
    %v3222 = vshrl.u32 2102212464, %v3213
    %v3223 = vor.u32 %v3221, %v3222
    %v3224 = vshll.u32 2102212464, %v3212
    %v3225 = vshrl.u32 920167782, %v3213
    %v3226 = vor.u32 %v3224, %v3225
    %v3227 = vshll.u32 920167782, %v3212
    %v3228 = vshrl.u32 1326507024, %v3213
    %v3229 = vor.u32 %v3227, %v3228
    %vm3230 = vcmp.lt.s32.totalorder %v3211, 1
    %vm3231 = vcmp.lt.s32.totalorder %v3211, 2
    %vm3232 = vcmp.lt.s32.totalorder %v3211, 3
    %vm3233 = vcmp.lt.s32.totalorder %v3211, 4
    %v3234 = vsel %vm3230, %v3214, %v3217
    %v3235 = vsel %vm3233, %v3223, 2102212464
    %v3236 = vsel %vm3232, %v3220, %v3235
    %v3237 = vsel %vm3231, %v3234, %v3236
    %v3238 = vsel %vm3230, %v3217, %v3220
    %v3239 = vsel %vm3233, %v3226, 920167782
    %v3240 = vsel %vm3232, %v3223, %v3239
    %v3241 = vsel %vm3231, %v3238, %v3240
    %v3242 = vsel %vm3230, %v3220, %v3223
    %v3243 = vsel %vm3233, %v3229, 1326507024
    %v3244 = vsel %vm3232, %v3226, %v3243
    %v3245 = vsel %vm3231, %v3242, %v3244
    %v3246 = vshll.u32 %v3206, 8
    %v3247 = vmul.u32.u64.compose %v3246, %v3245
    %v3248 = vextract.low.u32 %v3247
    %v3249 = vextract.high.u32 %v3247
    %v3250 = vmul.u32.u64.compose %v3246, %v3241
    %v3251 = vextract.low.u32 %v3250
    %v3252 = vextract.high.u32 %v3250
    %v3253 = vmul.u32 %v3246, %v3237
    %v3254 = vadd.s32 %v3249, %v3251
    %vm3255 = vc.u32 %v3249, %v3251
    %v3256 = vadd.s32 %v3252, 1
    %v3257 = vsel %vm3255, %v3256, %v3252
    %v3258 = vadd.s32 %v3253, %v3257
    %v3259 = vadd.s32 %v3258, 536870912
    %v3260 = vshrl.u32 %v3259, 30
    %v3261 = vshll.u32 %v3260, 30
    %v3262 = vsub.s32 %v3258, %v3261
    %vm3263 = vcmp.lt.s32.totalorder %v3262, 0
    %v3264 = vsub.s32 0, %v3262
    %v3265 = vsel %vm3263, %v3264, %v3262
    %v3266 = vclz %v3265
    %v3267 = vsub.s32 %v3266, 2
    %vm3268 = vcmp.gt.s32.totalorder 0, %v3267
    %v3269 = vsel %vm3268, 0, %v3267
    %v3270 = vsub.s32 32, %v3269
    %v3271 = vshll.u32 %v3262, %v3269
    %v3272 = vshrl.u32 %v3254, %v3270
    %v3273 = vor.u32 %v3271, %v3272
    %v3274 = vsub.s32 4294967266, %v3269
    %v3275 = vadd.s32 %v3274, 127
    %v3276 = vshll.u32 %v3275, 23
    %v3277 = vor.u32 4788187, %v3276
    %v3278 = vand.u32 2147483647, %v3277
    %v3280 = vcvt.s32.f32 %v3273
    %v3281 = vmul.f32 %v3280, %v3278
    %v3282 = vxor.u32 %v3281, 2147483648
    %v3283 = vsel %vm3200, %v3282, %v3281
    %v3284 = vsub.s32 4, %v3260
    %v3285 = vsel %vm3200, %v3284, %v3260
    %v3286 = vsel %vm3199, %v2569, %v3283
    %v3287 = vsel %vm3199, 0, %v3285
    %v3288 = vcosq.f32.pop %v3286
    %v3289 = vsinq.f32.pop %v3286
    %vm3290 = vweird.f32 %v2569
    %v3291 = vand.u32 %v3287, 3
    %vm3292 = vcmp.lt.s32.totalorder %v3291, 2
    %vm3293 = vcmp.eq.s32.totalorder %v3291, 0
    %v3294 = vxor.u32 %v3289, 2147483648
    %v3295 = vsel %vm3293, %v3288, %v3294
    %vm3296 = vcmp.eq.s32.totalorder %v3291, 2
    %v3297 = vxor.u32 %v3288, 2147483648
    %v3298 = vsel %vm3296, %v3297, %v3289
    %v3299 = vsel %vm3292, %v3295, %v3298
    %v3300 = vsel %vm3290, nan, %v3299
    %v3301 = vand.u32 2147483647, %v2570
    %vm3302 = vcmp.le.f32.partialorder %v3301, 0.7853982
    %vm3303 = vcmp.lt.s32.totalorder %v2570, 0
    %v3304 = vand.u32 %v2570, 2139095040
    %v3305 = vshrl.u32 %v3304, 23
    %v3306 = vsub.s32 %v3305, 127
    %v3307 = vand.u32 2147483647, %v2570
    %v3308 = vand.u32 %v3307, 8388607
    %v3309 = vor.u32 %v3308, 8388608
    %v3310 = vsub.s32 0, %v3309
    %v3311 = vadd.s32 %v3306, 1
    %vm3312 = vcmp.gt.s32.totalorder %v3311, 0
    %v3313 = vsel %vm3312, %v3311, 0
    %v3314 = vshrl.u32 %v3313, 5
    %v3315 = vand.u32 %v3313, 31
    %v3316 = vsub.s32 32, %v3315
    %v3317 = vshrl.u32 683565275, %v3316
    %v3318 = vshll.u32 683565275, %v3315
    %v3319 = vshrl.u32 2475754826, %v3316
    %v3320 = vor.u32 %v3318, %v3319
    %v3321 = vshll.u32 2475754826, %v3315
    %v3322 = vshrl.u32 2131351028, %v3316
    %v3323 = vor.u32 %v3321, %v3322
    %v3324 = vshll.u32 2131351028, %v3315
    %v3325 = vshrl.u32 2102212464, %v3316
    %v3326 = vor.u32 %v3324, %v3325
    %v3327 = vshll.u32 2102212464, %v3315
    %v3328 = vshrl.u32 920167782, %v3316
    %v3329 = vor.u32 %v3327, %v3328
    %v3330 = vshll.u32 920167782, %v3315
    %v3331 = vshrl.u32 1326507024, %v3316
    %v3332 = vor.u32 %v3330, %v3331
    %vm3333 = vcmp.lt.s32.totalorder %v3314, 1
    %vm3334 = vcmp.lt.s32.totalorder %v3314, 2
    %vm3335 = vcmp.lt.s32.totalorder %v3314, 3
    %vm3336 = vcmp.lt.s32.totalorder %v3314, 4
    %v3337 = vsel %vm3333, %v3317, %v3320
    %v3338 = vsel %vm3336, %v3326, 2102212464
    %v3339 = vsel %vm3335, %v3323, %v3338
    %v3340 = vsel %vm3334, %v3337, %v3339
    %v3341 = vsel %vm3333, %v3320, %v3323
    %v3342 = vsel %vm3336, %v3329, 920167782
    %v3343 = vsel %vm3335, %v3326, %v3342
    %v3344 = vsel %vm3334, %v3341, %v3343
    %v3345 = vsel %vm3333, %v3323, %v3326
    %v3346 = vsel %vm3336, %v3332, 1326507024
    %v3347 = vsel %vm3335, %v3329, %v3346
    %v3348 = vsel %vm3334, %v3345, %v3347
    %v3349 = vshll.u32 %v3309, 8
    %v3350 = vmul.u32.u64.compose %v3349, %v3348
    %v3351 = vextract.low.u32 %v3350
    %v3352 = vextract.high.u32 %v3350
    %v3353 = vmul.u32.u64.compose %v3349, %v3344
    %v3354 = vextract.low.u32 %v3353
    %v3355 = vextract.high.u32 %v3353
    %v3356 = vmul.u32 %v3349, %v3340
    %v3357 = vadd.s32 %v3352, %v3354
    %vm3358 = vc.u32 %v3352, %v3354
    %v3359 = vadd.s32 %v3355, 1
    %v3360 = vsel %vm3358, %v3359, %v3355
    %v3361 = vadd.s32 %v3356, %v3360
    %v3362 = vadd.s32 %v3361, 536870912
    %v3363 = vshrl.u32 %v3362, 30
    %v3364 = vshll.u32 %v3363, 30
    %v3365 = vsub.s32 %v3361, %v3364
    %vm3366 = vcmp.lt.s32.totalorder %v3365, 0
    %v3367 = vsub.s32 0, %v3365
    %v3368 = vsel %vm3366, %v3367, %v3365
    %v3369 = vclz %v3368
    %v3370 = vsub.s32 %v3369, 2
    %vm3371 = vcmp.gt.s32.totalorder 0, %v3370
    %v3372 = vsel %vm3371, 0, %v3370
    %v3373 = vsub.s32 32, %v3372
    %v3374 = vshll.u32 %v3365, %v3372
    %v3375 = vshrl.u32 %v3357, %v3373
    %v3376 = vor.u32 %v3374, %v3375
    %v3377 = vsub.s32 4294967266, %v3372
    %v3378 = vadd.s32 %v3377, 127
    %v3379 = vshll.u32 %v3378, 23
    %v3380 = vor.u32 4788187, %v3379
    %v3381 = vand.u32 2147483647, %v3380
    %v3383 = vcvt.s32.f32 %v3376
    %v3384 = vmul.f32 %v3383, %v3381
    %v3385 = vxor.u32 %v3384, 2147483648
    %v3386 = vsel %vm3303, %v3385, %v3384
    %v3387 = vsub.s32 4, %v3363
    %v3388 = vsel %vm3303, %v3387, %v3363
    %v3389 = vsel %vm3302, %v2570, %v3386
    %v3390 = vsel %vm3302, 0, %v3388
    %v3391 = vcosq.f32.pop %v3389
    %v3392 = vsinq.f32.pop %v3389
    %vm3393 = vweird.f32 %v2570
    %v3394 = vand.u32 %v3390, 3
    %vm3395 = vcmp.lt.s32.totalorder %v3394, 2
    %vm3396 = vcmp.eq.s32.totalorder %v3394, 0
    %v3397 = vxor.u32 %v3392, 2147483648
    %v3398 = vsel %vm3396, %v3391, %v3397
    %vm3399 = vcmp.eq.s32.totalorder %v3394, 2
    %v3400 = vxor.u32 %v3391, 2147483648
    %v3401 = vsel %vm3399, %v3400, %v3392
    %v3402 = vsel %vm3395, %v3398, %v3401
    %v3403 = vsel %vm3393, nan, %v3402
    %s3404 = scalar_lea.vmem [#allocation5], 256
    %3405 = vst [vmem:[%s3404] sm:$0xff] %v3094
    %3406 = vst [vmem:[%s3404 + $0x8] sm:$0xff] %v3197
    %3407 = vst [vmem:[%s3404 + $0x10] sm:$0xff] %v3300
    %3408 = vst [vmem:[%s3404 + $0x18] sm:$0xff] %v3403
    %v3409 = vld [vmem:[#allocation2] sm:$0xff]
    %v3410 = vld [vmem:[#allocation2 + $0x8] sm:$0xff]
    %v3411 = vld [vmem:[#allocation2 + $0x10] sm:$0xff]
    %v3412 = vld [vmem:[#allocation2 + $0x18] sm:$0xff]
    %v3413 = vmul.f32 %v3409, 16.0
    %v3414 = vmul.f32 %v3410, 16.0
    %v3415 = vmul.f32 %v3411, 16.0
    %v3416 = vmul.f32 %v3412, 16.0
    %v3417 = vand.u32 2147483647, %v3413
    %vm3418 = vcmp.le.f32.partialorder %v3417, 0.7853982
    %vm3419 = vcmp.lt.s32.totalorder %v3413, 0
    %v3420 = vand.u32 %v3413, 2139095040
    %v3421 = vshrl.u32 %v3420, 23
    %v3422 = vsub.s32 %v3421, 127
    %v3423 = vand.u32 2147483647, %v3413
    %v3424 = vand.u32 %v3423, 8388607
    %v3425 = vor.u32 %v3424, 8388608
    %v3426 = vsub.s32 0, %v3425
    %v3427 = vadd.s32 %v3422, 1
    %vm3428 = vcmp.gt.s32.totalorder %v3427, 0
    %v3429 = vsel %vm3428, %v3427, 0
    %v3430 = vshrl.u32 %v3429, 5
    %v3431 = vand.u32 %v3429, 31
    %v3432 = vsub.s32 32, %v3431
    %v3433 = vshrl.u32 683565275, %v3432
    %v3434 = vshll.u32 683565275, %v3431
    %v3435 = vshrl.u32 2475754826, %v3432
    %v3436 = vor.u32 %v3434, %v3435
    %v3437 = vshll.u32 2475754826, %v3431
    %v3438 = vshrl.u32 2131351028, %v3432
    %v3439 = vor.u32 %v3437, %v3438
    %v3440 = vshll.u32 2131351028, %v3431
    %v3441 = vshrl.u32 2102212464, %v3432
    %v3442 = vor.u32 %v3440, %v3441
    %v3443 = vshll.u32 2102212464, %v3431
    %v3444 = vshrl.u32 920167782, %v3432
    %v3445 = vor.u32 %v3443, %v3444
    %v3446 = vshll.u32 920167782, %v3431
    %v3447 = vshrl.u32 1326507024, %v3432
    %v3448 = vor.u32 %v3446, %v3447
    %vm3449 = vcmp.lt.s32.totalorder %v3430, 1
    %vm3450 = vcmp.lt.s32.totalorder %v3430, 2
    %vm3451 = vcmp.lt.s32.totalorder %v3430, 3
    %vm3452 = vcmp.lt.s32.totalorder %v3430, 4
    %v3453 = vsel %vm3449, %v3433, %v3436
    %v3454 = vsel %vm3452, %v3442, 2102212464
    %v3455 = vsel %vm3451, %v3439, %v3454
    %v3456 = vsel %vm3450, %v3453, %v3455
    %v3457 = vsel %vm3449, %v3436, %v3439
    %v3458 = vsel %vm3452, %v3445, 920167782
    %v3459 = vsel %vm3451, %v3442, %v3458
    %v3460 = vsel %vm3450, %v3457, %v3459
    %v3461 = vsel %vm3449, %v3439, %v3442
    %v3462 = vsel %vm3452, %v3448, 1326507024
    %v3463 = vsel %vm3451, %v3445, %v3462
    %v3464 = vsel %vm3450, %v3461, %v3463
    %v3465 = vshll.u32 %v3425, 8
    %v3466 = vmul.u32.u64.compose %v3465, %v3464
    %v3467 = vextract.low.u32 %v3466
    %v3468 = vextract.high.u32 %v3466
    %v3469 = vmul.u32.u64.compose %v3465, %v3460
    %v3470 = vextract.low.u32 %v3469
    %v3471 = vextract.high.u32 %v3469
    %v3472 = vmul.u32 %v3465, %v3456
    %v3473 = vadd.s32 %v3468, %v3470
    %vm3474 = vc.u32 %v3468, %v3470
    %v3475 = vadd.s32 %v3471, 1
    %v3476 = vsel %vm3474, %v3475, %v3471
    %v3477 = vadd.s32 %v3472, %v3476
    %v3478 = vadd.s32 %v3477, 536870912
    %v3479 = vshrl.u32 %v3478, 30
    %v3480 = vshll.u32 %v3479, 30
    %v3481 = vsub.s32 %v3477, %v3480
    %vm3482 = vcmp.lt.s32.totalorder %v3481, 0
    %v3483 = vsub.s32 0, %v3481
    %v3484 = vsel %vm3482, %v3483, %v3481
    %v3485 = vclz %v3484
    %v3486 = vsub.s32 %v3485, 2
    %vm3487 = vcmp.gt.s32.totalorder 0, %v3486
    %v3488 = vsel %vm3487, 0, %v3486
    %v3489 = vsub.s32 32, %v3488
    %v3490 = vshll.u32 %v3481, %v3488
    %v3491 = vshrl.u32 %v3473, %v3489
    %v3492 = vor.u32 %v3490, %v3491
    %v3493 = vsub.s32 4294967266, %v3488
    %v3494 = vadd.s32 %v3493, 127
    %v3495 = vshll.u32 %v3494, 23
    %v3496 = vor.u32 4788187, %v3495
    %v3497 = vand.u32 2147483647, %v3496
    %v3499 = vcvt.s32.f32 %v3492
    %v3500 = vmul.f32 %v3499, %v3497
    %v3501 = vxor.u32 %v3500, 2147483648
    %v3502 = vsel %vm3419, %v3501, %v3500
    %v3503 = vsub.s32 4, %v3479
    %v3504 = vsel %vm3419, %v3503, %v3479
    %v3505 = vsel %vm3418, %v3413, %v3502
    %v3506 = vsel %vm3418, 0, %v3504
    %v3507 = vcosq.f32.pop %v3505
    %v3508 = vsinq.f32.pop %v3505
    %vm3509 = vweird.f32 %v3413
    %v3510 = vadd.s32 %v3506, 3
    %v3511 = vand.u32 %v3510, 3
    %vm3512 = vcmp.lt.s32.totalorder %v3511, 2
    %vm3513 = vcmp.eq.s32.totalorder %v3511, 0
    %v3514 = vxor.u32 %v3508, 2147483648
    %v3515 = vsel %vm3513, %v3507, %v3514
    %vm3516 = vcmp.eq.s32.totalorder %v3511, 2
    %v3517 = vxor.u32 %v3507, 2147483648
    %v3518 = vsel %vm3516, %v3517, %v3508
    %v3519 = vsel %vm3512, %v3515, %v3518
    %v3520 = vsel %vm3509, nan, %v3519
    %v3521 = vand.u32 2147483647, %v3414
    %vm3522 = vcmp.le.f32.partialorder %v3521, 0.7853982
    %vm3523 = vcmp.lt.s32.totalorder %v3414, 0
    %v3524 = vand.u32 %v3414, 2139095040
    %v3525 = vshrl.u32 %v3524, 23
    %v3526 = vsub.s32 %v3525, 127
    %v3527 = vand.u32 2147483647, %v3414
    %v3528 = vand.u32 %v3527, 8388607
    %v3529 = vor.u32 %v3528, 8388608
    %v3530 = vsub.s32 0, %v3529
    %v3531 = vadd.s32 %v3526, 1
    %vm3532 = vcmp.gt.s32.totalorder %v3531, 0
    %v3533 = vsel %vm3532, %v3531, 0
    %v3534 = vshrl.u32 %v3533, 5
    %v3535 = vand.u32 %v3533, 31
    %v3536 = vsub.s32 32, %v3535
    %v3537 = vshrl.u32 683565275, %v3536
    %v3538 = vshll.u32 683565275, %v3535
    %v3539 = vshrl.u32 2475754826, %v3536
    %v3540 = vor.u32 %v3538, %v3539
    %v3541 = vshll.u32 2475754826, %v3535
    %v3542 = vshrl.u32 2131351028, %v3536
    %v3543 = vor.u32 %v3541, %v3542
    %v3544 = vshll.u32 2131351028, %v3535
    %v3545 = vshrl.u32 2102212464, %v3536
    %v3546 = vor.u32 %v3544, %v3545
    %v3547 = vshll.u32 2102212464, %v3535
    %v3548 = vshrl.u32 920167782, %v3536
    %v3549 = vor.u32 %v3547, %v3548
    %v3550 = vshll.u32 920167782, %v3535
    %v3551 = vshrl.u32 1326507024, %v3536
    %v3552 = vor.u32 %v3550, %v3551
    %vm3553 = vcmp.lt.s32.totalorder %v3534, 1
    %vm3554 = vcmp.lt.s32.totalorder %v3534, 2
    %vm3555 = vcmp.lt.s32.totalorder %v3534, 3
    %vm3556 = vcmp.lt.s32.totalorder %v3534, 4
    %v3557 = vsel %vm3553, %v3537, %v3540
    %v3558 = vsel %vm3556, %v3546, 2102212464
    %v3559 = vsel %vm3555, %v3543, %v3558
    %v3560 = vsel %vm3554, %v3557, %v3559
    %v3561 = vsel %vm3553, %v3540, %v3543
    %v3562 = vsel %vm3556, %v3549, 920167782
    %v3563 = vsel %vm3555, %v3546, %v3562
    %v3564 = vsel %vm3554, %v3561, %v3563
    %v3565 = vsel %vm3553, %v3543, %v3546
    %v3566 = vsel %vm3556, %v3552, 1326507024
    %v3567 = vsel %vm3555, %v3549, %v3566
    %v3568 = vsel %vm3554, %v3565, %v3567
    %v3569 = vshll.u32 %v3529, 8
    %v3570 = vmul.u32.u64.compose %v3569, %v3568
    %v3571 = vextract.low.u32 %v3570
    %v3572 = vextract.high.u32 %v3570
    %v3573 = vmul.u32.u64.compose %v3569, %v3564
    %v3574 = vextract.low.u32 %v3573
    %v3575 = vextract.high.u32 %v3573
    %v3576 = vmul.u32 %v3569, %v3560
    %v3577 = vadd.s32 %v3572, %v3574
    %vm3578 = vc.u32 %v3572, %v3574
    %v3579 = vadd.s32 %v3575, 1
    %v3580 = vsel %vm3578, %v3579, %v3575
    %v3581 = vadd.s32 %v3576, %v3580
    %v3582 = vadd.s32 %v3581, 536870912
    %v3583 = vshrl.u32 %v3582, 30
    %v3584 = vshll.u32 %v3583, 30
    %v3585 = vsub.s32 %v3581, %v3584
    %vm3586 = vcmp.lt.s32.totalorder %v3585, 0
    %v3587 = vsub.s32 0, %v3585
    %v3588 = vsel %vm3586, %v3587, %v3585
    %v3589 = vclz %v3588
    %v3590 = vsub.s32 %v3589, 2
    %vm3591 = vcmp.gt.s32.totalorder 0, %v3590
    %v3592 = vsel %vm3591, 0, %v3590
    %v3593 = vsub.s32 32, %v3592
    %v3594 = vshll.u32 %v3585, %v3592
    %v3595 = vshrl.u32 %v3577, %v3593
    %v3596 = vor.u32 %v3594, %v3595
    %v3597 = vsub.s32 4294967266, %v3592
    %v3598 = vadd.s32 %v3597, 127
    %v3599 = vshll.u32 %v3598, 23
    %v3600 = vor.u32 4788187, %v3599
    %v3601 = vand.u32 2147483647, %v3600
    %v3603 = vcvt.s32.f32 %v3596
    %v3604 = vmul.f32 %v3603, %v3601
    %v3605 = vxor.u32 %v3604, 2147483648
    %v3606 = vsel %vm3523, %v3605, %v3604
    %v3607 = vsub.s32 4, %v3583
    %v3608 = vsel %vm3523, %v3607, %v3583
    %v3609 = vsel %vm3522, %v3414, %v3606
    %v3610 = vsel %vm3522, 0, %v3608
    %v3611 = vcosq.f32.pop %v3609
    %v3612 = vsinq.f32.pop %v3609
    %vm3613 = vweird.f32 %v3414
    %v3614 = vadd.s32 %v3610, 3
    %v3615 = vand.u32 %v3614, 3
    %vm3616 = vcmp.lt.s32.totalorder %v3615, 2
    %vm3617 = vcmp.eq.s32.totalorder %v3615, 0
    %v3618 = vxor.u32 %v3612, 2147483648
    %v3619 = vsel %vm3617, %v3611, %v3618
    %vm3620 = vcmp.eq.s32.totalorder %v3615, 2
    %v3621 = vxor.u32 %v3611, 2147483648
    %v3622 = vsel %vm3620, %v3621, %v3612
    %v3623 = vsel %vm3616, %v3619, %v3622
    %v3624 = vsel %vm3613, nan, %v3623
    %v3625 = vand.u32 2147483647, %v3415
    %vm3626 = vcmp.le.f32.partialorder %v3625, 0.7853982
    %vm3627 = vcmp.lt.s32.totalorder %v3415, 0
    %v3628 = vand.u32 %v3415, 2139095040
    %v3629 = vshrl.u32 %v3628, 23
    %v3630 = vsub.s32 %v3629, 127
    %v3631 = vand.u32 2147483647, %v3415
    %v3632 = vand.u32 %v3631, 8388607
    %v3633 = vor.u32 %v3632, 8388608
    %v3634 = vsub.s32 0, %v3633
    %v3635 = vadd.s32 %v3630, 1
    %vm3636 = vcmp.gt.s32.totalorder %v3635, 0
    %v3637 = vsel %vm3636, %v3635, 0
    %v3638 = vshrl.u32 %v3637, 5
    %v3639 = vand.u32 %v3637, 31
    %v3640 = vsub.s32 32, %v3639
    %v3641 = vshrl.u32 683565275, %v3640
    %v3642 = vshll.u32 683565275, %v3639
    %v3643 = vshrl.u32 2475754826, %v3640
    %v3644 = vor.u32 %v3642, %v3643
    %v3645 = vshll.u32 2475754826, %v3639
    %v3646 = vshrl.u32 2131351028, %v3640
    %v3647 = vor.u32 %v3645, %v3646
    %v3648 = vshll.u32 2131351028, %v3639
    %v3649 = vshrl.u32 2102212464, %v3640
    %v3650 = vor.u32 %v3648, %v3649
    %v3651 = vshll.u32 2102212464, %v3639
    %v3652 = vshrl.u32 920167782, %v3640
    %v3653 = vor.u32 %v3651, %v3652
    %v3654 = vshll.u32 920167782, %v3639
    %v3655 = vshrl.u32 1326507024, %v3640
    %v3656 = vor.u32 %v3654, %v3655
    %vm3657 = vcmp.lt.s32.totalorder %v3638, 1
    %vm3658 = vcmp.lt.s32.totalorder %v3638, 2
    %vm3659 = vcmp.lt.s32.totalorder %v3638, 3
    %vm3660 = vcmp.lt.s32.totalorder %v3638, 4
    %v3661 = vsel %vm3657, %v3641, %v3644
    %v3662 = vsel %vm3660, %v3650, 2102212464
    %v3663 = vsel %vm3659, %v3647, %v3662
    %v3664 = vsel %vm3658, %v3661, %v3663
    %v3665 = vsel %vm3657, %v3644, %v3647
    %v3666 = vsel %vm3660, %v3653, 920167782
    %v3667 = vsel %vm3659, %v3650, %v3666
    %v3668 = vsel %vm3658, %v3665, %v3667
    %v3669 = vsel %vm3657, %v3647, %v3650
    %v3670 = vsel %vm3660, %v3656, 1326507024
    %v3671 = vsel %vm3659, %v3653, %v3670
    %v3672 = vsel %vm3658, %v3669, %v3671
    %v3673 = vshll.u32 %v3633, 8
    %v3674 = vmul.u32.u64.compose %v3673, %v3672
    %v3675 = vextract.low.u32 %v3674
    %v3676 = vextract.high.u32 %v3674
    %v3677 = vmul.u32.u64.compose %v3673, %v3668
    %v3678 = vextract.low.u32 %v3677
    %v3679 = vextract.high.u32 %v3677
    %v3680 = vmul.u32 %v3673, %v3664
    %v3681 = vadd.s32 %v3676, %v3678
    %vm3682 = vc.u32 %v3676, %v3678
    %v3683 = vadd.s32 %v3679, 1
    %v3684 = vsel %vm3682, %v3683, %v3679
    %v3685 = vadd.s32 %v3680, %v3684
    %v3686 = vadd.s32 %v3685, 536870912
    %v3687 = vshrl.u32 %v3686, 30
    %v3688 = vshll.u32 %v3687, 30
    %v3689 = vsub.s32 %v3685, %v3688
    %vm3690 = vcmp.lt.s32.totalorder %v3689, 0
    %v3691 = vsub.s32 0, %v3689
    %v3692 = vsel %vm3690, %v3691, %v3689
    %v3693 = vclz %v3692
    %v3694 = vsub.s32 %v3693, 2
    %vm3695 = vcmp.gt.s32.totalorder 0, %v3694
    %v3696 = vsel %vm3695, 0, %v3694
    %v3697 = vsub.s32 32, %v3696
    %v3698 = vshll.u32 %v3689, %v3696
    %v3699 = vshrl.u32 %v3681, %v3697
    %v3700 = vor.u32 %v3698, %v3699
    %v3701 = vsub.s32 4294967266, %v3696
    %v3702 = vadd.s32 %v3701, 127
    %v3703 = vshll.u32 %v3702, 23
    %v3704 = vor.u32 4788187, %v3703
    %v3705 = vand.u32 2147483647, %v3704
    %v3707 = vcvt.s32.f32 %v3700
    %v3708 = vmul.f32 %v3707, %v3705
    %v3709 = vxor.u32 %v3708, 2147483648
    %v3710 = vsel %vm3627, %v3709, %v3708
    %v3711 = vsub.s32 4, %v3687
    %v3712 = vsel %vm3627, %v3711, %v3687
    %v3713 = vsel %vm3626, %v3415, %v3710
    %v3714 = vsel %vm3626, 0, %v3712
    %v3715 = vcosq.f32.pop %v3713
    %v3716 = vsinq.f32.pop %v3713
    %vm3717 = vweird.f32 %v3415
    %v3718 = vadd.s32 %v3714, 3
    %v3719 = vand.u32 %v3718, 3
    %vm3720 = vcmp.lt.s32.totalorder %v3719, 2
    %vm3721 = vcmp.eq.s32.totalorder %v3719, 0
    %v3722 = vxor.u32 %v3716, 2147483648
    %v3723 = vsel %vm3721, %v3715, %v3722
    %vm3724 = vcmp.eq.s32.totalorder %v3719, 2
    %v3725 = vxor.u32 %v3715, 2147483648
    %v3726 = vsel %vm3724, %v3725, %v3716
    %v3727 = vsel %vm3720, %v3723, %v3726
    %v3728 = vsel %vm3717, nan, %v3727
    %v3729 = vand.u32 2147483647, %v3416
    %vm3730 = vcmp.le.f32.partialorder %v3729, 0.7853982
    %vm3731 = vcmp.lt.s32.totalorder %v3416, 0
    %v3732 = vand.u32 %v3416, 2139095040
    %v3733 = vshrl.u32 %v3732, 23
    %v3734 = vsub.s32 %v3733, 127
    %v3735 = vand.u32 2147483647, %v3416
    %v3736 = vand.u32 %v3735, 8388607
    %v3737 = vor.u32 %v3736, 8388608
    %v3738 = vsub.s32 0, %v3737
    %v3739 = vadd.s32 %v3734, 1
    %vm3740 = vcmp.gt.s32.totalorder %v3739, 0
    %v3741 = vsel %vm3740, %v3739, 0
    %v3742 = vshrl.u32 %v3741, 5
    %v3743 = vand.u32 %v3741, 31
    %v3744 = vsub.s32 32, %v3743
    %v3745 = vshrl.u32 683565275, %v3744
    %v3746 = vshll.u32 683565275, %v3743
    %v3747 = vshrl.u32 2475754826, %v3744
    %v3748 = vor.u32 %v3746, %v3747
    %v3749 = vshll.u32 2475754826, %v3743
    %v3750 = vshrl.u32 2131351028, %v3744
    %v3751 = vor.u32 %v3749, %v3750
    %v3752 = vshll.u32 2131351028, %v3743
    %v3753 = vshrl.u32 2102212464, %v3744
    %v3754 = vor.u32 %v3752, %v3753
    %v3755 = vshll.u32 2102212464, %v3743
    %v3756 = vshrl.u32 920167782, %v3744
    %v3757 = vor.u32 %v3755, %v3756
    %v3758 = vshll.u32 920167782, %v3743
    %v3759 = vshrl.u32 1326507024, %v3744
    %v3760 = vor.u32 %v3758, %v3759
    %vm3761 = vcmp.lt.s32.totalorder %v3742, 1
    %vm3762 = vcmp.lt.s32.totalorder %v3742, 2
    %vm3763 = vcmp.lt.s32.totalorder %v3742, 3
    %vm3764 = vcmp.lt.s32.totalorder %v3742, 4
    %v3765 = vsel %vm3761, %v3745, %v3748
    %v3766 = vsel %vm3764, %v3754, 2102212464
    %v3767 = vsel %vm3763, %v3751, %v3766
    %v3768 = vsel %vm3762, %v3765, %v3767
    %v3769 = vsel %vm3761, %v3748, %v3751
    %v3770 = vsel %vm3764, %v3757, 920167782
    %v3771 = vsel %vm3763, %v3754, %v3770
    %v3772 = vsel %vm3762, %v3769, %v3771
    %v3773 = vsel %vm3761, %v3751, %v3754
    %v3774 = vsel %vm3764, %v3760, 1326507024
    %v3775 = vsel %vm3763, %v3757, %v3774
    %v3776 = vsel %vm3762, %v3773, %v3775
    %v3777 = vshll.u32 %v3737, 8
    %v3778 = vmul.u32.u64.compose %v3777, %v3776
    %v3779 = vextract.low.u32 %v3778
    %v3780 = vextract.high.u32 %v3778
    %v3781 = vmul.u32.u64.compose %v3777, %v3772
    %v3782 = vextract.low.u32 %v3781
    %v3783 = vextract.high.u32 %v3781
    %v3784 = vmul.u32 %v3777, %v3768
    %v3785 = vadd.s32 %v3780, %v3782
    %vm3786 = vc.u32 %v3780, %v3782
    %v3787 = vadd.s32 %v3783, 1
    %v3788 = vsel %vm3786, %v3787, %v3783
    %v3789 = vadd.s32 %v3784, %v3788
    %v3790 = vadd.s32 %v3789, 536870912
    %v3791 = vshrl.u32 %v3790, 30
    %v3792 = vshll.u32 %v3791, 30
    %v3793 = vsub.s32 %v3789, %v3792
    %vm3794 = vcmp.lt.s32.totalorder %v3793, 0
    %v3795 = vsub.s32 0, %v3793
    %v3796 = vsel %vm3794, %v3795, %v3793
    %v3797 = vclz %v3796
    %v3798 = vsub.s32 %v3797, 2
    %vm3799 = vcmp.gt.s32.totalorder 0, %v3798
    %v3800 = vsel %vm3799, 0, %v3798
    %v3801 = vsub.s32 32, %v3800
    %v3802 = vshll.u32 %v3793, %v3800
    %v3803 = vshrl.u32 %v3785, %v3801
    %v3804 = vor.u32 %v3802, %v3803
    %v3805 = vsub.s32 4294967266, %v3800
    %v3806 = vadd.s32 %v3805, 127
    %v3807 = vshll.u32 %v3806, 23
    %v3808 = vor.u32 4788187, %v3807
    %v3809 = vand.u32 2147483647, %v3808
    %v3811 = vcvt.s32.f32 %v3804
    %v3812 = vmul.f32 %v3811, %v3809
    %v3813 = vxor.u32 %v3812, 2147483648
    %v3814 = vsel %vm3731, %v3813, %v3812
    %v3815 = vsub.s32 4, %v3791
    %v3816 = vsel %vm3731, %v3815, %v3791
    %v3817 = vsel %vm3730, %v3416, %v3814
    %v3818 = vsel %vm3730, 0, %v3816
    %v3819 = vcosq.f32.pop %v3817
    %v3820 = vsinq.f32.pop %v3817
    %vm3821 = vweird.f32 %v3416
    %v3822 = vadd.s32 %v3818, 3
    %v3823 = vand.u32 %v3822, 3
    %vm3824 = vcmp.lt.s32.totalorder %v3823, 2
    %vm3825 = vcmp.eq.s32.totalorder %v3823, 0
    %v3826 = vxor.u32 %v3820, 2147483648
    %v3827 = vsel %vm3825, %v3819, %v3826
    %vm3828 = vcmp.eq.s32.totalorder %v3823, 2
    %v3829 = vxor.u32 %v3819, 2147483648
    %v3830 = vsel %vm3828, %v3829, %v3820
    %v3831 = vsel %vm3824, %v3827, %v3830
    %v3832 = vsel %vm3821, nan, %v3831
    %s3833 = scalar_lea.vmem [#allocation5], 288
    %3834 = vst [vmem:[%s3833] sm:$0xff] %v3520
    %3835 = vst [vmem:[%s3833 + $0x8] sm:$0xff] %v3624
    %3836 = vst [vmem:[%s3833 + $0x10] sm:$0xff] %v3728
    %3837 = vst [vmem:[%s3833 + $0x18] sm:$0xff] %v3832
    %v3838 = vand.u32 2147483647, %v3413
    %vm3839 = vcmp.le.f32.partialorder %v3838, 0.7853982
    %vm3840 = vcmp.lt.s32.totalorder %v3413, 0
    %v3841 = vand.u32 %v3413, 2139095040
    %v3842 = vshrl.u32 %v3841, 23
    %v3843 = vsub.s32 %v3842, 127
    %v3844 = vand.u32 2147483647, %v3413
    %v3845 = vand.u32 %v3844, 8388607
    %v3846 = vor.u32 %v3845, 8388608
    %v3847 = vsub.s32 0, %v3846
    %v3848 = vadd.s32 %v3843, 1
    %vm3849 = vcmp.gt.s32.totalorder %v3848, 0
    %v3850 = vsel %vm3849, %v3848, 0
    %v3851 = vshrl.u32 %v3850, 5
    %v3852 = vand.u32 %v3850, 31
    %v3853 = vsub.s32 32, %v3852
    %v3854 = vshrl.u32 683565275, %v3853
    %v3855 = vshll.u32 683565275, %v3852
    %v3856 = vshrl.u32 2475754826, %v3853
    %v3857 = vor.u32 %v3855, %v3856
    %v3858 = vshll.u32 2475754826, %v3852
    %v3859 = vshrl.u32 2131351028, %v3853
    %v3860 = vor.u32 %v3858, %v3859
    %v3861 = vshll.u32 2131351028, %v3852
    %v3862 = vshrl.u32 2102212464, %v3853
    %v3863 = vor.u32 %v3861, %v3862
    %v3864 = vshll.u32 2102212464, %v3852
    %v3865 = vshrl.u32 920167782, %v3853
    %v3866 = vor.u32 %v3864, %v3865
    %v3867 = vshll.u32 920167782, %v3852
    %v3868 = vshrl.u32 1326507024, %v3853
    %v3869 = vor.u32 %v3867, %v3868
    %vm3870 = vcmp.lt.s32.totalorder %v3851, 1
    %vm3871 = vcmp.lt.s32.totalorder %v3851, 2
    %vm3872 = vcmp.lt.s32.totalorder %v3851, 3
    %vm3873 = vcmp.lt.s32.totalorder %v3851, 4
    %v3874 = vsel %vm3870, %v3854, %v3857
    %v3875 = vsel %vm3873, %v3863, 2102212464
    %v3876 = vsel %vm3872, %v3860, %v3875
    %v3877 = vsel %vm3871, %v3874, %v3876
    %v3878 = vsel %vm3870, %v3857, %v3860
    %v3879 = vsel %vm3873, %v3866, 920167782
    %v3880 = vsel %vm3872, %v3863, %v3879
    %v3881 = vsel %vm3871, %v3878, %v3880
    %v3882 = vsel %vm3870, %v3860, %v3863
    %v3883 = vsel %vm3873, %v3869, 1326507024
    %v3884 = vsel %vm3872, %v3866, %v3883
    %v3885 = vsel %vm3871, %v3882, %v3884
    %v3886 = vshll.u32 %v3846, 8
    %v3887 = vmul.u32.u64.compose %v3886, %v3885
    %v3888 = vextract.low.u32 %v3887
    %v3889 = vextract.high.u32 %v3887
    %v3890 = vmul.u32.u64.compose %v3886, %v3881
    %v3891 = vextract.low.u32 %v3890
    %v3892 = vextract.high.u32 %v3890
    %v3893 = vmul.u32 %v3886, %v3877
    %v3894 = vadd.s32 %v3889, %v3891
    %vm3895 = vc.u32 %v3889, %v3891
    %v3896 = vadd.s32 %v3892, 1
    %v3897 = vsel %vm3895, %v3896, %v3892
    %v3898 = vadd.s32 %v3893, %v3897
    %v3899 = vadd.s32 %v3898, 536870912
    %v3900 = vshrl.u32 %v3899, 30
    %v3901 = vshll.u32 %v3900, 30
    %v3902 = vsub.s32 %v3898, %v3901
    %vm3903 = vcmp.lt.s32.totalorder %v3902, 0
    %v3904 = vsub.s32 0, %v3902
    %v3905 = vsel %vm3903, %v3904, %v3902
    %v3906 = vclz %v3905
    %v3907 = vsub.s32 %v3906, 2
    %vm3908 = vcmp.gt.s32.totalorder 0, %v3907
    %v3909 = vsel %vm3908, 0, %v3907
    %v3910 = vsub.s32 32, %v3909
    %v3911 = vshll.u32 %v3902, %v3909
    %v3912 = vshrl.u32 %v3894, %v3910
    %v3913 = vor.u32 %v3911, %v3912
    %v3914 = vsub.s32 4294967266, %v3909
    %v3915 = vadd.s32 %v3914, 127
    %v3916 = vshll.u32 %v3915, 23
    %v3917 = vor.u32 4788187, %v3916
    %v3918 = vand.u32 2147483647, %v3917
    %v3920 = vcvt.s32.f32 %v3913
    %v3921 = vmul.f32 %v3920, %v3918
    %v3922 = vxor.u32 %v3921, 2147483648
    %v3923 = vsel %vm3840, %v3922, %v3921
    %v3924 = vsub.s32 4, %v3900
    %v3925 = vsel %vm3840, %v3924, %v3900
    %v3926 = vsel %vm3839, %v3413, %v3923
    %v3927 = vsel %vm3839, 0, %v3925
    %v3928 = vcosq.f32.pop %v3926
    %v3929 = vsinq.f32.pop %v3926
    %vm3930 = vweird.f32 %v3413
    %v3931 = vand.u32 %v3927, 3
    %vm3932 = vcmp.lt.s32.totalorder %v3931, 2
    %vm3933 = vcmp.eq.s32.totalorder %v3931, 0
    %v3934 = vxor.u32 %v3929, 2147483648
    %v3935 = vsel %vm3933, %v3928, %v3934
    %vm3936 = vcmp.eq.s32.totalorder %v3931, 2
    %v3937 = vxor.u32 %v3928, 2147483648
    %v3938 = vsel %vm3936, %v3937, %v3929
    %v3939 = vsel %vm3932, %v3935, %v3938
    %v3940 = vsel %vm3930, nan, %v3939
    %v3941 = vand.u32 2147483647, %v3414
    %vm3942 = vcmp.le.f32.partialorder %v3941, 0.7853982
    %vm3943 = vcmp.lt.s32.totalorder %v3414, 0
    %v3944 = vand.u32 %v3414, 2139095040
    %v3945 = vshrl.u32 %v3944, 23
    %v3946 = vsub.s32 %v3945, 127
    %v3947 = vand.u32 2147483647, %v3414
    %v3948 = vand.u32 %v3947, 8388607
    %v3949 = vor.u32 %v3948, 8388608
    %v3950 = vsub.s32 0, %v3949
    %v3951 = vadd.s32 %v3946, 1
    %vm3952 = vcmp.gt.s32.totalorder %v3951, 0
    %v3953 = vsel %vm3952, %v3951, 0
    %v3954 = vshrl.u32 %v3953, 5
    %v3955 = vand.u32 %v3953, 31
    %v3956 = vsub.s32 32, %v3955
    %v3957 = vshrl.u32 683565275, %v3956
    %v3958 = vshll.u32 683565275, %v3955
    %v3959 = vshrl.u32 2475754826, %v3956
    %v3960 = vor.u32 %v3958, %v3959
    %v3961 = vshll.u32 2475754826, %v3955
    %v3962 = vshrl.u32 2131351028, %v3956
    %v3963 = vor.u32 %v3961, %v3962
    %v3964 = vshll.u32 2131351028, %v3955
    %v3965 = vshrl.u32 2102212464, %v3956
    %v3966 = vor.u32 %v3964, %v3965
    %v3967 = vshll.u32 2102212464, %v3955
    %v3968 = vshrl.u32 920167782, %v3956
    %v3969 = vor.u32 %v3967, %v3968
    %v3970 = vshll.u32 920167782, %v3955
    %v3971 = vshrl.u32 1326507024, %v3956
    %v3972 = vor.u32 %v3970, %v3971
    %vm3973 = vcmp.lt.s32.totalorder %v3954, 1
    %vm3974 = vcmp.lt.s32.totalorder %v3954, 2
    %vm3975 = vcmp.lt.s32.totalorder %v3954, 3
    %vm3976 = vcmp.lt.s32.totalorder %v3954, 4
    %v3977 = vsel %vm3973, %v3957, %v3960
    %v3978 = vsel %vm3976, %v3966, 2102212464
    %v3979 = vsel %vm3975, %v3963, %v3978
    %v3980 = vsel %vm3974, %v3977, %v3979
    %v3981 = vsel %vm3973, %v3960, %v3963
    %v3982 = vsel %vm3976, %v3969, 920167782
    %v3983 = vsel %vm3975, %v3966, %v3982
    %v3984 = vsel %vm3974, %v3981, %v3983
    %v3985 = vsel %vm3973, %v3963, %v3966
    %v3986 = vsel %vm3976, %v3972, 1326507024
    %v3987 = vsel %vm3975, %v3969, %v3986
    %v3988 = vsel %vm3974, %v3985, %v3987
    %v3989 = vshll.u32 %v3949, 8
    %v3990 = vmul.u32.u64.compose %v3989, %v3988
    %v3991 = vextract.low.u32 %v3990
    %v3992 = vextract.high.u32 %v3990
    %v3993 = vmul.u32.u64.compose %v3989, %v3984
    %v3994 = vextract.low.u32 %v3993
    %v3995 = vextract.high.u32 %v3993
    %v3996 = vmul.u32 %v3989, %v3980
    %v3997 = vadd.s32 %v3992, %v3994
    %vm3998 = vc.u32 %v3992, %v3994
    %v3999 = vadd.s32 %v3995, 1
    %v4000 = vsel %vm3998, %v3999, %v3995
    %v4001 = vadd.s32 %v3996, %v4000
    %v4002 = vadd.s32 %v4001, 536870912
    %v4003 = vshrl.u32 %v4002, 30
    %v4004 = vshll.u32 %v4003, 30
    %v4005 = vsub.s32 %v4001, %v4004
    %vm4006 = vcmp.lt.s32.totalorder %v4005, 0
    %v4007 = vsub.s32 0, %v4005
    %v4008 = vsel %vm4006, %v4007, %v4005
    %v4009 = vclz %v4008
    %v4010 = vsub.s32 %v4009, 2
    %vm4011 = vcmp.gt.s32.totalorder 0, %v4010
    %v4012 = vsel %vm4011, 0, %v4010
    %v4013 = vsub.s32 32, %v4012
    %v4014 = vshll.u32 %v4005, %v4012
    %v4015 = vshrl.u32 %v3997, %v4013
    %v4016 = vor.u32 %v4014, %v4015
    %v4017 = vsub.s32 4294967266, %v4012
    %v4018 = vadd.s32 %v4017, 127
    %v4019 = vshll.u32 %v4018, 23
    %v4020 = vor.u32 4788187, %v4019
    %v4021 = vand.u32 2147483647, %v4020
    %v4023 = vcvt.s32.f32 %v4016
    %v4024 = vmul.f32 %v4023, %v4021
    %v4025 = vxor.u32 %v4024, 2147483648
    %v4026 = vsel %vm3943, %v4025, %v4024
    %v4027 = vsub.s32 4, %v4003
    %v4028 = vsel %vm3943, %v4027, %v4003
    %v4029 = vsel %vm3942, %v3414, %v4026
    %v4030 = vsel %vm3942, 0, %v4028
    %v4031 = vcosq.f32.pop %v4029
    %v4032 = vsinq.f32.pop %v4029
    %vm4033 = vweird.f32 %v3414
    %v4034 = vand.u32 %v4030, 3
    %vm4035 = vcmp.lt.s32.totalorder %v4034, 2
    %vm4036 = vcmp.eq.s32.totalorder %v4034, 0
    %v4037 = vxor.u32 %v4032, 2147483648
    %v4038 = vsel %vm4036, %v4031, %v4037
    %vm4039 = vcmp.eq.s32.totalorder %v4034, 2
    %v4040 = vxor.u32 %v4031, 2147483648
    %v4041 = vsel %vm4039, %v4040, %v4032
    %v4042 = vsel %vm4035, %v4038, %v4041
    %v4043 = vsel %vm4033, nan, %v4042
    %v4044 = vand.u32 2147483647, %v3415
    %vm4045 = vcmp.le.f32.partialorder %v4044, 0.7853982
    %vm4046 = vcmp.lt.s32.totalorder %v3415, 0
    %v4047 = vand.u32 %v3415, 2139095040
    %v4048 = vshrl.u32 %v4047, 23
    %v4049 = vsub.s32 %v4048, 127
    %v4050 = vand.u32 2147483647, %v3415
    %v4051 = vand.u32 %v4050, 8388607
    %v4052 = vor.u32 %v4051, 8388608
    %v4053 = vsub.s32 0, %v4052
    %v4054 = vadd.s32 %v4049, 1
    %vm4055 = vcmp.gt.s32.totalorder %v4054, 0
    %v4056 = vsel %vm4055, %v4054, 0
    %v4057 = vshrl.u32 %v4056, 5
    %v4058 = vand.u32 %v4056, 31
    %v4059 = vsub.s32 32, %v4058
    %v4060 = vshrl.u32 683565275, %v4059
    %v4061 = vshll.u32 683565275, %v4058
    %v4062 = vshrl.u32 2475754826, %v4059
    %v4063 = vor.u32 %v4061, %v4062
    %v4064 = vshll.u32 2475754826, %v4058
    %v4065 = vshrl.u32 2131351028, %v4059
    %v4066 = vor.u32 %v4064, %v4065
    %v4067 = vshll.u32 2131351028, %v4058
    %v4068 = vshrl.u32 2102212464, %v4059
    %v4069 = vor.u32 %v4067, %v4068
    %v4070 = vshll.u32 2102212464, %v4058
    %v4071 = vshrl.u32 920167782, %v4059
    %v4072 = vor.u32 %v4070, %v4071
    %v4073 = vshll.u32 920167782, %v4058
    %v4074 = vshrl.u32 1326507024, %v4059
    %v4075 = vor.u32 %v4073, %v4074
    %vm4076 = vcmp.lt.s32.totalorder %v4057, 1
    %vm4077 = vcmp.lt.s32.totalorder %v4057, 2
    %vm4078 = vcmp.lt.s32.totalorder %v4057, 3
    %vm4079 = vcmp.lt.s32.totalorder %v4057, 4
    %v4080 = vsel %vm4076, %v4060, %v4063
    %v4081 = vsel %vm4079, %v4069, 2102212464
    %v4082 = vsel %vm4078, %v4066, %v4081
    %v4083 = vsel %vm4077, %v4080, %v4082
    %v4084 = vsel %vm4076, %v4063, %v4066
    %v4085 = vsel %vm4079, %v4072, 920167782
    %v4086 = vsel %vm4078, %v4069, %v4085
    %v4087 = vsel %vm4077, %v4084, %v4086
    %v4088 = vsel %vm4076, %v4066, %v4069
    %v4089 = vsel %vm4079, %v4075, 1326507024
    %v4090 = vsel %vm4078, %v4072, %v4089
    %v4091 = vsel %vm4077, %v4088, %v4090
    %v4092 = vshll.u32 %v4052, 8
    %v4093 = vmul.u32.u64.compose %v4092, %v4091
    %v4094 = vextract.low.u32 %v4093
    %v4095 = vextract.high.u32 %v4093
    %v4096 = vmul.u32.u64.compose %v4092, %v4087
    %v4097 = vextract.low.u32 %v4096
    %v4098 = vextract.high.u32 %v4096
    %v4099 = vmul.u32 %v4092, %v4083
    %v4100 = vadd.s32 %v4095, %v4097
    %vm4101 = vc.u32 %v4095, %v4097
    %v4102 = vadd.s32 %v4098, 1
    %v4103 = vsel %vm4101, %v4102, %v4098
    %v4104 = vadd.s32 %v4099, %v4103
    %v4105 = vadd.s32 %v4104, 536870912
    %v4106 = vshrl.u32 %v4105, 30
    %v4107 = vshll.u32 %v4106, 30
    %v4108 = vsub.s32 %v4104, %v4107
    %vm4109 = vcmp.lt.s32.totalorder %v4108, 0
    %v4110 = vsub.s32 0, %v4108
    %v4111 = vsel %vm4109, %v4110, %v4108
    %v4112 = vclz %v4111
    %v4113 = vsub.s32 %v4112, 2
    %vm4114 = vcmp.gt.s32.totalorder 0, %v4113
    %v4115 = vsel %vm4114, 0, %v4113
    %v4116 = vsub.s32 32, %v4115
    %v4117 = vshll.u32 %v4108, %v4115
    %v4118 = vshrl.u32 %v4100, %v4116
    %v4119 = vor.u32 %v4117, %v4118
    %v4120 = vsub.s32 4294967266, %v4115
    %v4121 = vadd.s32 %v4120, 127
    %v4122 = vshll.u32 %v4121, 23
    %v4123 = vor.u32 4788187, %v4122
    %v4124 = vand.u32 2147483647, %v4123
    %v4126 = vcvt.s32.f32 %v4119
    %v4127 = vmul.f32 %v4126, %v4124
    %v4128 = vxor.u32 %v4127, 2147483648
    %v4129 = vsel %vm4046, %v4128, %v4127
    %v4130 = vsub.s32 4, %v4106
    %v4131 = vsel %vm4046, %v4130, %v4106
    %v4132 = vsel %vm4045, %v3415, %v4129
    %v4133 = vsel %vm4045, 0, %v4131
    %v4134 = vcosq.f32.pop %v4132
    %v4135 = vsinq.f32.pop %v4132
    %vm4136 = vweird.f32 %v3415
    %v4137 = vand.u32 %v4133, 3
    %vm4138 = vcmp.lt.s32.totalorder %v4137, 2
    %vm4139 = vcmp.eq.s32.totalorder %v4137, 0
    %v4140 = vxor.u32 %v4135, 2147483648
    %v4141 = vsel %vm4139, %v4134, %v4140
    %vm4142 = vcmp.eq.s32.totalorder %v4137, 2
    %v4143 = vxor.u32 %v4134, 2147483648
    %v4144 = vsel %vm4142, %v4143, %v4135
    %v4145 = vsel %vm4138, %v4141, %v4144
    %v4146 = vsel %vm4136, nan, %v4145
    %v4147 = vand.u32 2147483647, %v3416
    %vm4148 = vcmp.le.f32.partialorder %v4147, 0.7853982
    %vm4149 = vcmp.lt.s32.totalorder %v3416, 0
    %v4150 = vand.u32 %v3416, 2139095040
    %v4151 = vshrl.u32 %v4150, 23
    %v4152 = vsub.s32 %v4151, 127
    %v4153 = vand.u32 2147483647, %v3416
    %v4154 = vand.u32 %v4153, 8388607
    %v4155 = vor.u32 %v4154, 8388608
    %v4156 = vsub.s32 0, %v4155
    %v4157 = vadd.s32 %v4152, 1
    %vm4158 = vcmp.gt.s32.totalorder %v4157, 0
    %v4159 = vsel %vm4158, %v4157, 0
    %v4160 = vshrl.u32 %v4159, 5
    %v4161 = vand.u32 %v4159, 31
    %v4162 = vsub.s32 32, %v4161
    %v4163 = vshrl.u32 683565275, %v4162
    %v4164 = vshll.u32 683565275, %v4161
    %v4165 = vshrl.u32 2475754826, %v4162
    %v4166 = vor.u32 %v4164, %v4165
    %v4167 = vshll.u32 2475754826, %v4161
    %v4168 = vshrl.u32 2131351028, %v4162
    %v4169 = vor.u32 %v4167, %v4168
    %v4170 = vshll.u32 2131351028, %v4161
    %v4171 = vshrl.u32 2102212464, %v4162
    %v4172 = vor.u32 %v4170, %v4171
    %v4173 = vshll.u32 2102212464, %v4161
    %v4174 = vshrl.u32 920167782, %v4162
    %v4175 = vor.u32 %v4173, %v4174
    %v4176 = vshll.u32 920167782, %v4161
    %v4177 = vshrl.u32 1326507024, %v4162
    %v4178 = vor.u32 %v4176, %v4177
    %vm4179 = vcmp.lt.s32.totalorder %v4160, 1
    %vm4180 = vcmp.lt.s32.totalorder %v4160, 2
    %vm4181 = vcmp.lt.s32.totalorder %v4160, 3
    %vm4182 = vcmp.lt.s32.totalorder %v4160, 4
    %v4183 = vsel %vm4179, %v4163, %v4166
    %v4184 = vsel %vm4182, %v4172, 2102212464
    %v4185 = vsel %vm4181, %v4169, %v4184
    %v4186 = vsel %vm4180, %v4183, %v4185
    %v4187 = vsel %vm4179, %v4166, %v4169
    %v4188 = vsel %vm4182, %v4175, 920167782
    %v4189 = vsel %vm4181, %v4172, %v4188
    %v4190 = vsel %vm4180, %v4187, %v4189
    %v4191 = vsel %vm4179, %v4169, %v4172
    %v4192 = vsel %vm4182, %v4178, 1326507024
    %v4193 = vsel %vm4181, %v4175, %v4192
    %v4194 = vsel %vm4180, %v4191, %v4193
    %v4195 = vshll.u32 %v4155, 8
    %v4196 = vmul.u32.u64.compose %v4195, %v4194
    %v4197 = vextract.low.u32 %v4196
    %v4198 = vextract.high.u32 %v4196
    %v4199 = vmul.u32.u64.compose %v4195, %v4190
    %v4200 = vextract.low.u32 %v4199
    %v4201 = vextract.high.u32 %v4199
    %v4202 = vmul.u32 %v4195, %v4186
    %v4203 = vadd.s32 %v4198, %v4200
    %vm4204 = vc.u32 %v4198, %v4200
    %v4205 = vadd.s32 %v4201, 1
    %v4206 = vsel %vm4204, %v4205, %v4201
    %v4207 = vadd.s32 %v4202, %v4206
    %v4208 = vadd.s32 %v4207, 536870912
    %v4209 = vshrl.u32 %v4208, 30
    %v4210 = vshll.u32 %v4209, 30
    %v4211 = vsub.s32 %v4207, %v4210
    %vm4212 = vcmp.lt.s32.totalorder %v4211, 0
    %v4213 = vsub.s32 0, %v4211
    %v4214 = vsel %vm4212, %v4213, %v4211
    %v4215 = vclz %v4214
    %v4216 = vsub.s32 %v4215, 2
    %vm4217 = vcmp.gt.s32.totalorder 0, %v4216
    %v4218 = vsel %vm4217, 0, %v4216
    %v4219 = vsub.s32 32, %v4218
    %v4220 = vshll.u32 %v4211, %v4218
    %v4221 = vshrl.u32 %v4203, %v4219
    %v4222 = vor.u32 %v4220, %v4221
    %v4223 = vsub.s32 4294967266, %v4218
    %v4224 = vadd.s32 %v4223, 127
    %v4225 = vshll.u32 %v4224, 23
    %v4226 = vor.u32 4788187, %v4225
    %v4227 = vand.u32 2147483647, %v4226
    %v4229 = vcvt.s32.f32 %v4222
    %v4230 = vmul.f32 %v4229, %v4227
    %v4231 = vxor.u32 %v4230, 2147483648
    %v4232 = vsel %vm4149, %v4231, %v4230
    %v4233 = vsub.s32 4, %v4209
    %v4234 = vsel %vm4149, %v4233, %v4209
    %v4235 = vsel %vm4148, %v3416, %v4232
    %v4236 = vsel %vm4148, 0, %v4234
    %v4237 = vcosq.f32.pop %v4235
    %v4238 = vsinq.f32.pop %v4235
    %vm4239 = vweird.f32 %v3416
    %v4240 = vand.u32 %v4236, 3
    %vm4241 = vcmp.lt.s32.totalorder %v4240, 2
    %vm4242 = vcmp.eq.s32.totalorder %v4240, 0
    %v4243 = vxor.u32 %v4238, 2147483648
    %v4244 = vsel %vm4242, %v4237, %v4243
    %vm4245 = vcmp.eq.s32.totalorder %v4240, 2
    %v4246 = vxor.u32 %v4237, 2147483648
    %v4247 = vsel %vm4245, %v4246, %v4238
    %v4248 = vsel %vm4241, %v4244, %v4247
    %v4249 = vsel %vm4239, nan, %v4248
    %s4250 = scalar_lea.vmem [#allocation5], 320
    %4251 = vst [vmem:[%s4250] sm:$0xff] %v3940
    %4252 = vst [vmem:[%s4250 + $0x8] sm:$0xff] %v4043
    %4253 = vst [vmem:[%s4250 + $0x10] sm:$0xff] %v4146
    %4254 = vst [vmem:[%s4250 + $0x18] sm:$0xff] %v4249
    %v4255 = vld [vmem:[#allocation2] sm:$0xff]
    %v4256 = vld [vmem:[#allocation2 + $0x8] sm:$0xff]
    %v4257 = vld [vmem:[#allocation2 + $0x10] sm:$0xff]
    %v4258 = vld [vmem:[#allocation2 + $0x18] sm:$0xff]
    %v4259 = vmul.f32 %v4255, 32.0
    %v4260 = vmul.f32 %v4256, 32.0
    %v4261 = vmul.f32 %v4257, 32.0
    %v4262 = vmul.f32 %v4258, 32.0
    %v4263 = vand.u32 2147483647, %v4259
    %vm4264 = vcmp.le.f32.partialorder %v4263, 0.7853982
    %vm4265 = vcmp.lt.s32.totalorder %v4259, 0
    %v4266 = vand.u32 %v4259, 2139095040
    %v4267 = vshrl.u32 %v4266, 23
    %v4268 = vsub.s32 %v4267, 127
    %v4269 = vand.u32 2147483647, %v4259
    %v4270 = vand.u32 %v4269, 8388607
    %v4271 = vor.u32 %v4270, 8388608
    %v4272 = vsub.s32 0, %v4271
    %v4273 = vadd.s32 %v4268, 1
    %vm4274 = vcmp.gt.s32.totalorder %v4273, 0
    %v4275 = vsel %vm4274, %v4273, 0
    %v4276 = vshrl.u32 %v4275, 5
    %v4277 = vand.u32 %v4275, 31
    %v4278 = vsub.s32 32, %v4277
    %v4279 = vshrl.u32 683565275, %v4278
    %v4280 = vshll.u32 683565275, %v4277
    %v4281 = vshrl.u32 2475754826, %v4278
    %v4282 = vor.u32 %v4280, %v4281
    %v4283 = vshll.u32 2475754826, %v4277
    %v4284 = vshrl.u32 2131351028, %v4278
    %v4285 = vor.u32 %v4283, %v4284
    %v4286 = vshll.u32 2131351028, %v4277
    %v4287 = vshrl.u32 2102212464, %v4278
    %v4288 = vor.u32 %v4286, %v4287
    %v4289 = vshll.u32 2102212464, %v4277
    %v4290 = vshrl.u32 920167782, %v4278
    %v4291 = vor.u32 %v4289, %v4290
    %v4292 = vshll.u32 920167782, %v4277
    %v4293 = vshrl.u32 1326507024, %v4278
    %v4294 = vor.u32 %v4292, %v4293
    %vm4295 = vcmp.lt.s32.totalorder %v4276, 1
    %vm4296 = vcmp.lt.s32.totalorder %v4276, 2
    %vm4297 = vcmp.lt.s32.totalorder %v4276, 3
    %vm4298 = vcmp.lt.s32.totalorder %v4276, 4
    %v4299 = vsel %vm4295, %v4279, %v4282
    %v4300 = vsel %vm4298, %v4288, 2102212464
    %v4301 = vsel %vm4297, %v4285, %v4300
    %v4302 = vsel %vm4296, %v4299, %v4301
    %v4303 = vsel %vm4295, %v4282, %v4285
    %v4304 = vsel %vm4298, %v4291, 920167782
    %v4305 = vsel %vm4297, %v4288, %v4304
    %v4306 = vsel %vm4296, %v4303, %v4305
    %v4307 = vsel %vm4295, %v4285, %v4288
    %v4308 = vsel %vm4298, %v4294, 1326507024
    %v4309 = vsel %vm4297, %v4291, %v4308
    %v4310 = vsel %vm4296, %v4307, %v4309
    %v4311 = vshll.u32 %v4271, 8
    %v4312 = vmul.u32.u64.compose %v4311, %v4310
    %v4313 = vextract.low.u32 %v4312
    %v4314 = vextract.high.u32 %v4312
    %v4315 = vmul.u32.u64.compose %v4311, %v4306
    %v4316 = vextract.low.u32 %v4315
    %v4317 = vextract.high.u32 %v4315
    %v4318 = vmul.u32 %v4311, %v4302
    %v4319 = vadd.s32 %v4314, %v4316
    %vm4320 = vc.u32 %v4314, %v4316
    %v4321 = vadd.s32 %v4317, 1
    %v4322 = vsel %vm4320, %v4321, %v4317
    %v4323 = vadd.s32 %v4318, %v4322
    %v4324 = vadd.s32 %v4323, 536870912
    %v4325 = vshrl.u32 %v4324, 30
    %v4326 = vshll.u32 %v4325, 30
    %v4327 = vsub.s32 %v4323, %v4326
    %vm4328 = vcmp.lt.s32.totalorder %v4327, 0
    %v4329 = vsub.s32 0, %v4327
    %v4330 = vsel %vm4328, %v4329, %v4327
    %v4331 = vclz %v4330
    %v4332 = vsub.s32 %v4331, 2
    %vm4333 = vcmp.gt.s32.totalorder 0, %v4332
    %v4334 = vsel %vm4333, 0, %v4332
    %v4335 = vsub.s32 32, %v4334
    %v4336 = vshll.u32 %v4327, %v4334
    %v4337 = vshrl.u32 %v4319, %v4335
    %v4338 = vor.u32 %v4336, %v4337
    %v4339 = vsub.s32 4294967266, %v4334
    %v4340 = vadd.s32 %v4339, 127
    %v4341 = vshll.u32 %v4340, 23
    %v4342 = vor.u32 4788187, %v4341
    %v4343 = vand.u32 2147483647, %v4342
    %v4345 = vcvt.s32.f32 %v4338
    %v4346 = vmul.f32 %v4345, %v4343
    %v4347 = vxor.u32 %v4346, 2147483648
    %v4348 = vsel %vm4265, %v4347, %v4346
    %v4349 = vsub.s32 4, %v4325
    %v4350 = vsel %vm4265, %v4349, %v4325
    %v4351 = vsel %vm4264, %v4259, %v4348
    %v4352 = vsel %vm4264, 0, %v4350
    %v4353 = vcosq.f32.pop %v4351
    %v4354 = vsinq.f32.pop %v4351
    %vm4355 = vweird.f32 %v4259
    %v4356 = vadd.s32 %v4352, 3
    %v4357 = vand.u32 %v4356, 3
    %vm4358 = vcmp.lt.s32.totalorder %v4357, 2
    %vm4359 = vcmp.eq.s32.totalorder %v4357, 0
    %v4360 = vxor.u32 %v4354, 2147483648
    %v4361 = vsel %vm4359, %v4353, %v4360
    %vm4362 = vcmp.eq.s32.totalorder %v4357, 2
    %v4363 = vxor.u32 %v4353, 2147483648
    %v4364 = vsel %vm4362, %v4363, %v4354
    %v4365 = vsel %vm4358, %v4361, %v4364
    %v4366 = vsel %vm4355, nan, %v4365
    %v4367 = vand.u32 2147483647, %v4260
    %vm4368 = vcmp.le.f32.partialorder %v4367, 0.7853982
    %vm4369 = vcmp.lt.s32.totalorder %v4260, 0
    %v4370 = vand.u32 %v4260, 2139095040
    %v4371 = vshrl.u32 %v4370, 23
    %v4372 = vsub.s32 %v4371, 127
    %v4373 = vand.u32 2147483647, %v4260
    %v4374 = vand.u32 %v4373, 8388607
    %v4375 = vor.u32 %v4374, 8388608
    %v4376 = vsub.s32 0, %v4375
    %v4377 = vadd.s32 %v4372, 1
    %vm4378 = vcmp.gt.s32.totalorder %v4377, 0
    %v4379 = vsel %vm4378, %v4377, 0
    %v4380 = vshrl.u32 %v4379, 5
    %v4381 = vand.u32 %v4379, 31
    %v4382 = vsub.s32 32, %v4381
    %v4383 = vshrl.u32 683565275, %v4382
    %v4384 = vshll.u32 683565275, %v4381
    %v4385 = vshrl.u32 2475754826, %v4382
    %v4386 = vor.u32 %v4384, %v4385
    %v4387 = vshll.u32 2475754826, %v4381
    %v4388 = vshrl.u32 2131351028, %v4382
    %v4389 = vor.u32 %v4387, %v4388
    %v4390 = vshll.u32 2131351028, %v4381
    %v4391 = vshrl.u32 2102212464, %v4382
    %v4392 = vor.u32 %v4390, %v4391
    %v4393 = vshll.u32 2102212464, %v4381
    %v4394 = vshrl.u32 920167782, %v4382
    %v4395 = vor.u32 %v4393, %v4394
    %v4396 = vshll.u32 920167782, %v4381
    %v4397 = vshrl.u32 1326507024, %v4382
    %v4398 = vor.u32 %v4396, %v4397
    %vm4399 = vcmp.lt.s32.totalorder %v4380, 1
    %vm4400 = vcmp.lt.s32.totalorder %v4380, 2
    %vm4401 = vcmp.lt.s32.totalorder %v4380, 3
    %vm4402 = vcmp.lt.s32.totalorder %v4380, 4
    %v4403 = vsel %vm4399, %v4383, %v4386
    %v4404 = vsel %vm4402, %v4392, 2102212464
    %v4405 = vsel %vm4401, %v4389, %v4404
    %v4406 = vsel %vm4400, %v4403, %v4405
    %v4407 = vsel %vm4399, %v4386, %v4389
    %v4408 = vsel %vm4402, %v4395, 920167782
    %v4409 = vsel %vm4401, %v4392, %v4408
    %v4410 = vsel %vm4400, %v4407, %v4409
    %v4411 = vsel %vm4399, %v4389, %v4392
    %v4412 = vsel %vm4402, %v4398, 1326507024
    %v4413 = vsel %vm4401, %v4395, %v4412
    %v4414 = vsel %vm4400, %v4411, %v4413
    %v4415 = vshll.u32 %v4375, 8
    %v4416 = vmul.u32.u64.compose %v4415, %v4414
    %v4417 = vextract.low.u32 %v4416
    %v4418 = vextract.high.u32 %v4416
    %v4419 = vmul.u32.u64.compose %v4415, %v4410
    %v4420 = vextract.low.u32 %v4419
    %v4421 = vextract.high.u32 %v4419
    %v4422 = vmul.u32 %v4415, %v4406
    %v4423 = vadd.s32 %v4418, %v4420
    %vm4424 = vc.u32 %v4418, %v4420
    %v4425 = vadd.s32 %v4421, 1
    %v4426 = vsel %vm4424, %v4425, %v4421
    %v4427 = vadd.s32 %v4422, %v4426
    %v4428 = vadd.s32 %v4427, 536870912
    %v4429 = vshrl.u32 %v4428, 30
    %v4430 = vshll.u32 %v4429, 30
    %v4431 = vsub.s32 %v4427, %v4430
    %vm4432 = vcmp.lt.s32.totalorder %v4431, 0
    %v4433 = vsub.s32 0, %v4431
    %v4434 = vsel %vm4432, %v4433, %v4431
    %v4435 = vclz %v4434
    %v4436 = vsub.s32 %v4435, 2
    %vm4437 = vcmp.gt.s32.totalorder 0, %v4436
    %v4438 = vsel %vm4437, 0, %v4436
    %v4439 = vsub.s32 32, %v4438
    %v4440 = vshll.u32 %v4431, %v4438
    %v4441 = vshrl.u32 %v4423, %v4439
    %v4442 = vor.u32 %v4440, %v4441
    %v4443 = vsub.s32 4294967266, %v4438
    %v4444 = vadd.s32 %v4443, 127
    %v4445 = vshll.u32 %v4444, 23
    %v4446 = vor.u32 4788187, %v4445
    %v4447 = vand.u32 2147483647, %v4446
    %v4449 = vcvt.s32.f32 %v4442
    %v4450 = vmul.f32 %v4449, %v4447
    %v4451 = vxor.u32 %v4450, 2147483648
    %v4452 = vsel %vm4369, %v4451, %v4450
    %v4453 = vsub.s32 4, %v4429
    %v4454 = vsel %vm4369, %v4453, %v4429
    %v4455 = vsel %vm4368, %v4260, %v4452
    %v4456 = vsel %vm4368, 0, %v4454
    %v4457 = vcosq.f32.pop %v4455
    %v4458 = vsinq.f32.pop %v4455
    %vm4459 = vweird.f32 %v4260
    %v4460 = vadd.s32 %v4456, 3
    %v4461 = vand.u32 %v4460, 3
    %vm4462 = vcmp.lt.s32.totalorder %v4461, 2
    %vm4463 = vcmp.eq.s32.totalorder %v4461, 0
    %v4464 = vxor.u32 %v4458, 2147483648
    %v4465 = vsel %vm4463, %v4457, %v4464
    %vm4466 = vcmp.eq.s32.totalorder %v4461, 2
    %v4467 = vxor.u32 %v4457, 2147483648
    %v4468 = vsel %vm4466, %v4467, %v4458
    %v4469 = vsel %vm4462, %v4465, %v4468
    %v4470 = vsel %vm4459, nan, %v4469
    %v4471 = vand.u32 2147483647, %v4261
    %vm4472 = vcmp.le.f32.partialorder %v4471, 0.7853982
    %vm4473 = vcmp.lt.s32.totalorder %v4261, 0
    %v4474 = vand.u32 %v4261, 2139095040
    %v4475 = vshrl.u32 %v4474, 23
    %v4476 = vsub.s32 %v4475, 127
    %v4477 = vand.u32 2147483647, %v4261
    %v4478 = vand.u32 %v4477, 8388607
    %v4479 = vor.u32 %v4478, 8388608
    %v4480 = vsub.s32 0, %v4479
    %v4481 = vadd.s32 %v4476, 1
    %vm4482 = vcmp.gt.s32.totalorder %v4481, 0
    %v4483 = vsel %vm4482, %v4481, 0
    %v4484 = vshrl.u32 %v4483, 5
    %v4485 = vand.u32 %v4483, 31
    %v4486 = vsub.s32 32, %v4485
    %v4487 = vshrl.u32 683565275, %v4486
    %v4488 = vshll.u32 683565275, %v4485
    %v4489 = vshrl.u32 2475754826, %v4486
    %v4490 = vor.u32 %v4488, %v4489
    %v4491 = vshll.u32 2475754826, %v4485
    %v4492 = vshrl.u32 2131351028, %v4486
    %v4493 = vor.u32 %v4491, %v4492
    %v4494 = vshll.u32 2131351028, %v4485
    %v4495 = vshrl.u32 2102212464, %v4486
    %v4496 = vor.u32 %v4494, %v4495
    %v4497 = vshll.u32 2102212464, %v4485
    %v4498 = vshrl.u32 920167782, %v4486
    %v4499 = vor.u32 %v4497, %v4498
    %v4500 = vshll.u32 920167782, %v4485
    %v4501 = vshrl.u32 1326507024, %v4486
    %v4502 = vor.u32 %v4500, %v4501
    %vm4503 = vcmp.lt.s32.totalorder %v4484, 1
    %vm4504 = vcmp.lt.s32.totalorder %v4484, 2
    %vm4505 = vcmp.lt.s32.totalorder %v4484, 3
    %vm4506 = vcmp.lt.s32.totalorder %v4484, 4
    %v4507 = vsel %vm4503, %v4487, %v4490
    %v4508 = vsel %vm4506, %v4496, 2102212464
    %v4509 = vsel %vm4505, %v4493, %v4508
    %v4510 = vsel %vm4504, %v4507, %v4509
    %v4511 = vsel %vm4503, %v4490, %v4493
    %v4512 = vsel %vm4506, %v4499, 920167782
    %v4513 = vsel %vm4505, %v4496, %v4512
    %v4514 = vsel %vm4504, %v4511, %v4513
    %v4515 = vsel %vm4503, %v4493, %v4496
    %v4516 = vsel %vm4506, %v4502, 1326507024
    %v4517 = vsel %vm4505, %v4499, %v4516
    %v4518 = vsel %vm4504, %v4515, %v4517
    %v4519 = vshll.u32 %v4479, 8
    %v4520 = vmul.u32.u64.compose %v4519, %v4518
    %v4521 = vextract.low.u32 %v4520
    %v4522 = vextract.high.u32 %v4520
    %v4523 = vmul.u32.u64.compose %v4519, %v4514
    %v4524 = vextract.low.u32 %v4523
    %v4525 = vextract.high.u32 %v4523
    %v4526 = vmul.u32 %v4519, %v4510
    %v4527 = vadd.s32 %v4522, %v4524
    %vm4528 = vc.u32 %v4522, %v4524
    %v4529 = vadd.s32 %v4525, 1
    %v4530 = vsel %vm4528, %v4529, %v4525
    %v4531 = vadd.s32 %v4526, %v4530
    %v4532 = vadd.s32 %v4531, 536870912
    %v4533 = vshrl.u32 %v4532, 30
    %v4534 = vshll.u32 %v4533, 30
    %v4535 = vsub.s32 %v4531, %v4534
    %vm4536 = vcmp.lt.s32.totalorder %v4535, 0
    %v4537 = vsub.s32 0, %v4535
    %v4538 = vsel %vm4536, %v4537, %v4535
    %v4539 = vclz %v4538
    %v4540 = vsub.s32 %v4539, 2
    %vm4541 = vcmp.gt.s32.totalorder 0, %v4540
    %v4542 = vsel %vm4541, 0, %v4540
    %v4543 = vsub.s32 32, %v4542
    %v4544 = vshll.u32 %v4535, %v4542
    %v4545 = vshrl.u32 %v4527, %v4543
    %v4546 = vor.u32 %v4544, %v4545
    %v4547 = vsub.s32 4294967266, %v4542
    %v4548 = vadd.s32 %v4547, 127
    %v4549 = vshll.u32 %v4548, 23
    %v4550 = vor.u32 4788187, %v4549
    %v4551 = vand.u32 2147483647, %v4550
    %v4553 = vcvt.s32.f32 %v4546
    %v4554 = vmul.f32 %v4553, %v4551
    %v4555 = vxor.u32 %v4554, 2147483648
    %v4556 = vsel %vm4473, %v4555, %v4554
    %v4557 = vsub.s32 4, %v4533
    %v4558 = vsel %vm4473, %v4557, %v4533
    %v4559 = vsel %vm4472, %v4261, %v4556
    %v4560 = vsel %vm4472, 0, %v4558
    %v4561 = vcosq.f32.pop %v4559
    %v4562 = vsinq.f32.pop %v4559
    %vm4563 = vweird.f32 %v4261
    %v4564 = vadd.s32 %v4560, 3
    %v4565 = vand.u32 %v4564, 3
    %vm4566 = vcmp.lt.s32.totalorder %v4565, 2
    %vm4567 = vcmp.eq.s32.totalorder %v4565, 0
    %v4568 = vxor.u32 %v4562, 2147483648
    %v4569 = vsel %vm4567, %v4561, %v4568
    %vm4570 = vcmp.eq.s32.totalorder %v4565, 2
    %v4571 = vxor.u32 %v4561, 2147483648
    %v4572 = vsel %vm4570, %v4571, %v4562
    %v4573 = vsel %vm4566, %v4569, %v4572
    %v4574 = vsel %vm4563, nan, %v4573
    %v4575 = vand.u32 2147483647, %v4262
    %vm4576 = vcmp.le.f32.partialorder %v4575, 0.7853982
    %vm4577 = vcmp.lt.s32.totalorder %v4262, 0
    %v4578 = vand.u32 %v4262, 2139095040
    %v4579 = vshrl.u32 %v4578, 23
    %v4580 = vsub.s32 %v4579, 127
    %v4581 = vand.u32 2147483647, %v4262
    %v4582 = vand.u32 %v4581, 8388607
    %v4583 = vor.u32 %v4582, 8388608
    %v4584 = vsub.s32 0, %v4583
    %v4585 = vadd.s32 %v4580, 1
    %vm4586 = vcmp.gt.s32.totalorder %v4585, 0
    %v4587 = vsel %vm4586, %v4585, 0
    %v4588 = vshrl.u32 %v4587, 5
    %v4589 = vand.u32 %v4587, 31
    %v4590 = vsub.s32 32, %v4589
    %v4591 = vshrl.u32 683565275, %v4590
    %v4592 = vshll.u32 683565275, %v4589
    %v4593 = vshrl.u32 2475754826, %v4590
    %v4594 = vor.u32 %v4592, %v4593
    %v4595 = vshll.u32 2475754826, %v4589
    %v4596 = vshrl.u32 2131351028, %v4590
    %v4597 = vor.u32 %v4595, %v4596
    %v4598 = vshll.u32 2131351028, %v4589
    %v4599 = vshrl.u32 2102212464, %v4590
    %v4600 = vor.u32 %v4598, %v4599
    %v4601 = vshll.u32 2102212464, %v4589
    %v4602 = vshrl.u32 920167782, %v4590
    %v4603 = vor.u32 %v4601, %v4602
    %v4604 = vshll.u32 920167782, %v4589
    %v4605 = vshrl.u32 1326507024, %v4590
    %v4606 = vor.u32 %v4604, %v4605
    %vm4607 = vcmp.lt.s32.totalorder %v4588, 1
    %vm4608 = vcmp.lt.s32.totalorder %v4588, 2
    %vm4609 = vcmp.lt.s32.totalorder %v4588, 3
    %vm4610 = vcmp.lt.s32.totalorder %v4588, 4
    %v4611 = vsel %vm4607, %v4591, %v4594
    %v4612 = vsel %vm4610, %v4600, 2102212464
    %v4613 = vsel %vm4609, %v4597, %v4612
    %v4614 = vsel %vm4608, %v4611, %v4613
    %v4615 = vsel %vm4607, %v4594, %v4597
    %v4616 = vsel %vm4610, %v4603, 920167782
    %v4617 = vsel %vm4609, %v4600, %v4616
    %v4618 = vsel %vm4608, %v4615, %v4617
    %v4619 = vsel %vm4607, %v4597, %v4600
    %v4620 = vsel %vm4610, %v4606, 1326507024
    %v4621 = vsel %vm4609, %v4603, %v4620
    %v4622 = vsel %vm4608, %v4619, %v4621
    %v4623 = vshll.u32 %v4583, 8
    %v4624 = vmul.u32.u64.compose %v4623, %v4622
    %v4625 = vextract.low.u32 %v4624
    %v4626 = vextract.high.u32 %v4624
    %v4627 = vmul.u32.u64.compose %v4623, %v4618
    %v4628 = vextract.low.u32 %v4627
    %v4629 = vextract.high.u32 %v4627
    %v4630 = vmul.u32 %v4623, %v4614
    %v4631 = vadd.s32 %v4626, %v4628
    %vm4632 = vc.u32 %v4626, %v4628
    %v4633 = vadd.s32 %v4629, 1
    %v4634 = vsel %vm4632, %v4633, %v4629
    %v4635 = vadd.s32 %v4630, %v4634
    %v4636 = vadd.s32 %v4635, 536870912
    %v4637 = vshrl.u32 %v4636, 30
    %v4638 = vshll.u32 %v4637, 30
    %v4639 = vsub.s32 %v4635, %v4638
    %vm4640 = vcmp.lt.s32.totalorder %v4639, 0
    %v4641 = vsub.s32 0, %v4639
    %v4642 = vsel %vm4640, %v4641, %v4639
    %v4643 = vclz %v4642
    %v4644 = vsub.s32 %v4643, 2
    %vm4645 = vcmp.gt.s32.totalorder 0, %v4644
    %v4646 = vsel %vm4645, 0, %v4644
    %v4647 = vsub.s32 32, %v4646
    %v4648 = vshll.u32 %v4639, %v4646
    %v4649 = vshrl.u32 %v4631, %v4647
    %v4650 = vor.u32 %v4648, %v4649
    %v4651 = vsub.s32 4294967266, %v4646
    %v4652 = vadd.s32 %v4651, 127
    %v4653 = vshll.u32 %v4652, 23
    %v4654 = vor.u32 4788187, %v4653
    %v4655 = vand.u32 2147483647, %v4654
    %v4657 = vcvt.s32.f32 %v4650
    %v4658 = vmul.f32 %v4657, %v4655
    %v4659 = vxor.u32 %v4658, 2147483648
    %v4660 = vsel %vm4577, %v4659, %v4658
    %v4661 = vsub.s32 4, %v4637
    %v4662 = vsel %vm4577, %v4661, %v4637
    %v4663 = vsel %vm4576, %v4262, %v4660
    %v4664 = vsel %vm4576, 0, %v4662
    %v4665 = vcosq.f32.pop %v4663
    %v4666 = vsinq.f32.pop %v4663
    %vm4667 = vweird.f32 %v4262
    %v4668 = vadd.s32 %v4664, 3
    %v4669 = vand.u32 %v4668, 3
    %vm4670 = vcmp.lt.s32.totalorder %v4669, 2
    %vm4671 = vcmp.eq.s32.totalorder %v4669, 0
    %v4672 = vxor.u32 %v4666, 2147483648
    %v4673 = vsel %vm4671, %v4665, %v4672
    %vm4674 = vcmp.eq.s32.totalorder %v4669, 2
    %v4675 = vxor.u32 %v4665, 2147483648
    %v4676 = vsel %vm4674, %v4675, %v4666
    %v4677 = vsel %vm4670, %v4673, %v4676
    %v4678 = vsel %vm4667, nan, %v4677
    %s4679 = scalar_lea.vmem [#allocation5], 352
    %4680 = vst [vmem:[%s4679] sm:$0xff] %v4366
    %4681 = vst [vmem:[%s4679 + $0x8] sm:$0xff] %v4470
    %4682 = vst [vmem:[%s4679 + $0x10] sm:$0xff] %v4574
    %4683 = vst [vmem:[%s4679 + $0x18] sm:$0xff] %v4678
    %v4684 = vand.u32 2147483647, %v4259
    %vm4685 = vcmp.le.f32.partialorder %v4684, 0.7853982
    %vm4686 = vcmp.lt.s32.totalorder %v4259, 0
    %v4687 = vand.u32 %v4259, 2139095040
    %v4688 = vshrl.u32 %v4687, 23
    %v4689 = vsub.s32 %v4688, 127
    %v4690 = vand.u32 2147483647, %v4259
    %v4691 = vand.u32 %v4690, 8388607
    %v4692 = vor.u32 %v4691, 8388608
    %v4693 = vsub.s32 0, %v4692
    %v4694 = vadd.s32 %v4689, 1
    %vm4695 = vcmp.gt.s32.totalorder %v4694, 0
    %v4696 = vsel %vm4695, %v4694, 0
    %v4697 = vshrl.u32 %v4696, 5
    %v4698 = vand.u32 %v4696, 31
    %v4699 = vsub.s32 32, %v4698
    %v4700 = vshrl.u32 683565275, %v4699
    %v4701 = vshll.u32 683565275, %v4698
    %v4702 = vshrl.u32 2475754826, %v4699
    %v4703 = vor.u32 %v4701, %v4702
    %v4704 = vshll.u32 2475754826, %v4698
    %v4705 = vshrl.u32 2131351028, %v4699
    %v4706 = vor.u32 %v4704, %v4705
    %v4707 = vshll.u32 2131351028, %v4698
    %v4708 = vshrl.u32 2102212464, %v4699
    %v4709 = vor.u32 %v4707, %v4708
    %v4710 = vshll.u32 2102212464, %v4698
    %v4711 = vshrl.u32 920167782, %v4699
    %v4712 = vor.u32 %v4710, %v4711
    %v4713 = vshll.u32 920167782, %v4698
    %v4714 = vshrl.u32 1326507024, %v4699
    %v4715 = vor.u32 %v4713, %v4714
    %vm4716 = vcmp.lt.s32.totalorder %v4697, 1
    %vm4717 = vcmp.lt.s32.totalorder %v4697, 2
    %vm4718 = vcmp.lt.s32.totalorder %v4697, 3
    %vm4719 = vcmp.lt.s32.totalorder %v4697, 4
    %v4720 = vsel %vm4716, %v4700, %v4703
    %v4721 = vsel %vm4719, %v4709, 2102212464
    %v4722 = vsel %vm4718, %v4706, %v4721
    %v4723 = vsel %vm4717, %v4720, %v4722
    %v4724 = vsel %vm4716, %v4703, %v4706
    %v4725 = vsel %vm4719, %v4712, 920167782
    %v4726 = vsel %vm4718, %v4709, %v4725
    %v4727 = vsel %vm4717, %v4724, %v4726
    %v4728 = vsel %vm4716, %v4706, %v4709
    %v4729 = vsel %vm4719, %v4715, 1326507024
    %v4730 = vsel %vm4718, %v4712, %v4729
    %v4731 = vsel %vm4717, %v4728, %v4730
    %v4732 = vshll.u32 %v4692, 8
    %v4733 = vmul.u32.u64.compose %v4732, %v4731
    %v4734 = vextract.low.u32 %v4733
    %v4735 = vextract.high.u32 %v4733
    %v4736 = vmul.u32.u64.compose %v4732, %v4727
    %v4737 = vextract.low.u32 %v4736
    %v4738 = vextract.high.u32 %v4736
    %v4739 = vmul.u32 %v4732, %v4723
    %v4740 = vadd.s32 %v4735, %v4737
    %vm4741 = vc.u32 %v4735, %v4737
    %v4742 = vadd.s32 %v4738, 1
    %v4743 = vsel %vm4741, %v4742, %v4738
    %v4744 = vadd.s32 %v4739, %v4743
    %v4745 = vadd.s32 %v4744, 536870912
    %v4746 = vshrl.u32 %v4745, 30
    %v4747 = vshll.u32 %v4746, 30
    %v4748 = vsub.s32 %v4744, %v4747
    %vm4749 = vcmp.lt.s32.totalorder %v4748, 0
    %v4750 = vsub.s32 0, %v4748
    %v4751 = vsel %vm4749, %v4750, %v4748
    %v4752 = vclz %v4751
    %v4753 = vsub.s32 %v4752, 2
    %vm4754 = vcmp.gt.s32.totalorder 0, %v4753
    %v4755 = vsel %vm4754, 0, %v4753
    %v4756 = vsub.s32 32, %v4755
    %v4757 = vshll.u32 %v4748, %v4755
    %v4758 = vshrl.u32 %v4740, %v4756
    %v4759 = vor.u32 %v4757, %v4758
    %v4760 = vsub.s32 4294967266, %v4755
    %v4761 = vadd.s32 %v4760, 127
    %v4762 = vshll.u32 %v4761, 23
    %v4763 = vor.u32 4788187, %v4762
    %v4764 = vand.u32 2147483647, %v4763
    %v4766 = vcvt.s32.f32 %v4759
    %v4767 = vmul.f32 %v4766, %v4764
    %v4768 = vxor.u32 %v4767, 2147483648
    %v4769 = vsel %vm4686, %v4768, %v4767
    %v4770 = vsub.s32 4, %v4746
    %v4771 = vsel %vm4686, %v4770, %v4746
    %v4772 = vsel %vm4685, %v4259, %v4769
    %v4773 = vsel %vm4685, 0, %v4771
    %v4774 = vcosq.f32.pop %v4772
    %v4775 = vsinq.f32.pop %v4772
    %vm4776 = vweird.f32 %v4259
    %v4777 = vand.u32 %v4773, 3
    %vm4778 = vcmp.lt.s32.totalorder %v4777, 2
    %vm4779 = vcmp.eq.s32.totalorder %v4777, 0
    %v4780 = vxor.u32 %v4775, 2147483648
    %v4781 = vsel %vm4779, %v4774, %v4780
    %vm4782 = vcmp.eq.s32.totalorder %v4777, 2
    %v4783 = vxor.u32 %v4774, 2147483648
    %v4784 = vsel %vm4782, %v4783, %v4775
    %v4785 = vsel %vm4778, %v4781, %v4784
    %v4786 = vsel %vm4776, nan, %v4785
    %v4787 = vand.u32 2147483647, %v4260
    %vm4788 = vcmp.le.f32.partialorder %v4787, 0.7853982
    %vm4789 = vcmp.lt.s32.totalorder %v4260, 0
    %v4790 = vand.u32 %v4260, 2139095040
    %v4791 = vshrl.u32 %v4790, 23
    %v4792 = vsub.s32 %v4791, 127
    %v4793 = vand.u32 2147483647, %v4260
    %v4794 = vand.u32 %v4793, 8388607
    %v4795 = vor.u32 %v4794, 8388608
    %v4796 = vsub.s32 0, %v4795
    %v4797 = vadd.s32 %v4792, 1
    %vm4798 = vcmp.gt.s32.totalorder %v4797, 0
    %v4799 = vsel %vm4798, %v4797, 0
    %v4800 = vshrl.u32 %v4799, 5
    %v4801 = vand.u32 %v4799, 31
    %v4802 = vsub.s32 32, %v4801
    %v4803 = vshrl.u32 683565275, %v4802
    %v4804 = vshll.u32 683565275, %v4801
    %v4805 = vshrl.u32 2475754826, %v4802
    %v4806 = vor.u32 %v4804, %v4805
    %v4807 = vshll.u32 2475754826, %v4801
    %v4808 = vshrl.u32 2131351028, %v4802
    %v4809 = vor.u32 %v4807, %v4808
    %v4810 = vshll.u32 2131351028, %v4801
    %v4811 = vshrl.u32 2102212464, %v4802
    %v4812 = vor.u32 %v4810, %v4811
    %v4813 = vshll.u32 2102212464, %v4801
    %v4814 = vshrl.u32 920167782, %v4802
    %v4815 = vor.u32 %v4813, %v4814
    %v4816 = vshll.u32 920167782, %v4801
    %v4817 = vshrl.u32 1326507024, %v4802
    %v4818 = vor.u32 %v4816, %v4817
    %vm4819 = vcmp.lt.s32.totalorder %v4800, 1
    %vm4820 = vcmp.lt.s32.totalorder %v4800, 2
    %vm4821 = vcmp.lt.s32.totalorder %v4800, 3
    %vm4822 = vcmp.lt.s32.totalorder %v4800, 4
    %v4823 = vsel %vm4819, %v4803, %v4806
    %v4824 = vsel %vm4822, %v4812, 2102212464
    %v4825 = vsel %vm4821, %v4809, %v4824
    %v4826 = vsel %vm4820, %v4823, %v4825
    %v4827 = vsel %vm4819, %v4806, %v4809
    %v4828 = vsel %vm4822, %v4815, 920167782
    %v4829 = vsel %vm4821, %v4812, %v4828
    %v4830 = vsel %vm4820, %v4827, %v4829
    %v4831 = vsel %vm4819, %v4809, %v4812
    %v4832 = vsel %vm4822, %v4818, 1326507024
    %v4833 = vsel %vm4821, %v4815, %v4832
    %v4834 = vsel %vm4820, %v4831, %v4833
    %v4835 = vshll.u32 %v4795, 8
    %v4836 = vmul.u32.u64.compose %v4835, %v4834
    %v4837 = vextract.low.u32 %v4836
    %v4838 = vextract.high.u32 %v4836
    %v4839 = vmul.u32.u64.compose %v4835, %v4830
    %v4840 = vextract.low.u32 %v4839
    %v4841 = vextract.high.u32 %v4839
    %v4842 = vmul.u32 %v4835, %v4826
    %v4843 = vadd.s32 %v4838, %v4840
    %vm4844 = vc.u32 %v4838, %v4840
    %v4845 = vadd.s32 %v4841, 1
    %v4846 = vsel %vm4844, %v4845, %v4841
    %v4847 = vadd.s32 %v4842, %v4846
    %v4848 = vadd.s32 %v4847, 536870912
    %v4849 = vshrl.u32 %v4848, 30
    %v4850 = vshll.u32 %v4849, 30
    %v4851 = vsub.s32 %v4847, %v4850
    %vm4852 = vcmp.lt.s32.totalorder %v4851, 0
    %v4853 = vsub.s32 0, %v4851
    %v4854 = vsel %vm4852, %v4853, %v4851
    %v4855 = vclz %v4854
    %v4856 = vsub.s32 %v4855, 2
    %vm4857 = vcmp.gt.s32.totalorder 0, %v4856
    %v4858 = vsel %vm4857, 0, %v4856
    %v4859 = vsub.s32 32, %v4858
    %v4860 = vshll.u32 %v4851, %v4858
    %v4861 = vshrl.u32 %v4843, %v4859
    %v4862 = vor.u32 %v4860, %v4861
    %v4863 = vsub.s32 4294967266, %v4858
    %v4864 = vadd.s32 %v4863, 127
    %v4865 = vshll.u32 %v4864, 23
    %v4866 = vor.u32 4788187, %v4865
    %v4867 = vand.u32 2147483647, %v4866
    %v4869 = vcvt.s32.f32 %v4862
    %v4870 = vmul.f32 %v4869, %v4867
    %v4871 = vxor.u32 %v4870, 2147483648
    %v4872 = vsel %vm4789, %v4871, %v4870
    %v4873 = vsub.s32 4, %v4849
    %v4874 = vsel %vm4789, %v4873, %v4849
    %v4875 = vsel %vm4788, %v4260, %v4872
    %v4876 = vsel %vm4788, 0, %v4874
    %v4877 = vcosq.f32.pop %v4875
    %v4878 = vsinq.f32.pop %v4875
    %vm4879 = vweird.f32 %v4260
    %v4880 = vand.u32 %v4876, 3
    %vm4881 = vcmp.lt.s32.totalorder %v4880, 2
    %vm4882 = vcmp.eq.s32.totalorder %v4880, 0
    %v4883 = vxor.u32 %v4878, 2147483648
    %v4884 = vsel %vm4882, %v4877, %v4883
    %vm4885 = vcmp.eq.s32.totalorder %v4880, 2
    %v4886 = vxor.u32 %v4877, 2147483648
    %v4887 = vsel %vm4885, %v4886, %v4878
    %v4888 = vsel %vm4881, %v4884, %v4887
    %v4889 = vsel %vm4879, nan, %v4888
    %v4890 = vand.u32 2147483647, %v4261
    %vm4891 = vcmp.le.f32.partialorder %v4890, 0.7853982
    %vm4892 = vcmp.lt.s32.totalorder %v4261, 0
    %v4893 = vand.u32 %v4261, 2139095040
    %v4894 = vshrl.u32 %v4893, 23
    %v4895 = vsub.s32 %v4894, 127
    %v4896 = vand.u32 2147483647, %v4261
    %v4897 = vand.u32 %v4896, 8388607
    %v4898 = vor.u32 %v4897, 8388608
    %v4899 = vsub.s32 0, %v4898
    %v4900 = vadd.s32 %v4895, 1
    %vm4901 = vcmp.gt.s32.totalorder %v4900, 0
    %v4902 = vsel %vm4901, %v4900, 0
    %v4903 = vshrl.u32 %v4902, 5
    %v4904 = vand.u32 %v4902, 31
    %v4905 = vsub.s32 32, %v4904
    %v4906 = vshrl.u32 683565275, %v4905
    %v4907 = vshll.u32 683565275, %v4904
    %v4908 = vshrl.u32 2475754826, %v4905
    %v4909 = vor.u32 %v4907, %v4908
    %v4910 = vshll.u32 2475754826, %v4904
    %v4911 = vshrl.u32 2131351028, %v4905
    %v4912 = vor.u32 %v4910, %v4911
    %v4913 = vshll.u32 2131351028, %v4904
    %v4914 = vshrl.u32 2102212464, %v4905
    %v4915 = vor.u32 %v4913, %v4914
    %v4916 = vshll.u32 2102212464, %v4904
    %v4917 = vshrl.u32 920167782, %v4905
    %v4918 = vor.u32 %v4916, %v4917
    %v4919 = vshll.u32 920167782, %v4904
    %v4920 = vshrl.u32 1326507024, %v4905
    %v4921 = vor.u32 %v4919, %v4920
    %vm4922 = vcmp.lt.s32.totalorder %v4903, 1
    %vm4923 = vcmp.lt.s32.totalorder %v4903, 2
    %vm4924 = vcmp.lt.s32.totalorder %v4903, 3
    %vm4925 = vcmp.lt.s32.totalorder %v4903, 4
    %v4926 = vsel %vm4922, %v4906, %v4909
    %v4927 = vsel %vm4925, %v4915, 2102212464
    %v4928 = vsel %vm4924, %v4912, %v4927
    %v4929 = vsel %vm4923, %v4926, %v4928
    %v4930 = vsel %vm4922, %v4909, %v4912
    %v4931 = vsel %vm4925, %v4918, 920167782
    %v4932 = vsel %vm4924, %v4915, %v4931
    %v4933 = vsel %vm4923, %v4930, %v4932
    %v4934 = vsel %vm4922, %v4912, %v4915
    %v4935 = vsel %vm4925, %v4921, 1326507024
    %v4936 = vsel %vm4924, %v4918, %v4935
    %v4937 = vsel %vm4923, %v4934, %v4936
    %v4938 = vshll.u32 %v4898, 8
    %v4939 = vmul.u32.u64.compose %v4938, %v4937
    %v4940 = vextract.low.u32 %v4939
    %v4941 = vextract.high.u32 %v4939
    %v4942 = vmul.u32.u64.compose %v4938, %v4933
    %v4943 = vextract.low.u32 %v4942
    %v4944 = vextract.high.u32 %v4942
    %v4945 = vmul.u32 %v4938, %v4929
    %v4946 = vadd.s32 %v4941, %v4943
    %vm4947 = vc.u32 %v4941, %v4943
    %v4948 = vadd.s32 %v4944, 1
    %v4949 = vsel %vm4947, %v4948, %v4944
    %v4950 = vadd.s32 %v4945, %v4949
    %v4951 = vadd.s32 %v4950, 536870912
    %v4952 = vshrl.u32 %v4951, 30
    %v4953 = vshll.u32 %v4952, 30
    %v4954 = vsub.s32 %v4950, %v4953
    %vm4955 = vcmp.lt.s32.totalorder %v4954, 0
    %v4956 = vsub.s32 0, %v4954
    %v4957 = vsel %vm4955, %v4956, %v4954
    %v4958 = vclz %v4957
    %v4959 = vsub.s32 %v4958, 2
    %vm4960 = vcmp.gt.s32.totalorder 0, %v4959
    %v4961 = vsel %vm4960, 0, %v4959
    %v4962 = vsub.s32 32, %v4961
    %v4963 = vshll.u32 %v4954, %v4961
    %v4964 = vshrl.u32 %v4946, %v4962
    %v4965 = vor.u32 %v4963, %v4964
    %v4966 = vsub.s32 4294967266, %v4961
    %v4967 = vadd.s32 %v4966, 127
    %v4968 = vshll.u32 %v4967, 23
    %v4969 = vor.u32 4788187, %v4968
    %v4970 = vand.u32 2147483647, %v4969
    %v4972 = vcvt.s32.f32 %v4965
    %v4973 = vmul.f32 %v4972, %v4970
    %v4974 = vxor.u32 %v4973, 2147483648
    %v4975 = vsel %vm4892, %v4974, %v4973
    %v4976 = vsub.s32 4, %v4952
    %v4977 = vsel %vm4892, %v4976, %v4952
    %v4978 = vsel %vm4891, %v4261, %v4975
    %v4979 = vsel %vm4891, 0, %v4977
    %v4980 = vcosq.f32.pop %v4978
    %v4981 = vsinq.f32.pop %v4978
    %vm4982 = vweird.f32 %v4261
    %v4983 = vand.u32 %v4979, 3
    %vm4984 = vcmp.lt.s32.totalorder %v4983, 2
    %vm4985 = vcmp.eq.s32.totalorder %v4983, 0
    %v4986 = vxor.u32 %v4981, 2147483648
    %v4987 = vsel %vm4985, %v4980, %v4986
    %vm4988 = vcmp.eq.s32.totalorder %v4983, 2
    %v4989 = vxor.u32 %v4980, 2147483648
    %v4990 = vsel %vm4988, %v4989, %v4981
    %v4991 = vsel %vm4984, %v4987, %v4990
    %v4992 = vsel %vm4982, nan, %v4991
    %v4993 = vand.u32 2147483647, %v4262
    %vm4994 = vcmp.le.f32.partialorder %v4993, 0.7853982
    %vm4995 = vcmp.lt.s32.totalorder %v4262, 0
    %v4996 = vand.u32 %v4262, 2139095040
    %v4997 = vshrl.u32 %v4996, 23
    %v4998 = vsub.s32 %v4997, 127
    %v4999 = vand.u32 2147483647, %v4262
    %v5000 = vand.u32 %v4999, 8388607
    %v5001 = vor.u32 %v5000, 8388608
    %v5002 = vsub.s32 0, %v5001
    %v5003 = vadd.s32 %v4998, 1
    %vm5004 = vcmp.gt.s32.totalorder %v5003, 0
    %v5005 = vsel %vm5004, %v5003, 0
    %v5006 = vshrl.u32 %v5005, 5
    %v5007 = vand.u32 %v5005, 31
    %v5008 = vsub.s32 32, %v5007
    %v5009 = vshrl.u32 683565275, %v5008
    %v5010 = vshll.u32 683565275, %v5007
    %v5011 = vshrl.u32 2475754826, %v5008
    %v5012 = vor.u32 %v5010, %v5011
    %v5013 = vshll.u32 2475754826, %v5007
    %v5014 = vshrl.u32 2131351028, %v5008
    %v5015 = vor.u32 %v5013, %v5014
    %v5016 = vshll.u32 2131351028, %v5007
    %v5017 = vshrl.u32 2102212464, %v5008
    %v5018 = vor.u32 %v5016, %v5017
    %v5019 = vshll.u32 2102212464, %v5007
    %v5020 = vshrl.u32 920167782, %v5008
    %v5021 = vor.u32 %v5019, %v5020
    %v5022 = vshll.u32 920167782, %v5007
    %v5023 = vshrl.u32 1326507024, %v5008
    %v5024 = vor.u32 %v5022, %v5023
    %vm5025 = vcmp.lt.s32.totalorder %v5006, 1
    %vm5026 = vcmp.lt.s32.totalorder %v5006, 2
    %vm5027 = vcmp.lt.s32.totalorder %v5006, 3
    %vm5028 = vcmp.lt.s32.totalorder %v5006, 4
    %v5029 = vsel %vm5025, %v5009, %v5012
    %v5030 = vsel %vm5028, %v5018, 2102212464
    %v5031 = vsel %vm5027, %v5015, %v5030
    %v5032 = vsel %vm5026, %v5029, %v5031
    %v5033 = vsel %vm5025, %v5012, %v5015
    %v5034 = vsel %vm5028, %v5021, 920167782
    %v5035 = vsel %vm5027, %v5018, %v5034
    %v5036 = vsel %vm5026, %v5033, %v5035
    %v5037 = vsel %vm5025, %v5015, %v5018
    %v5038 = vsel %vm5028, %v5024, 1326507024
    %v5039 = vsel %vm5027, %v5021, %v5038
    %v5040 = vsel %vm5026, %v5037, %v5039
    %v5041 = vshll.u32 %v5001, 8
    %v5042 = vmul.u32.u64.compose %v5041, %v5040
    %v5043 = vextract.low.u32 %v5042
    %v5044 = vextract.high.u32 %v5042
    %v5045 = vmul.u32.u64.compose %v5041, %v5036
    %v5046 = vextract.low.u32 %v5045
    %v5047 = vextract.high.u32 %v5045
    %v5048 = vmul.u32 %v5041, %v5032
    %v5049 = vadd.s32 %v5044, %v5046
    %vm5050 = vc.u32 %v5044, %v5046
    %v5051 = vadd.s32 %v5047, 1
    %v5052 = vsel %vm5050, %v5051, %v5047
    %v5053 = vadd.s32 %v5048, %v5052
    %v5054 = vadd.s32 %v5053, 536870912
    %v5055 = vshrl.u32 %v5054, 30
    %v5056 = vshll.u32 %v5055, 30
    %v5057 = vsub.s32 %v5053, %v5056
    %vm5058 = vcmp.lt.s32.totalorder %v5057, 0
    %v5059 = vsub.s32 0, %v5057
    %v5060 = vsel %vm5058, %v5059, %v5057
    %v5061 = vclz %v5060
    %v5062 = vsub.s32 %v5061, 2
    %vm5063 = vcmp.gt.s32.totalorder 0, %v5062
    %v5064 = vsel %vm5063, 0, %v5062
    %v5065 = vsub.s32 32, %v5064
    %v5066 = vshll.u32 %v5057, %v5064
    %v5067 = vshrl.u32 %v5049, %v5065
    %v5068 = vor.u32 %v5066, %v5067
    %v5069 = vsub.s32 4294967266, %v5064
    %v5070 = vadd.s32 %v5069, 127
    %v5071 = vshll.u32 %v5070, 23
    %v5072 = vor.u32 4788187, %v5071
    %v5073 = vand.u32 2147483647, %v5072
    %v5075 = vcvt.s32.f32 %v5068
    %v5076 = vmul.f32 %v5075, %v5073
    %v5077 = vxor.u32 %v5076, 2147483648
    %v5078 = vsel %vm4995, %v5077, %v5076
    %v5079 = vsub.s32 4, %v5055
    %v5080 = vsel %vm4995, %v5079, %v5055
    %v5081 = vsel %vm4994, %v4262, %v5078
    %v5082 = vsel %vm4994, 0, %v5080
    %v5083 = vcosq.f32.pop %v5081
    %v5084 = vsinq.f32.pop %v5081
    %vm5085 = vweird.f32 %v4262
    %v5086 = vand.u32 %v5082, 3
    %vm5087 = vcmp.lt.s32.totalorder %v5086, 2
    %vm5088 = vcmp.eq.s32.totalorder %v5086, 0
    %v5089 = vxor.u32 %v5084, 2147483648
    %v5090 = vsel %vm5088, %v5083, %v5089
    %vm5091 = vcmp.eq.s32.totalorder %v5086, 2
    %v5092 = vxor.u32 %v5083, 2147483648
    %v5093 = vsel %vm5091, %v5092, %v5084
    %v5094 = vsel %vm5087, %v5090, %v5093
    %v5095 = vsel %vm5085, nan, %v5094
    %s5096 = scalar_lea.vmem [#allocation5], 384
    %5097 = vst [vmem:[%s5096] sm:$0xff] %v4786
    %5098 = vst [vmem:[%s5096 + $0x8] sm:$0xff] %v4889
    %5099 = vst [vmem:[%s5096 + $0x10] sm:$0xff] %v4992
    %5100 = vst [vmem:[%s5096 + $0x18] sm:$0xff] %v5095
    %v5101 = vld [vmem:[#allocation2] sm:$0xff]
    %v5102 = vld [vmem:[#allocation2 + $0x8] sm:$0xff]
    %v5103 = vld [vmem:[#allocation2 + $0x10] sm:$0xff]
    %v5104 = vld [vmem:[#allocation2 + $0x18] sm:$0xff]
    %v5105 = vmul.f32 %v5101, 64.0
    %v5106 = vmul.f32 %v5102, 64.0
    %v5107 = vmul.f32 %v5103, 64.0
    %v5108 = vmul.f32 %v5104, 64.0
    %v5109 = vand.u32 2147483647, %v5105
    %vm5110 = vcmp.le.f32.partialorder %v5109, 0.7853982
    %vm5111 = vcmp.lt.s32.totalorder %v5105, 0
    %v5112 = vand.u32 %v5105, 2139095040
    %v5113 = vshrl.u32 %v5112, 23
    %v5114 = vsub.s32 %v5113, 127
    %v5115 = vand.u32 2147483647, %v5105
    %v5116 = vand.u32 %v5115, 8388607
    %v5117 = vor.u32 %v5116, 8388608
    %v5118 = vsub.s32 0, %v5117
    %v5119 = vadd.s32 %v5114, 1
    %vm5120 = vcmp.gt.s32.totalorder %v5119, 0
    %v5121 = vsel %vm5120, %v5119, 0
    %v5122 = vshrl.u32 %v5121, 5
    %v5123 = vand.u32 %v5121, 31
    %v5124 = vsub.s32 32, %v5123
    %v5125 = vshrl.u32 683565275, %v5124
    %v5126 = vshll.u32 683565275, %v5123
    %v5127 = vshrl.u32 2475754826, %v5124
    %v5128 = vor.u32 %v5126, %v5127
    %v5129 = vshll.u32 2475754826, %v5123
    %v5130 = vshrl.u32 2131351028, %v5124
    %v5131 = vor.u32 %v5129, %v5130
    %v5132 = vshll.u32 2131351028, %v5123
    %v5133 = vshrl.u32 2102212464, %v5124
    %v5134 = vor.u32 %v5132, %v5133
    %v5135 = vshll.u32 2102212464, %v5123
    %v5136 = vshrl.u32 920167782, %v5124
    %v5137 = vor.u32 %v5135, %v5136
    %v5138 = vshll.u32 920167782, %v5123
    %v5139 = vshrl.u32 1326507024, %v5124
    %v5140 = vor.u32 %v5138, %v5139
    %vm5141 = vcmp.lt.s32.totalorder %v5122, 1
    %vm5142 = vcmp.lt.s32.totalorder %v5122, 2
    %vm5143 = vcmp.lt.s32.totalorder %v5122, 3
    %vm5144 = vcmp.lt.s32.totalorder %v5122, 4
    %v5145 = vsel %vm5141, %v5125, %v5128
    %v5146 = vsel %vm5144, %v5134, 2102212464
    %v5147 = vsel %vm5143, %v5131, %v5146
    %v5148 = vsel %vm5142, %v5145, %v5147
    %v5149 = vsel %vm5141, %v5128, %v5131
    %v5150 = vsel %vm5144, %v5137, 920167782
    %v5151 = vsel %vm5143, %v5134, %v5150
    %v5152 = vsel %vm5142, %v5149, %v5151
    %v5153 = vsel %vm5141, %v5131, %v5134
    %v5154 = vsel %vm5144, %v5140, 1326507024
    %v5155 = vsel %vm5143, %v5137, %v5154
    %v5156 = vsel %vm5142, %v5153, %v5155
    %v5157 = vshll.u32 %v5117, 8
    %v5158 = vmul.u32.u64.compose %v5157, %v5156
    %v5159 = vextract.low.u32 %v5158
    %v5160 = vextract.high.u32 %v5158
    %v5161 = vmul.u32.u64.compose %v5157, %v5152
    %v5162 = vextract.low.u32 %v5161
    %v5163 = vextract.high.u32 %v5161
    %v5164 = vmul.u32 %v5157, %v5148
    %v5165 = vadd.s32 %v5160, %v5162
    %vm5166 = vc.u32 %v5160, %v5162
    %v5167 = vadd.s32 %v5163, 1
    %v5168 = vsel %vm5166, %v5167, %v5163
    %v5169 = vadd.s32 %v5164, %v5168
    %v5170 = vadd.s32 %v5169, 536870912
    %v5171 = vshrl.u32 %v5170, 30
    %v5172 = vshll.u32 %v5171, 30
    %v5173 = vsub.s32 %v5169, %v5172
    %vm5174 = vcmp.lt.s32.totalorder %v5173, 0
    %v5175 = vsub.s32 0, %v5173
    %v5176 = vsel %vm5174, %v5175, %v5173
    %v5177 = vclz %v5176
    %v5178 = vsub.s32 %v5177, 2
    %vm5179 = vcmp.gt.s32.totalorder 0, %v5178
    %v5180 = vsel %vm5179, 0, %v5178
    %v5181 = vsub.s32 32, %v5180
    %v5182 = vshll.u32 %v5173, %v5180
    %v5183 = vshrl.u32 %v5165, %v5181
    %v5184 = vor.u32 %v5182, %v5183
    %v5185 = vsub.s32 4294967266, %v5180
    %v5186 = vadd.s32 %v5185, 127
    %v5187 = vshll.u32 %v5186, 23
    %v5188 = vor.u32 4788187, %v5187
    %v5189 = vand.u32 2147483647, %v5188
    %v5191 = vcvt.s32.f32 %v5184
    %v5192 = vmul.f32 %v5191, %v5189
    %v5193 = vxor.u32 %v5192, 2147483648
    %v5194 = vsel %vm5111, %v5193, %v5192
    %v5195 = vsub.s32 4, %v5171
    %v5196 = vsel %vm5111, %v5195, %v5171
    %v5197 = vsel %vm5110, %v5105, %v5194
    %v5198 = vsel %vm5110, 0, %v5196
    %v5199 = vcosq.f32.pop %v5197
    %v5200 = vsinq.f32.pop %v5197
    %vm5201 = vweird.f32 %v5105
    %v5202 = vadd.s32 %v5198, 3
    %v5203 = vand.u32 %v5202, 3
    %vm5204 = vcmp.lt.s32.totalorder %v5203, 2
    %vm5205 = vcmp.eq.s32.totalorder %v5203, 0
    %v5206 = vxor.u32 %v5200, 2147483648
    %v5207 = vsel %vm5205, %v5199, %v5206
    %vm5208 = vcmp.eq.s32.totalorder %v5203, 2
    %v5209 = vxor.u32 %v5199, 2147483648
    %v5210 = vsel %vm5208, %v5209, %v5200
    %v5211 = vsel %vm5204, %v5207, %v5210
    %v5212 = vsel %vm5201, nan, %v5211
    %v5213 = vand.u32 2147483647, %v5106
    %vm5214 = vcmp.le.f32.partialorder %v5213, 0.7853982
    %vm5215 = vcmp.lt.s32.totalorder %v5106, 0
    %v5216 = vand.u32 %v5106, 2139095040
    %v5217 = vshrl.u32 %v5216, 23
    %v5218 = vsub.s32 %v5217, 127
    %v5219 = vand.u32 2147483647, %v5106
    %v5220 = vand.u32 %v5219, 8388607
    %v5221 = vor.u32 %v5220, 8388608
    %v5222 = vsub.s32 0, %v5221
    %v5223 = vadd.s32 %v5218, 1
    %vm5224 = vcmp.gt.s32.totalorder %v5223, 0
    %v5225 = vsel %vm5224, %v5223, 0
    %v5226 = vshrl.u32 %v5225, 5
    %v5227 = vand.u32 %v5225, 31
    %v5228 = vsub.s32 32, %v5227
    %v5229 = vshrl.u32 683565275, %v5228
    %v5230 = vshll.u32 683565275, %v5227
    %v5231 = vshrl.u32 2475754826, %v5228
    %v5232 = vor.u32 %v5230, %v5231
    %v5233 = vshll.u32 2475754826, %v5227
    %v5234 = vshrl.u32 2131351028, %v5228
    %v5235 = vor.u32 %v5233, %v5234
    %v5236 = vshll.u32 2131351028, %v5227
    %v5237 = vshrl.u32 2102212464, %v5228
    %v5238 = vor.u32 %v5236, %v5237
    %v5239 = vshll.u32 2102212464, %v5227
    %v5240 = vshrl.u32 920167782, %v5228
    %v5241 = vor.u32 %v5239, %v5240
    %v5242 = vshll.u32 920167782, %v5227
    %v5243 = vshrl.u32 1326507024, %v5228
    %v5244 = vor.u32 %v5242, %v5243
    %vm5245 = vcmp.lt.s32.totalorder %v5226, 1
    %vm5246 = vcmp.lt.s32.totalorder %v5226, 2
    %vm5247 = vcmp.lt.s32.totalorder %v5226, 3
    %vm5248 = vcmp.lt.s32.totalorder %v5226, 4
    %v5249 = vsel %vm5245, %v5229, %v5232
    %v5250 = vsel %vm5248, %v5238, 2102212464
    %v5251 = vsel %vm5247, %v5235, %v5250
    %v5252 = vsel %vm5246, %v5249, %v5251
    %v5253 = vsel %vm5245, %v5232, %v5235
    %v5254 = vsel %vm5248, %v5241, 920167782
    %v5255 = vsel %vm5247, %v5238, %v5254
    %v5256 = vsel %vm5246, %v5253, %v5255
    %v5257 = vsel %vm5245, %v5235, %v5238
    %v5258 = vsel %vm5248, %v5244, 1326507024
    %v5259 = vsel %vm5247, %v5241, %v5258
    %v5260 = vsel %vm5246, %v5257, %v5259
    %v5261 = vshll.u32 %v5221, 8
    %v5262 = vmul.u32.u64.compose %v5261, %v5260
    %v5263 = vextract.low.u32 %v5262
    %v5264 = vextract.high.u32 %v5262
    %v5265 = vmul.u32.u64.compose %v5261, %v5256
    %v5266 = vextract.low.u32 %v5265
    %v5267 = vextract.high.u32 %v5265
    %v5268 = vmul.u32 %v5261, %v5252
    %v5269 = vadd.s32 %v5264, %v5266
    %vm5270 = vc.u32 %v5264, %v5266
    %v5271 = vadd.s32 %v5267, 1
    %v5272 = vsel %vm5270, %v5271, %v5267
    %v5273 = vadd.s32 %v5268, %v5272
    %v5274 = vadd.s32 %v5273, 536870912
    %v5275 = vshrl.u32 %v5274, 30
    %v5276 = vshll.u32 %v5275, 30
    %v5277 = vsub.s32 %v5273, %v5276
    %vm5278 = vcmp.lt.s32.totalorder %v5277, 0
    %v5279 = vsub.s32 0, %v5277
    %v5280 = vsel %vm5278, %v5279, %v5277
    %v5281 = vclz %v5280
    %v5282 = vsub.s32 %v5281, 2
    %vm5283 = vcmp.gt.s32.totalorder 0, %v5282
    %v5284 = vsel %vm5283, 0, %v5282
    %v5285 = vsub.s32 32, %v5284
    %v5286 = vshll.u32 %v5277, %v5284
    %v5287 = vshrl.u32 %v5269, %v5285
    %v5288 = vor.u32 %v5286, %v5287
    %v5289 = vsub.s32 4294967266, %v5284
    %v5290 = vadd.s32 %v5289, 127
    %v5291 = vshll.u32 %v5290, 23
    %v5292 = vor.u32 4788187, %v5291
    %v5293 = vand.u32 2147483647, %v5292
    %v5295 = vcvt.s32.f32 %v5288
    %v5296 = vmul.f32 %v5295, %v5293
    %v5297 = vxor.u32 %v5296, 2147483648
    %v5298 = vsel %vm5215, %v5297, %v5296
    %v5299 = vsub.s32 4, %v5275
    %v5300 = vsel %vm5215, %v5299, %v5275
    %v5301 = vsel %vm5214, %v5106, %v5298
    %v5302 = vsel %vm5214, 0, %v5300
    %v5303 = vcosq.f32.pop %v5301
    %v5304 = vsinq.f32.pop %v5301
    %vm5305 = vweird.f32 %v5106
    %v5306 = vadd.s32 %v5302, 3
    %v5307 = vand.u32 %v5306, 3
    %vm5308 = vcmp.lt.s32.totalorder %v5307, 2
    %vm5309 = vcmp.eq.s32.totalorder %v5307, 0
    %v5310 = vxor.u32 %v5304, 2147483648
    %v5311 = vsel %vm5309, %v5303, %v5310
    %vm5312 = vcmp.eq.s32.totalorder %v5307, 2
    %v5313 = vxor.u32 %v5303, 2147483648
    %v5314 = vsel %vm5312, %v5313, %v5304
    %v5315 = vsel %vm5308, %v5311, %v5314
    %v5316 = vsel %vm5305, nan, %v5315
    %v5317 = vand.u32 2147483647, %v5107
    %vm5318 = vcmp.le.f32.partialorder %v5317, 0.7853982
    %vm5319 = vcmp.lt.s32.totalorder %v5107, 0
    %v5320 = vand.u32 %v5107, 2139095040
    %v5321 = vshrl.u32 %v5320, 23
    %v5322 = vsub.s32 %v5321, 127
    %v5323 = vand.u32 2147483647, %v5107
    %v5324 = vand.u32 %v5323, 8388607
    %v5325 = vor.u32 %v5324, 8388608
    %v5326 = vsub.s32 0, %v5325
    %v5327 = vadd.s32 %v5322, 1
    %vm5328 = vcmp.gt.s32.totalorder %v5327, 0
    %v5329 = vsel %vm5328, %v5327, 0
    %v5330 = vshrl.u32 %v5329, 5
    %v5331 = vand.u32 %v5329, 31
    %v5332 = vsub.s32 32, %v5331
    %v5333 = vshrl.u32 683565275, %v5332
    %v5334 = vshll.u32 683565275, %v5331
    %v5335 = vshrl.u32 2475754826, %v5332
    %v5336 = vor.u32 %v5334, %v5335
    %v5337 = vshll.u32 2475754826, %v5331
    %v5338 = vshrl.u32 2131351028, %v5332
    %v5339 = vor.u32 %v5337, %v5338
    %v5340 = vshll.u32 2131351028, %v5331
    %v5341 = vshrl.u32 2102212464, %v5332
    %v5342 = vor.u32 %v5340, %v5341
    %v5343 = vshll.u32 2102212464, %v5331
    %v5344 = vshrl.u32 920167782, %v5332
    %v5345 = vor.u32 %v5343, %v5344
    %v5346 = vshll.u32 920167782, %v5331
    %v5347 = vshrl.u32 1326507024, %v5332
    %v5348 = vor.u32 %v5346, %v5347
    %vm5349 = vcmp.lt.s32.totalorder %v5330, 1
    %vm5350 = vcmp.lt.s32.totalorder %v5330, 2
    %vm5351 = vcmp.lt.s32.totalorder %v5330, 3
    %vm5352 = vcmp.lt.s32.totalorder %v5330, 4
    %v5353 = vsel %vm5349, %v5333, %v5336
    %v5354 = vsel %vm5352, %v5342, 2102212464
    %v5355 = vsel %vm5351, %v5339, %v5354
    %v5356 = vsel %vm5350, %v5353, %v5355
    %v5357 = vsel %vm5349, %v5336, %v5339
    %v5358 = vsel %vm5352, %v5345, 920167782
    %v5359 = vsel %vm5351, %v5342, %v5358
    %v5360 = vsel %vm5350, %v5357, %v5359
    %v5361 = vsel %vm5349, %v5339, %v5342
    %v5362 = vsel %vm5352, %v5348, 1326507024
    %v5363 = vsel %vm5351, %v5345, %v5362
    %v5364 = vsel %vm5350, %v5361, %v5363
    %v5365 = vshll.u32 %v5325, 8
    %v5366 = vmul.u32.u64.compose %v5365, %v5364
    %v5367 = vextract.low.u32 %v5366
    %v5368 = vextract.high.u32 %v5366
    %v5369 = vmul.u32.u64.compose %v5365, %v5360
    %v5370 = vextract.low.u32 %v5369
    %v5371 = vextract.high.u32 %v5369
    %v5372 = vmul.u32 %v5365, %v5356
    %v5373 = vadd.s32 %v5368, %v5370
    %vm5374 = vc.u32 %v5368, %v5370
    %v5375 = vadd.s32 %v5371, 1
    %v5376 = vsel %vm5374, %v5375, %v5371
    %v5377 = vadd.s32 %v5372, %v5376
    %v5378 = vadd.s32 %v5377, 536870912
    %v5379 = vshrl.u32 %v5378, 30
    %v5380 = vshll.u32 %v5379, 30
    %v5381 = vsub.s32 %v5377, %v5380
    %vm5382 = vcmp.lt.s32.totalorder %v5381, 0
    %v5383 = vsub.s32 0, %v5381
    %v5384 = vsel %vm5382, %v5383, %v5381
    %v5385 = vclz %v5384
    %v5386 = vsub.s32 %v5385, 2
    %vm5387 = vcmp.gt.s32.totalorder 0, %v5386
    %v5388 = vsel %vm5387, 0, %v5386
    %v5389 = vsub.s32 32, %v5388
    %v5390 = vshll.u32 %v5381, %v5388
    %v5391 = vshrl.u32 %v5373, %v5389
    %v5392 = vor.u32 %v5390, %v5391
    %v5393 = vsub.s32 4294967266, %v5388
    %v5394 = vadd.s32 %v5393, 127
    %v5395 = vshll.u32 %v5394, 23
    %v5396 = vor.u32 4788187, %v5395
    %v5397 = vand.u32 2147483647, %v5396
    %v5399 = vcvt.s32.f32 %v5392
    %v5400 = vmul.f32 %v5399, %v5397
    %v5401 = vxor.u32 %v5400, 2147483648
    %v5402 = vsel %vm5319, %v5401, %v5400
    %v5403 = vsub.s32 4, %v5379
    %v5404 = vsel %vm5319, %v5403, %v5379
    %v5405 = vsel %vm5318, %v5107, %v5402
    %v5406 = vsel %vm5318, 0, %v5404
    %v5407 = vcosq.f32.pop %v5405
    %v5408 = vsinq.f32.pop %v5405
    %vm5409 = vweird.f32 %v5107
    %v5410 = vadd.s32 %v5406, 3
    %v5411 = vand.u32 %v5410, 3
    %vm5412 = vcmp.lt.s32.totalorder %v5411, 2
    %vm5413 = vcmp.eq.s32.totalorder %v5411, 0
    %v5414 = vxor.u32 %v5408, 2147483648
    %v5415 = vsel %vm5413, %v5407, %v5414
    %vm5416 = vcmp.eq.s32.totalorder %v5411, 2
    %v5417 = vxor.u32 %v5407, 2147483648
    %v5418 = vsel %vm5416, %v5417, %v5408
    %v5419 = vsel %vm5412, %v5415, %v5418
    %v5420 = vsel %vm5409, nan, %v5419
    %v5421 = vand.u32 2147483647, %v5108
    %vm5422 = vcmp.le.f32.partialorder %v5421, 0.7853982
    %vm5423 = vcmp.lt.s32.totalorder %v5108, 0
    %v5424 = vand.u32 %v5108, 2139095040
    %v5425 = vshrl.u32 %v5424, 23
    %v5426 = vsub.s32 %v5425, 127
    %v5427 = vand.u32 2147483647, %v5108
    %v5428 = vand.u32 %v5427, 8388607
    %v5429 = vor.u32 %v5428, 8388608
    %v5430 = vsub.s32 0, %v5429
    %v5431 = vadd.s32 %v5426, 1
    %vm5432 = vcmp.gt.s32.totalorder %v5431, 0
    %v5433 = vsel %vm5432, %v5431, 0
    %v5434 = vshrl.u32 %v5433, 5
    %v5435 = vand.u32 %v5433, 31
    %v5436 = vsub.s32 32, %v5435
    %v5437 = vshrl.u32 683565275, %v5436
    %v5438 = vshll.u32 683565275, %v5435
    %v5439 = vshrl.u32 2475754826, %v5436
    %v5440 = vor.u32 %v5438, %v5439
    %v5441 = vshll.u32 2475754826, %v5435
    %v5442 = vshrl.u32 2131351028, %v5436
    %v5443 = vor.u32 %v5441, %v5442
    %v5444 = vshll.u32 2131351028, %v5435
    %v5445 = vshrl.u32 2102212464, %v5436
    %v5446 = vor.u32 %v5444, %v5445
    %v5447 = vshll.u32 2102212464, %v5435
    %v5448 = vshrl.u32 920167782, %v5436
    %v5449 = vor.u32 %v5447, %v5448
    %v5450 = vshll.u32 920167782, %v5435
    %v5451 = vshrl.u32 1326507024, %v5436
    %v5452 = vor.u32 %v5450, %v5451
    %vm5453 = vcmp.lt.s32.totalorder %v5434, 1
    %vm5454 = vcmp.lt.s32.totalorder %v5434, 2
    %vm5455 = vcmp.lt.s32.totalorder %v5434, 3
    %vm5456 = vcmp.lt.s32.totalorder %v5434, 4
    %v5457 = vsel %vm5453, %v5437, %v5440
    %v5458 = vsel %vm5456, %v5446, 2102212464
    %v5459 = vsel %vm5455, %v5443, %v5458
    %v5460 = vsel %vm5454, %v5457, %v5459
    %v5461 = vsel %vm5453, %v5440, %v5443
    %v5462 = vsel %vm5456, %v5449, 920167782
    %v5463 = vsel %vm5455, %v5446, %v5462
    %v5464 = vsel %vm5454, %v5461, %v5463
    %v5465 = vsel %vm5453, %v5443, %v5446
    %v5466 = vsel %vm5456, %v5452, 1326507024
    %v5467 = vsel %vm5455, %v5449, %v5466
    %v5468 = vsel %vm5454, %v5465, %v5467
    %v5469 = vshll.u32 %v5429, 8
    %v5470 = vmul.u32.u64.compose %v5469, %v5468
    %v5471 = vextract.low.u32 %v5470
    %v5472 = vextract.high.u32 %v5470
    %v5473 = vmul.u32.u64.compose %v5469, %v5464
    %v5474 = vextract.low.u32 %v5473
    %v5475 = vextract.high.u32 %v5473
    %v5476 = vmul.u32 %v5469, %v5460
    %v5477 = vadd.s32 %v5472, %v5474
    %vm5478 = vc.u32 %v5472, %v5474
    %v5479 = vadd.s32 %v5475, 1
    %v5480 = vsel %vm5478, %v5479, %v5475
    %v5481 = vadd.s32 %v5476, %v5480
    %v5482 = vadd.s32 %v5481, 536870912
    %v5483 = vshrl.u32 %v5482, 30
    %v5484 = vshll.u32 %v5483, 30
    %v5485 = vsub.s32 %v5481, %v5484
    %vm5486 = vcmp.lt.s32.totalorder %v5485, 0
    %v5487 = vsub.s32 0, %v5485
    %v5488 = vsel %vm5486, %v5487, %v5485
    %v5489 = vclz %v5488
    %v5490 = vsub.s32 %v5489, 2
    %vm5491 = vcmp.gt.s32.totalorder 0, %v5490
    %v5492 = vsel %vm5491, 0, %v5490
    %v5493 = vsub.s32 32, %v5492
    %v5494 = vshll.u32 %v5485, %v5492
    %v5495 = vshrl.u32 %v5477, %v5493
    %v5496 = vor.u32 %v5494, %v5495
    %v5497 = vsub.s32 4294967266, %v5492
    %v5498 = vadd.s32 %v5497, 127
    %v5499 = vshll.u32 %v5498, 23
    %v5500 = vor.u32 4788187, %v5499
    %v5501 = vand.u32 2147483647, %v5500
    %v5503 = vcvt.s32.f32 %v5496
    %v5504 = vmul.f32 %v5503, %v5501
    %v5505 = vxor.u32 %v5504, 2147483648
    %v5506 = vsel %vm5423, %v5505, %v5504
    %v5507 = vsub.s32 4, %v5483
    %v5508 = vsel %vm5423, %v5507, %v5483
    %v5509 = vsel %vm5422, %v5108, %v5506
    %v5510 = vsel %vm5422, 0, %v5508
    %v5511 = vcosq.f32.pop %v5509
    %v5512 = vsinq.f32.pop %v5509
    %vm5513 = vweird.f32 %v5108
    %v5514 = vadd.s32 %v5510, 3
    %v5515 = vand.u32 %v5514, 3
    %vm5516 = vcmp.lt.s32.totalorder %v5515, 2
    %vm5517 = vcmp.eq.s32.totalorder %v5515, 0
    %v5518 = vxor.u32 %v5512, 2147483648
    %v5519 = vsel %vm5517, %v5511, %v5518
    %vm5520 = vcmp.eq.s32.totalorder %v5515, 2
    %v5521 = vxor.u32 %v5511, 2147483648
    %v5522 = vsel %vm5520, %v5521, %v5512
    %v5523 = vsel %vm5516, %v5519, %v5522
    %v5524 = vsel %vm5513, nan, %v5523
    %s5525 = scalar_lea.vmem [#allocation5], 416
    %5526 = vst [vmem:[%s5525] sm:$0xff] %v5212
    %5527 = vst [vmem:[%s5525 + $0x8] sm:$0xff] %v5316
    %5528 = vst [vmem:[%s5525 + $0x10] sm:$0xff] %v5420
    %5529 = vst [vmem:[%s5525 + $0x18] sm:$0xff] %v5524
    %v5530 = vand.u32 2147483647, %v5105
    %vm5531 = vcmp.le.f32.partialorder %v5530, 0.7853982
    %vm5532 = vcmp.lt.s32.totalorder %v5105, 0
    %v5533 = vand.u32 %v5105, 2139095040
    %v5534 = vshrl.u32 %v5533, 23
    %v5535 = vsub.s32 %v5534, 127
    %v5536 = vand.u32 2147483647, %v5105
    %v5537 = vand.u32 %v5536, 8388607
    %v5538 = vor.u32 %v5537, 8388608
    %v5539 = vsub.s32 0, %v5538
    %v5540 = vadd.s32 %v5535, 1
    %vm5541 = vcmp.gt.s32.totalorder %v5540, 0
    %v5542 = vsel %vm5541, %v5540, 0
    %v5543 = vshrl.u32 %v5542, 5
    %v5544 = vand.u32 %v5542, 31
    %v5545 = vsub.s32 32, %v5544
    %v5546 = vshrl.u32 683565275, %v5545
    %v5547 = vshll.u32 683565275, %v5544
    %v5548 = vshrl.u32 2475754826, %v5545
    %v5549 = vor.u32 %v5547, %v5548
    %v5550 = vshll.u32 2475754826, %v5544
    %v5551 = vshrl.u32 2131351028, %v5545
    %v5552 = vor.u32 %v5550, %v5551
    %v5553 = vshll.u32 2131351028, %v5544
    %v5554 = vshrl.u32 2102212464, %v5545
    %v5555 = vor.u32 %v5553, %v5554
    %v5556 = vshll.u32 2102212464, %v5544
    %v5557 = vshrl.u32 920167782, %v5545
    %v5558 = vor.u32 %v5556, %v5557
    %v5559 = vshll.u32 920167782, %v5544
    %v5560 = vshrl.u32 1326507024, %v5545
    %v5561 = vor.u32 %v5559, %v5560
    %vm5562 = vcmp.lt.s32.totalorder %v5543, 1
    %vm5563 = vcmp.lt.s32.totalorder %v5543, 2
    %vm5564 = vcmp.lt.s32.totalorder %v5543, 3
    %vm5565 = vcmp.lt.s32.totalorder %v5543, 4
    %v5566 = vsel %vm5562, %v5546, %v5549
    %v5567 = vsel %vm5565, %v5555, 2102212464
    %v5568 = vsel %vm5564, %v5552, %v5567
    %v5569 = vsel %vm5563, %v5566, %v5568
    %v5570 = vsel %vm5562, %v5549, %v5552
    %v5571 = vsel %vm5565, %v5558, 920167782
    %v5572 = vsel %vm5564, %v5555, %v5571
    %v5573 = vsel %vm5563, %v5570, %v5572
    %v5574 = vsel %vm5562, %v5552, %v5555
    %v5575 = vsel %vm5565, %v5561, 1326507024
    %v5576 = vsel %vm5564, %v5558, %v5575
    %v5577 = vsel %vm5563, %v5574, %v5576
    %v5578 = vshll.u32 %v5538, 8
    %v5579 = vmul.u32.u64.compose %v5578, %v5577
    %v5580 = vextract.low.u32 %v5579
    %v5581 = vextract.high.u32 %v5579
    %v5582 = vmul.u32.u64.compose %v5578, %v5573
    %v5583 = vextract.low.u32 %v5582
    %v5584 = vextract.high.u32 %v5582
    %v5585 = vmul.u32 %v5578, %v5569
    %v5586 = vadd.s32 %v5581, %v5583
    %vm5587 = vc.u32 %v5581, %v5583
    %v5588 = vadd.s32 %v5584, 1
    %v5589 = vsel %vm5587, %v5588, %v5584
    %v5590 = vadd.s32 %v5585, %v5589
    %v5591 = vadd.s32 %v5590, 536870912
    %v5592 = vshrl.u32 %v5591, 30
    %v5593 = vshll.u32 %v5592, 30
    %v5594 = vsub.s32 %v5590, %v5593
    %vm5595 = vcmp.lt.s32.totalorder %v5594, 0
    %v5596 = vsub.s32 0, %v5594
    %v5597 = vsel %vm5595, %v5596, %v5594
    %v5598 = vclz %v5597
    %v5599 = vsub.s32 %v5598, 2
    %vm5600 = vcmp.gt.s32.totalorder 0, %v5599
    %v5601 = vsel %vm5600, 0, %v5599
    %v5602 = vsub.s32 32, %v5601
    %v5603 = vshll.u32 %v5594, %v5601
    %v5604 = vshrl.u32 %v5586, %v5602
    %v5605 = vor.u32 %v5603, %v5604
    %v5606 = vsub.s32 4294967266, %v5601
    %v5607 = vadd.s32 %v5606, 127
    %v5608 = vshll.u32 %v5607, 23
    %v5609 = vor.u32 4788187, %v5608
    %v5610 = vand.u32 2147483647, %v5609
    %v5612 = vcvt.s32.f32 %v5605
    %v5613 = vmul.f32 %v5612, %v5610
    %v5614 = vxor.u32 %v5613, 2147483648
    %v5615 = vsel %vm5532, %v5614, %v5613
    %v5616 = vsub.s32 4, %v5592
    %v5617 = vsel %vm5532, %v5616, %v5592
    %v5618 = vsel %vm5531, %v5105, %v5615
    %v5619 = vsel %vm5531, 0, %v5617
    %v5620 = vcosq.f32.pop %v5618
    %v5621 = vsinq.f32.pop %v5618
    %vm5622 = vweird.f32 %v5105
    %v5623 = vand.u32 %v5619, 3
    %vm5624 = vcmp.lt.s32.totalorder %v5623, 2
    %vm5625 = vcmp.eq.s32.totalorder %v5623, 0
    %v5626 = vxor.u32 %v5621, 2147483648
    %v5627 = vsel %vm5625, %v5620, %v5626
    %vm5628 = vcmp.eq.s32.totalorder %v5623, 2
    %v5629 = vxor.u32 %v5620, 2147483648
    %v5630 = vsel %vm5628, %v5629, %v5621
    %v5631 = vsel %vm5624, %v5627, %v5630
    %v5632 = vsel %vm5622, nan, %v5631
    %v5633 = vand.u32 2147483647, %v5106
    %vm5634 = vcmp.le.f32.partialorder %v5633, 0.7853982
    %vm5635 = vcmp.lt.s32.totalorder %v5106, 0
    %v5636 = vand.u32 %v5106, 2139095040
    %v5637 = vshrl.u32 %v5636, 23
    %v5638 = vsub.s32 %v5637, 127
    %v5639 = vand.u32 2147483647, %v5106
    %v5640 = vand.u32 %v5639, 8388607
    %v5641 = vor.u32 %v5640, 8388608
    %v5642 = vsub.s32 0, %v5641
    %v5643 = vadd.s32 %v5638, 1
    %vm5644 = vcmp.gt.s32.totalorder %v5643, 0
    %v5645 = vsel %vm5644, %v5643, 0
    %v5646 = vshrl.u32 %v5645, 5
    %v5647 = vand.u32 %v5645, 31
    %v5648 = vsub.s32 32, %v5647
    %v5649 = vshrl.u32 683565275, %v5648
    %v5650 = vshll.u32 683565275, %v5647
    %v5651 = vshrl.u32 2475754826, %v5648
    %v5652 = vor.u32 %v5650, %v5651
    %v5653 = vshll.u32 2475754826, %v5647
    %v5654 = vshrl.u32 2131351028, %v5648
    %v5655 = vor.u32 %v5653, %v5654
    %v5656 = vshll.u32 2131351028, %v5647
    %v5657 = vshrl.u32 2102212464, %v5648
    %v5658 = vor.u32 %v5656, %v5657
    %v5659 = vshll.u32 2102212464, %v5647
    %v5660 = vshrl.u32 920167782, %v5648
    %v5661 = vor.u32 %v5659, %v5660
    %v5662 = vshll.u32 920167782, %v5647
    %v5663 = vshrl.u32 1326507024, %v5648
    %v5664 = vor.u32 %v5662, %v5663
    %vm5665 = vcmp.lt.s32.totalorder %v5646, 1
    %vm5666 = vcmp.lt.s32.totalorder %v5646, 2
    %vm5667 = vcmp.lt.s32.totalorder %v5646, 3
    %vm5668 = vcmp.lt.s32.totalorder %v5646, 4
    %v5669 = vsel %vm5665, %v5649, %v5652
    %v5670 = vsel %vm5668, %v5658, 2102212464
    %v5671 = vsel %vm5667, %v5655, %v5670
    %v5672 = vsel %vm5666, %v5669, %v5671
    %v5673 = vsel %vm5665, %v5652, %v5655
    %v5674 = vsel %vm5668, %v5661, 920167782
    %v5675 = vsel %vm5667, %v5658, %v5674
    %v5676 = vsel %vm5666, %v5673, %v5675
    %v5677 = vsel %vm5665, %v5655, %v5658
    %v5678 = vsel %vm5668, %v5664, 1326507024
    %v5679 = vsel %vm5667, %v5661, %v5678
    %v5680 = vsel %vm5666, %v5677, %v5679
    %v5681 = vshll.u32 %v5641, 8
    %v5682 = vmul.u32.u64.compose %v5681, %v5680
    %v5683 = vextract.low.u32 %v5682
    %v5684 = vextract.high.u32 %v5682
    %v5685 = vmul.u32.u64.compose %v5681, %v5676
    %v5686 = vextract.low.u32 %v5685
    %v5687 = vextract.high.u32 %v5685
    %v5688 = vmul.u32 %v5681, %v5672
    %v5689 = vadd.s32 %v5684, %v5686
    %vm5690 = vc.u32 %v5684, %v5686
    %v5691 = vadd.s32 %v5687, 1
    %v5692 = vsel %vm5690, %v5691, %v5687
    %v5693 = vadd.s32 %v5688, %v5692
    %v5694 = vadd.s32 %v5693, 536870912
    %v5695 = vshrl.u32 %v5694, 30
    %v5696 = vshll.u32 %v5695, 30
    %v5697 = vsub.s32 %v5693, %v5696
    %vm5698 = vcmp.lt.s32.totalorder %v5697, 0
    %v5699 = vsub.s32 0, %v5697
    %v5700 = vsel %vm5698, %v5699, %v5697
    %v5701 = vclz %v5700
    %v5702 = vsub.s32 %v5701, 2
    %vm5703 = vcmp.gt.s32.totalorder 0, %v5702
    %v5704 = vsel %vm5703, 0, %v5702
    %v5705 = vsub.s32 32, %v5704
    %v5706 = vshll.u32 %v5697, %v5704
    %v5707 = vshrl.u32 %v5689, %v5705
    %v5708 = vor.u32 %v5706, %v5707
    %v5709 = vsub.s32 4294967266, %v5704
    %v5710 = vadd.s32 %v5709, 127
    %v5711 = vshll.u32 %v5710, 23
    %v5712 = vor.u32 4788187, %v5711
    %v5713 = vand.u32 2147483647, %v5712
    %v5715 = vcvt.s32.f32 %v5708
    %v5716 = vmul.f32 %v5715, %v5713
    %v5717 = vxor.u32 %v5716, 2147483648
    %v5718 = vsel %vm5635, %v5717, %v5716
    %v5719 = vsub.s32 4, %v5695
    %v5720 = vsel %vm5635, %v5719, %v5695
    %v5721 = vsel %vm5634, %v5106, %v5718
    %v5722 = vsel %vm5634, 0, %v5720
    %v5723 = vcosq.f32.pop %v5721
    %v5724 = vsinq.f32.pop %v5721
    %vm5725 = vweird.f32 %v5106
    %v5726 = vand.u32 %v5722, 3
    %vm5727 = vcmp.lt.s32.totalorder %v5726, 2
    %vm5728 = vcmp.eq.s32.totalorder %v5726, 0
    %v5729 = vxor.u32 %v5724, 2147483648
    %v5730 = vsel %vm5728, %v5723, %v5729
    %vm5731 = vcmp.eq.s32.totalorder %v5726, 2
    %v5732 = vxor.u32 %v5723, 2147483648
    %v5733 = vsel %vm5731, %v5732, %v5724
    %v5734 = vsel %vm5727, %v5730, %v5733
    %v5735 = vsel %vm5725, nan, %v5734
    %v5736 = vand.u32 2147483647, %v5107
    %vm5737 = vcmp.le.f32.partialorder %v5736, 0.7853982
    %vm5738 = vcmp.lt.s32.totalorder %v5107, 0
    %v5739 = vand.u32 %v5107, 2139095040
    %v5740 = vshrl.u32 %v5739, 23
    %v5741 = vsub.s32 %v5740, 127
    %v5742 = vand.u32 2147483647, %v5107
    %v5743 = vand.u32 %v5742, 8388607
    %v5744 = vor.u32 %v5743, 8388608
    %v5745 = vsub.s32 0, %v5744
    %v5746 = vadd.s32 %v5741, 1
    %vm5747 = vcmp.gt.s32.totalorder %v5746, 0
    %v5748 = vsel %vm5747, %v5746, 0
    %v5749 = vshrl.u32 %v5748, 5
    %v5750 = vand.u32 %v5748, 31
    %v5751 = vsub.s32 32, %v5750
    %v5752 = vshrl.u32 683565275, %v5751
    %v5753 = vshll.u32 683565275, %v5750
    %v5754 = vshrl.u32 2475754826, %v5751
    %v5755 = vor.u32 %v5753, %v5754
    %v5756 = vshll.u32 2475754826, %v5750
    %v5757 = vshrl.u32 2131351028, %v5751
    %v5758 = vor.u32 %v5756, %v5757
    %v5759 = vshll.u32 2131351028, %v5750
    %v5760 = vshrl.u32 2102212464, %v5751
    %v5761 = vor.u32 %v5759, %v5760
    %v5762 = vshll.u32 2102212464, %v5750
    %v5763 = vshrl.u32 920167782, %v5751
    %v5764 = vor.u32 %v5762, %v5763
    %v5765 = vshll.u32 920167782, %v5750
    %v5766 = vshrl.u32 1326507024, %v5751
    %v5767 = vor.u32 %v5765, %v5766
    %vm5768 = vcmp.lt.s32.totalorder %v5749, 1
    %vm5769 = vcmp.lt.s32.totalorder %v5749, 2
    %vm5770 = vcmp.lt.s32.totalorder %v5749, 3
    %vm5771 = vcmp.lt.s32.totalorder %v5749, 4
    %v5772 = vsel %vm5768, %v5752, %v5755
    %v5773 = vsel %vm5771, %v5761, 2102212464
    %v5774 = vsel %vm5770, %v5758, %v5773
    %v5775 = vsel %vm5769, %v5772, %v5774
    %v5776 = vsel %vm5768, %v5755, %v5758
    %v5777 = vsel %vm5771, %v5764, 920167782
    %v5778 = vsel %vm5770, %v5761, %v5777
    %v5779 = vsel %vm5769, %v5776, %v5778
    %v5780 = vsel %vm5768, %v5758, %v5761
    %v5781 = vsel %vm5771, %v5767, 1326507024
    %v5782 = vsel %vm5770, %v5764, %v5781
    %v5783 = vsel %vm5769, %v5780, %v5782
    %v5784 = vshll.u32 %v5744, 8
    %v5785 = vmul.u32.u64.compose %v5784, %v5783
    %v5786 = vextract.low.u32 %v5785
    %v5787 = vextract.high.u32 %v5785
    %v5788 = vmul.u32.u64.compose %v5784, %v5779
    %v5789 = vextract.low.u32 %v5788
    %v5790 = vextract.high.u32 %v5788
    %v5791 = vmul.u32 %v5784, %v5775
    %v5792 = vadd.s32 %v5787, %v5789
    %vm5793 = vc.u32 %v5787, %v5789
    %v5794 = vadd.s32 %v5790, 1
    %v5795 = vsel %vm5793, %v5794, %v5790
    %v5796 = vadd.s32 %v5791, %v5795
    %v5797 = vadd.s32 %v5796, 536870912
    %v5798 = vshrl.u32 %v5797, 30
    %v5799 = vshll.u32 %v5798, 30
    %v5800 = vsub.s32 %v5796, %v5799
    %vm5801 = vcmp.lt.s32.totalorder %v5800, 0
    %v5802 = vsub.s32 0, %v5800
    %v5803 = vsel %vm5801, %v5802, %v5800
    %v5804 = vclz %v5803
    %v5805 = vsub.s32 %v5804, 2
    %vm5806 = vcmp.gt.s32.totalorder 0, %v5805
    %v5807 = vsel %vm5806, 0, %v5805
    %v5808 = vsub.s32 32, %v5807
    %v5809 = vshll.u32 %v5800, %v5807
    %v5810 = vshrl.u32 %v5792, %v5808
    %v5811 = vor.u32 %v5809, %v5810
    %v5812 = vsub.s32 4294967266, %v5807
    %v5813 = vadd.s32 %v5812, 127
    %v5814 = vshll.u32 %v5813, 23
    %v5815 = vor.u32 4788187, %v5814
    %v5816 = vand.u32 2147483647, %v5815
    %v5818 = vcvt.s32.f32 %v5811
    %v5819 = vmul.f32 %v5818, %v5816
    %v5820 = vxor.u32 %v5819, 2147483648
    %v5821 = vsel %vm5738, %v5820, %v5819
    %v5822 = vsub.s32 4, %v5798
    %v5823 = vsel %vm5738, %v5822, %v5798
    %v5824 = vsel %vm5737, %v5107, %v5821
    %v5825 = vsel %vm5737, 0, %v5823
    %v5826 = vcosq.f32.pop %v5824
    %v5827 = vsinq.f32.pop %v5824
    %vm5828 = vweird.f32 %v5107
    %v5829 = vand.u32 %v5825, 3
    %vm5830 = vcmp.lt.s32.totalorder %v5829, 2
    %vm5831 = vcmp.eq.s32.totalorder %v5829, 0
    %v5832 = vxor.u32 %v5827, 2147483648
    %v5833 = vsel %vm5831, %v5826, %v5832
    %vm5834 = vcmp.eq.s32.totalorder %v5829, 2
    %v5835 = vxor.u32 %v5826, 2147483648
    %v5836 = vsel %vm5834, %v5835, %v5827
    %v5837 = vsel %vm5830, %v5833, %v5836
    %v5838 = vsel %vm5828, nan, %v5837
    %v5839 = vand.u32 2147483647, %v5108
    %vm5840 = vcmp.le.f32.partialorder %v5839, 0.7853982
    %vm5841 = vcmp.lt.s32.totalorder %v5108, 0
    %v5842 = vand.u32 %v5108, 2139095040
    %v5843 = vshrl.u32 %v5842, 23
    %v5844 = vsub.s32 %v5843, 127
    %v5845 = vand.u32 2147483647, %v5108
    %v5846 = vand.u32 %v5845, 8388607
    %v5847 = vor.u32 %v5846, 8388608
    %v5848 = vsub.s32 0, %v5847
    %v5849 = vadd.s32 %v5844, 1
    %vm5850 = vcmp.gt.s32.totalorder %v5849, 0
    %v5851 = vsel %vm5850, %v5849, 0
    %v5852 = vshrl.u32 %v5851, 5
    %v5853 = vand.u32 %v5851, 31
    %v5854 = vsub.s32 32, %v5853
    %v5855 = vshrl.u32 683565275, %v5854
    %v5856 = vshll.u32 683565275, %v5853
    %v5857 = vshrl.u32 2475754826, %v5854
    %v5858 = vor.u32 %v5856, %v5857
    %v5859 = vshll.u32 2475754826, %v5853
    %v5860 = vshrl.u32 2131351028, %v5854
    %v5861 = vor.u32 %v5859, %v5860
    %v5862 = vshll.u32 2131351028, %v5853
    %v5863 = vshrl.u32 2102212464, %v5854
    %v5864 = vor.u32 %v5862, %v5863
    %v5865 = vshll.u32 2102212464, %v5853
    %v5866 = vshrl.u32 920167782, %v5854
    %v5867 = vor.u32 %v5865, %v5866
    %v5868 = vshll.u32 920167782, %v5853
    %v5869 = vshrl.u32 1326507024, %v5854
    %v5870 = vor.u32 %v5868, %v5869
    %vm5871 = vcmp.lt.s32.totalorder %v5852, 1
    %vm5872 = vcmp.lt.s32.totalorder %v5852, 2
    %vm5873 = vcmp.lt.s32.totalorder %v5852, 3
    %vm5874 = vcmp.lt.s32.totalorder %v5852, 4
    %v5875 = vsel %vm5871, %v5855, %v5858
    %v5876 = vsel %vm5874, %v5864, 2102212464
    %v5877 = vsel %vm5873, %v5861, %v5876
    %v5878 = vsel %vm5872, %v5875, %v5877
    %v5879 = vsel %vm5871, %v5858, %v5861
    %v5880 = vsel %vm5874, %v5867, 920167782
    %v5881 = vsel %vm5873, %v5864, %v5880
    %v5882 = vsel %vm5872, %v5879, %v5881
    %v5883 = vsel %vm5871, %v5861, %v5864
    %v5884 = vsel %vm5874, %v5870, 1326507024
    %v5885 = vsel %vm5873, %v5867, %v5884
    %v5886 = vsel %vm5872, %v5883, %v5885
    %v5887 = vshll.u32 %v5847, 8
    %v5888 = vmul.u32.u64.compose %v5887, %v5886
    %v5889 = vextract.low.u32 %v5888
    %v5890 = vextract.high.u32 %v5888
    %v5891 = vmul.u32.u64.compose %v5887, %v5882
    %v5892 = vextract.low.u32 %v5891
    %v5893 = vextract.high.u32 %v5891
    %v5894 = vmul.u32 %v5887, %v5878
    %v5895 = vadd.s32 %v5890, %v5892
    %vm5896 = vc.u32 %v5890, %v5892
    %v5897 = vadd.s32 %v5893, 1
    %v5898 = vsel %vm5896, %v5897, %v5893
    %v5899 = vadd.s32 %v5894, %v5898
    %v5900 = vadd.s32 %v5899, 536870912
    %v5901 = vshrl.u32 %v5900, 30
    %v5902 = vshll.u32 %v5901, 30
    %v5903 = vsub.s32 %v5899, %v5902
    %vm5904 = vcmp.lt.s32.totalorder %v5903, 0
    %v5905 = vsub.s32 0, %v5903
    %v5906 = vsel %vm5904, %v5905, %v5903
    %v5907 = vclz %v5906
    %v5908 = vsub.s32 %v5907, 2
    %vm5909 = vcmp.gt.s32.totalorder 0, %v5908
    %v5910 = vsel %vm5909, 0, %v5908
    %v5911 = vsub.s32 32, %v5910
    %v5912 = vshll.u32 %v5903, %v5910
    %v5913 = vshrl.u32 %v5895, %v5911
    %v5914 = vor.u32 %v5912, %v5913
    %v5915 = vsub.s32 4294967266, %v5910
    %v5916 = vadd.s32 %v5915, 127
    %v5917 = vshll.u32 %v5916, 23
    %v5918 = vor.u32 4788187, %v5917
    %v5919 = vand.u32 2147483647, %v5918
    %v5921 = vcvt.s32.f32 %v5914
    %v5922 = vmul.f32 %v5921, %v5919
    %v5923 = vxor.u32 %v5922, 2147483648
    %v5924 = vsel %vm5841, %v5923, %v5922
    %v5925 = vsub.s32 4, %v5901
    %v5926 = vsel %vm5841, %v5925, %v5901
    %v5927 = vsel %vm5840, %v5108, %v5924
    %v5928 = vsel %vm5840, 0, %v5926
    %v5929 = vcosq.f32.pop %v5927
    %v5930 = vsinq.f32.pop %v5927
    %vm5931 = vweird.f32 %v5108
    %v5932 = vand.u32 %v5928, 3
    %vm5933 = vcmp.lt.s32.totalorder %v5932, 2
    %vm5934 = vcmp.eq.s32.totalorder %v5932, 0
    %v5935 = vxor.u32 %v5930, 2147483648
    %v5936 = vsel %vm5934, %v5929, %v5935
    %vm5937 = vcmp.eq.s32.totalorder %v5932, 2
    %v5938 = vxor.u32 %v5929, 2147483648
    %v5939 = vsel %vm5937, %v5938, %v5930
    %v5940 = vsel %vm5933, %v5936, %v5939
    %v5941 = vsel %vm5931, nan, %v5940
    %s5942 = scalar_lea.vmem [#allocation5], 448
    %5943 = vst [vmem:[%s5942] sm:$0xff] %v5632
    %5944 = vst [vmem:[%s5942 + $0x8] sm:$0xff] %v5735
    %5945 = vst [vmem:[%s5942 + $0x10] sm:$0xff] %v5838
    %5946 = vst [vmem:[%s5942 + $0x18] sm:$0xff] %v5941
    %v5947 = vld [vmem:[#allocation2] sm:$0xff]
    %v5948 = vld [vmem:[#allocation2 + $0x8] sm:$0xff]
    %v5949 = vld [vmem:[#allocation2 + $0x10] sm:$0xff]
    %v5950 = vld [vmem:[#allocation2 + $0x18] sm:$0xff]
    %v5951 = vmul.f32 %v5947, 128.0
    %v5952 = vmul.f32 %v5948, 128.0
    %v5953 = vmul.f32 %v5949, 128.0
    %v5954 = vmul.f32 %v5950, 128.0
    %v5955 = vand.u32 2147483647, %v5951
    %vm5956 = vcmp.le.f32.partialorder %v5955, 0.7853982
    %vm5957 = vcmp.lt.s32.totalorder %v5951, 0
    %v5958 = vand.u32 %v5951, 2139095040
    %v5959 = vshrl.u32 %v5958, 23
    %v5960 = vsub.s32 %v5959, 127
    %v5961 = vand.u32 2147483647, %v5951
    %v5962 = vand.u32 %v5961, 8388607
    %v5963 = vor.u32 %v5962, 8388608
    %v5964 = vsub.s32 0, %v5963
    %v5965 = vadd.s32 %v5960, 1
    %vm5966 = vcmp.gt.s32.totalorder %v5965, 0
    %v5967 = vsel %vm5966, %v5965, 0
    %v5968 = vshrl.u32 %v5967, 5
    %v5969 = vand.u32 %v5967, 31
    %v5970 = vsub.s32 32, %v5969
    %v5971 = vshrl.u32 683565275, %v5970
    %v5972 = vshll.u32 683565275, %v5969
    %v5973 = vshrl.u32 2475754826, %v5970
    %v5974 = vor.u32 %v5972, %v5973
    %v5975 = vshll.u32 2475754826, %v5969
    %v5976 = vshrl.u32 2131351028, %v5970
    %v5977 = vor.u32 %v5975, %v5976
    %v5978 = vshll.u32 2131351028, %v5969
    %v5979 = vshrl.u32 2102212464, %v5970
    %v5980 = vor.u32 %v5978, %v5979
    %v5981 = vshll.u32 2102212464, %v5969
    %v5982 = vshrl.u32 920167782, %v5970
    %v5983 = vor.u32 %v5981, %v5982
    %v5984 = vshll.u32 920167782, %v5969
    %v5985 = vshrl.u32 1326507024, %v5970
    %v5986 = vor.u32 %v5984, %v5985
    %vm5987 = vcmp.lt.s32.totalorder %v5968, 1
    %vm5988 = vcmp.lt.s32.totalorder %v5968, 2
    %vm5989 = vcmp.lt.s32.totalorder %v5968, 3
    %vm5990 = vcmp.lt.s32.totalorder %v5968, 4
    %v5991 = vsel %vm5987, %v5971, %v5974
    %v5992 = vsel %vm5990, %v5980, 2102212464
    %v5993 = vsel %vm5989, %v5977, %v5992
    %v5994 = vsel %vm5988, %v5991, %v5993
    %v5995 = vsel %vm5987, %v5974, %v5977
    %v5996 = vsel %vm5990, %v5983, 920167782
    %v5997 = vsel %vm5989, %v5980, %v5996
    %v5998 = vsel %vm5988, %v5995, %v5997
    %v5999 = vsel %vm5987, %v5977, %v5980
    %v6000 = vsel %vm5990, %v5986, 1326507024
    %v6001 = vsel %vm5989, %v5983, %v6000
    %v6002 = vsel %vm5988, %v5999, %v6001
    %v6003 = vshll.u32 %v5963, 8
    %v6004 = vmul.u32.u64.compose %v6003, %v6002
    %v6005 = vextract.low.u32 %v6004
    %v6006 = vextract.high.u32 %v6004
    %v6007 = vmul.u32.u64.compose %v6003, %v5998
    %v6008 = vextract.low.u32 %v6007
    %v6009 = vextract.high.u32 %v6007
    %v6010 = vmul.u32 %v6003, %v5994
    %v6011 = vadd.s32 %v6006, %v6008
    %vm6012 = vc.u32 %v6006, %v6008
    %v6013 = vadd.s32 %v6009, 1
    %v6014 = vsel %vm6012, %v6013, %v6009
    %v6015 = vadd.s32 %v6010, %v6014
    %v6016 = vadd.s32 %v6015, 536870912
    %v6017 = vshrl.u32 %v6016, 30
    %v6018 = vshll.u32 %v6017, 30
    %v6019 = vsub.s32 %v6015, %v6018
    %vm6020 = vcmp.lt.s32.totalorder %v6019, 0
    %v6021 = vsub.s32 0, %v6019
    %v6022 = vsel %vm6020, %v6021, %v6019
    %v6023 = vclz %v6022
    %v6024 = vsub.s32 %v6023, 2
    %vm6025 = vcmp.gt.s32.totalorder 0, %v6024
    %v6026 = vsel %vm6025, 0, %v6024
    %v6027 = vsub.s32 32, %v6026
    %v6028 = vshll.u32 %v6019, %v6026
    %v6029 = vshrl.u32 %v6011, %v6027
    %v6030 = vor.u32 %v6028, %v6029
    %v6031 = vsub.s32 4294967266, %v6026
    %v6032 = vadd.s32 %v6031, 127
    %v6033 = vshll.u32 %v6032, 23
    %v6034 = vor.u32 4788187, %v6033
    %v6035 = vand.u32 2147483647, %v6034
    %v6037 = vcvt.s32.f32 %v6030
    %v6038 = vmul.f32 %v6037, %v6035
    %v6039 = vxor.u32 %v6038, 2147483648
    %v6040 = vsel %vm5957, %v6039, %v6038
    %v6041 = vsub.s32 4, %v6017
    %v6042 = vsel %vm5957, %v6041, %v6017
    %v6043 = vsel %vm5956, %v5951, %v6040
    %v6044 = vsel %vm5956, 0, %v6042
    %v6045 = vcosq.f32.pop %v6043
    %v6046 = vsinq.f32.pop %v6043
    %vm6047 = vweird.f32 %v5951
    %v6048 = vadd.s32 %v6044, 3
    %v6049 = vand.u32 %v6048, 3
    %vm6050 = vcmp.lt.s32.totalorder %v6049, 2
    %vm6051 = vcmp.eq.s32.totalorder %v6049, 0
    %v6052 = vxor.u32 %v6046, 2147483648
    %v6053 = vsel %vm6051, %v6045, %v6052
    %vm6054 = vcmp.eq.s32.totalorder %v6049, 2
    %v6055 = vxor.u32 %v6045, 2147483648
    %v6056 = vsel %vm6054, %v6055, %v6046
    %v6057 = vsel %vm6050, %v6053, %v6056
    %v6058 = vsel %vm6047, nan, %v6057
    %v6059 = vand.u32 2147483647, %v5952
    %vm6060 = vcmp.le.f32.partialorder %v6059, 0.7853982
    %vm6061 = vcmp.lt.s32.totalorder %v5952, 0
    %v6062 = vand.u32 %v5952, 2139095040
    %v6063 = vshrl.u32 %v6062, 23
    %v6064 = vsub.s32 %v6063, 127
    %v6065 = vand.u32 2147483647, %v5952
    %v6066 = vand.u32 %v6065, 8388607
    %v6067 = vor.u32 %v6066, 8388608
    %v6068 = vsub.s32 0, %v6067
    %v6069 = vadd.s32 %v6064, 1
    %vm6070 = vcmp.gt.s32.totalorder %v6069, 0
    %v6071 = vsel %vm6070, %v6069, 0
    %v6072 = vshrl.u32 %v6071, 5
    %v6073 = vand.u32 %v6071, 31
    %v6074 = vsub.s32 32, %v6073
    %v6075 = vshrl.u32 683565275, %v6074
    %v6076 = vshll.u32 683565275, %v6073
    %v6077 = vshrl.u32 2475754826, %v6074
    %v6078 = vor.u32 %v6076, %v6077
    %v6079 = vshll.u32 2475754826, %v6073
    %v6080 = vshrl.u32 2131351028, %v6074
    %v6081 = vor.u32 %v6079, %v6080
    %v6082 = vshll.u32 2131351028, %v6073
    %v6083 = vshrl.u32 2102212464, %v6074
    %v6084 = vor.u32 %v6082, %v6083
    %v6085 = vshll.u32 2102212464, %v6073
    %v6086 = vshrl.u32 920167782, %v6074
    %v6087 = vor.u32 %v6085, %v6086
    %v6088 = vshll.u32 920167782, %v6073
    %v6089 = vshrl.u32 1326507024, %v6074
    %v6090 = vor.u32 %v6088, %v6089
    %vm6091 = vcmp.lt.s32.totalorder %v6072, 1
    %vm6092 = vcmp.lt.s32.totalorder %v6072, 2
    %vm6093 = vcmp.lt.s32.totalorder %v6072, 3
    %vm6094 = vcmp.lt.s32.totalorder %v6072, 4
    %v6095 = vsel %vm6091, %v6075, %v6078
    %v6096 = vsel %vm6094, %v6084, 2102212464
    %v6097 = vsel %vm6093, %v6081, %v6096
    %v6098 = vsel %vm6092, %v6095, %v6097
    %v6099 = vsel %vm6091, %v6078, %v6081
    %v6100 = vsel %vm6094, %v6087, 920167782
    %v6101 = vsel %vm6093, %v6084, %v6100
    %v6102 = vsel %vm6092, %v6099, %v6101
    %v6103 = vsel %vm6091, %v6081, %v6084
    %v6104 = vsel %vm6094, %v6090, 1326507024
    %v6105 = vsel %vm6093, %v6087, %v6104
    %v6106 = vsel %vm6092, %v6103, %v6105
    %v6107 = vshll.u32 %v6067, 8
    %v6108 = vmul.u32.u64.compose %v6107, %v6106
    %v6109 = vextract.low.u32 %v6108
    %v6110 = vextract.high.u32 %v6108
    %v6111 = vmul.u32.u64.compose %v6107, %v6102
    %v6112 = vextract.low.u32 %v6111
    %v6113 = vextract.high.u32 %v6111
    %v6114 = vmul.u32 %v6107, %v6098
    %v6115 = vadd.s32 %v6110, %v6112
    %vm6116 = vc.u32 %v6110, %v6112
    %v6117 = vadd.s32 %v6113, 1
    %v6118 = vsel %vm6116, %v6117, %v6113
    %v6119 = vadd.s32 %v6114, %v6118
    %v6120 = vadd.s32 %v6119, 536870912
    %v6121 = vshrl.u32 %v6120, 30
    %v6122 = vshll.u32 %v6121, 30
    %v6123 = vsub.s32 %v6119, %v6122
    %vm6124 = vcmp.lt.s32.totalorder %v6123, 0
    %v6125 = vsub.s32 0, %v6123
    %v6126 = vsel %vm6124, %v6125, %v6123
    %v6127 = vclz %v6126
    %v6128 = vsub.s32 %v6127, 2
    %vm6129 = vcmp.gt.s32.totalorder 0, %v6128
    %v6130 = vsel %vm6129, 0, %v6128
    %v6131 = vsub.s32 32, %v6130
    %v6132 = vshll.u32 %v6123, %v6130
    %v6133 = vshrl.u32 %v6115, %v6131
    %v6134 = vor.u32 %v6132, %v6133
    %v6135 = vsub.s32 4294967266, %v6130
    %v6136 = vadd.s32 %v6135, 127
    %v6137 = vshll.u32 %v6136, 23
    %v6138 = vor.u32 4788187, %v6137
    %v6139 = vand.u32 2147483647, %v6138
    %v6141 = vcvt.s32.f32 %v6134
    %v6142 = vmul.f32 %v6141, %v6139
    %v6143 = vxor.u32 %v6142, 2147483648
    %v6144 = vsel %vm6061, %v6143, %v6142
    %v6145 = vsub.s32 4, %v6121
    %v6146 = vsel %vm6061, %v6145, %v6121
    %v6147 = vsel %vm6060, %v5952, %v6144
    %v6148 = vsel %vm6060, 0, %v6146
    %v6149 = vcosq.f32.pop %v6147
    %v6150 = vsinq.f32.pop %v6147
    %vm6151 = vweird.f32 %v5952
    %v6152 = vadd.s32 %v6148, 3
    %v6153 = vand.u32 %v6152, 3
    %vm6154 = vcmp.lt.s32.totalorder %v6153, 2
    %vm6155 = vcmp.eq.s32.totalorder %v6153, 0
    %v6156 = vxor.u32 %v6150, 2147483648
    %v6157 = vsel %vm6155, %v6149, %v6156
    %vm6158 = vcmp.eq.s32.totalorder %v6153, 2
    %v6159 = vxor.u32 %v6149, 2147483648
    %v6160 = vsel %vm6158, %v6159, %v6150
    %v6161 = vsel %vm6154, %v6157, %v6160
    %v6162 = vsel %vm6151, nan, %v6161
    %v6163 = vand.u32 2147483647, %v5953
    %vm6164 = vcmp.le.f32.partialorder %v6163, 0.7853982
    %vm6165 = vcmp.lt.s32.totalorder %v5953, 0
    %v6166 = vand.u32 %v5953, 2139095040
    %v6167 = vshrl.u32 %v6166, 23
    %v6168 = vsub.s32 %v6167, 127
    %v6169 = vand.u32 2147483647, %v5953
    %v6170 = vand.u32 %v6169, 8388607
    %v6171 = vor.u32 %v6170, 8388608
    %v6172 = vsub.s32 0, %v6171
    %v6173 = vadd.s32 %v6168, 1
    %vm6174 = vcmp.gt.s32.totalorder %v6173, 0
    %v6175 = vsel %vm6174, %v6173, 0
    %v6176 = vshrl.u32 %v6175, 5
    %v6177 = vand.u32 %v6175, 31
    %v6178 = vsub.s32 32, %v6177
    %v6179 = vshrl.u32 683565275, %v6178
    %v6180 = vshll.u32 683565275, %v6177
    %v6181 = vshrl.u32 2475754826, %v6178
    %v6182 = vor.u32 %v6180, %v6181
    %v6183 = vshll.u32 2475754826, %v6177
    %v6184 = vshrl.u32 2131351028, %v6178
    %v6185 = vor.u32 %v6183, %v6184
    %v6186 = vshll.u32 2131351028, %v6177
    %v6187 = vshrl.u32 2102212464, %v6178
    %v6188 = vor.u32 %v6186, %v6187
    %v6189 = vshll.u32 2102212464, %v6177
    %v6190 = vshrl.u32 920167782, %v6178
    %v6191 = vor.u32 %v6189, %v6190
    %v6192 = vshll.u32 920167782, %v6177
    %v6193 = vshrl.u32 1326507024, %v6178
    %v6194 = vor.u32 %v6192, %v6193
    %vm6195 = vcmp.lt.s32.totalorder %v6176, 1
    %vm6196 = vcmp.lt.s32.totalorder %v6176, 2
    %vm6197 = vcmp.lt.s32.totalorder %v6176, 3
    %vm6198 = vcmp.lt.s32.totalorder %v6176, 4
    %v6199 = vsel %vm6195, %v6179, %v6182
    %v6200 = vsel %vm6198, %v6188, 2102212464
    %v6201 = vsel %vm6197, %v6185, %v6200
    %v6202 = vsel %vm6196, %v6199, %v6201
    %v6203 = vsel %vm6195, %v6182, %v6185
    %v6204 = vsel %vm6198, %v6191, 920167782
    %v6205 = vsel %vm6197, %v6188, %v6204
    %v6206 = vsel %vm6196, %v6203, %v6205
    %v6207 = vsel %vm6195, %v6185, %v6188
    %v6208 = vsel %vm6198, %v6194, 1326507024
    %v6209 = vsel %vm6197, %v6191, %v6208
    %v6210 = vsel %vm6196, %v6207, %v6209
    %v6211 = vshll.u32 %v6171, 8
    %v6212 = vmul.u32.u64.compose %v6211, %v6210
    %v6213 = vextract.low.u32 %v6212
    %v6214 = vextract.high.u32 %v6212
    %v6215 = vmul.u32.u64.compose %v6211, %v6206
    %v6216 = vextract.low.u32 %v6215
    %v6217 = vextract.high.u32 %v6215
    %v6218 = vmul.u32 %v6211, %v6202
    %v6219 = vadd.s32 %v6214, %v6216
    %vm6220 = vc.u32 %v6214, %v6216
    %v6221 = vadd.s32 %v6217, 1
    %v6222 = vsel %vm6220, %v6221, %v6217
    %v6223 = vadd.s32 %v6218, %v6222
    %v6224 = vadd.s32 %v6223, 536870912
    %v6225 = vshrl.u32 %v6224, 30
    %v6226 = vshll.u32 %v6225, 30
    %v6227 = vsub.s32 %v6223, %v6226
    %vm6228 = vcmp.lt.s32.totalorder %v6227, 0
    %v6229 = vsub.s32 0, %v6227
    %v6230 = vsel %vm6228, %v6229, %v6227
    %v6231 = vclz %v6230
    %v6232 = vsub.s32 %v6231, 2
    %vm6233 = vcmp.gt.s32.totalorder 0, %v6232
    %v6234 = vsel %vm6233, 0, %v6232
    %v6235 = vsub.s32 32, %v6234
    %v6236 = vshll.u32 %v6227, %v6234
    %v6237 = vshrl.u32 %v6219, %v6235
    %v6238 = vor.u32 %v6236, %v6237
    %v6239 = vsub.s32 4294967266, %v6234
    %v6240 = vadd.s32 %v6239, 127
    %v6241 = vshll.u32 %v6240, 23
    %v6242 = vor.u32 4788187, %v6241
    %v6243 = vand.u32 2147483647, %v6242
    %v6245 = vcvt.s32.f32 %v6238
    %v6246 = vmul.f32 %v6245, %v6243
    %v6247 = vxor.u32 %v6246, 2147483648
    %v6248 = vsel %vm6165, %v6247, %v6246
    %v6249 = vsub.s32 4, %v6225
    %v6250 = vsel %vm6165, %v6249, %v6225
    %v6251 = vsel %vm6164, %v5953, %v6248
    %v6252 = vsel %vm6164, 0, %v6250
    %v6253 = vcosq.f32.pop %v6251
    %v6254 = vsinq.f32.pop %v6251
    %vm6255 = vweird.f32 %v5953
    %v6256 = vadd.s32 %v6252, 3
    %v6257 = vand.u32 %v6256, 3
    %vm6258 = vcmp.lt.s32.totalorder %v6257, 2
    %vm6259 = vcmp.eq.s32.totalorder %v6257, 0
    %v6260 = vxor.u32 %v6254, 2147483648
    %v6261 = vsel %vm6259, %v6253, %v6260
    %vm6262 = vcmp.eq.s32.totalorder %v6257, 2
    %v6263 = vxor.u32 %v6253, 2147483648
    %v6264 = vsel %vm6262, %v6263, %v6254
    %v6265 = vsel %vm6258, %v6261, %v6264
    %v6266 = vsel %vm6255, nan, %v6265
    %v6267 = vand.u32 2147483647, %v5954
    %vm6268 = vcmp.le.f32.partialorder %v6267, 0.7853982
    %vm6269 = vcmp.lt.s32.totalorder %v5954, 0
    %v6270 = vand.u32 %v5954, 2139095040
    %v6271 = vshrl.u32 %v6270, 23
    %v6272 = vsub.s32 %v6271, 127
    %v6273 = vand.u32 2147483647, %v5954
    %v6274 = vand.u32 %v6273, 8388607
    %v6275 = vor.u32 %v6274, 8388608
    %v6276 = vsub.s32 0, %v6275
    %v6277 = vadd.s32 %v6272, 1
    %vm6278 = vcmp.gt.s32.totalorder %v6277, 0
    %v6279 = vsel %vm6278, %v6277, 0
    %v6280 = vshrl.u32 %v6279, 5
    %v6281 = vand.u32 %v6279, 31
    %v6282 = vsub.s32 32, %v6281
    %v6283 = vshrl.u32 683565275, %v6282
    %v6284 = vshll.u32 683565275, %v6281
    %v6285 = vshrl.u32 2475754826, %v6282
    %v6286 = vor.u32 %v6284, %v6285
    %v6287 = vshll.u32 2475754826, %v6281
    %v6288 = vshrl.u32 2131351028, %v6282
    %v6289 = vor.u32 %v6287, %v6288
    %v6290 = vshll.u32 2131351028, %v6281
    %v6291 = vshrl.u32 2102212464, %v6282
    %v6292 = vor.u32 %v6290, %v6291
    %v6293 = vshll.u32 2102212464, %v6281
    %v6294 = vshrl.u32 920167782, %v6282
    %v6295 = vor.u32 %v6293, %v6294
    %v6296 = vshll.u32 920167782, %v6281
    %v6297 = vshrl.u32 1326507024, %v6282
    %v6298 = vor.u32 %v6296, %v6297
    %vm6299 = vcmp.lt.s32.totalorder %v6280, 1
    %vm6300 = vcmp.lt.s32.totalorder %v6280, 2
    %vm6301 = vcmp.lt.s32.totalorder %v6280, 3
    %vm6302 = vcmp.lt.s32.totalorder %v6280, 4
    %v6303 = vsel %vm6299, %v6283, %v6286
    %v6304 = vsel %vm6302, %v6292, 2102212464
    %v6305 = vsel %vm6301, %v6289, %v6304
    %v6306 = vsel %vm6300, %v6303, %v6305
    %v6307 = vsel %vm6299, %v6286, %v6289
    %v6308 = vsel %vm6302, %v6295, 920167782
    %v6309 = vsel %vm6301, %v6292, %v6308
    %v6310 = vsel %vm6300, %v6307, %v6309
    %v6311 = vsel %vm6299, %v6289, %v6292
    %v6312 = vsel %vm6302, %v6298, 1326507024
    %v6313 = vsel %vm6301, %v6295, %v6312
    %v6314 = vsel %vm6300, %v6311, %v6313
    %v6315 = vshll.u32 %v6275, 8
    %v6316 = vmul.u32.u64.compose %v6315, %v6314
    %v6317 = vextract.low.u32 %v6316
    %v6318 = vextract.high.u32 %v6316
    %v6319 = vmul.u32.u64.compose %v6315, %v6310
    %v6320 = vextract.low.u32 %v6319
    %v6321 = vextract.high.u32 %v6319
    %v6322 = vmul.u32 %v6315, %v6306
    %v6323 = vadd.s32 %v6318, %v6320
    %vm6324 = vc.u32 %v6318, %v6320
    %v6325 = vadd.s32 %v6321, 1
    %v6326 = vsel %vm6324, %v6325, %v6321
    %v6327 = vadd.s32 %v6322, %v6326
    %v6328 = vadd.s32 %v6327, 536870912
    %v6329 = vshrl.u32 %v6328, 30
    %v6330 = vshll.u32 %v6329, 30
    %v6331 = vsub.s32 %v6327, %v6330
    %vm6332 = vcmp.lt.s32.totalorder %v6331, 0
    %v6333 = vsub.s32 0, %v6331
    %v6334 = vsel %vm6332, %v6333, %v6331
    %v6335 = vclz %v6334
    %v6336 = vsub.s32 %v6335, 2
    %vm6337 = vcmp.gt.s32.totalorder 0, %v6336
    %v6338 = vsel %vm6337, 0, %v6336
    %v6339 = vsub.s32 32, %v6338
    %v6340 = vshll.u32 %v6331, %v6338
    %v6341 = vshrl.u32 %v6323, %v6339
    %v6342 = vor.u32 %v6340, %v6341
    %v6343 = vsub.s32 4294967266, %v6338
    %v6344 = vadd.s32 %v6343, 127
    %v6345 = vshll.u32 %v6344, 23
    %v6346 = vor.u32 4788187, %v6345
    %v6347 = vand.u32 2147483647, %v6346
    %v6349 = vcvt.s32.f32 %v6342
    %v6350 = vmul.f32 %v6349, %v6347
    %v6351 = vxor.u32 %v6350, 2147483648
    %v6352 = vsel %vm6269, %v6351, %v6350
    %v6353 = vsub.s32 4, %v6329
    %v6354 = vsel %vm6269, %v6353, %v6329
    %v6355 = vsel %vm6268, %v5954, %v6352
    %v6356 = vsel %vm6268, 0, %v6354
    %v6357 = vcosq.f32.pop %v6355
    %v6358 = vsinq.f32.pop %v6355
    %vm6359 = vweird.f32 %v5954
    %v6360 = vadd.s32 %v6356, 3
    %v6361 = vand.u32 %v6360, 3
    %vm6362 = vcmp.lt.s32.totalorder %v6361, 2
    %vm6363 = vcmp.eq.s32.totalorder %v6361, 0
    %v6364 = vxor.u32 %v6358, 2147483648
    %v6365 = vsel %vm6363, %v6357, %v6364
    %vm6366 = vcmp.eq.s32.totalorder %v6361, 2
    %v6367 = vxor.u32 %v6357, 2147483648
    %v6368 = vsel %vm6366, %v6367, %v6358
    %v6369 = vsel %vm6362, %v6365, %v6368
    %v6370 = vsel %vm6359, nan, %v6369
    %s6371 = scalar_lea.vmem [#allocation5], 480
    %6372 = vst [vmem:[%s6371] sm:$0xff] %v6058
    %6373 = vst [vmem:[%s6371 + $0x8] sm:$0xff] %v6162
    %6374 = vst [vmem:[%s6371 + $0x10] sm:$0xff] %v6266
    %6375 = vst [vmem:[%s6371 + $0x18] sm:$0xff] %v6370
    %v6376 = vand.u32 2147483647, %v5951
    %vm6377 = vcmp.le.f32.partialorder %v6376, 0.7853982
    %vm6378 = vcmp.lt.s32.totalorder %v5951, 0
    %v6379 = vand.u32 %v5951, 2139095040
    %v6380 = vshrl.u32 %v6379, 23
    %v6381 = vsub.s32 %v6380, 127
    %v6382 = vand.u32 2147483647, %v5951
    %v6383 = vand.u32 %v6382, 8388607
    %v6384 = vor.u32 %v6383, 8388608
    %v6385 = vsub.s32 0, %v6384
    %v6386 = vadd.s32 %v6381, 1
    %vm6387 = vcmp.gt.s32.totalorder %v6386, 0
    %v6388 = vsel %vm6387, %v6386, 0
    %v6389 = vshrl.u32 %v6388, 5
    %v6390 = vand.u32 %v6388, 31
    %v6391 = vsub.s32 32, %v6390
    %v6392 = vshrl.u32 683565275, %v6391
    %v6393 = vshll.u32 683565275, %v6390
    %v6394 = vshrl.u32 2475754826, %v6391
    %v6395 = vor.u32 %v6393, %v6394
    %v6396 = vshll.u32 2475754826, %v6390
    %v6397 = vshrl.u32 2131351028, %v6391
    %v6398 = vor.u32 %v6396, %v6397
    %v6399 = vshll.u32 2131351028, %v6390
    %v6400 = vshrl.u32 2102212464, %v6391
    %v6401 = vor.u32 %v6399, %v6400
    %v6402 = vshll.u32 2102212464, %v6390
    %v6403 = vshrl.u32 920167782, %v6391
    %v6404 = vor.u32 %v6402, %v6403
    %v6405 = vshll.u32 920167782, %v6390
    %v6406 = vshrl.u32 1326507024, %v6391
    %v6407 = vor.u32 %v6405, %v6406
    %vm6408 = vcmp.lt.s32.totalorder %v6389, 1
    %vm6409 = vcmp.lt.s32.totalorder %v6389, 2
    %vm6410 = vcmp.lt.s32.totalorder %v6389, 3
    %vm6411 = vcmp.lt.s32.totalorder %v6389, 4
    %v6412 = vsel %vm6408, %v6392, %v6395
    %v6413 = vsel %vm6411, %v6401, 2102212464
    %v6414 = vsel %vm6410, %v6398, %v6413
    %v6415 = vsel %vm6409, %v6412, %v6414
    %v6416 = vsel %vm6408, %v6395, %v6398
    %v6417 = vsel %vm6411, %v6404, 920167782
    %v6418 = vsel %vm6410, %v6401, %v6417
    %v6419 = vsel %vm6409, %v6416, %v6418
    %v6420 = vsel %vm6408, %v6398, %v6401
    %v6421 = vsel %vm6411, %v6407, 1326507024
    %v6422 = vsel %vm6410, %v6404, %v6421
    %v6423 = vsel %vm6409, %v6420, %v6422
    %v6424 = vshll.u32 %v6384, 8
    %v6425 = vmul.u32.u64.compose %v6424, %v6423
    %v6426 = vextract.low.u32 %v6425
    %v6427 = vextract.high.u32 %v6425
    %v6428 = vmul.u32.u64.compose %v6424, %v6419
    %v6429 = vextract.low.u32 %v6428
    %v6430 = vextract.high.u32 %v6428
    %v6431 = vmul.u32 %v6424, %v6415
    %v6432 = vadd.s32 %v6427, %v6429
    %vm6433 = vc.u32 %v6427, %v6429
    %v6434 = vadd.s32 %v6430, 1
    %v6435 = vsel %vm6433, %v6434, %v6430
    %v6436 = vadd.s32 %v6431, %v6435
    %v6437 = vadd.s32 %v6436, 536870912
    %v6438 = vshrl.u32 %v6437, 30
    %v6439 = vshll.u32 %v6438, 30
    %v6440 = vsub.s32 %v6436, %v6439
    %vm6441 = vcmp.lt.s32.totalorder %v6440, 0
    %v6442 = vsub.s32 0, %v6440
    %v6443 = vsel %vm6441, %v6442, %v6440
    %v6444 = vclz %v6443
    %v6445 = vsub.s32 %v6444, 2
    %vm6446 = vcmp.gt.s32.totalorder 0, %v6445
    %v6447 = vsel %vm6446, 0, %v6445
    %v6448 = vsub.s32 32, %v6447
    %v6449 = vshll.u32 %v6440, %v6447
    %v6450 = vshrl.u32 %v6432, %v6448
    %v6451 = vor.u32 %v6449, %v6450
    %v6452 = vsub.s32 4294967266, %v6447
    %v6453 = vadd.s32 %v6452, 127
    %v6454 = vshll.u32 %v6453, 23
    %v6455 = vor.u32 4788187, %v6454
    %v6456 = vand.u32 2147483647, %v6455
    %v6458 = vcvt.s32.f32 %v6451
    %v6459 = vmul.f32 %v6458, %v6456
    %v6460 = vxor.u32 %v6459, 2147483648
    %v6461 = vsel %vm6378, %v6460, %v6459
    %v6462 = vsub.s32 4, %v6438
    %v6463 = vsel %vm6378, %v6462, %v6438
    %v6464 = vsel %vm6377, %v5951, %v6461
    %v6465 = vsel %vm6377, 0, %v6463
    %v6466 = vcosq.f32.pop %v6464
    %v6467 = vsinq.f32.pop %v6464
    %vm6468 = vweird.f32 %v5951
    %v6469 = vand.u32 %v6465, 3
    %vm6470 = vcmp.lt.s32.totalorder %v6469, 2
    %vm6471 = vcmp.eq.s32.totalorder %v6469, 0
    %v6472 = vxor.u32 %v6467, 2147483648
    %v6473 = vsel %vm6471, %v6466, %v6472
    %vm6474 = vcmp.eq.s32.totalorder %v6469, 2
    %v6475 = vxor.u32 %v6466, 2147483648
    %v6476 = vsel %vm6474, %v6475, %v6467
    %v6477 = vsel %vm6470, %v6473, %v6476
    %v6478 = vsel %vm6468, nan, %v6477
    %v6479 = vand.u32 2147483647, %v5952
    %vm6480 = vcmp.le.f32.partialorder %v6479, 0.7853982
    %vm6481 = vcmp.lt.s32.totalorder %v5952, 0
    %v6482 = vand.u32 %v5952, 2139095040
    %v6483 = vshrl.u32 %v6482, 23
    %v6484 = vsub.s32 %v6483, 127
    %v6485 = vand.u32 2147483647, %v5952
    %v6486 = vand.u32 %v6485, 8388607
    %v6487 = vor.u32 %v6486, 8388608
    %v6488 = vsub.s32 0, %v6487
    %v6489 = vadd.s32 %v6484, 1
    %vm6490 = vcmp.gt.s32.totalorder %v6489, 0
    %v6491 = vsel %vm6490, %v6489, 0
    %v6492 = vshrl.u32 %v6491, 5
    %v6493 = vand.u32 %v6491, 31
    %v6494 = vsub.s32 32, %v6493
    %v6495 = vshrl.u32 683565275, %v6494
    %v6496 = vshll.u32 683565275, %v6493
    %v6497 = vshrl.u32 2475754826, %v6494
    %v6498 = vor.u32 %v6496, %v6497
    %v6499 = vshll.u32 2475754826, %v6493
    %v6500 = vshrl.u32 2131351028, %v6494
    %v6501 = vor.u32 %v6499, %v6500
    %v6502 = vshll.u32 2131351028, %v6493
    %v6503 = vshrl.u32 2102212464, %v6494
    %v6504 = vor.u32 %v6502, %v6503
    %v6505 = vshll.u32 2102212464, %v6493
    %v6506 = vshrl.u32 920167782, %v6494
    %v6507 = vor.u32 %v6505, %v6506
    %v6508 = vshll.u32 920167782, %v6493
    %v6509 = vshrl.u32 1326507024, %v6494
    %v6510 = vor.u32 %v6508, %v6509
    %vm6511 = vcmp.lt.s32.totalorder %v6492, 1
    %vm6512 = vcmp.lt.s32.totalorder %v6492, 2
    %vm6513 = vcmp.lt.s32.totalorder %v6492, 3
    %vm6514 = vcmp.lt.s32.totalorder %v6492, 4
    %v6515 = vsel %vm6511, %v6495, %v6498
    %v6516 = vsel %vm6514, %v6504, 2102212464
    %v6517 = vsel %vm6513, %v6501, %v6516
    %v6518 = vsel %vm6512, %v6515, %v6517
    %v6519 = vsel %vm6511, %v6498, %v6501
    %v6520 = vsel %vm6514, %v6507, 920167782
    %v6521 = vsel %vm6513, %v6504, %v6520
    %v6522 = vsel %vm6512, %v6519, %v6521
    %v6523 = vsel %vm6511, %v6501, %v6504
    %v6524 = vsel %vm6514, %v6510, 1326507024
    %v6525 = vsel %vm6513, %v6507, %v6524
    %v6526 = vsel %vm6512, %v6523, %v6525
    %v6527 = vshll.u32 %v6487, 8
    %v6528 = vmul.u32.u64.compose %v6527, %v6526
    %v6529 = vextract.low.u32 %v6528
    %v6530 = vextract.high.u32 %v6528
    %v6531 = vmul.u32.u64.compose %v6527, %v6522
    %v6532 = vextract.low.u32 %v6531
    %v6533 = vextract.high.u32 %v6531
    %v6534 = vmul.u32 %v6527, %v6518
    %v6535 = vadd.s32 %v6530, %v6532
    %vm6536 = vc.u32 %v6530, %v6532
    %v6537 = vadd.s32 %v6533, 1
    %v6538 = vsel %vm6536, %v6537, %v6533
    %v6539 = vadd.s32 %v6534, %v6538
    %v6540 = vadd.s32 %v6539, 536870912
    %v6541 = vshrl.u32 %v6540, 30
    %v6542 = vshll.u32 %v6541, 30
    %v6543 = vsub.s32 %v6539, %v6542
    %vm6544 = vcmp.lt.s32.totalorder %v6543, 0
    %v6545 = vsub.s32 0, %v6543
    %v6546 = vsel %vm6544, %v6545, %v6543
    %v6547 = vclz %v6546
    %v6548 = vsub.s32 %v6547, 2
    %vm6549 = vcmp.gt.s32.totalorder 0, %v6548
    %v6550 = vsel %vm6549, 0, %v6548
    %v6551 = vsub.s32 32, %v6550
    %v6552 = vshll.u32 %v6543, %v6550
    %v6553 = vshrl.u32 %v6535, %v6551
    %v6554 = vor.u32 %v6552, %v6553
    %v6555 = vsub.s32 4294967266, %v6550
    %v6556 = vadd.s32 %v6555, 127
    %v6557 = vshll.u32 %v6556, 23
    %v6558 = vor.u32 4788187, %v6557
    %v6559 = vand.u32 2147483647, %v6558
    %v6561 = vcvt.s32.f32 %v6554
    %v6562 = vmul.f32 %v6561, %v6559
    %v6563 = vxor.u32 %v6562, 2147483648
    %v6564 = vsel %vm6481, %v6563, %v6562
    %v6565 = vsub.s32 4, %v6541
    %v6566 = vsel %vm6481, %v6565, %v6541
    %v6567 = vsel %vm6480, %v5952, %v6564
    %v6568 = vsel %vm6480, 0, %v6566
    %v6569 = vcosq.f32.pop %v6567
    %v6570 = vsinq.f32.pop %v6567
    %vm6571 = vweird.f32 %v5952
    %v6572 = vand.u32 %v6568, 3
    %vm6573 = vcmp.lt.s32.totalorder %v6572, 2
    %vm6574 = vcmp.eq.s32.totalorder %v6572, 0
    %v6575 = vxor.u32 %v6570, 2147483648
    %v6576 = vsel %vm6574, %v6569, %v6575
    %vm6577 = vcmp.eq.s32.totalorder %v6572, 2
    %v6578 = vxor.u32 %v6569, 2147483648
    %v6579 = vsel %vm6577, %v6578, %v6570
    %v6580 = vsel %vm6573, %v6576, %v6579
    %v6581 = vsel %vm6571, nan, %v6580
    %v6582 = vand.u32 2147483647, %v5953
    %vm6583 = vcmp.le.f32.partialorder %v6582, 0.7853982
    %vm6584 = vcmp.lt.s32.totalorder %v5953, 0
    %v6585 = vand.u32 %v5953, 2139095040
    %v6586 = vshrl.u32 %v6585, 23
    %v6587 = vsub.s32 %v6586, 127
    %v6588 = vand.u32 2147483647, %v5953
    %v6589 = vand.u32 %v6588, 8388607
    %v6590 = vor.u32 %v6589, 8388608
    %v6591 = vsub.s32 0, %v6590
    %v6592 = vadd.s32 %v6587, 1
    %vm6593 = vcmp.gt.s32.totalorder %v6592, 0
    %v6594 = vsel %vm6593, %v6592, 0
    %v6595 = vshrl.u32 %v6594, 5
    %v6596 = vand.u32 %v6594, 31
    %v6597 = vsub.s32 32, %v6596
    %v6598 = vshrl.u32 683565275, %v6597
    %v6599 = vshll.u32 683565275, %v6596
    %v6600 = vshrl.u32 2475754826, %v6597
    %v6601 = vor.u32 %v6599, %v6600
    %v6602 = vshll.u32 2475754826, %v6596
    %v6603 = vshrl.u32 2131351028, %v6597
    %v6604 = vor.u32 %v6602, %v6603
    %v6605 = vshll.u32 2131351028, %v6596
    %v6606 = vshrl.u32 2102212464, %v6597
    %v6607 = vor.u32 %v6605, %v6606
    %v6608 = vshll.u32 2102212464, %v6596
    %v6609 = vshrl.u32 920167782, %v6597
    %v6610 = vor.u32 %v6608, %v6609
    %v6611 = vshll.u32 920167782, %v6596
    %v6612 = vshrl.u32 1326507024, %v6597
    %v6613 = vor.u32 %v6611, %v6612
    %vm6614 = vcmp.lt.s32.totalorder %v6595, 1
    %vm6615 = vcmp.lt.s32.totalorder %v6595, 2
    %vm6616 = vcmp.lt.s32.totalorder %v6595, 3
    %vm6617 = vcmp.lt.s32.totalorder %v6595, 4
    %v6618 = vsel %vm6614, %v6598, %v6601
    %v6619 = vsel %vm6617, %v6607, 2102212464
    %v6620 = vsel %vm6616, %v6604, %v6619
    %v6621 = vsel %vm6615, %v6618, %v6620
    %v6622 = vsel %vm6614, %v6601, %v6604
    %v6623 = vsel %vm6617, %v6610, 920167782
    %v6624 = vsel %vm6616, %v6607, %v6623
    %v6625 = vsel %vm6615, %v6622, %v6624
    %v6626 = vsel %vm6614, %v6604, %v6607
    %v6627 = vsel %vm6617, %v6613, 1326507024
    %v6628 = vsel %vm6616, %v6610, %v6627
    %v6629 = vsel %vm6615, %v6626, %v6628
    %v6630 = vshll.u32 %v6590, 8
    %v6631 = vmul.u32.u64.compose %v6630, %v6629
    %v6632 = vextract.low.u32 %v6631
    %v6633 = vextract.high.u32 %v6631
    %v6634 = vmul.u32.u64.compose %v6630, %v6625
    %v6635 = vextract.low.u32 %v6634
    %v6636 = vextract.high.u32 %v6634
    %v6637 = vmul.u32 %v6630, %v6621
    %v6638 = vadd.s32 %v6633, %v6635
    %vm6639 = vc.u32 %v6633, %v6635
    %v6640 = vadd.s32 %v6636, 1
    %v6641 = vsel %vm6639, %v6640, %v6636
    %v6642 = vadd.s32 %v6637, %v6641
    %v6643 = vadd.s32 %v6642, 536870912
    %v6644 = vshrl.u32 %v6643, 30
    %v6645 = vshll.u32 %v6644, 30
    %v6646 = vsub.s32 %v6642, %v6645
    %vm6647 = vcmp.lt.s32.totalorder %v6646, 0
    %v6648 = vsub.s32 0, %v6646
    %v6649 = vsel %vm6647, %v6648, %v6646
    %v6650 = vclz %v6649
    %v6651 = vsub.s32 %v6650, 2
    %vm6652 = vcmp.gt.s32.totalorder 0, %v6651
    %v6653 = vsel %vm6652, 0, %v6651
    %v6654 = vsub.s32 32, %v6653
    %v6655 = vshll.u32 %v6646, %v6653
    %v6656 = vshrl.u32 %v6638, %v6654
    %v6657 = vor.u32 %v6655, %v6656
    %v6658 = vsub.s32 4294967266, %v6653
    %v6659 = vadd.s32 %v6658, 127
    %v6660 = vshll.u32 %v6659, 23
    %v6661 = vor.u32 4788187, %v6660
    %v6662 = vand.u32 2147483647, %v6661
    %v6664 = vcvt.s32.f32 %v6657
    %v6665 = vmul.f32 %v6664, %v6662
    %v6666 = vxor.u32 %v6665, 2147483648
    %v6667 = vsel %vm6584, %v6666, %v6665
    %v6668 = vsub.s32 4, %v6644
    %v6669 = vsel %vm6584, %v6668, %v6644
    %v6670 = vsel %vm6583, %v5953, %v6667
    %v6671 = vsel %vm6583, 0, %v6669
    %v6672 = vcosq.f32.pop %v6670
    %v6673 = vsinq.f32.pop %v6670
    %vm6674 = vweird.f32 %v5953
    %v6675 = vand.u32 %v6671, 3
    %vm6676 = vcmp.lt.s32.totalorder %v6675, 2
    %vm6677 = vcmp.eq.s32.totalorder %v6675, 0
    %v6678 = vxor.u32 %v6673, 2147483648
    %v6679 = vsel %vm6677, %v6672, %v6678
    %vm6680 = vcmp.eq.s32.totalorder %v6675, 2
    %v6681 = vxor.u32 %v6672, 2147483648
    %v6682 = vsel %vm6680, %v6681, %v6673
    %v6683 = vsel %vm6676, %v6679, %v6682
    %v6684 = vsel %vm6674, nan, %v6683
    %v6685 = vand.u32 2147483647, %v5954
    %vm6686 = vcmp.le.f32.partialorder %v6685, 0.7853982
    %vm6687 = vcmp.lt.s32.totalorder %v5954, 0
    %v6688 = vand.u32 %v5954, 2139095040
    %v6689 = vshrl.u32 %v6688, 23
    %v6690 = vsub.s32 %v6689, 127
    %v6691 = vand.u32 2147483647, %v5954
    %v6692 = vand.u32 %v6691, 8388607
    %v6693 = vor.u32 %v6692, 8388608
    %v6694 = vsub.s32 0, %v6693
    %v6695 = vadd.s32 %v6690, 1
    %vm6696 = vcmp.gt.s32.totalorder %v6695, 0
    %v6697 = vsel %vm6696, %v6695, 0
    %v6698 = vshrl.u32 %v6697, 5
    %v6699 = vand.u32 %v6697, 31
    %v6700 = vsub.s32 32, %v6699
    %v6701 = vshrl.u32 683565275, %v6700
    %v6702 = vshll.u32 683565275, %v6699
    %v6703 = vshrl.u32 2475754826, %v6700
    %v6704 = vor.u32 %v6702, %v6703
    %v6705 = vshll.u32 2475754826, %v6699
    %v6706 = vshrl.u32 2131351028, %v6700
    %v6707 = vor.u32 %v6705, %v6706
    %v6708 = vshll.u32 2131351028, %v6699
    %v6709 = vshrl.u32 2102212464, %v6700
    %v6710 = vor.u32 %v6708, %v6709
    %v6711 = vshll.u32 2102212464, %v6699
    %v6712 = vshrl.u32 920167782, %v6700
    %v6713 = vor.u32 %v6711, %v6712
    %v6714 = vshll.u32 920167782, %v6699
    %v6715 = vshrl.u32 1326507024, %v6700
    %v6716 = vor.u32 %v6714, %v6715
    %vm6717 = vcmp.lt.s32.totalorder %v6698, 1
    %vm6718 = vcmp.lt.s32.totalorder %v6698, 2
    %vm6719 = vcmp.lt.s32.totalorder %v6698, 3
    %vm6720 = vcmp.lt.s32.totalorder %v6698, 4
    %v6721 = vsel %vm6717, %v6701, %v6704
    %v6722 = vsel %vm6720, %v6710, 2102212464
    %v6723 = vsel %vm6719, %v6707, %v6722
    %v6724 = vsel %vm6718, %v6721, %v6723
    %v6725 = vsel %vm6717, %v6704, %v6707
    %v6726 = vsel %vm6720, %v6713, 920167782
    %v6727 = vsel %vm6719, %v6710, %v6726
    %v6728 = vsel %vm6718, %v6725, %v6727
    %v6729 = vsel %vm6717, %v6707, %v6710
    %v6730 = vsel %vm6720, %v6716, 1326507024
    %v6731 = vsel %vm6719, %v6713, %v6730
    %v6732 = vsel %vm6718, %v6729, %v6731
    %v6733 = vshll.u32 %v6693, 8
    %v6734 = vmul.u32.u64.compose %v6733, %v6732
    %v6735 = vextract.low.u32 %v6734
    %v6736 = vextract.high.u32 %v6734
    %v6737 = vmul.u32.u64.compose %v6733, %v6728
    %v6738 = vextract.low.u32 %v6737
    %v6739 = vextract.high.u32 %v6737
    %v6740 = vmul.u32 %v6733, %v6724
    %v6741 = vadd.s32 %v6736, %v6738
    %vm6742 = vc.u32 %v6736, %v6738
    %v6743 = vadd.s32 %v6739, 1
    %v6744 = vsel %vm6742, %v6743, %v6739
    %v6745 = vadd.s32 %v6740, %v6744
    %v6746 = vadd.s32 %v6745, 536870912
    %v6747 = vshrl.u32 %v6746, 30
    %v6748 = vshll.u32 %v6747, 30
    %v6749 = vsub.s32 %v6745, %v6748
    %vm6750 = vcmp.lt.s32.totalorder %v6749, 0
    %v6751 = vsub.s32 0, %v6749
    %v6752 = vsel %vm6750, %v6751, %v6749
    %v6753 = vclz %v6752
    %v6754 = vsub.s32 %v6753, 2
    %vm6755 = vcmp.gt.s32.totalorder 0, %v6754
    %v6756 = vsel %vm6755, 0, %v6754
    %v6757 = vsub.s32 32, %v6756
    %v6758 = vshll.u32 %v6749, %v6756
    %v6759 = vshrl.u32 %v6741, %v6757
    %v6760 = vor.u32 %v6758, %v6759
    %v6761 = vsub.s32 4294967266, %v6756
    %v6762 = vadd.s32 %v6761, 127
    %v6763 = vshll.u32 %v6762, 23
    %v6764 = vor.u32 4788187, %v6763
    %v6765 = vand.u32 2147483647, %v6764
    %v6767 = vcvt.s32.f32 %v6760
    %v6768 = vmul.f32 %v6767, %v6765
    %v6769 = vxor.u32 %v6768, 2147483648
    %v6770 = vsel %vm6687, %v6769, %v6768
    %v6771 = vsub.s32 4, %v6747
    %v6772 = vsel %vm6687, %v6771, %v6747
    %v6773 = vsel %vm6686, %v5954, %v6770
    %v6774 = vsel %vm6686, 0, %v6772
    %v6775 = vcosq.f32.pop %v6773
    %v6776 = vsinq.f32.pop %v6773
    %vm6777 = vweird.f32 %v5954
    %v6778 = vand.u32 %v6774, 3
    %vm6779 = vcmp.lt.s32.totalorder %v6778, 2
    %vm6780 = vcmp.eq.s32.totalorder %v6778, 0
    %v6781 = vxor.u32 %v6776, 2147483648
    %v6782 = vsel %vm6780, %v6775, %v6781
    %vm6783 = vcmp.eq.s32.totalorder %v6778, 2
    %v6784 = vxor.u32 %v6775, 2147483648
    %v6785 = vsel %vm6783, %v6784, %v6776
    %v6786 = vsel %vm6779, %v6782, %v6785
    %v6787 = vsel %vm6777, nan, %v6786
    %s6788 = scalar_lea.vmem [#allocation5], 512
    %6789 = vst [vmem:[%s6788] sm:$0xff] %v6478
    %6790 = vst [vmem:[%s6788 + $0x8] sm:$0xff] %v6581
    %6791 = vst [vmem:[%s6788 + $0x10] sm:$0xff] %v6684
    %6792 = vst [vmem:[%s6788 + $0x18] sm:$0xff] %v6787
    %v6793 = vld [vmem:[#allocation2] sm:$0xff]
    %v6794 = vld [vmem:[#allocation2 + $0x8] sm:$0xff]
    %v6795 = vld [vmem:[#allocation2 + $0x10] sm:$0xff]
    %v6796 = vld [vmem:[#allocation2 + $0x18] sm:$0xff]
    %v6797 = vmul.f32 %v6793, 256.0
    %v6798 = vmul.f32 %v6794, 256.0
    %v6799 = vmul.f32 %v6795, 256.0
    %v6800 = vmul.f32 %v6796, 256.0
    %v6801 = vand.u32 2147483647, %v6797
    %vm6802 = vcmp.le.f32.partialorder %v6801, 0.7853982
    %vm6803 = vcmp.lt.s32.totalorder %v6797, 0
    %v6804 = vand.u32 %v6797, 2139095040
    %v6805 = vshrl.u32 %v6804, 23
    %v6806 = vsub.s32 %v6805, 127
    %v6807 = vand.u32 2147483647, %v6797
    %v6808 = vand.u32 %v6807, 8388607
    %v6809 = vor.u32 %v6808, 8388608
    %v6810 = vsub.s32 0, %v6809
    %v6811 = vadd.s32 %v6806, 1
    %vm6812 = vcmp.gt.s32.totalorder %v6811, 0
    %v6813 = vsel %vm6812, %v6811, 0
    %v6814 = vshrl.u32 %v6813, 5
    %v6815 = vand.u32 %v6813, 31
    %v6816 = vsub.s32 32, %v6815
    %v6817 = vshrl.u32 683565275, %v6816
    %v6818 = vshll.u32 683565275, %v6815
    %v6819 = vshrl.u32 2475754826, %v6816
    %v6820 = vor.u32 %v6818, %v6819
    %v6821 = vshll.u32 2475754826, %v6815
    %v6822 = vshrl.u32 2131351028, %v6816
    %v6823 = vor.u32 %v6821, %v6822
    %v6824 = vshll.u32 2131351028, %v6815
    %v6825 = vshrl.u32 2102212464, %v6816
    %v6826 = vor.u32 %v6824, %v6825
    %v6827 = vshll.u32 2102212464, %v6815
    %v6828 = vshrl.u32 920167782, %v6816
    %v6829 = vor.u32 %v6827, %v6828
    %v6830 = vshll.u32 920167782, %v6815
    %v6831 = vshrl.u32 1326507024, %v6816
    %v6832 = vor.u32 %v6830, %v6831
    %vm6833 = vcmp.lt.s32.totalorder %v6814, 1
    %vm6834 = vcmp.lt.s32.totalorder %v6814, 2
    %vm6835 = vcmp.lt.s32.totalorder %v6814, 3
    %vm6836 = vcmp.lt.s32.totalorder %v6814, 4
    %v6837 = vsel %vm6833, %v6817, %v6820
    %v6838 = vsel %vm6836, %v6826, 2102212464
    %v6839 = vsel %vm6835, %v6823, %v6838
    %v6840 = vsel %vm6834, %v6837, %v6839
    %v6841 = vsel %vm6833, %v6820, %v6823
    %v6842 = vsel %vm6836, %v6829, 920167782
    %v6843 = vsel %vm6835, %v6826, %v6842
    %v6844 = vsel %vm6834, %v6841, %v6843
    %v6845 = vsel %vm6833, %v6823, %v6826
    %v6846 = vsel %vm6836, %v6832, 1326507024
    %v6847 = vsel %vm6835, %v6829, %v6846
    %v6848 = vsel %vm6834, %v6845, %v6847
    %v6849 = vshll.u32 %v6809, 8
    %v6850 = vmul.u32.u64.compose %v6849, %v6848
    %v6851 = vextract.low.u32 %v6850
    %v6852 = vextract.high.u32 %v6850
    %v6853 = vmul.u32.u64.compose %v6849, %v6844
    %v6854 = vextract.low.u32 %v6853
    %v6855 = vextract.high.u32 %v6853
    %v6856 = vmul.u32 %v6849, %v6840
    %v6857 = vadd.s32 %v6852, %v6854
    %vm6858 = vc.u32 %v6852, %v6854
    %v6859 = vadd.s32 %v6855, 1
    %v6860 = vsel %vm6858, %v6859, %v6855
    %v6861 = vadd.s32 %v6856, %v6860
    %v6862 = vadd.s32 %v6861, 536870912
    %v6863 = vshrl.u32 %v6862, 30
    %v6864 = vshll.u32 %v6863, 30
    %v6865 = vsub.s32 %v6861, %v6864
    %vm6866 = vcmp.lt.s32.totalorder %v6865, 0
    %v6867 = vsub.s32 0, %v6865
    %v6868 = vsel %vm6866, %v6867, %v6865
    %v6869 = vclz %v6868
    %v6870 = vsub.s32 %v6869, 2
    %vm6871 = vcmp.gt.s32.totalorder 0, %v6870
    %v6872 = vsel %vm6871, 0, %v6870
    %v6873 = vsub.s32 32, %v6872
    %v6874 = vshll.u32 %v6865, %v6872
    %v6875 = vshrl.u32 %v6857, %v6873
    %v6876 = vor.u32 %v6874, %v6875
    %v6877 = vsub.s32 4294967266, %v6872
    %v6878 = vadd.s32 %v6877, 127
    %v6879 = vshll.u32 %v6878, 23
    %v6880 = vor.u32 4788187, %v6879
    %v6881 = vand.u32 2147483647, %v6880
    %v6883 = vcvt.s32.f32 %v6876
    %v6884 = vmul.f32 %v6883, %v6881
    %v6885 = vxor.u32 %v6884, 2147483648
    %v6886 = vsel %vm6803, %v6885, %v6884
    %v6887 = vsub.s32 4, %v6863
    %v6888 = vsel %vm6803, %v6887, %v6863
    %v6889 = vsel %vm6802, %v6797, %v6886
    %v6890 = vsel %vm6802, 0, %v6888
    %v6891 = vcosq.f32.pop %v6889
    %v6892 = vsinq.f32.pop %v6889
    %vm6893 = vweird.f32 %v6797
    %v6894 = vadd.s32 %v6890, 3
    %v6895 = vand.u32 %v6894, 3
    %vm6896 = vcmp.lt.s32.totalorder %v6895, 2
    %vm6897 = vcmp.eq.s32.totalorder %v6895, 0
    %v6898 = vxor.u32 %v6892, 2147483648
    %v6899 = vsel %vm6897, %v6891, %v6898
    %vm6900 = vcmp.eq.s32.totalorder %v6895, 2
    %v6901 = vxor.u32 %v6891, 2147483648
    %v6902 = vsel %vm6900, %v6901, %v6892
    %v6903 = vsel %vm6896, %v6899, %v6902
    %v6904 = vsel %vm6893, nan, %v6903
    %v6905 = vand.u32 2147483647, %v6798
    %vm6906 = vcmp.le.f32.partialorder %v6905, 0.7853982
    %vm6907 = vcmp.lt.s32.totalorder %v6798, 0
    %v6908 = vand.u32 %v6798, 2139095040
    %v6909 = vshrl.u32 %v6908, 23
    %v6910 = vsub.s32 %v6909, 127
    %v6911 = vand.u32 2147483647, %v6798
    %v6912 = vand.u32 %v6911, 8388607
    %v6913 = vor.u32 %v6912, 8388608
    %v6914 = vsub.s32 0, %v6913
    %v6915 = vadd.s32 %v6910, 1
    %vm6916 = vcmp.gt.s32.totalorder %v6915, 0
    %v6917 = vsel %vm6916, %v6915, 0
    %v6918 = vshrl.u32 %v6917, 5
    %v6919 = vand.u32 %v6917, 31
    %v6920 = vsub.s32 32, %v6919
    %v6921 = vshrl.u32 683565275, %v6920
    %v6922 = vshll.u32 683565275, %v6919
    %v6923 = vshrl.u32 2475754826, %v6920
    %v6924 = vor.u32 %v6922, %v6923
    %v6925 = vshll.u32 2475754826, %v6919
    %v6926 = vshrl.u32 2131351028, %v6920
    %v6927 = vor.u32 %v6925, %v6926
    %v6928 = vshll.u32 2131351028, %v6919
    %v6929 = vshrl.u32 2102212464, %v6920
    %v6930 = vor.u32 %v6928, %v6929
    %v6931 = vshll.u32 2102212464, %v6919
    %v6932 = vshrl.u32 920167782, %v6920
    %v6933 = vor.u32 %v6931, %v6932
    %v6934 = vshll.u32 920167782, %v6919
    %v6935 = vshrl.u32 1326507024, %v6920
    %v6936 = vor.u32 %v6934, %v6935
    %vm6937 = vcmp.lt.s32.totalorder %v6918, 1
    %vm6938 = vcmp.lt.s32.totalorder %v6918, 2
    %vm6939 = vcmp.lt.s32.totalorder %v6918, 3
    %vm6940 = vcmp.lt.s32.totalorder %v6918, 4
    %v6941 = vsel %vm6937, %v6921, %v6924
    %v6942 = vsel %vm6940, %v6930, 2102212464
    %v6943 = vsel %vm6939, %v6927, %v6942
    %v6944 = vsel %vm6938, %v6941, %v6943
    %v6945 = vsel %vm6937, %v6924, %v6927
    %v6946 = vsel %vm6940, %v6933, 920167782
    %v6947 = vsel %vm6939, %v6930, %v6946
    %v6948 = vsel %vm6938, %v6945, %v6947
    %v6949 = vsel %vm6937, %v6927, %v6930
    %v6950 = vsel %vm6940, %v6936, 1326507024
    %v6951 = vsel %vm6939, %v6933, %v6950
    %v6952 = vsel %vm6938, %v6949, %v6951
    %v6953 = vshll.u32 %v6913, 8
    %v6954 = vmul.u32.u64.compose %v6953, %v6952
    %v6955 = vextract.low.u32 %v6954
    %v6956 = vextract.high.u32 %v6954
    %v6957 = vmul.u32.u64.compose %v6953, %v6948
    %v6958 = vextract.low.u32 %v6957
    %v6959 = vextract.high.u32 %v6957
    %v6960 = vmul.u32 %v6953, %v6944
    %v6961 = vadd.s32 %v6956, %v6958
    %vm6962 = vc.u32 %v6956, %v6958
    %v6963 = vadd.s32 %v6959, 1
    %v6964 = vsel %vm6962, %v6963, %v6959
    %v6965 = vadd.s32 %v6960, %v6964
    %v6966 = vadd.s32 %v6965, 536870912
    %v6967 = vshrl.u32 %v6966, 30
    %v6968 = vshll.u32 %v6967, 30
    %v6969 = vsub.s32 %v6965, %v6968
    %vm6970 = vcmp.lt.s32.totalorder %v6969, 0
    %v6971 = vsub.s32 0, %v6969
    %v6972 = vsel %vm6970, %v6971, %v6969
    %v6973 = vclz %v6972
    %v6974 = vsub.s32 %v6973, 2
    %vm6975 = vcmp.gt.s32.totalorder 0, %v6974
    %v6976 = vsel %vm6975, 0, %v6974
    %v6977 = vsub.s32 32, %v6976
    %v6978 = vshll.u32 %v6969, %v6976
    %v6979 = vshrl.u32 %v6961, %v6977
    %v6980 = vor.u32 %v6978, %v6979
    %v6981 = vsub.s32 4294967266, %v6976
    %v6982 = vadd.s32 %v6981, 127
    %v6983 = vshll.u32 %v6982, 23
    %v6984 = vor.u32 4788187, %v6983
    %v6985 = vand.u32 2147483647, %v6984
    %v6987 = vcvt.s32.f32 %v6980
    %v6988 = vmul.f32 %v6987, %v6985
    %v6989 = vxor.u32 %v6988, 2147483648
    %v6990 = vsel %vm6907, %v6989, %v6988
    %v6991 = vsub.s32 4, %v6967
    %v6992 = vsel %vm6907, %v6991, %v6967
    %v6993 = vsel %vm6906, %v6798, %v6990
    %v6994 = vsel %vm6906, 0, %v6992
    %v6995 = vcosq.f32.pop %v6993
    %v6996 = vsinq.f32.pop %v6993
    %vm6997 = vweird.f32 %v6798
    %v6998 = vadd.s32 %v6994, 3
    %v6999 = vand.u32 %v6998, 3
    %vm7000 = vcmp.lt.s32.totalorder %v6999, 2
    %vm7001 = vcmp.eq.s32.totalorder %v6999, 0
    %v7002 = vxor.u32 %v6996, 2147483648
    %v7003 = vsel %vm7001, %v6995, %v7002
    %vm7004 = vcmp.eq.s32.totalorder %v6999, 2
    %v7005 = vxor.u32 %v6995, 2147483648
    %v7006 = vsel %vm7004, %v7005, %v6996
    %v7007 = vsel %vm7000, %v7003, %v7006
    %v7008 = vsel %vm6997, nan, %v7007
    %v7009 = vand.u32 2147483647, %v6799
    %vm7010 = vcmp.le.f32.partialorder %v7009, 0.7853982
    %vm7011 = vcmp.lt.s32.totalorder %v6799, 0
    %v7012 = vand.u32 %v6799, 2139095040
    %v7013 = vshrl.u32 %v7012, 23
    %v7014 = vsub.s32 %v7013, 127
    %v7015 = vand.u32 2147483647, %v6799
    %v7016 = vand.u32 %v7015, 8388607
    %v7017 = vor.u32 %v7016, 8388608
    %v7018 = vsub.s32 0, %v7017
    %v7019 = vadd.s32 %v7014, 1
    %vm7020 = vcmp.gt.s32.totalorder %v7019, 0
    %v7021 = vsel %vm7020, %v7019, 0
    %v7022 = vshrl.u32 %v7021, 5
    %v7023 = vand.u32 %v7021, 31
    %v7024 = vsub.s32 32, %v7023
    %v7025 = vshrl.u32 683565275, %v7024
    %v7026 = vshll.u32 683565275, %v7023
    %v7027 = vshrl.u32 2475754826, %v7024
    %v7028 = vor.u32 %v7026, %v7027
    %v7029 = vshll.u32 2475754826, %v7023
    %v7030 = vshrl.u32 2131351028, %v7024
    %v7031 = vor.u32 %v7029, %v7030
    %v7032 = vshll.u32 2131351028, %v7023
    %v7033 = vshrl.u32 2102212464, %v7024
    %v7034 = vor.u32 %v7032, %v7033
    %v7035 = vshll.u32 2102212464, %v7023
    %v7036 = vshrl.u32 920167782, %v7024
    %v7037 = vor.u32 %v7035, %v7036
    %v7038 = vshll.u32 920167782, %v7023
    %v7039 = vshrl.u32 1326507024, %v7024
    %v7040 = vor.u32 %v7038, %v7039
    %vm7041 = vcmp.lt.s32.totalorder %v7022, 1
    %vm7042 = vcmp.lt.s32.totalorder %v7022, 2
    %vm7043 = vcmp.lt.s32.totalorder %v7022, 3
    %vm7044 = vcmp.lt.s32.totalorder %v7022, 4
    %v7045 = vsel %vm7041, %v7025, %v7028
    %v7046 = vsel %vm7044, %v7034, 2102212464
    %v7047 = vsel %vm7043, %v7031, %v7046
    %v7048 = vsel %vm7042, %v7045, %v7047
    %v7049 = vsel %vm7041, %v7028, %v7031
    %v7050 = vsel %vm7044, %v7037, 920167782
    %v7051 = vsel %vm7043, %v7034, %v7050
    %v7052 = vsel %vm7042, %v7049, %v7051
    %v7053 = vsel %vm7041, %v7031, %v7034
    %v7054 = vsel %vm7044, %v7040, 1326507024
    %v7055 = vsel %vm7043, %v7037, %v7054
    %v7056 = vsel %vm7042, %v7053, %v7055
    %v7057 = vshll.u32 %v7017, 8
    %v7058 = vmul.u32.u64.compose %v7057, %v7056
    %v7059 = vextract.low.u32 %v7058
    %v7060 = vextract.high.u32 %v7058
    %v7061 = vmul.u32.u64.compose %v7057, %v7052
    %v7062 = vextract.low.u32 %v7061
    %v7063 = vextract.high.u32 %v7061
    %v7064 = vmul.u32 %v7057, %v7048
    %v7065 = vadd.s32 %v7060, %v7062
    %vm7066 = vc.u32 %v7060, %v7062
    %v7067 = vadd.s32 %v7063, 1
    %v7068 = vsel %vm7066, %v7067, %v7063
    %v7069 = vadd.s32 %v7064, %v7068
    %v7070 = vadd.s32 %v7069, 536870912
    %v7071 = vshrl.u32 %v7070, 30
    %v7072 = vshll.u32 %v7071, 30
    %v7073 = vsub.s32 %v7069, %v7072
    %vm7074 = vcmp.lt.s32.totalorder %v7073, 0
    %v7075 = vsub.s32 0, %v7073
    %v7076 = vsel %vm7074, %v7075, %v7073
    %v7077 = vclz %v7076
    %v7078 = vsub.s32 %v7077, 2
    %vm7079 = vcmp.gt.s32.totalorder 0, %v7078
    %v7080 = vsel %vm7079, 0, %v7078
    %v7081 = vsub.s32 32, %v7080
    %v7082 = vshll.u32 %v7073, %v7080
    %v7083 = vshrl.u32 %v7065, %v7081
    %v7084 = vor.u32 %v7082, %v7083
    %v7085 = vsub.s32 4294967266, %v7080
    %v7086 = vadd.s32 %v7085, 127
    %v7087 = vshll.u32 %v7086, 23
    %v7088 = vor.u32 4788187, %v7087
    %v7089 = vand.u32 2147483647, %v7088
    %v7091 = vcvt.s32.f32 %v7084
    %v7092 = vmul.f32 %v7091, %v7089
    %v7093 = vxor.u32 %v7092, 2147483648
    %v7094 = vsel %vm7011, %v7093, %v7092
    %v7095 = vsub.s32 4, %v7071
    %v7096 = vsel %vm7011, %v7095, %v7071
    %v7097 = vsel %vm7010, %v6799, %v7094
    %v7098 = vsel %vm7010, 0, %v7096
    %v7099 = vcosq.f32.pop %v7097
    %v7100 = vsinq.f32.pop %v7097
    %vm7101 = vweird.f32 %v6799
    %v7102 = vadd.s32 %v7098, 3
    %v7103 = vand.u32 %v7102, 3
    %vm7104 = vcmp.lt.s32.totalorder %v7103, 2
    %vm7105 = vcmp.eq.s32.totalorder %v7103, 0
    %v7106 = vxor.u32 %v7100, 2147483648
    %v7107 = vsel %vm7105, %v7099, %v7106
    %vm7108 = vcmp.eq.s32.totalorder %v7103, 2
    %v7109 = vxor.u32 %v7099, 2147483648
    %v7110 = vsel %vm7108, %v7109, %v7100
    %v7111 = vsel %vm7104, %v7107, %v7110
    %v7112 = vsel %vm7101, nan, %v7111
    %v7113 = vand.u32 2147483647, %v6800
    %vm7114 = vcmp.le.f32.partialorder %v7113, 0.7853982
    %vm7115 = vcmp.lt.s32.totalorder %v6800, 0
    %v7116 = vand.u32 %v6800, 2139095040
    %v7117 = vshrl.u32 %v7116, 23
    %v7118 = vsub.s32 %v7117, 127
    %v7119 = vand.u32 2147483647, %v6800
    %v7120 = vand.u32 %v7119, 8388607
    %v7121 = vor.u32 %v7120, 8388608
    %v7122 = vsub.s32 0, %v7121
    %v7123 = vadd.s32 %v7118, 1
    %vm7124 = vcmp.gt.s32.totalorder %v7123, 0
    %v7125 = vsel %vm7124, %v7123, 0
    %v7126 = vshrl.u32 %v7125, 5
    %v7127 = vand.u32 %v7125, 31
    %v7128 = vsub.s32 32, %v7127
    %v7129 = vshrl.u32 683565275, %v7128
    %v7130 = vshll.u32 683565275, %v7127
    %v7131 = vshrl.u32 2475754826, %v7128
    %v7132 = vor.u32 %v7130, %v7131
    %v7133 = vshll.u32 2475754826, %v7127
    %v7134 = vshrl.u32 2131351028, %v7128
    %v7135 = vor.u32 %v7133, %v7134
    %v7136 = vshll.u32 2131351028, %v7127
    %v7137 = vshrl.u32 2102212464, %v7128
    %v7138 = vor.u32 %v7136, %v7137
    %v7139 = vshll.u32 2102212464, %v7127
    %v7140 = vshrl.u32 920167782, %v7128
    %v7141 = vor.u32 %v7139, %v7140
    %v7142 = vshll.u32 920167782, %v7127
    %v7143 = vshrl.u32 1326507024, %v7128
    %v7144 = vor.u32 %v7142, %v7143
    %vm7145 = vcmp.lt.s32.totalorder %v7126, 1
    %vm7146 = vcmp.lt.s32.totalorder %v7126, 2
    %vm7147 = vcmp.lt.s32.totalorder %v7126, 3
    %vm7148 = vcmp.lt.s32.totalorder %v7126, 4
    %v7149 = vsel %vm7145, %v7129, %v7132
    %v7150 = vsel %vm7148, %v7138, 2102212464
    %v7151 = vsel %vm7147, %v7135, %v7150
    %v7152 = vsel %vm7146, %v7149, %v7151
    %v7153 = vsel %vm7145, %v7132, %v7135
    %v7154 = vsel %vm7148, %v7141, 920167782
    %v7155 = vsel %vm7147, %v7138, %v7154
    %v7156 = vsel %vm7146, %v7153, %v7155
    %v7157 = vsel %vm7145, %v7135, %v7138
    %v7158 = vsel %vm7148, %v7144, 1326507024
    %v7159 = vsel %vm7147, %v7141, %v7158
    %v7160 = vsel %vm7146, %v7157, %v7159
    %v7161 = vshll.u32 %v7121, 8
    %v7162 = vmul.u32.u64.compose %v7161, %v7160
    %v7163 = vextract.low.u32 %v7162
    %v7164 = vextract.high.u32 %v7162
    %v7165 = vmul.u32.u64.compose %v7161, %v7156
    %v7166 = vextract.low.u32 %v7165
    %v7167 = vextract.high.u32 %v7165
    %v7168 = vmul.u32 %v7161, %v7152
    %v7169 = vadd.s32 %v7164, %v7166
    %vm7170 = vc.u32 %v7164, %v7166
    %v7171 = vadd.s32 %v7167, 1
    %v7172 = vsel %vm7170, %v7171, %v7167
    %v7173 = vadd.s32 %v7168, %v7172
    %v7174 = vadd.s32 %v7173, 536870912
    %v7175 = vshrl.u32 %v7174, 30
    %v7176 = vshll.u32 %v7175, 30
    %v7177 = vsub.s32 %v7173, %v7176
    %vm7178 = vcmp.lt.s32.totalorder %v7177, 0
    %v7179 = vsub.s32 0, %v7177
    %v7180 = vsel %vm7178, %v7179, %v7177
    %v7181 = vclz %v7180
    %v7182 = vsub.s32 %v7181, 2
    %vm7183 = vcmp.gt.s32.totalorder 0, %v7182
    %v7184 = vsel %vm7183, 0, %v7182
    %v7185 = vsub.s32 32, %v7184
    %v7186 = vshll.u32 %v7177, %v7184
    %v7187 = vshrl.u32 %v7169, %v7185
    %v7188 = vor.u32 %v7186, %v7187
    %v7189 = vsub.s32 4294967266, %v7184
    %v7190 = vadd.s32 %v7189, 127
    %v7191 = vshll.u32 %v7190, 23
    %v7192 = vor.u32 4788187, %v7191
    %v7193 = vand.u32 2147483647, %v7192
    %v7195 = vcvt.s32.f32 %v7188
    %v7196 = vmul.f32 %v7195, %v7193
    %v7197 = vxor.u32 %v7196, 2147483648
    %v7198 = vsel %vm7115, %v7197, %v7196
    %v7199 = vsub.s32 4, %v7175
    %v7200 = vsel %vm7115, %v7199, %v7175
    %v7201 = vsel %vm7114, %v6800, %v7198
    %v7202 = vsel %vm7114, 0, %v7200
    %v7203 = vcosq.f32.pop %v7201
    %v7204 = vsinq.f32.pop %v7201
    %vm7205 = vweird.f32 %v6800
    %v7206 = vadd.s32 %v7202, 3
    %v7207 = vand.u32 %v7206, 3
    %vm7208 = vcmp.lt.s32.totalorder %v7207, 2
    %vm7209 = vcmp.eq.s32.totalorder %v7207, 0
    %v7210 = vxor.u32 %v7204, 2147483648
    %v7211 = vsel %vm7209, %v7203, %v7210
    %vm7212 = vcmp.eq.s32.totalorder %v7207, 2
    %v7213 = vxor.u32 %v7203, 2147483648
    %v7214 = vsel %vm7212, %v7213, %v7204
    %v7215 = vsel %vm7208, %v7211, %v7214
    %v7216 = vsel %vm7205, nan, %v7215
    %s7217 = scalar_lea.vmem [#allocation5], 544
    %7218 = vst [vmem:[%s7217] sm:$0xff] %v6904
    %7219 = vst [vmem:[%s7217 + $0x8] sm:$0xff] %v7008
    %7220 = vst [vmem:[%s7217 + $0x10] sm:$0xff] %v7112
    %7221 = vst [vmem:[%s7217 + $0x18] sm:$0xff] %v7216
    %v7222 = vand.u32 2147483647, %v6797
    %vm7223 = vcmp.le.f32.partialorder %v7222, 0.7853982
    %vm7224 = vcmp.lt.s32.totalorder %v6797, 0
    %v7225 = vand.u32 %v6797, 2139095040
    %v7226 = vshrl.u32 %v7225, 23
    %v7227 = vsub.s32 %v7226, 127
    %v7228 = vand.u32 2147483647, %v6797
    %v7229 = vand.u32 %v7228, 8388607
    %v7230 = vor.u32 %v7229, 8388608
    %v7231 = vsub.s32 0, %v7230
    %v7232 = vadd.s32 %v7227, 1
    %vm7233 = vcmp.gt.s32.totalorder %v7232, 0
    %v7234 = vsel %vm7233, %v7232, 0
    %v7235 = vshrl.u32 %v7234, 5
    %v7236 = vand.u32 %v7234, 31
    %v7237 = vsub.s32 32, %v7236
    %v7238 = vshrl.u32 683565275, %v7237
    %v7239 = vshll.u32 683565275, %v7236
    %v7240 = vshrl.u32 2475754826, %v7237
    %v7241 = vor.u32 %v7239, %v7240
    %v7242 = vshll.u32 2475754826, %v7236
    %v7243 = vshrl.u32 2131351028, %v7237
    %v7244 = vor.u32 %v7242, %v7243
    %v7245 = vshll.u32 2131351028, %v7236
    %v7246 = vshrl.u32 2102212464, %v7237
    %v7247 = vor.u32 %v7245, %v7246
    %v7248 = vshll.u32 2102212464, %v7236
    %v7249 = vshrl.u32 920167782, %v7237
    %v7250 = vor.u32 %v7248, %v7249
    %v7251 = vshll.u32 920167782, %v7236
    %v7252 = vshrl.u32 1326507024, %v7237
    %v7253 = vor.u32 %v7251, %v7252
    %vm7254 = vcmp.lt.s32.totalorder %v7235, 1
    %vm7255 = vcmp.lt.s32.totalorder %v7235, 2
    %vm7256 = vcmp.lt.s32.totalorder %v7235, 3
    %vm7257 = vcmp.lt.s32.totalorder %v7235, 4
    %v7258 = vsel %vm7254, %v7238, %v7241
    %v7259 = vsel %vm7257, %v7247, 2102212464
    %v7260 = vsel %vm7256, %v7244, %v7259
    %v7261 = vsel %vm7255, %v7258, %v7260
    %v7262 = vsel %vm7254, %v7241, %v7244
    %v7263 = vsel %vm7257, %v7250, 920167782
    %v7264 = vsel %vm7256, %v7247, %v7263
    %v7265 = vsel %vm7255, %v7262, %v7264
    %v7266 = vsel %vm7254, %v7244, %v7247
    %v7267 = vsel %vm7257, %v7253, 1326507024
    %v7268 = vsel %vm7256, %v7250, %v7267
    %v7269 = vsel %vm7255, %v7266, %v7268
    %v7270 = vshll.u32 %v7230, 8
    %v7271 = vmul.u32.u64.compose %v7270, %v7269
    %v7272 = vextract.low.u32 %v7271
    %v7273 = vextract.high.u32 %v7271
    %v7274 = vmul.u32.u64.compose %v7270, %v7265
    %v7275 = vextract.low.u32 %v7274
    %v7276 = vextract.high.u32 %v7274
    %v7277 = vmul.u32 %v7270, %v7261
    %v7278 = vadd.s32 %v7273, %v7275
    %vm7279 = vc.u32 %v7273, %v7275
    %v7280 = vadd.s32 %v7276, 1
    %v7281 = vsel %vm7279, %v7280, %v7276
    %v7282 = vadd.s32 %v7277, %v7281
    %v7283 = vadd.s32 %v7282, 536870912
    %v7284 = vshrl.u32 %v7283, 30
    %v7285 = vshll.u32 %v7284, 30
    %v7286 = vsub.s32 %v7282, %v7285
    %vm7287 = vcmp.lt.s32.totalorder %v7286, 0
    %v7288 = vsub.s32 0, %v7286
    %v7289 = vsel %vm7287, %v7288, %v7286
    %v7290 = vclz %v7289
    %v7291 = vsub.s32 %v7290, 2
    %vm7292 = vcmp.gt.s32.totalorder 0, %v7291
    %v7293 = vsel %vm7292, 0, %v7291
    %v7294 = vsub.s32 32, %v7293
    %v7295 = vshll.u32 %v7286, %v7293
    %v7296 = vshrl.u32 %v7278, %v7294
    %v7297 = vor.u32 %v7295, %v7296
    %v7298 = vsub.s32 4294967266, %v7293
    %v7299 = vadd.s32 %v7298, 127
    %v7300 = vshll.u32 %v7299, 23
    %v7301 = vor.u32 4788187, %v7300
    %v7302 = vand.u32 2147483647, %v7301
    %v7304 = vcvt.s32.f32 %v7297
    %v7305 = vmul.f32 %v7304, %v7302
    %v7306 = vxor.u32 %v7305, 2147483648
    %v7307 = vsel %vm7224, %v7306, %v7305
    %v7308 = vsub.s32 4, %v7284
    %v7309 = vsel %vm7224, %v7308, %v7284
    %v7310 = vsel %vm7223, %v6797, %v7307
    %v7311 = vsel %vm7223, 0, %v7309
    %v7312 = vcosq.f32.pop %v7310
    %v7313 = vsinq.f32.pop %v7310
    %vm7314 = vweird.f32 %v6797
    %v7315 = vand.u32 %v7311, 3
    %vm7316 = vcmp.lt.s32.totalorder %v7315, 2
    %vm7317 = vcmp.eq.s32.totalorder %v7315, 0
    %v7318 = vxor.u32 %v7313, 2147483648
    %v7319 = vsel %vm7317, %v7312, %v7318
    %vm7320 = vcmp.eq.s32.totalorder %v7315, 2
    %v7321 = vxor.u32 %v7312, 2147483648
    %v7322 = vsel %vm7320, %v7321, %v7313
    %v7323 = vsel %vm7316, %v7319, %v7322
    %v7324 = vsel %vm7314, nan, %v7323
    %v7325 = vand.u32 2147483647, %v6798
    %vm7326 = vcmp.le.f32.partialorder %v7325, 0.7853982
    %vm7327 = vcmp.lt.s32.totalorder %v6798, 0
    %v7328 = vand.u32 %v6798, 2139095040
    %v7329 = vshrl.u32 %v7328, 23
    %v7330 = vsub.s32 %v7329, 127
    %v7331 = vand.u32 2147483647, %v6798
    %v7332 = vand.u32 %v7331, 8388607
    %v7333 = vor.u32 %v7332, 8388608
    %v7334 = vsub.s32 0, %v7333
    %v7335 = vadd.s32 %v7330, 1
    %vm7336 = vcmp.gt.s32.totalorder %v7335, 0
    %v7337 = vsel %vm7336, %v7335, 0
    %v7338 = vshrl.u32 %v7337, 5
    %v7339 = vand.u32 %v7337, 31
    %v7340 = vsub.s32 32, %v7339
    %v7341 = vshrl.u32 683565275, %v7340
    %v7342 = vshll.u32 683565275, %v7339
    %v7343 = vshrl.u32 2475754826, %v7340
    %v7344 = vor.u32 %v7342, %v7343
    %v7345 = vshll.u32 2475754826, %v7339
    %v7346 = vshrl.u32 2131351028, %v7340
    %v7347 = vor.u32 %v7345, %v7346
    %v7348 = vshll.u32 2131351028, %v7339
    %v7349 = vshrl.u32 2102212464, %v7340
    %v7350 = vor.u32 %v7348, %v7349
    %v7351 = vshll.u32 2102212464, %v7339
    %v7352 = vshrl.u32 920167782, %v7340
    %v7353 = vor.u32 %v7351, %v7352
    %v7354 = vshll.u32 920167782, %v7339
    %v7355 = vshrl.u32 1326507024, %v7340
    %v7356 = vor.u32 %v7354, %v7355
    %vm7357 = vcmp.lt.s32.totalorder %v7338, 1
    %vm7358 = vcmp.lt.s32.totalorder %v7338, 2
    %vm7359 = vcmp.lt.s32.totalorder %v7338, 3
    %vm7360 = vcmp.lt.s32.totalorder %v7338, 4
    %v7361 = vsel %vm7357, %v7341, %v7344
    %v7362 = vsel %vm7360, %v7350, 2102212464
    %v7363 = vsel %vm7359, %v7347, %v7362
    %v7364 = vsel %vm7358, %v7361, %v7363
    %v7365 = vsel %vm7357, %v7344, %v7347
    %v7366 = vsel %vm7360, %v7353, 920167782
    %v7367 = vsel %vm7359, %v7350, %v7366
    %v7368 = vsel %vm7358, %v7365, %v7367
    %v7369 = vsel %vm7357, %v7347, %v7350
    %v7370 = vsel %vm7360, %v7356, 1326507024
    %v7371 = vsel %vm7359, %v7353, %v7370
    %v7372 = vsel %vm7358, %v7369, %v7371
    %v7373 = vshll.u32 %v7333, 8
    %v7374 = vmul.u32.u64.compose %v7373, %v7372
    %v7375 = vextract.low.u32 %v7374
    %v7376 = vextract.high.u32 %v7374
    %v7377 = vmul.u32.u64.compose %v7373, %v7368
    %v7378 = vextract.low.u32 %v7377
    %v7379 = vextract.high.u32 %v7377
    %v7380 = vmul.u32 %v7373, %v7364
    %v7381 = vadd.s32 %v7376, %v7378
    %vm7382 = vc.u32 %v7376, %v7378
    %v7383 = vadd.s32 %v7379, 1
    %v7384 = vsel %vm7382, %v7383, %v7379
    %v7385 = vadd.s32 %v7380, %v7384
    %v7386 = vadd.s32 %v7385, 536870912
    %v7387 = vshrl.u32 %v7386, 30
    %v7388 = vshll.u32 %v7387, 30
    %v7389 = vsub.s32 %v7385, %v7388
    %vm7390 = vcmp.lt.s32.totalorder %v7389, 0
    %v7391 = vsub.s32 0, %v7389
    %v7392 = vsel %vm7390, %v7391, %v7389
    %v7393 = vclz %v7392
    %v7394 = vsub.s32 %v7393, 2
    %vm7395 = vcmp.gt.s32.totalorder 0, %v7394
    %v7396 = vsel %vm7395, 0, %v7394
    %v7397 = vsub.s32 32, %v7396
    %v7398 = vshll.u32 %v7389, %v7396
    %v7399 = vshrl.u32 %v7381, %v7397
    %v7400 = vor.u32 %v7398, %v7399
    %v7401 = vsub.s32 4294967266, %v7396
    %v7402 = vadd.s32 %v7401, 127
    %v7403 = vshll.u32 %v7402, 23
    %v7404 = vor.u32 4788187, %v7403
    %v7405 = vand.u32 2147483647, %v7404
    %v7407 = vcvt.s32.f32 %v7400
    %v7408 = vmul.f32 %v7407, %v7405
    %v7409 = vxor.u32 %v7408, 2147483648
    %v7410 = vsel %vm7327, %v7409, %v7408
    %v7411 = vsub.s32 4, %v7387
    %v7412 = vsel %vm7327, %v7411, %v7387
    %v7413 = vsel %vm7326, %v6798, %v7410
    %v7414 = vsel %vm7326, 0, %v7412
    %v7415 = vcosq.f32.pop %v7413
    %v7416 = vsinq.f32.pop %v7413
    %vm7417 = vweird.f32 %v6798
    %v7418 = vand.u32 %v7414, 3
    %vm7419 = vcmp.lt.s32.totalorder %v7418, 2
    %vm7420 = vcmp.eq.s32.totalorder %v7418, 0
    %v7421 = vxor.u32 %v7416, 2147483648
    %v7422 = vsel %vm7420, %v7415, %v7421
    %vm7423 = vcmp.eq.s32.totalorder %v7418, 2
    %v7424 = vxor.u32 %v7415, 2147483648
    %v7425 = vsel %vm7423, %v7424, %v7416
    %v7426 = vsel %vm7419, %v7422, %v7425
    %v7427 = vsel %vm7417, nan, %v7426
    %v7428 = vand.u32 2147483647, %v6799
    %vm7429 = vcmp.le.f32.partialorder %v7428, 0.7853982
    %vm7430 = vcmp.lt.s32.totalorder %v6799, 0
    %v7431 = vand.u32 %v6799, 2139095040
    %v7432 = vshrl.u32 %v7431, 23
    %v7433 = vsub.s32 %v7432, 127
    %v7434 = vand.u32 2147483647, %v6799
    %v7435 = vand.u32 %v7434, 8388607
    %v7436 = vor.u32 %v7435, 8388608
    %v7437 = vsub.s32 0, %v7436
    %v7438 = vadd.s32 %v7433, 1
    %vm7439 = vcmp.gt.s32.totalorder %v7438, 0
    %v7440 = vsel %vm7439, %v7438, 0
    %v7441 = vshrl.u32 %v7440, 5
    %v7442 = vand.u32 %v7440, 31
    %v7443 = vsub.s32 32, %v7442
    %v7444 = vshrl.u32 683565275, %v7443
    %v7445 = vshll.u32 683565275, %v7442
    %v7446 = vshrl.u32 2475754826, %v7443
    %v7447 = vor.u32 %v7445, %v7446
    %v7448 = vshll.u32 2475754826, %v7442
    %v7449 = vshrl.u32 2131351028, %v7443
    %v7450 = vor.u32 %v7448, %v7449
    %v7451 = vshll.u32 2131351028, %v7442
    %v7452 = vshrl.u32 2102212464, %v7443
    %v7453 = vor.u32 %v7451, %v7452
    %v7454 = vshll.u32 2102212464, %v7442
    %v7455 = vshrl.u32 920167782, %v7443
    %v7456 = vor.u32 %v7454, %v7455
    %v7457 = vshll.u32 920167782, %v7442
    %v7458 = vshrl.u32 1326507024, %v7443
    %v7459 = vor.u32 %v7457, %v7458
    %vm7460 = vcmp.lt.s32.totalorder %v7441, 1
    %vm7461 = vcmp.lt.s32.totalorder %v7441, 2
    %vm7462 = vcmp.lt.s32.totalorder %v7441, 3
    %vm7463 = vcmp.lt.s32.totalorder %v7441, 4
    %v7464 = vsel %vm7460, %v7444, %v7447
    %v7465 = vsel %vm7463, %v7453, 2102212464
    %v7466 = vsel %vm7462, %v7450, %v7465
    %v7467 = vsel %vm7461, %v7464, %v7466
    %v7468 = vsel %vm7460, %v7447, %v7450
    %v7469 = vsel %vm7463, %v7456, 920167782
    %v7470 = vsel %vm7462, %v7453, %v7469
    %v7471 = vsel %vm7461, %v7468, %v7470
    %v7472 = vsel %vm7460, %v7450, %v7453
    %v7473 = vsel %vm7463, %v7459, 1326507024
    %v7474 = vsel %vm7462, %v7456, %v7473
    %v7475 = vsel %vm7461, %v7472, %v7474
    %v7476 = vshll.u32 %v7436, 8
    %v7477 = vmul.u32.u64.compose %v7476, %v7475
    %v7478 = vextract.low.u32 %v7477
    %v7479 = vextract.high.u32 %v7477
    %v7480 = vmul.u32.u64.compose %v7476, %v7471
    %v7481 = vextract.low.u32 %v7480
    %v7482 = vextract.high.u32 %v7480
    %v7483 = vmul.u32 %v7476, %v7467
    %v7484 = vadd.s32 %v7479, %v7481
    %vm7485 = vc.u32 %v7479, %v7481
    %v7486 = vadd.s32 %v7482, 1
    %v7487 = vsel %vm7485, %v7486, %v7482
    %v7488 = vadd.s32 %v7483, %v7487
    %v7489 = vadd.s32 %v7488, 536870912
    %v7490 = vshrl.u32 %v7489, 30
    %v7491 = vshll.u32 %v7490, 30
    %v7492 = vsub.s32 %v7488, %v7491
    %vm7493 = vcmp.lt.s32.totalorder %v7492, 0
    %v7494 = vsub.s32 0, %v7492
    %v7495 = vsel %vm7493, %v7494, %v7492
    %v7496 = vclz %v7495
    %v7497 = vsub.s32 %v7496, 2
    %vm7498 = vcmp.gt.s32.totalorder 0, %v7497
    %v7499 = vsel %vm7498, 0, %v7497
    %v7500 = vsub.s32 32, %v7499
    %v7501 = vshll.u32 %v7492, %v7499
    %v7502 = vshrl.u32 %v7484, %v7500
    %v7503 = vor.u32 %v7501, %v7502
    %v7504 = vsub.s32 4294967266, %v7499
    %v7505 = vadd.s32 %v7504, 127
    %v7506 = vshll.u32 %v7505, 23
    %v7507 = vor.u32 4788187, %v7506
    %v7508 = vand.u32 2147483647, %v7507
    %v7510 = vcvt.s32.f32 %v7503
    %v7511 = vmul.f32 %v7510, %v7508
    %v7512 = vxor.u32 %v7511, 2147483648
    %v7513 = vsel %vm7430, %v7512, %v7511
    %v7514 = vsub.s32 4, %v7490
    %v7515 = vsel %vm7430, %v7514, %v7490
    %v7516 = vsel %vm7429, %v6799, %v7513
    %v7517 = vsel %vm7429, 0, %v7515
    %v7518 = vcosq.f32.pop %v7516
    %v7519 = vsinq.f32.pop %v7516
    %vm7520 = vweird.f32 %v6799
    %v7521 = vand.u32 %v7517, 3
    %vm7522 = vcmp.lt.s32.totalorder %v7521, 2
    %vm7523 = vcmp.eq.s32.totalorder %v7521, 0
    %v7524 = vxor.u32 %v7519, 2147483648
    %v7525 = vsel %vm7523, %v7518, %v7524
    %vm7526 = vcmp.eq.s32.totalorder %v7521, 2
    %v7527 = vxor.u32 %v7518, 2147483648
    %v7528 = vsel %vm7526, %v7527, %v7519
    %v7529 = vsel %vm7522, %v7525, %v7528
    %v7530 = vsel %vm7520, nan, %v7529
    %v7531 = vand.u32 2147483647, %v6800
    %vm7532 = vcmp.le.f32.partialorder %v7531, 0.7853982
    %vm7533 = vcmp.lt.s32.totalorder %v6800, 0
    %v7534 = vand.u32 %v6800, 2139095040
    %v7535 = vshrl.u32 %v7534, 23
    %v7536 = vsub.s32 %v7535, 127
    %v7537 = vand.u32 2147483647, %v6800
    %v7538 = vand.u32 %v7537, 8388607
    %v7539 = vor.u32 %v7538, 8388608
    %v7540 = vsub.s32 0, %v7539
    %v7541 = vadd.s32 %v7536, 1
    %vm7542 = vcmp.gt.s32.totalorder %v7541, 0
    %v7543 = vsel %vm7542, %v7541, 0
    %v7544 = vshrl.u32 %v7543, 5
    %v7545 = vand.u32 %v7543, 31
    %v7546 = vsub.s32 32, %v7545
    %v7547 = vshrl.u32 683565275, %v7546
    %v7548 = vshll.u32 683565275, %v7545
    %v7549 = vshrl.u32 2475754826, %v7546
    %v7550 = vor.u32 %v7548, %v7549
    %v7551 = vshll.u32 2475754826, %v7545
    %v7552 = vshrl.u32 2131351028, %v7546
    %v7553 = vor.u32 %v7551, %v7552
    %v7554 = vshll.u32 2131351028, %v7545
    %v7555 = vshrl.u32 2102212464, %v7546
    %v7556 = vor.u32 %v7554, %v7555
    %v7557 = vshll.u32 2102212464, %v7545
    %v7558 = vshrl.u32 920167782, %v7546
    %v7559 = vor.u32 %v7557, %v7558
    %v7560 = vshll.u32 920167782, %v7545
    %v7561 = vshrl.u32 1326507024, %v7546
    %v7562 = vor.u32 %v7560, %v7561
    %vm7563 = vcmp.lt.s32.totalorder %v7544, 1
    %vm7564 = vcmp.lt.s32.totalorder %v7544, 2
    %vm7565 = vcmp.lt.s32.totalorder %v7544, 3
    %vm7566 = vcmp.lt.s32.totalorder %v7544, 4
    %v7567 = vsel %vm7563, %v7547, %v7550
    %v7568 = vsel %vm7566, %v7556, 2102212464
    %v7569 = vsel %vm7565, %v7553, %v7568
    %v7570 = vsel %vm7564, %v7567, %v7569
    %v7571 = vsel %vm7563, %v7550, %v7553
    %v7572 = vsel %vm7566, %v7559, 920167782
    %v7573 = vsel %vm7565, %v7556, %v7572
    %v7574 = vsel %vm7564, %v7571, %v7573
    %v7575 = vsel %vm7563, %v7553, %v7556
    %v7576 = vsel %vm7566, %v7562, 1326507024
    %v7577 = vsel %vm7565, %v7559, %v7576
    %v7578 = vsel %vm7564, %v7575, %v7577
    %v7579 = vshll.u32 %v7539, 8
    %v7580 = vmul.u32.u64.compose %v7579, %v7578
    %v7581 = vextract.low.u32 %v7580
    %v7582 = vextract.high.u32 %v7580
    %v7583 = vmul.u32.u64.compose %v7579, %v7574
    %v7584 = vextract.low.u32 %v7583
    %v7585 = vextract.high.u32 %v7583
    %v7586 = vmul.u32 %v7579, %v7570
    %v7587 = vadd.s32 %v7582, %v7584
    %vm7588 = vc.u32 %v7582, %v7584
    %v7589 = vadd.s32 %v7585, 1
    %v7590 = vsel %vm7588, %v7589, %v7585
    %v7591 = vadd.s32 %v7586, %v7590
    %v7592 = vadd.s32 %v7591, 536870912
    %v7593 = vshrl.u32 %v7592, 30
    %v7594 = vshll.u32 %v7593, 30
    %v7595 = vsub.s32 %v7591, %v7594
    %vm7596 = vcmp.lt.s32.totalorder %v7595, 0
    %v7597 = vsub.s32 0, %v7595
    %v7598 = vsel %vm7596, %v7597, %v7595
    %v7599 = vclz %v7598
    %v7600 = vsub.s32 %v7599, 2
    %vm7601 = vcmp.gt.s32.totalorder 0, %v7600
    %v7602 = vsel %vm7601, 0, %v7600
    %v7603 = vsub.s32 32, %v7602
    %v7604 = vshll.u32 %v7595, %v7602
    %v7605 = vshrl.u32 %v7587, %v7603
    %v7606 = vor.u32 %v7604, %v7605
    %v7607 = vsub.s32 4294967266, %v7602
    %v7608 = vadd.s32 %v7607, 127
    %v7609 = vshll.u32 %v7608, 23
    %v7610 = vor.u32 4788187, %v7609
    %v7611 = vand.u32 2147483647, %v7610
    %v7613 = vcvt.s32.f32 %v7606
    %v7614 = vmul.f32 %v7613, %v7611
    %v7615 = vxor.u32 %v7614, 2147483648
    %v7616 = vsel %vm7533, %v7615, %v7614
    %v7617 = vsub.s32 4, %v7593
    %v7618 = vsel %vm7533, %v7617, %v7593
    %v7619 = vsel %vm7532, %v6800, %v7616
    %v7620 = vsel %vm7532, 0, %v7618
    %v7621 = vcosq.f32.pop %v7619
    %v7622 = vsinq.f32.pop %v7619
    %vm7623 = vweird.f32 %v6800
    %v7624 = vand.u32 %v7620, 3
    %vm7625 = vcmp.lt.s32.totalorder %v7624, 2
    %vm7626 = vcmp.eq.s32.totalorder %v7624, 0
    %v7627 = vxor.u32 %v7622, 2147483648
    %v7628 = vsel %vm7626, %v7621, %v7627
    %vm7629 = vcmp.eq.s32.totalorder %v7624, 2
    %v7630 = vxor.u32 %v7621, 2147483648
    %v7631 = vsel %vm7629, %v7630, %v7622
    %v7632 = vsel %vm7625, %v7628, %v7631
    %v7633 = vsel %vm7623, nan, %v7632
    %s7634 = scalar_lea.vmem [#allocation5], 576
    %7635 = vst [vmem:[%s7634] sm:$0xff] %v7324
    %7636 = vst [vmem:[%s7634 + $0x8] sm:$0xff] %v7427
    %7637 = vst [vmem:[%s7634 + $0x10] sm:$0xff] %v7530
    %7638 = vst [vmem:[%s7634 + $0x18] sm:$0xff] %v7633
    %v7639 = vld [vmem:[#allocation2] sm:$0xff]
    %v7640 = vld [vmem:[#allocation2 + $0x8] sm:$0xff]
    %v7641 = vld [vmem:[#allocation2 + $0x10] sm:$0xff]
    %v7642 = vld [vmem:[#allocation2 + $0x18] sm:$0xff]
    %v7643 = vmul.f32 %v7639, 512.0
    %v7644 = vmul.f32 %v7640, 512.0
    %v7645 = vmul.f32 %v7641, 512.0
    %v7646 = vmul.f32 %v7642, 512.0
    %v7647 = vand.u32 2147483647, %v7643
    %vm7648 = vcmp.le.f32.partialorder %v7647, 0.7853982
    %vm7649 = vcmp.lt.s32.totalorder %v7643, 0
    %v7650 = vand.u32 %v7643, 2139095040
    %v7651 = vshrl.u32 %v7650, 23
    %v7652 = vsub.s32 %v7651, 127
    %v7653 = vand.u32 2147483647, %v7643
    %v7654 = vand.u32 %v7653, 8388607
    %v7655 = vor.u32 %v7654, 8388608
    %v7656 = vsub.s32 0, %v7655
    %v7657 = vadd.s32 %v7652, 1
    %vm7658 = vcmp.gt.s32.totalorder %v7657, 0
    %v7659 = vsel %vm7658, %v7657, 0
    %v7660 = vshrl.u32 %v7659, 5
    %v7661 = vand.u32 %v7659, 31
    %v7662 = vsub.s32 32, %v7661
    %v7663 = vshrl.u32 683565275, %v7662
    %v7664 = vshll.u32 683565275, %v7661
    %v7665 = vshrl.u32 2475754826, %v7662
    %v7666 = vor.u32 %v7664, %v7665
    %v7667 = vshll.u32 2475754826, %v7661
    %v7668 = vshrl.u32 2131351028, %v7662
    %v7669 = vor.u32 %v7667, %v7668
    %v7670 = vshll.u32 2131351028, %v7661
    %v7671 = vshrl.u32 2102212464, %v7662
    %v7672 = vor.u32 %v7670, %v7671
    %v7673 = vshll.u32 2102212464, %v7661
    %v7674 = vshrl.u32 920167782, %v7662
    %v7675 = vor.u32 %v7673, %v7674
    %v7676 = vshll.u32 920167782, %v7661
    %v7677 = vshrl.u32 1326507024, %v7662
    %v7678 = vor.u32 %v7676, %v7677
    %vm7679 = vcmp.lt.s32.totalorder %v7660, 1
    %vm7680 = vcmp.lt.s32.totalorder %v7660, 2
    %vm7681 = vcmp.lt.s32.totalorder %v7660, 3
    %vm7682 = vcmp.lt.s32.totalorder %v7660, 4
    %v7683 = vsel %vm7679, %v7663, %v7666
    %v7684 = vsel %vm7682, %v7672, 2102212464
    %v7685 = vsel %vm7681, %v7669, %v7684
    %v7686 = vsel %vm7680, %v7683, %v7685
    %v7687 = vsel %vm7679, %v7666, %v7669
    %v7688 = vsel %vm7682, %v7675, 920167782
    %v7689 = vsel %vm7681, %v7672, %v7688
    %v7690 = vsel %vm7680, %v7687, %v7689
    %v7691 = vsel %vm7679, %v7669, %v7672
    %v7692 = vsel %vm7682, %v7678, 1326507024
    %v7693 = vsel %vm7681, %v7675, %v7692
    %v7694 = vsel %vm7680, %v7691, %v7693
    %v7695 = vshll.u32 %v7655, 8
    %v7696 = vmul.u32.u64.compose %v7695, %v7694
    %v7697 = vextract.low.u32 %v7696
    %v7698 = vextract.high.u32 %v7696
    %v7699 = vmul.u32.u64.compose %v7695, %v7690
    %v7700 = vextract.low.u32 %v7699
    %v7701 = vextract.high.u32 %v7699
    %v7702 = vmul.u32 %v7695, %v7686
    %v7703 = vadd.s32 %v7698, %v7700
    %vm7704 = vc.u32 %v7698, %v7700
    %v7705 = vadd.s32 %v7701, 1
    %v7706 = vsel %vm7704, %v7705, %v7701
    %v7707 = vadd.s32 %v7702, %v7706
    %v7708 = vadd.s32 %v7707, 536870912
    %v7709 = vshrl.u32 %v7708, 30
    %v7710 = vshll.u32 %v7709, 30
    %v7711 = vsub.s32 %v7707, %v7710
    %vm7712 = vcmp.lt.s32.totalorder %v7711, 0
    %v7713 = vsub.s32 0, %v7711
    %v7714 = vsel %vm7712, %v7713, %v7711
    %v7715 = vclz %v7714
    %v7716 = vsub.s32 %v7715, 2
    %vm7717 = vcmp.gt.s32.totalorder 0, %v7716
    %v7718 = vsel %vm7717, 0, %v7716
    %v7719 = vsub.s32 32, %v7718
    %v7720 = vshll.u32 %v7711, %v7718
    %v7721 = vshrl.u32 %v7703, %v7719
    %v7722 = vor.u32 %v7720, %v7721
    %v7723 = vsub.s32 4294967266, %v7718
    %v7724 = vadd.s32 %v7723, 127
    %v7725 = vshll.u32 %v7724, 23
    %v7726 = vor.u32 4788187, %v7725
    %v7727 = vand.u32 2147483647, %v7726
    %v7729 = vcvt.s32.f32 %v7722
    %v7730 = vmul.f32 %v7729, %v7727
    %v7731 = vxor.u32 %v7730, 2147483648
    %v7732 = vsel %vm7649, %v7731, %v7730
    %v7733 = vsub.s32 4, %v7709
    %v7734 = vsel %vm7649, %v7733, %v7709
    %v7735 = vsel %vm7648, %v7643, %v7732
    %v7736 = vsel %vm7648, 0, %v7734
    %v7737 = vcosq.f32.pop %v7735
    %v7738 = vsinq.f32.pop %v7735
    %vm7739 = vweird.f32 %v7643
    %v7740 = vadd.s32 %v7736, 3
    %v7741 = vand.u32 %v7740, 3
    %vm7742 = vcmp.lt.s32.totalorder %v7741, 2
    %vm7743 = vcmp.eq.s32.totalorder %v7741, 0
    %v7744 = vxor.u32 %v7738, 2147483648
    %v7745 = vsel %vm7743, %v7737, %v7744
    %vm7746 = vcmp.eq.s32.totalorder %v7741, 2
    %v7747 = vxor.u32 %v7737, 2147483648
    %v7748 = vsel %vm7746, %v7747, %v7738
    %v7749 = vsel %vm7742, %v7745, %v7748
    %v7750 = vsel %vm7739, nan, %v7749
    %v7751 = vand.u32 2147483647, %v7644
    %vm7752 = vcmp.le.f32.partialorder %v7751, 0.7853982
    %vm7753 = vcmp.lt.s32.totalorder %v7644, 0
    %v7754 = vand.u32 %v7644, 2139095040
    %v7755 = vshrl.u32 %v7754, 23
    %v7756 = vsub.s32 %v7755, 127
    %v7757 = vand.u32 2147483647, %v7644
    %v7758 = vand.u32 %v7757, 8388607
    %v7759 = vor.u32 %v7758, 8388608
    %v7760 = vsub.s32 0, %v7759
    %v7761 = vadd.s32 %v7756, 1
    %vm7762 = vcmp.gt.s32.totalorder %v7761, 0
    %v7763 = vsel %vm7762, %v7761, 0
    %v7764 = vshrl.u32 %v7763, 5
    %v7765 = vand.u32 %v7763, 31
    %v7766 = vsub.s32 32, %v7765
    %v7767 = vshrl.u32 683565275, %v7766
    %v7768 = vshll.u32 683565275, %v7765
    %v7769 = vshrl.u32 2475754826, %v7766
    %v7770 = vor.u32 %v7768, %v7769
    %v7771 = vshll.u32 2475754826, %v7765
    %v7772 = vshrl.u32 2131351028, %v7766
    %v7773 = vor.u32 %v7771, %v7772
    %v7774 = vshll.u32 2131351028, %v7765
    %v7775 = vshrl.u32 2102212464, %v7766
    %v7776 = vor.u32 %v7774, %v7775
    %v7777 = vshll.u32 2102212464, %v7765
    %v7778 = vshrl.u32 920167782, %v7766
    %v7779 = vor.u32 %v7777, %v7778
    %v7780 = vshll.u32 920167782, %v7765
    %v7781 = vshrl.u32 1326507024, %v7766
    %v7782 = vor.u32 %v7780, %v7781
    %vm7783 = vcmp.lt.s32.totalorder %v7764, 1
    %vm7784 = vcmp.lt.s32.totalorder %v7764, 2
    %vm7785 = vcmp.lt.s32.totalorder %v7764, 3
    %vm7786 = vcmp.lt.s32.totalorder %v7764, 4
    %v7787 = vsel %vm7783, %v7767, %v7770
    %v7788 = vsel %vm7786, %v7776, 2102212464
    %v7789 = vsel %vm7785, %v7773, %v7788
    %v7790 = vsel %vm7784, %v7787, %v7789
    %v7791 = vsel %vm7783, %v7770, %v7773
    %v7792 = vsel %vm7786, %v7779, 920167782
    %v7793 = vsel %vm7785, %v7776, %v7792
    %v7794 = vsel %vm7784, %v7791, %v7793
    %v7795 = vsel %vm7783, %v7773, %v7776
    %v7796 = vsel %vm7786, %v7782, 1326507024
    %v7797 = vsel %vm7785, %v7779, %v7796
    %v7798 = vsel %vm7784, %v7795, %v7797
    %v7799 = vshll.u32 %v7759, 8
    %v7800 = vmul.u32.u64.compose %v7799, %v7798
    %v7801 = vextract.low.u32 %v7800
    %v7802 = vextract.high.u32 %v7800
    %v7803 = vmul.u32.u64.compose %v7799, %v7794
    %v7804 = vextract.low.u32 %v7803
    %v7805 = vextract.high.u32 %v7803
    %v7806 = vmul.u32 %v7799, %v7790
    %v7807 = vadd.s32 %v7802, %v7804
    %vm7808 = vc.u32 %v7802, %v7804
    %v7809 = vadd.s32 %v7805, 1
    %v7810 = vsel %vm7808, %v7809, %v7805
    %v7811 = vadd.s32 %v7806, %v7810
    %v7812 = vadd.s32 %v7811, 536870912
    %v7813 = vshrl.u32 %v7812, 30
    %v7814 = vshll.u32 %v7813, 30
    %v7815 = vsub.s32 %v7811, %v7814
    %vm7816 = vcmp.lt.s32.totalorder %v7815, 0
    %v7817 = vsub.s32 0, %v7815
    %v7818 = vsel %vm7816, %v7817, %v7815
    %v7819 = vclz %v7818
    %v7820 = vsub.s32 %v7819, 2
    %vm7821 = vcmp.gt.s32.totalorder 0, %v7820
    %v7822 = vsel %vm7821, 0, %v7820
    %v7823 = vsub.s32 32, %v7822
    %v7824 = vshll.u32 %v7815, %v7822
    %v7825 = vshrl.u32 %v7807, %v7823
    %v7826 = vor.u32 %v7824, %v7825
    %v7827 = vsub.s32 4294967266, %v7822
    %v7828 = vadd.s32 %v7827, 127
    %v7829 = vshll.u32 %v7828, 23
    %v7830 = vor.u32 4788187, %v7829
    %v7831 = vand.u32 2147483647, %v7830
    %v7833 = vcvt.s32.f32 %v7826
    %v7834 = vmul.f32 %v7833, %v7831
    %v7835 = vxor.u32 %v7834, 2147483648
    %v7836 = vsel %vm7753, %v7835, %v7834
    %v7837 = vsub.s32 4, %v7813
    %v7838 = vsel %vm7753, %v7837, %v7813
    %v7839 = vsel %vm7752, %v7644, %v7836
    %v7840 = vsel %vm7752, 0, %v7838
    %v7841 = vcosq.f32.pop %v7839
    %v7842 = vsinq.f32.pop %v7839
    %vm7843 = vweird.f32 %v7644
    %v7844 = vadd.s32 %v7840, 3
    %v7845 = vand.u32 %v7844, 3
    %vm7846 = vcmp.lt.s32.totalorder %v7845, 2
    %vm7847 = vcmp.eq.s32.totalorder %v7845, 0
    %v7848 = vxor.u32 %v7842, 2147483648
    %v7849 = vsel %vm7847, %v7841, %v7848
    %vm7850 = vcmp.eq.s32.totalorder %v7845, 2
    %v7851 = vxor.u32 %v7841, 2147483648
    %v7852 = vsel %vm7850, %v7851, %v7842
    %v7853 = vsel %vm7846, %v7849, %v7852
    %v7854 = vsel %vm7843, nan, %v7853
    %v7855 = vand.u32 2147483647, %v7645
    %vm7856 = vcmp.le.f32.partialorder %v7855, 0.7853982
    %vm7857 = vcmp.lt.s32.totalorder %v7645, 0
    %v7858 = vand.u32 %v7645, 2139095040
    %v7859 = vshrl.u32 %v7858, 23
    %v7860 = vsub.s32 %v7859, 127
    %v7861 = vand.u32 2147483647, %v7645
    %v7862 = vand.u32 %v7861, 8388607
    %v7863 = vor.u32 %v7862, 8388608
    %v7864 = vsub.s32 0, %v7863
    %v7865 = vadd.s32 %v7860, 1
    %vm7866 = vcmp.gt.s32.totalorder %v7865, 0
    %v7867 = vsel %vm7866, %v7865, 0
    %v7868 = vshrl.u32 %v7867, 5
    %v7869 = vand.u32 %v7867, 31
    %v7870 = vsub.s32 32, %v7869
    %v7871 = vshrl.u32 683565275, %v7870
    %v7872 = vshll.u32 683565275, %v7869
    %v7873 = vshrl.u32 2475754826, %v7870
    %v7874 = vor.u32 %v7872, %v7873
    %v7875 = vshll.u32 2475754826, %v7869
    %v7876 = vshrl.u32 2131351028, %v7870
    %v7877 = vor.u32 %v7875, %v7876
    %v7878 = vshll.u32 2131351028, %v7869
    %v7879 = vshrl.u32 2102212464, %v7870
    %v7880 = vor.u32 %v7878, %v7879
    %v7881 = vshll.u32 2102212464, %v7869
    %v7882 = vshrl.u32 920167782, %v7870
    %v7883 = vor.u32 %v7881, %v7882
    %v7884 = vshll.u32 920167782, %v7869
    %v7885 = vshrl.u32 1326507024, %v7870
    %v7886 = vor.u32 %v7884, %v7885
    %vm7887 = vcmp.lt.s32.totalorder %v7868, 1
    %vm7888 = vcmp.lt.s32.totalorder %v7868, 2
    %vm7889 = vcmp.lt.s32.totalorder %v7868, 3
    %vm7890 = vcmp.lt.s32.totalorder %v7868, 4
    %v7891 = vsel %vm7887, %v7871, %v7874
    %v7892 = vsel %vm7890, %v7880, 2102212464
    %v7893 = vsel %vm7889, %v7877, %v7892
    %v7894 = vsel %vm7888, %v7891, %v7893
    %v7895 = vsel %vm7887, %v7874, %v7877
    %v7896 = vsel %vm7890, %v7883, 920167782
    %v7897 = vsel %vm7889, %v7880, %v7896
    %v7898 = vsel %vm7888, %v7895, %v7897
    %v7899 = vsel %vm7887, %v7877, %v7880
    %v7900 = vsel %vm7890, %v7886, 1326507024
    %v7901 = vsel %vm7889, %v7883, %v7900
    %v7902 = vsel %vm7888, %v7899, %v7901
    %v7903 = vshll.u32 %v7863, 8
    %v7904 = vmul.u32.u64.compose %v7903, %v7902
    %v7905 = vextract.low.u32 %v7904
    %v7906 = vextract.high.u32 %v7904
    %v7907 = vmul.u32.u64.compose %v7903, %v7898
    %v7908 = vextract.low.u32 %v7907
    %v7909 = vextract.high.u32 %v7907
    %v7910 = vmul.u32 %v7903, %v7894
    %v7911 = vadd.s32 %v7906, %v7908
    %vm7912 = vc.u32 %v7906, %v7908
    %v7913 = vadd.s32 %v7909, 1
    %v7914 = vsel %vm7912, %v7913, %v7909
    %v7915 = vadd.s32 %v7910, %v7914
    %v7916 = vadd.s32 %v7915, 536870912
    %v7917 = vshrl.u32 %v7916, 30
    %v7918 = vshll.u32 %v7917, 30
    %v7919 = vsub.s32 %v7915, %v7918
    %vm7920 = vcmp.lt.s32.totalorder %v7919, 0
    %v7921 = vsub.s32 0, %v7919
    %v7922 = vsel %vm7920, %v7921, %v7919
    %v7923 = vclz %v7922
    %v7924 = vsub.s32 %v7923, 2
    %vm7925 = vcmp.gt.s32.totalorder 0, %v7924
    %v7926 = vsel %vm7925, 0, %v7924
    %v7927 = vsub.s32 32, %v7926
    %v7928 = vshll.u32 %v7919, %v7926
    %v7929 = vshrl.u32 %v7911, %v7927
    %v7930 = vor.u32 %v7928, %v7929
    %v7931 = vsub.s32 4294967266, %v7926
    %v7932 = vadd.s32 %v7931, 127
    %v7933 = vshll.u32 %v7932, 23
    %v7934 = vor.u32 4788187, %v7933
    %v7935 = vand.u32 2147483647, %v7934
    %v7937 = vcvt.s32.f32 %v7930
    %v7938 = vmul.f32 %v7937, %v7935
    %v7939 = vxor.u32 %v7938, 2147483648
    %v7940 = vsel %vm7857, %v7939, %v7938
    %v7941 = vsub.s32 4, %v7917
    %v7942 = vsel %vm7857, %v7941, %v7917
    %v7943 = vsel %vm7856, %v7645, %v7940
    %v7944 = vsel %vm7856, 0, %v7942
    %v7945 = vcosq.f32.pop %v7943
    %v7946 = vsinq.f32.pop %v7943
    %vm7947 = vweird.f32 %v7645
    %v7948 = vadd.s32 %v7944, 3
    %v7949 = vand.u32 %v7948, 3
    %vm7950 = vcmp.lt.s32.totalorder %v7949, 2
    %vm7951 = vcmp.eq.s32.totalorder %v7949, 0
    %v7952 = vxor.u32 %v7946, 2147483648
    %v7953 = vsel %vm7951, %v7945, %v7952
    %vm7954 = vcmp.eq.s32.totalorder %v7949, 2
    %v7955 = vxor.u32 %v7945, 2147483648
    %v7956 = vsel %vm7954, %v7955, %v7946
    %v7957 = vsel %vm7950, %v7953, %v7956
    %v7958 = vsel %vm7947, nan, %v7957
    %v7959 = vand.u32 2147483647, %v7646
    %vm7960 = vcmp.le.f32.partialorder %v7959, 0.7853982
    %vm7961 = vcmp.lt.s32.totalorder %v7646, 0
    %v7962 = vand.u32 %v7646, 2139095040
    %v7963 = vshrl.u32 %v7962, 23
    %v7964 = vsub.s32 %v7963, 127
    %v7965 = vand.u32 2147483647, %v7646
    %v7966 = vand.u32 %v7965, 8388607
    %v7967 = vor.u32 %v7966, 8388608
    %v7968 = vsub.s32 0, %v7967
    %v7969 = vadd.s32 %v7964, 1
    %vm7970 = vcmp.gt.s32.totalorder %v7969, 0
    %v7971 = vsel %vm7970, %v7969, 0
    %v7972 = vshrl.u32 %v7971, 5
    %v7973 = vand.u32 %v7971, 31
    %v7974 = vsub.s32 32, %v7973
    %v7975 = vshrl.u32 683565275, %v7974
    %v7976 = vshll.u32 683565275, %v7973
    %v7977 = vshrl.u32 2475754826, %v7974
    %v7978 = vor.u32 %v7976, %v7977
    %v7979 = vshll.u32 2475754826, %v7973
    %v7980 = vshrl.u32 2131351028, %v7974
    %v7981 = vor.u32 %v7979, %v7980
    %v7982 = vshll.u32 2131351028, %v7973
    %v7983 = vshrl.u32 2102212464, %v7974
    %v7984 = vor.u32 %v7982, %v7983
    %v7985 = vshll.u32 2102212464, %v7973
    %v7986 = vshrl.u32 920167782, %v7974
    %v7987 = vor.u32 %v7985, %v7986
    %v7988 = vshll.u32 920167782, %v7973
    %v7989 = vshrl.u32 1326507024, %v7974
    %v7990 = vor.u32 %v7988, %v7989
    %vm7991 = vcmp.lt.s32.totalorder %v7972, 1
    %vm7992 = vcmp.lt.s32.totalorder %v7972, 2
    %vm7993 = vcmp.lt.s32.totalorder %v7972, 3
    %vm7994 = vcmp.lt.s32.totalorder %v7972, 4
    %v7995 = vsel %vm7991, %v7975, %v7978
    %v7996 = vsel %vm7994, %v7984, 2102212464
    %v7997 = vsel %vm7993, %v7981, %v7996
    %v7998 = vsel %vm7992, %v7995, %v7997
    %v7999 = vsel %vm7991, %v7978, %v7981
    %v8000 = vsel %vm7994, %v7987, 920167782
    %v8001 = vsel %vm7993, %v7984, %v8000
    %v8002 = vsel %vm7992, %v7999, %v8001
    %v8003 = vsel %vm7991, %v7981, %v7984
    %v8004 = vsel %vm7994, %v7990, 1326507024
    %v8005 = vsel %vm7993, %v7987, %v8004
    %v8006 = vsel %vm7992, %v8003, %v8005
    %v8007 = vshll.u32 %v7967, 8
    %v8008 = vmul.u32.u64.compose %v8007, %v8006
    %v8009 = vextract.low.u32 %v8008
    %v8010 = vextract.high.u32 %v8008
    %v8011 = vmul.u32.u64.compose %v8007, %v8002
    %v8012 = vextract.low.u32 %v8011
    %v8013 = vextract.high.u32 %v8011
    %v8014 = vmul.u32 %v8007, %v7998
    %v8015 = vadd.s32 %v8010, %v8012
    %vm8016 = vc.u32 %v8010, %v8012
    %v8017 = vadd.s32 %v8013, 1
    %v8018 = vsel %vm8016, %v8017, %v8013
    %v8019 = vadd.s32 %v8014, %v8018
    %v8020 = vadd.s32 %v8019, 536870912
    %v8021 = vshrl.u32 %v8020, 30
    %v8022 = vshll.u32 %v8021, 30
    %v8023 = vsub.s32 %v8019, %v8022
    %vm8024 = vcmp.lt.s32.totalorder %v8023, 0
    %v8025 = vsub.s32 0, %v8023
    %v8026 = vsel %vm8024, %v8025, %v8023
    %v8027 = vclz %v8026
    %v8028 = vsub.s32 %v8027, 2
    %vm8029 = vcmp.gt.s32.totalorder 0, %v8028
    %v8030 = vsel %vm8029, 0, %v8028
    %v8031 = vsub.s32 32, %v8030
    %v8032 = vshll.u32 %v8023, %v8030
    %v8033 = vshrl.u32 %v8015, %v8031
    %v8034 = vor.u32 %v8032, %v8033
    %v8035 = vsub.s32 4294967266, %v8030
    %v8036 = vadd.s32 %v8035, 127
    %v8037 = vshll.u32 %v8036, 23
    %v8038 = vor.u32 4788187, %v8037
    %v8039 = vand.u32 2147483647, %v8038
    %v8041 = vcvt.s32.f32 %v8034
    %v8042 = vmul.f32 %v8041, %v8039
    %v8043 = vxor.u32 %v8042, 2147483648
    %v8044 = vsel %vm7961, %v8043, %v8042
    %v8045 = vsub.s32 4, %v8021
    %v8046 = vsel %vm7961, %v8045, %v8021
    %v8047 = vsel %vm7960, %v7646, %v8044
    %v8048 = vsel %vm7960, 0, %v8046
    %v8049 = vcosq.f32.pop %v8047
    %v8050 = vsinq.f32.pop %v8047
    %vm8051 = vweird.f32 %v7646
    %v8052 = vadd.s32 %v8048, 3
    %v8053 = vand.u32 %v8052, 3
    %vm8054 = vcmp.lt.s32.totalorder %v8053, 2
    %vm8055 = vcmp.eq.s32.totalorder %v8053, 0
    %v8056 = vxor.u32 %v8050, 2147483648
    %v8057 = vsel %vm8055, %v8049, %v8056
    %vm8058 = vcmp.eq.s32.totalorder %v8053, 2
    %v8059 = vxor.u32 %v8049, 2147483648
    %v8060 = vsel %vm8058, %v8059, %v8050
    %v8061 = vsel %vm8054, %v8057, %v8060
    %v8062 = vsel %vm8051, nan, %v8061
    %s8063 = scalar_lea.vmem [#allocation5], 608
    %8064 = vst [vmem:[%s8063] sm:$0xff] %v7750
    %8065 = vst [vmem:[%s8063 + $0x8] sm:$0xff] %v7854
    %8066 = vst [vmem:[%s8063 + $0x10] sm:$0xff] %v7958
    %8067 = vst [vmem:[%s8063 + $0x18] sm:$0xff] %v8062
    %v8068 = vand.u32 2147483647, %v7643
    %vm8069 = vcmp.le.f32.partialorder %v8068, 0.7853982
    %vm8070 = vcmp.lt.s32.totalorder %v7643, 0
    %v8071 = vand.u32 %v7643, 2139095040
    %v8072 = vshrl.u32 %v8071, 23
    %v8073 = vsub.s32 %v8072, 127
    %v8074 = vand.u32 2147483647, %v7643
    %v8075 = vand.u32 %v8074, 8388607
    %v8076 = vor.u32 %v8075, 8388608
    %v8077 = vsub.s32 0, %v8076
    %v8078 = vadd.s32 %v8073, 1
    %vm8079 = vcmp.gt.s32.totalorder %v8078, 0
    %v8080 = vsel %vm8079, %v8078, 0
    %v8081 = vshrl.u32 %v8080, 5
    %v8082 = vand.u32 %v8080, 31
    %v8083 = vsub.s32 32, %v8082
    %v8084 = vshrl.u32 683565275, %v8083
    %v8085 = vshll.u32 683565275, %v8082
    %v8086 = vshrl.u32 2475754826, %v8083
    %v8087 = vor.u32 %v8085, %v8086
    %v8088 = vshll.u32 2475754826, %v8082
    %v8089 = vshrl.u32 2131351028, %v8083
    %v8090 = vor.u32 %v8088, %v8089
    %v8091 = vshll.u32 2131351028, %v8082
    %v8092 = vshrl.u32 2102212464, %v8083
    %v8093 = vor.u32 %v8091, %v8092
    %v8094 = vshll.u32 2102212464, %v8082
    %v8095 = vshrl.u32 920167782, %v8083
    %v8096 = vor.u32 %v8094, %v8095
    %v8097 = vshll.u32 920167782, %v8082
    %v8098 = vshrl.u32 1326507024, %v8083
    %v8099 = vor.u32 %v8097, %v8098
    %vm8100 = vcmp.lt.s32.totalorder %v8081, 1
    %vm8101 = vcmp.lt.s32.totalorder %v8081, 2
    %vm8102 = vcmp.lt.s32.totalorder %v8081, 3
    %vm8103 = vcmp.lt.s32.totalorder %v8081, 4
    %v8104 = vsel %vm8100, %v8084, %v8087
    %v8105 = vsel %vm8103, %v8093, 2102212464
    %v8106 = vsel %vm8102, %v8090, %v8105
    %v8107 = vsel %vm8101, %v8104, %v8106
    %v8108 = vsel %vm8100, %v8087, %v8090
    %v8109 = vsel %vm8103, %v8096, 920167782
    %v8110 = vsel %vm8102, %v8093, %v8109
    %v8111 = vsel %vm8101, %v8108, %v8110
    %v8112 = vsel %vm8100, %v8090, %v8093
    %v8113 = vsel %vm8103, %v8099, 1326507024
    %v8114 = vsel %vm8102, %v8096, %v8113
    %v8115 = vsel %vm8101, %v8112, %v8114
    %v8116 = vshll.u32 %v8076, 8
    %v8117 = vmul.u32.u64.compose %v8116, %v8115
    %v8118 = vextract.low.u32 %v8117
    %v8119 = vextract.high.u32 %v8117
    %v8120 = vmul.u32.u64.compose %v8116, %v8111
    %v8121 = vextract.low.u32 %v8120
    %v8122 = vextract.high.u32 %v8120
    %v8123 = vmul.u32 %v8116, %v8107
    %v8124 = vadd.s32 %v8119, %v8121
    %vm8125 = vc.u32 %v8119, %v8121
    %v8126 = vadd.s32 %v8122, 1
    %v8127 = vsel %vm8125, %v8126, %v8122
    %v8128 = vadd.s32 %v8123, %v8127
    %v8129 = vadd.s32 %v8128, 536870912
    %v8130 = vshrl.u32 %v8129, 30
    %v8131 = vshll.u32 %v8130, 30
    %v8132 = vsub.s32 %v8128, %v8131
    %vm8133 = vcmp.lt.s32.totalorder %v8132, 0
    %v8134 = vsub.s32 0, %v8132
    %v8135 = vsel %vm8133, %v8134, %v8132
    %v8136 = vclz %v8135
    %v8137 = vsub.s32 %v8136, 2
    %vm8138 = vcmp.gt.s32.totalorder 0, %v8137
    %v8139 = vsel %vm8138, 0, %v8137
    %v8140 = vsub.s32 32, %v8139
    %v8141 = vshll.u32 %v8132, %v8139
    %v8142 = vshrl.u32 %v8124, %v8140
    %v8143 = vor.u32 %v8141, %v8142
    %v8144 = vsub.s32 4294967266, %v8139
    %v8145 = vadd.s32 %v8144, 127
    %v8146 = vshll.u32 %v8145, 23
    %v8147 = vor.u32 4788187, %v8146
    %v8148 = vand.u32 2147483647, %v8147
    %v8150 = vcvt.s32.f32 %v8143
    %v8151 = vmul.f32 %v8150, %v8148
    %v8152 = vxor.u32 %v8151, 2147483648
    %v8153 = vsel %vm8070, %v8152, %v8151
    %v8154 = vsub.s32 4, %v8130
    %v8155 = vsel %vm8070, %v8154, %v8130
    %v8156 = vsel %vm8069, %v7643, %v8153
    %v8157 = vsel %vm8069, 0, %v8155
    %v8158 = vcosq.f32.pop %v8156
    %v8159 = vsinq.f32.pop %v8156
    %vm8160 = vweird.f32 %v7643
    %v8161 = vand.u32 %v8157, 3
    %vm8162 = vcmp.lt.s32.totalorder %v8161, 2
    %vm8163 = vcmp.eq.s32.totalorder %v8161, 0
    %v8164 = vxor.u32 %v8159, 2147483648
    %v8165 = vsel %vm8163, %v8158, %v8164
    %vm8166 = vcmp.eq.s32.totalorder %v8161, 2
    %v8167 = vxor.u32 %v8158, 2147483648
    %v8168 = vsel %vm8166, %v8167, %v8159
    %v8169 = vsel %vm8162, %v8165, %v8168
    %v8170 = vsel %vm8160, nan, %v8169
    %v8171 = vand.u32 2147483647, %v7644
    %vm8172 = vcmp.le.f32.partialorder %v8171, 0.7853982
    %vm8173 = vcmp.lt.s32.totalorder %v7644, 0
    %v8174 = vand.u32 %v7644, 2139095040
    %v8175 = vshrl.u32 %v8174, 23
    %v8176 = vsub.s32 %v8175, 127
    %v8177 = vand.u32 2147483647, %v7644
    %v8178 = vand.u32 %v8177, 8388607
    %v8179 = vor.u32 %v8178, 8388608
    %v8180 = vsub.s32 0, %v8179
    %v8181 = vadd.s32 %v8176, 1
    %vm8182 = vcmp.gt.s32.totalorder %v8181, 0
    %v8183 = vsel %vm8182, %v8181, 0
    %v8184 = vshrl.u32 %v8183, 5
    %v8185 = vand.u32 %v8183, 31
    %v8186 = vsub.s32 32, %v8185
    %v8187 = vshrl.u32 683565275, %v8186
    %v8188 = vshll.u32 683565275, %v8185
    %v8189 = vshrl.u32 2475754826, %v8186
    %v8190 = vor.u32 %v8188, %v8189
    %v8191 = vshll.u32 2475754826, %v8185
    %v8192 = vshrl.u32 2131351028, %v8186
    %v8193 = vor.u32 %v8191, %v8192
    %v8194 = vshll.u32 2131351028, %v8185
    %v8195 = vshrl.u32 2102212464, %v8186
    %v8196 = vor.u32 %v8194, %v8195
    %v8197 = vshll.u32 2102212464, %v8185
    %v8198 = vshrl.u32 920167782, %v8186
    %v8199 = vor.u32 %v8197, %v8198
    %v8200 = vshll.u32 920167782, %v8185
    %v8201 = vshrl.u32 1326507024, %v8186
    %v8202 = vor.u32 %v8200, %v8201
    %vm8203 = vcmp.lt.s32.totalorder %v8184, 1
    %vm8204 = vcmp.lt.s32.totalorder %v8184, 2
    %vm8205 = vcmp.lt.s32.totalorder %v8184, 3
    %vm8206 = vcmp.lt.s32.totalorder %v8184, 4
    %v8207 = vsel %vm8203, %v8187, %v8190
    %v8208 = vsel %vm8206, %v8196, 2102212464
    %v8209 = vsel %vm8205, %v8193, %v8208
    %v8210 = vsel %vm8204, %v8207, %v8209
    %v8211 = vsel %vm8203, %v8190, %v8193
    %v8212 = vsel %vm8206, %v8199, 920167782
    %v8213 = vsel %vm8205, %v8196, %v8212
    %v8214 = vsel %vm8204, %v8211, %v8213
    %v8215 = vsel %vm8203, %v8193, %v8196
    %v8216 = vsel %vm8206, %v8202, 1326507024
    %v8217 = vsel %vm8205, %v8199, %v8216
    %v8218 = vsel %vm8204, %v8215, %v8217
    %v8219 = vshll.u32 %v8179, 8
    %v8220 = vmul.u32.u64.compose %v8219, %v8218
    %v8221 = vextract.low.u32 %v8220
    %v8222 = vextract.high.u32 %v8220
    %v8223 = vmul.u32.u64.compose %v8219, %v8214
    %v8224 = vextract.low.u32 %v8223
    %v8225 = vextract.high.u32 %v8223
    %v8226 = vmul.u32 %v8219, %v8210
    %v8227 = vadd.s32 %v8222, %v8224
    %vm8228 = vc.u32 %v8222, %v8224
    %v8229 = vadd.s32 %v8225, 1
    %v8230 = vsel %vm8228, %v8229, %v8225
    %v8231 = vadd.s32 %v8226, %v8230
    %v8232 = vadd.s32 %v8231, 536870912
    %v8233 = vshrl.u32 %v8232, 30
    %v8234 = vshll.u32 %v8233, 30
    %v8235 = vsub.s32 %v8231, %v8234
    %vm8236 = vcmp.lt.s32.totalorder %v8235, 0
    %v8237 = vsub.s32 0, %v8235
    %v8238 = vsel %vm8236, %v8237, %v8235
    %v8239 = vclz %v8238
    %v8240 = vsub.s32 %v8239, 2
    %vm8241 = vcmp.gt.s32.totalorder 0, %v8240
    %v8242 = vsel %vm8241, 0, %v8240
    %v8243 = vsub.s32 32, %v8242
    %v8244 = vshll.u32 %v8235, %v8242
    %v8245 = vshrl.u32 %v8227, %v8243
    %v8246 = vor.u32 %v8244, %v8245
    %v8247 = vsub.s32 4294967266, %v8242
    %v8248 = vadd.s32 %v8247, 127
    %v8249 = vshll.u32 %v8248, 23
    %v8250 = vor.u32 4788187, %v8249
    %v8251 = vand.u32 2147483647, %v8250
    %v8253 = vcvt.s32.f32 %v8246
    %v8254 = vmul.f32 %v8253, %v8251
    %v8255 = vxor.u32 %v8254, 2147483648
    %v8256 = vsel %vm8173, %v8255, %v8254
    %v8257 = vsub.s32 4, %v8233
    %v8258 = vsel %vm8173, %v8257, %v8233
    %v8259 = vsel %vm8172, %v7644, %v8256
    %v8260 = vsel %vm8172, 0, %v8258
    %v8261 = vcosq.f32.pop %v8259
    %v8262 = vsinq.f32.pop %v8259
    %vm8263 = vweird.f32 %v7644
    %v8264 = vand.u32 %v8260, 3
    %vm8265 = vcmp.lt.s32.totalorder %v8264, 2
    %vm8266 = vcmp.eq.s32.totalorder %v8264, 0
    %v8267 = vxor.u32 %v8262, 2147483648
    %v8268 = vsel %vm8266, %v8261, %v8267
    %vm8269 = vcmp.eq.s32.totalorder %v8264, 2
    %v8270 = vxor.u32 %v8261, 2147483648
    %v8271 = vsel %vm8269, %v8270, %v8262
    %v8272 = vsel %vm8265, %v8268, %v8271
    %v8273 = vsel %vm8263, nan, %v8272
    %v8274 = vand.u32 2147483647, %v7645
    %vm8275 = vcmp.le.f32.partialorder %v8274, 0.7853982
    %vm8276 = vcmp.lt.s32.totalorder %v7645, 0
    %v8277 = vand.u32 %v7645, 2139095040
    %v8278 = vshrl.u32 %v8277, 23
    %v8279 = vsub.s32 %v8278, 127
    %v8280 = vand.u32 2147483647, %v7645
    %v8281 = vand.u32 %v8280, 8388607
    %v8282 = vor.u32 %v8281, 8388608
    %v8283 = vsub.s32 0, %v8282
    %v8284 = vadd.s32 %v8279, 1
    %vm8285 = vcmp.gt.s32.totalorder %v8284, 0
    %v8286 = vsel %vm8285, %v8284, 0
    %v8287 = vshrl.u32 %v8286, 5
    %v8288 = vand.u32 %v8286, 31
    %v8289 = vsub.s32 32, %v8288
    %v8290 = vshrl.u32 683565275, %v8289
    %v8291 = vshll.u32 683565275, %v8288
    %v8292 = vshrl.u32 2475754826, %v8289
    %v8293 = vor.u32 %v8291, %v8292
    %v8294 = vshll.u32 2475754826, %v8288
    %v8295 = vshrl.u32 2131351028, %v8289
    %v8296 = vor.u32 %v8294, %v8295
    %v8297 = vshll.u32 2131351028, %v8288
    %v8298 = vshrl.u32 2102212464, %v8289
    %v8299 = vor.u32 %v8297, %v8298
    %v8300 = vshll.u32 2102212464, %v8288
    %v8301 = vshrl.u32 920167782, %v8289
    %v8302 = vor.u32 %v8300, %v8301
    %v8303 = vshll.u32 920167782, %v8288
    %v8304 = vshrl.u32 1326507024, %v8289
    %v8305 = vor.u32 %v8303, %v8304
    %vm8306 = vcmp.lt.s32.totalorder %v8287, 1
    %vm8307 = vcmp.lt.s32.totalorder %v8287, 2
    %vm8308 = vcmp.lt.s32.totalorder %v8287, 3
    %vm8309 = vcmp.lt.s32.totalorder %v8287, 4
    %v8310 = vsel %vm8306, %v8290, %v8293
    %v8311 = vsel %vm8309, %v8299, 2102212464
    %v8312 = vsel %vm8308, %v8296, %v8311
    %v8313 = vsel %vm8307, %v8310, %v8312
    %v8314 = vsel %vm8306, %v8293, %v8296
    %v8315 = vsel %vm8309, %v8302, 920167782
    %v8316 = vsel %vm8308, %v8299, %v8315
    %v8317 = vsel %vm8307, %v8314, %v8316
    %v8318 = vsel %vm8306, %v8296, %v8299
    %v8319 = vsel %vm8309, %v8305, 1326507024
    %v8320 = vsel %vm8308, %v8302, %v8319
    %v8321 = vsel %vm8307, %v8318, %v8320
    %v8322 = vshll.u32 %v8282, 8
    %v8323 = vmul.u32.u64.compose %v8322, %v8321
    %v8324 = vextract.low.u32 %v8323
    %v8325 = vextract.high.u32 %v8323
    %v8326 = vmul.u32.u64.compose %v8322, %v8317
    %v8327 = vextract.low.u32 %v8326
    %v8328 = vextract.high.u32 %v8326
    %v8329 = vmul.u32 %v8322, %v8313
    %v8330 = vadd.s32 %v8325, %v8327
    %vm8331 = vc.u32 %v8325, %v8327
    %v8332 = vadd.s32 %v8328, 1
    %v8333 = vsel %vm8331, %v8332, %v8328
    %v8334 = vadd.s32 %v8329, %v8333
    %v8335 = vadd.s32 %v8334, 536870912
    %v8336 = vshrl.u32 %v8335, 30
    %v8337 = vshll.u32 %v8336, 30
    %v8338 = vsub.s32 %v8334, %v8337
    %vm8339 = vcmp.lt.s32.totalorder %v8338, 0
    %v8340 = vsub.s32 0, %v8338
    %v8341 = vsel %vm8339, %v8340, %v8338
    %v8342 = vclz %v8341
    %v8343 = vsub.s32 %v8342, 2
    %vm8344 = vcmp.gt.s32.totalorder 0, %v8343
    %v8345 = vsel %vm8344, 0, %v8343
    %v8346 = vsub.s32 32, %v8345
    %v8347 = vshll.u32 %v8338, %v8345
    %v8348 = vshrl.u32 %v8330, %v8346
    %v8349 = vor.u32 %v8347, %v8348
    %v8350 = vsub.s32 4294967266, %v8345
    %v8351 = vadd.s32 %v8350, 127
    %v8352 = vshll.u32 %v8351, 23
    %v8353 = vor.u32 4788187, %v8352
    %v8354 = vand.u32 2147483647, %v8353
    %v8356 = vcvt.s32.f32 %v8349
    %v8357 = vmul.f32 %v8356, %v8354
    %v8358 = vxor.u32 %v8357, 2147483648
    %v8359 = vsel %vm8276, %v8358, %v8357
    %v8360 = vsub.s32 4, %v8336
    %v8361 = vsel %vm8276, %v8360, %v8336
    %v8362 = vsel %vm8275, %v7645, %v8359
    %v8363 = vsel %vm8275, 0, %v8361
    %v8364 = vcosq.f32.pop %v8362
    %v8365 = vsinq.f32.pop %v8362
    %vm8366 = vweird.f32 %v7645
    %v8367 = vand.u32 %v8363, 3
    %vm8368 = vcmp.lt.s32.totalorder %v8367, 2
    %vm8369 = vcmp.eq.s32.totalorder %v8367, 0
    %v8370 = vxor.u32 %v8365, 2147483648
    %v8371 = vsel %vm8369, %v8364, %v8370
    %vm8372 = vcmp.eq.s32.totalorder %v8367, 2
    %v8373 = vxor.u32 %v8364, 2147483648
    %v8374 = vsel %vm8372, %v8373, %v8365
    %v8375 = vsel %vm8368, %v8371, %v8374
    %v8376 = vsel %vm8366, nan, %v8375
    %v8377 = vand.u32 2147483647, %v7646
    %vm8378 = vcmp.le.f32.partialorder %v8377, 0.7853982
    %vm8379 = vcmp.lt.s32.totalorder %v7646, 0
    %v8380 = vand.u32 %v7646, 2139095040
    %v8381 = vshrl.u32 %v8380, 23
    %v8382 = vsub.s32 %v8381, 127
    %v8383 = vand.u32 2147483647, %v7646
    %v8384 = vand.u32 %v8383, 8388607
    %v8385 = vor.u32 %v8384, 8388608
    %v8386 = vsub.s32 0, %v8385
    %v8387 = vadd.s32 %v8382, 1
    %vm8388 = vcmp.gt.s32.totalorder %v8387, 0
    %v8389 = vsel %vm8388, %v8387, 0
    %v8390 = vshrl.u32 %v8389, 5
    %v8391 = vand.u32 %v8389, 31
    %v8392 = vsub.s32 32, %v8391
    %v8393 = vshrl.u32 683565275, %v8392
    %v8394 = vshll.u32 683565275, %v8391
    %v8395 = vshrl.u32 2475754826, %v8392
    %v8396 = vor.u32 %v8394, %v8395
    %v8397 = vshll.u32 2475754826, %v8391
    %v8398 = vshrl.u32 2131351028, %v8392
    %v8399 = vor.u32 %v8397, %v8398
    %v8400 = vshll.u32 2131351028, %v8391
    %v8401 = vshrl.u32 2102212464, %v8392
    %v8402 = vor.u32 %v8400, %v8401
    %v8403 = vshll.u32 2102212464, %v8391
    %v8404 = vshrl.u32 920167782, %v8392
    %v8405 = vor.u32 %v8403, %v8404
    %v8406 = vshll.u32 920167782, %v8391
    %v8407 = vshrl.u32 1326507024, %v8392
    %v8408 = vor.u32 %v8406, %v8407
    %vm8409 = vcmp.lt.s32.totalorder %v8390, 1
    %vm8410 = vcmp.lt.s32.totalorder %v8390, 2
    %vm8411 = vcmp.lt.s32.totalorder %v8390, 3
    %vm8412 = vcmp.lt.s32.totalorder %v8390, 4
    %v8413 = vsel %vm8409, %v8393, %v8396
    %v8414 = vsel %vm8412, %v8402, 2102212464
    %v8415 = vsel %vm8411, %v8399, %v8414
    %v8416 = vsel %vm8410, %v8413, %v8415
    %v8417 = vsel %vm8409, %v8396, %v8399
    %v8418 = vsel %vm8412, %v8405, 920167782
    %v8419 = vsel %vm8411, %v8402, %v8418
    %v8420 = vsel %vm8410, %v8417, %v8419
    %v8421 = vsel %vm8409, %v8399, %v8402
    %v8422 = vsel %vm8412, %v8408, 1326507024
    %v8423 = vsel %vm8411, %v8405, %v8422
    %v8424 = vsel %vm8410, %v8421, %v8423
    %v8425 = vshll.u32 %v8385, 8
    %v8426 = vmul.u32.u64.compose %v8425, %v8424
    %v8427 = vextract.low.u32 %v8426
    %v8428 = vextract.high.u32 %v8426
    %v8429 = vmul.u32.u64.compose %v8425, %v8420
    %v8430 = vextract.low.u32 %v8429
    %v8431 = vextract.high.u32 %v8429
    %v8432 = vmul.u32 %v8425, %v8416
    %v8433 = vadd.s32 %v8428, %v8430
    %vm8434 = vc.u32 %v8428, %v8430
    %v8435 = vadd.s32 %v8431, 1
    %v8436 = vsel %vm8434, %v8435, %v8431
    %v8437 = vadd.s32 %v8432, %v8436
    %v8438 = vadd.s32 %v8437, 536870912
    %v8439 = vshrl.u32 %v8438, 30
    %v8440 = vshll.u32 %v8439, 30
    %v8441 = vsub.s32 %v8437, %v8440
    %vm8442 = vcmp.lt.s32.totalorder %v8441, 0
    %v8443 = vsub.s32 0, %v8441
    %v8444 = vsel %vm8442, %v8443, %v8441
    %v8445 = vclz %v8444
    %v8446 = vsub.s32 %v8445, 2
    %vm8447 = vcmp.gt.s32.totalorder 0, %v8446
    %v8448 = vsel %vm8447, 0, %v8446
    %v8449 = vsub.s32 32, %v8448
    %v8450 = vshll.u32 %v8441, %v8448
    %v8451 = vshrl.u32 %v8433, %v8449
    %v8452 = vor.u32 %v8450, %v8451
    %v8453 = vsub.s32 4294967266, %v8448
    %v8454 = vadd.s32 %v8453, 127
    %v8455 = vshll.u32 %v8454, 23
    %v8456 = vor.u32 4788187, %v8455
    %v8457 = vand.u32 2147483647, %v8456
    %v8459 = vcvt.s32.f32 %v8452
    %v8460 = vmul.f32 %v8459, %v8457
    %v8461 = vxor.u32 %v8460, 2147483648
    %v8462 = vsel %vm8379, %v8461, %v8460
    %v8463 = vsub.s32 4, %v8439
    %v8464 = vsel %vm8379, %v8463, %v8439
    %v8465 = vsel %vm8378, %v7646, %v8462
    %v8466 = vsel %vm8378, 0, %v8464
    %v8467 = vcosq.f32.pop %v8465
    %v8468 = vsinq.f32.pop %v8465
    %vm8469 = vweird.f32 %v7646
    %v8470 = vand.u32 %v8466, 3
    %vm8471 = vcmp.lt.s32.totalorder %v8470, 2
    %vm8472 = vcmp.eq.s32.totalorder %v8470, 0
    %v8473 = vxor.u32 %v8468, 2147483648
    %v8474 = vsel %vm8472, %v8467, %v8473
    %vm8475 = vcmp.eq.s32.totalorder %v8470, 2
    %v8476 = vxor.u32 %v8467, 2147483648
    %v8477 = vsel %vm8475, %v8476, %v8468
    %v8478 = vsel %vm8471, %v8474, %v8477
    %v8479 = vsel %vm8469, nan, %v8478
    %s8480 = scalar_lea.vmem [#allocation5], 640
    %8481 = vst [vmem:[%s8480] sm:$0xff] %v8170
    %8482 = vst [vmem:[%s8480 + $0x8] sm:$0xff] %v8273
    %8483 = vst [vmem:[%s8480 + $0x10] sm:$0xff] %v8376
    %8484 = vst [vmem:[%s8480 + $0x18] sm:$0xff] %v8479
    // Predicated region
    $region10: #{tpu_custom_call.1} parent=1 // pred_check
      _
    $region11: #{tpu_custom_call.1} parent=1 // pred_check_branch
      %8486 = sbr.rel (0) target = $region13
    $region12: #{tpu_custom_call.1} parent=1 // pred_region
      %s8488 = ssub.s32 10752, 10752
      %8489 = vsyncadd [#allocation4], %s8488
      %s8490 = sshll.u32 [#allocation5], 4
      %s8491 = int_to_ptr.vmem [resolvable:$true] %s8490
      %8496 = dma.vmem_to_hbm [thread:$0]  %s8491, 10752, %s1, [#allocation4], 512, 512, 32
    $region13: #{tpu_custom_call.1} parent=1 // pred_fallthru
      _
    // Predicated region
    $region14: #{tpu_custom_call.1} parent=1 // pred_check
      _
    $region15: #{tpu_custom_call.1} parent=1 // pred_check_branch
      %8498 = sbr.rel (0) target = $region17
    $region16: #{tpu_custom_call.1} parent=1 // pred_region
      %8499 = dma.done [#allocation4], 10752
    $region17: #{tpu_custom_call.1} parent=1 // pred_fallthru
      _
    %8500 = vsyncpa [#allocation3], 1
    %8501 = vsyncpa [#allocation4], 1

</llo_original>
